<compile_context>
chip_gen: v7x
topology: tpu7x:2x2x1
jax: 0.10.0
libtpu: 0.0.40
codegen_flags: <defaults>
</compile_context>

<pallas_src>
import jax
import jax.numpy as jnp
from jax import lax
from jax.experimental import pallas as pl
from jax.experimental.pallas import tpu as pltpu


# ----------------------------------------------------------------------------
# Fused decoder forward (NHWC entry point, one pallas_call)
# ----------------------------------------------------------------------------
def base_decoder_forward_nhwc(x_nhwc, rf_nhwc, p, *, compute_dtype=jnp.bfloat16,
                              out_dtype=jnp.float32, eps=1e-5):
    """Fused up_conv -> pad -> cat -> conv1(BN,ReLU) -> conv2(BN,ReLU), NHWC."""
    N, H, W, Cin = x_nhwc.shape
    Nr, Hr, Wr, F = rf_nhwc.shape
    Cout = p["c1_w"].shape[0]
    assert Nr == N and p["c1_w"].shape[1] == 2 * F
    assert Hr >= 2 * H and Wr >= 2 * W, "rf must be >= 2x the input spatially"

    HW = H * W
    M2 = Hr * Wr
    C2 = 2 * F
    Hp, Wp = Hr + 2, Wr + 2            # padded (conv halo) scratch extents

    # F.pad offsets (trace-time constants).
    diffY, diffX = Hr - 2 * H, Wr - 2 * W
    pt, pl0 = diffY // 2, diffX // 2

    # ---- ConvTranspose2d(k=2, s=2) packed as one (Cin, 4F) matmul weight.
    # PyTorch weight layout (Cin, F, kh, kw) -> columns ordered (kh, kw, f).
    wup = jnp.transpose(p["up_w"], (0, 2, 3, 1)).reshape(Cin, 4 * F)
    wup = wup.astype(compute_dtype)
    bup = jnp.tile(p["up_b"], 4).reshape(1, 4 * F).astype(jnp.float32)

    # ---- Fold BatchNorm (eval mode) into the conv weights; arrange each conv
    #      weight as (3, 3*Cin, Cout) so the 3 kw taps are folded into K.
    def fold_conv_bn(w_oihw, b, g, beta, m, v):
        scale = g / jnp.sqrt(v + eps)                               # (Cout,)
        wf = w_oihw.astype(jnp.float32) * scale[:, None, None, None]
        wf = jnp.transpose(wf, (2, 3, 1, 0))                        # (3,3,Ci,Co)
        shift = ((b - m) * scale + beta).reshape(1, -1).astype(jnp.float32)
        return wf, shift

    w1f, s1 = fold_conv_bn(p["c1_w"], p["c1_b"],
                           p["bn1_g"], p["bn1_b"], p["bn1_m"], p["bn1_v"])
    w2f, s2 = fold_conv_bn(p["c2_w"], p["c2_b"],
                           p["bn2_g"], p["bn2_b"], p["bn2_m"], p["bn2_v"])
    w1k = w1f.reshape(3, 3 * C2, Cout).astype(compute_dtype)   # K = (kw, cin)
    w2k = w2f.reshape(3, 3 * Cout, Cout).astype(compute_dtype)

    # ---- Contiguous (free) HBM reshapes so the kernel never reshapes inputs.
    x_d = x_nhwc.astype(compute_dtype).reshape(N, HW, Cin)     # matmul-ready
    rf_b = rf_nhwc.astype(compute_dtype)

    Kmax = max(3 * C2, 3 * Cout)                               # shared im2col

    # ------------------------------------------------------------------ kernel
    def kernel(x_ref, rf_ref, wup_ref, bup_ref, w1k_ref, s1_ref, w2k_ref,
               s2_ref, o_ref, cat_ref, y1_ref, im_ref):
        # cat_ref : (Hp, Wp, 2F)   padded [up | rf] concat (VMEM resident)
        # y1_ref  : (Hp, Wp, Cout) padded conv1 activation
        # im_ref  : (M2, Kmax)     im2col staging (taps folded into K)
        cdt = cat_ref.dtype

        # --- 0) zero ONLY the halo border and the F.pad margins.
        cat_ref[0:1, :, :] = jnp.zeros((1, Wp, C2), cdt)
        cat_ref[Hp - 1:, :, :] = jnp.zeros((1, Wp, C2), cdt)
        cat_ref[:, 0:1, :] = jnp.zeros((Hp, 1, C2), cdt)
        cat_ref[:, Wp - 1:, :] = jnp.zeros((Hp, 1, C2), cdt)
        if pt > 0:
            cat_ref[1:1 + pt, :, 0:F] = jnp.zeros((pt, Wp, F), cdt)
        if diffY - pt > 0:
            cat_ref[1 + pt + 2 * H:1 + Hr, :, 0:F] = (
                jnp.zeros((diffY - pt, Wp, F), cdt))
        if pl0 > 0:
            cat_ref[:, 1:1 + pl0, 0:F] = jnp.zeros((Hp, pl0, F), cdt)
        if diffX - pl0 > 0:
            cat_ref[:, 1 + pl0 + 2 * W:1 + Wr, 0:F] = (
                jnp.zeros((Hp, diffX - pl0, F), cdt))
        y1_ref[0:1, :, :] = jnp.zeros((1, Wp, Cout), cdt)
        y1_ref[Hp - 1:, :, :] = jnp.zeros((1, Wp, Cout), cdt)
        y1_ref[:, 0:1, :] = jnp.zeros((Hp, 1, Cout), cdt)
        y1_ref[:, Wp - 1:, :] = jnp.zeros((Hp, 1, Cout), cdt)

        # --- 1) rf half of the cat: one dense copy (no HBM concatenate).
        cat_ref[1:1 + Hr, 1:1 + Wr, F:C2] = rf_ref[0]

        # --- 2) ConvTranspose2d(k=2,s=2) == one (HW, Cin) @ (Cin, 4F) matmul.
        up4 = jnp.dot(x_ref[0], wup_ref[...],
                      preferred_element_type=jnp.float32) + bup_ref[...]
        up4 = up4.astype(cdt)                                   # (HW, 4F)

        # --- 3) pixel shuffle in registers, ONE store for the whole up half.
        #        planes[t] = sub-pixel plane (kh, kw) = (t // 2, t % 2).
        planes = [up4[:, t * F:(t + 1) * F].reshape(H, W, F) for t in range(4)]
        row0 = jnp.stack((planes[0], planes[1]), axis=2).reshape(H, 2 * W, F)
        row1 = jnp.stack((planes[2], planes[3]), axis=2).reshape(H, 2 * W, F)
        up_full = jnp.stack((row0, row1), axis=1).reshape(2 * H, 2 * W, F)
        cat_ref[1 + pt:1 + pt + 2 * H, 1 + pl0:1 + pl0 + 2 * W, 0:F] = up_full

        # --- 4) conv1 + folded BN + ReLU: 3 MXU matmuls, kw taps folded into
        #        K = 3*2F via the im2col scratch (bf16 in, f32 accumulate).
        acc1 = jnp.zeros((M2, Cout), jnp.float32)
        for kh in range(3):
            for kw in range(3):
                im_ref[:, kw * C2:(kw + 1) * C2] = (
                    cat_ref[kh:kh + Hr, kw:kw + Wr, :].reshape(M2, C2))
            acc1 = acc1 + jnp.dot(im_ref[:, 0:3 * C2], w1k_ref[kh],
                                  preferred_element_type=jnp.float32)
        y1 = jnp.maximum(acc1 + s1_ref[...], 0.0)
        y1_ref[1:1 + Hr, 1:1 + Wr, :] = y1.astype(cdt).reshape(Hr, Wr, Cout)

        # --- 5) conv2 + folded BN + ReLU, reading conv1's activation from
        #        VMEM; same K-folded im2col scheme (K = 3*Cout).
        acc2 = jnp.zeros((M2, Cout), jnp.float32)
        for kh in range(3):
            for kw in range(3):
                im_ref[:, kw * Cout:(kw + 1) * Cout] = (
                    y1_ref[kh:kh + Hr, kw:kw + Wr, :].reshape(M2, Cout))
            acc2 = acc2 + jnp.dot(im_ref[:, 0:3 * Cout], w2k_ref[kh],
                                  preferred_element_type=jnp.float32)
        y2 = jnp.maximum(acc2 + s2_ref[...], 0.0)
        o_ref[...] = y2.astype(o_ref.dtype).reshape(1, M2, Cout)

    out = pl.pallas_call(
        kernel,
        out_shape=jax.ShapeDtypeStruct((N, M2, Cout), out_dtype),
        grid=(N,),
        in_specs=[
            pl.BlockSpec((1, HW, Cin), lambda n: (n, 0, 0)),
            pl.BlockSpec((1, Hr, Wr, F), lambda n: (n, 0, 0, 0)),
            pl.BlockSpec((Cin, 4 * F), lambda n: (0, 0)),
            pl.BlockSpec((1, 4 * F), lambda n: (0, 0)),
            pl.BlockSpec((3, 3 * C2, Cout), lambda n: (0, 0, 0)),
            pl.BlockSpec((1, Cout), lambda n: (0, 0)),
            pl.BlockSpec((3, 3 * Cout, Cout), lambda n: (0, 0, 0)),
            pl.BlockSpec((1, Cout), lambda n: (0, 0)),
        ],
        out_specs=pl.BlockSpec((1, M2, Cout), lambda n: (n, 0, 0)),
        scratch_shapes=[
            pltpu.VMEM((Hp, Wp, C2), compute_dtype),      # padded cat
            pltpu.VMEM((Hp, Wp, Cout), compute_dtype),    # padded conv1 act
            pltpu.VMEM((M2, Kmax), compute_dtype),        # im2col (K-folded)
        ],
        compiler_params=pltpu.CompilerParams(
            dimension_semantics=("parallel",),
            vmem_limit_bytes=32 * 1024 * 1024),
    )(x_d, rf_b, wup, bup, w1k, s1, w2k, s2)

    return out.reshape(N, Hr, Wr, Cout)      # free (contiguous) HBM reshape


def base_decoder_forward(x_nchw, rf_nchw, p, *, out_dtype=jnp.float32):
    """PyTorch-convention wrapper (NCHW in / NCHW out, BatchNorm eval mode).

    Layout-native callers should use base_decoder_forward_nhwc directly (and
    bf16 out_dtype when feeding the next decoder block) to skip the two input
    transposes and the output transpose below and halve the HBM writeback.
    """
    x = jnp.transpose(x_nchw, (0, 2, 3, 1))
    rf = jnp.transpose(rf_nchw, (0, 2, 3, 1))
    y = base_decoder_forward_nhwc(x, rf, p, out_dtype=out_dtype)
    return jnp.transpose(y, (0, 3, 1, 2))


# ----------------------------------------------------------------------------
# Pure-JAX f32 reference (no Pallas) for validation
# ----------------------------------------------------------------------------
def _ref_conv_bn_relu(x, w, b, g, be, m, v, eps=1e-5):
    y = lax.conv_general_dilated(x, w, (1, 1), ((1, 1), (1, 1)),
                                 dimension_numbers=('NCHW', 'OIHW', 'NCHW'))
    y = y + b[None, :, None, None]
    y = (y - m[None, :, None, None]) / jnp.sqrt(v[None, :, None, None] + eps)
    y = y * g[None, :, None, None] + be[None, :, None, None]
    return jnp.maximum(y, 0.0)


def reference_forward(x, rf, p):
    N, Ci, H, W = x.shape
    F = p["up_w"].shape[1]
    e = jnp.einsum('nihw,iokl->nohwkl', x, p["up_w"])        # (N, F, H, W, 2, 2)
    up = e.transpose(0, 1, 2, 4, 3, 5).reshape(N, F, 2 * H, 2 * W)
    up = up + p["up_b"][None, :, None, None]
    cat = jnp.concatenate([up, rf], axis=1)
    y = _ref_conv_bn_relu(cat, p["c1_w"], p["c1_b"],
                          p["bn1_g"], p["bn1_b"], p["bn1_m"], p["bn1_v"])
    y = _ref_conv_bn_relu(y, p["c2_w"], p["c2_b"],
                          p["bn2_g"], p["bn2_b"], p["bn2_m"], p["bn2_v"])
    return y


# ----------------------------------------------------------------------------
if __name__ == "__main__":
    in_channels, f_channels, out_channels = 8, 4, 8
    N, H, W = 2, 8, 8                       # rf spatial = 2*H = 16

    key = jax.random.PRNGKey(0)
    ks = jax.random.split(key, 12)

    def rnd(k, shape):
        return jax.random.normal(k, shape, dtype=jnp.float32) * 0.1

    params = {
        "up_w": rnd(ks[0], (in_channels, f_channels, 2, 2)),
        "up_b": rnd(ks[1], (f_channels,)),
        "c1_w": rnd(ks[2], (out_channels, f_channels * 2, 3, 3)),
        "c1_b": rnd(ks[3], (out_channels,)),
        "bn1_g": 1.0 + rnd(ks[4], (out_channels,)),
        "bn1_b": rnd(ks[5], (out_channels,)),
        "bn1_m": jnp.zeros((out_channels,), jnp.float32),
        "bn1_v": jnp.ones((out_channels,), jnp.float32),
        "c2_w": rnd(ks[6], (out_channels, out_channels, 3, 3)),
        "c2_b": rnd(ks[7], (out_channels,)),
        "bn2_g": 1.0 + rnd(ks[8], (out_channels,)),
        "bn2_b": rnd(ks[9], (out_channels,)),
        "bn2_m": jnp.zeros((out_channels,), jnp.float32),
        "bn2_v": jnp.ones((out_channels,), jnp.float32),
    }

    x = jax.random.normal(ks[10], (N, in_channels, H, W), dtype=jnp.float32)
    rf = jax.random.normal(ks[11], (N, f_channels, 2 * H, 2 * W),
                           dtype=jnp.float32)

    out = jax.block_until_ready(base_decoder_forward(x, rf, params))
    ref = jax.block_until_ready(reference_forward(x, rf, params))

    assert out.shape == (N, out_channels, 2 * H, 2 * W), out.shape
    # bf16 matmul inputs (f32 accumulate) vs. f32 reference -> loose tolerance.
    max_err = float(jnp.abs(out - ref).max())
    assert jnp.allclose(out, ref, rtol=3e-2, atol=3e-2), max_err

    print("KERNEL_OK")
</pallas_src>

<mosaic_0001>
module attributes {stable_mosaic.version = 11 : i64} {
  func.func @kernel(%arg0: i32, %arg1: memref<1x64x8xbf16, #tpu.memory_space<vmem>>, %arg2: memref<1x16x16x4xbf16, #tpu.memory_space<vmem>>, %arg3: memref<8x16xbf16, #tpu.memory_space<vmem>>, %arg4: memref<1x16xf32, #tpu.memory_space<vmem>>, %arg5: memref<3x24x8xbf16, #tpu.memory_space<vmem>>, %arg6: memref<1x8xf32, #tpu.memory_space<vmem>>, %arg7: memref<3x24x8xbf16, #tpu.memory_space<vmem>>, %arg8: memref<1x8xf32, #tpu.memory_space<vmem>>, %arg9: memref<1x256x8xf32, #tpu.memory_space<vmem>>, %arg10: memref<18x18x8xbf16, #tpu.memory_space<vmem>>, %arg11: memref<18x18x8xbf16, #tpu.memory_space<vmem>>, %arg12: memref<256x24xbf16, #tpu.memory_space<vmem>>) attributes {dimension_semantics = [#tpu.dimension_semantics<parallel>], iteration_bounds = array<i64: 2>, scalar_prefetch = 0 : i64, scratch_operands = 3 : i64, tpu.core_type = #tpu.core_type<tc>, window_params = [{transform_indices = @transform_0, window_bounds = array<i64: 1, 64, 8>}, {transform_indices = @transform_1, window_bounds = array<i64: 1, 16, 16, 4>}, {pipeline_mode = #tpu.pipeline_mode<synchronous>, transform_indices = @transform_2, window_bounds = array<i64: 8, 16>}, {pipeline_mode = #tpu.pipeline_mode<synchronous>, transform_indices = @transform_3, window_bounds = array<i64: 1, 16>}, {pipeline_mode = #tpu.pipeline_mode<synchronous>, transform_indices = @transform_4, window_bounds = array<i64: 3, 24, 8>}, {pipeline_mode = #tpu.pipeline_mode<synchronous>, transform_indices = @transform_5, window_bounds = array<i64: 1, 8>}, {pipeline_mode = #tpu.pipeline_mode<synchronous>, transform_indices = @transform_6, window_bounds = array<i64: 3, 24, 8>}, {pipeline_mode = #tpu.pipeline_mode<synchronous>, transform_indices = @transform_7, window_bounds = array<i64: 1, 8>}, {transform_indices = @transform_8, window_bounds = array<i64: 1, 256, 8>}]} {
    %cst = arith.constant 0.000000e+00 : bf16
    %0 = vector.broadcast %cst : bf16 to vector<1x18x8xbf16>
    %c0 = arith.constant 0 : index
    %c0_0 = arith.constant 0 : index
    %c0_1 = arith.constant 0 : index
    %1 = vector.load %arg10[%c0, %c0_0, %c0_1] : memref<18x18x8xbf16, #tpu.memory_space<vmem>>, vector<1x18x8xbf16>
    tpu.vector_store %arg10[%c0, %c0_0, %c0_1], %0 {strides = array<i32>} : memref<18x18x8xbf16, #tpu.memory_space<vmem>>, vector<1x18x8xbf16>,
    %cst_2 = arith.constant 0.000000e+00 : bf16
    %2 = vector.broadcast %cst_2 : bf16 to vector<1x18x8xbf16>
    %c17 = arith.constant 17 : index
    %c0_3 = arith.constant 0 : index
    %c0_4 = arith.constant 0 : index
    %3 = vector.load %arg10[%c17, %c0_3, %c0_4] : memref<18x18x8xbf16, #tpu.memory_space<vmem>>, vector<1x18x8xbf16>
    tpu.vector_store %arg10[%c17, %c0_3, %c0_4], %2 {strides = array<i32>} : memref<18x18x8xbf16, #tpu.memory_space<vmem>>, vector<1x18x8xbf16>,
    %cst_5 = arith.constant 0.000000e+00 : bf16
    %4 = vector.broadcast %cst_5 : bf16 to vector<18x1x8xbf16>
    %c0_6 = arith.constant 0 : index
    %c0_7 = arith.constant 0 : index
    %c0_8 = arith.constant 0 : index
    %5 = vector.load %arg10[%c0_6, %c0_7, %c0_8] : memref<18x18x8xbf16, #tpu.memory_space<vmem>>, vector<18x1x8xbf16>
    tpu.vector_store %arg10[%c0_6, %c0_7, %c0_8], %4 {strides = array<i32>} : memref<18x18x8xbf16, #tpu.memory_space<vmem>>, vector<18x1x8xbf16>,
    %cst_9 = arith.constant 0.000000e+00 : bf16
    %6 = vector.broadcast %cst_9 : bf16 to vector<18x1x8xbf16>
    %c0_10 = arith.constant 0 : index
    %c17_11 = arith.constant 17 : index
    %c0_12 = arith.constant 0 : index
    %7 = vector.load %arg10[%c0_10, %c17_11, %c0_12] : memref<18x18x8xbf16, #tpu.memory_space<vmem>>, vector<18x1x8xbf16>
    tpu.vector_store %arg10[%c0_10, %c17_11, %c0_12], %6 {strides = array<i32>} : memref<18x18x8xbf16, #tpu.memory_space<vmem>>, vector<18x1x8xbf16>,
    %cst_13 = arith.constant 0.000000e+00 : bf16
    %8 = vector.broadcast %cst_13 : bf16 to vector<1x18x8xbf16>
    %c0_14 = arith.constant 0 : index
    %c0_15 = arith.constant 0 : index
    %c0_16 = arith.constant 0 : index
    %9 = vector.load %arg11[%c0_14, %c0_15, %c0_16] : memref<18x18x8xbf16, #tpu.memory_space<vmem>>, vector<1x18x8xbf16>
    tpu.vector_store %arg11[%c0_14, %c0_15, %c0_16], %8 {strides = array<i32>} : memref<18x18x8xbf16, #tpu.memory_space<vmem>>, vector<1x18x8xbf16>,
    %cst_17 = arith.constant 0.000000e+00 : bf16
    %10 = vector.broadcast %cst_17 : bf16 to vector<1x18x8xbf16>
    %c17_18 = arith.constant 17 : index
    %c0_19 = arith.constant 0 : index
    %c0_20 = arith.constant 0 : index
    %11 = vector.load %arg11[%c17_18, %c0_19, %c0_20] : memref<18x18x8xbf16, #tpu.memory_space<vmem>>, vector<1x18x8xbf16>
    tpu.vector_store %arg11[%c17_18, %c0_19, %c0_20], %10 {strides = array<i32>} : memref<18x18x8xbf16, #tpu.memory_space<vmem>>, vector<1x18x8xbf16>,
    %cst_21 = arith.constant 0.000000e+00 : bf16
    %12 = vector.broadcast %cst_21 : bf16 to vector<18x1x8xbf16>
    %c0_22 = arith.constant 0 : index
    %c0_23 = arith.constant 0 : index
    %c0_24 = arith.constant 0 : index
    %13 = vector.load %arg11[%c0_22, %c0_23, %c0_24] : memref<18x18x8xbf16, #tpu.memory_space<vmem>>, vector<18x1x8xbf16>
    tpu.vector_store %arg11[%c0_22, %c0_23, %c0_24], %12 {strides = array<i32>} : memref<18x18x8xbf16, #tpu.memory_space<vmem>>, vector<18x1x8xbf16>,
    %cst_25 = arith.constant 0.000000e+00 : bf16
    %14 = vector.broadcast %cst_25 : bf16 to vector<18x1x8xbf16>
    %c0_26 = arith.constant 0 : index
    %c17_27 = arith.constant 17 : index
    %c0_28 = arith.constant 0 : index
    %15 = vector.load %arg11[%c0_26, %c17_27, %c0_28] : memref<18x18x8xbf16, #tpu.memory_space<vmem>>, vector<18x1x8xbf16>
    tpu.vector_store %arg11[%c0_26, %c17_27, %c0_28], %14 {strides = array<i32>} : memref<18x18x8xbf16, #tpu.memory_space<vmem>>, vector<18x1x8xbf16>,
    %c0_29 = arith.constant 0 : index
    %c0_30 = arith.constant 0 : index
    %c0_31 = arith.constant 0 : index
    %c0_32 = arith.constant 0 : index
    %16 = vector.load %arg2[%c0_29, %c0_30, %c0_31, %c0_32] : memref<1x16x16x4xbf16, #tpu.memory_space<vmem>>, vector<1x16x16x4xbf16>
    %17 = vector.shape_cast %16 : vector<1x16x16x4xbf16> to vector<16x16x4xbf16>
    %c1 = arith.constant 1 : index
    %c1_33 = arith.constant 1 : index
    %c4 = arith.constant 4 : index
    %18 = vector.load %arg10[%c1, %c1_33, %c4] : memref<18x18x8xbf16, #tpu.memory_space<vmem>>, vector<16x16x4xbf16>
    tpu.vector_store %arg10[%c1, %c1_33, %c4], %17 {strides = array<i32>} : memref<18x18x8xbf16, #tpu.memory_space<vmem>>, vector<16x16x4xbf16>,
    %c0_34 = arith.constant 0 : index
    %c0_35 = arith.constant 0 : index
    %c0_36 = arith.constant 0 : index
    %19 = vector.load %arg1[%c0_34, %c0_35, %c0_36] : memref<1x64x8xbf16, #tpu.memory_space<vmem>>, vector<1x64x8xbf16>
    %20 = vector.shape_cast %19 : vector<1x64x8xbf16> to vector<64x8xbf16>
    %c0_37 = arith.constant 0 : index
    %c0_38 = arith.constant 0 : index
    %21 = vector.load %arg3[%c0_37, %c0_38] : memref<8x16xbf16, #tpu.memory_space<vmem>>, vector<8x16xbf16>
    %cst_39 = arith.constant dense<0.000000e+00> : vector<64x16xf32>
    %22 = tpu.matmul %20, %21, %cst_39 {dimension_numbers = #tpu.dot_dimension_numbers<[1], [0], [0], [1], [0, 0, 1, 1], [], []>} : vector<64x8xbf16>, vector<8x16xbf16>, vector<64x16xf32> -> vector<64x16xf32>
    %c0_40 = arith.constant 0 : index
    %c0_41 = arith.constant 0 : index
    %23 = vector.load %arg4[%c0_40, %c0_41] : memref<1x16xf32, #tpu.memory_space<vmem>>, vector<1x16xf32>
    %24 = vector.broadcast %23 : vector<1x16xf32> to vector<64x16xf32>
    %25 = arith.addf %22, %24 : vector<64x16xf32>
    %26 = arith.truncf %25 : vector<64x16xf32> to vector<64x16xbf16>
    %27 = vector.extract_strided_slice %26 {offsets = [0, 0], sizes = [64, 4], strides = [1, 1]} : vector<64x16xbf16> to vector<64x4xbf16>
    %28 = vector.shape_cast %27 : vector<64x4xbf16> to vector<8x8x4xbf16>
    %29 = vector.extract_strided_slice %26 {offsets = [0, 4], sizes = [64, 4], strides = [1, 1]} : vector<64x16xbf16> to vector<64x4xbf16>
    %30 = vector.shape_cast %29 : vector<64x4xbf16> to vector<8x8x4xbf16>
    %31 = vector.extract_strided_slice %26 {offsets = [0, 8], sizes = [64, 4], strides = [1, 1]} : vector<64x16xbf16> to vector<64x4xbf16>
    %32 = vector.shape_cast %31 : vector<64x4xbf16> to vector<8x8x4xbf16>
    %33 = vector.extract_strided_slice %26 {offsets = [0, 12], sizes = [64, 4], strides = [1, 1]} : vector<64x16xbf16> to vector<64x4xbf16>
    %34 = vector.shape_cast %33 : vector<64x4xbf16> to vector<8x8x4xbf16>
    %35 = vector.shape_cast %28 : vector<8x8x4xbf16> to vector<8x8x1x4xbf16>
    %36 = vector.shape_cast %30 : vector<8x8x4xbf16> to vector<8x8x1x4xbf16>
    %37 = tpu.concatenate %35, %36 in 2 : vector<8x8x1x4xbf16>, vector<8x8x1x4xbf16> -> vector<8x8x2x4xbf16>
    %38 = vector.shape_cast %37 : vector<8x8x2x4xbf16> to vector<8x16x4xbf16>
    %39 = vector.shape_cast %32 : vector<8x8x4xbf16> to vector<8x8x1x4xbf16>
    %40 = vector.shape_cast %34 : vector<8x8x4xbf16> to vector<8x8x1x4xbf16>
    %41 = tpu.concatenate %39, %40 in 2 : vector<8x8x1x4xbf16>, vector<8x8x1x4xbf16> -> vector<8x8x2x4xbf16>
    %42 = vector.shape_cast %41 : vector<8x8x2x4xbf16> to vector<8x16x4xbf16>
    %43 = vector.shape_cast %38 : vector<8x16x4xbf16> to vector<8x1x16x4xbf16>
    %44 = vector.shape_cast %42 : vector<8x16x4xbf16> to vector<8x1x16x4xbf16>
    %45 = tpu.concatenate %43, %44 in 1 : vector<8x1x16x4xbf16>, vector<8x1x16x4xbf16> -> vector<8x2x16x4xbf16>
    %46 = vector.shape_cast %45 : vector<8x2x16x4xbf16> to vector<16x16x4xbf16>
    %c1_42 = arith.constant 1 : index
    %c1_43 = arith.constant 1 : index
    %c0_44 = arith.constant 0 : index
    %47 = vector.load %arg10[%c1_42, %c1_43, %c0_44] : memref<18x18x8xbf16, #tpu.memory_space<vmem>>, vector<16x16x4xbf16>
    tpu.vector_store %arg10[%c1_42, %c1_43, %c0_44], %46 {strides = array<i32>} : memref<18x18x8xbf16, #tpu.memory_space<vmem>>, vector<16x16x4xbf16>,
    %cst_45 = arith.constant 0.000000e+00 : f32
    %48 = vector.broadcast %cst_45 : f32 to vector<256x8xf32>
    %c0_46 = arith.constant 0 : index
    %c0_47 = arith.constant 0 : index
    %c0_48 = arith.constant 0 : index
    %49 = vector.load %arg10[%c0_46, %c0_47, %c0_48] : memref<18x18x8xbf16, #tpu.memory_space<vmem>>, vector<16x16x8xbf16>
    %50 = vector.shape_cast %49 : vector<16x16x8xbf16> to vector<256x8xbf16>
    %c0_49 = arith.constant 0 : index
    %c0_50 = arith.constant 0 : index
    %51 = vector.load %arg12[%c0_49, %c0_50] : memref<256x24xbf16, #tpu.memory_space<vmem>>, vector<256x8xbf16>
    tpu.vector_store %arg12[%c0_49, %c0_50], %50 {strides = array<i32>} : memref<256x24xbf16, #tpu.memory_space<vmem>>, vector<256x8xbf16>,
    %c0_51 = arith.constant 0 : index
    %c1_52 = arith.constant 1 : index
    %c0_53 = arith.constant 0 : index
    %52 = vector.load %arg10[%c0_51, %c1_52, %c0_53] : memref<18x18x8xbf16, #tpu.memory_space<vmem>>, vector<16x16x8xbf16>
    %53 = vector.shape_cast %52 : vector<16x16x8xbf16> to vector<256x8xbf16>
    %c0_54 = arith.constant 0 : index
    %c8 = arith.constant 8 : index
    %54 = vector.load %arg12[%c0_54, %c8] : memref<256x24xbf16, #tpu.memory_space<vmem>>, vector<256x8xbf16>
    tpu.vector_store %arg12[%c0_54, %c8], %53 {strides = array<i32>} : memref<256x24xbf16, #tpu.memory_space<vmem>>, vector<256x8xbf16>,
    %c0_55 = arith.constant 0 : index
    %c2 = arith.constant 2 : index
    %c0_56 = arith.constant 0 : index
    %55 = vector.load %arg10[%c0_55, %c2, %c0_56] : memref<18x18x8xbf16, #tpu.memory_space<vmem>>, vector<16x16x8xbf16>
    %56 = vector.shape_cast %55 : vector<16x16x8xbf16> to vector<256x8xbf16>
    %c0_57 = arith.constant 0 : index
    %c16 = arith.constant 16 : index
    %57 = vector.load %arg12[%c0_57, %c16] : memref<256x24xbf16, #tpu.memory_space<vmem>>, vector<256x8xbf16>
    tpu.vector_store %arg12[%c0_57, %c16], %56 {strides = array<i32>} : memref<256x24xbf16, #tpu.memory_space<vmem>>, vector<256x8xbf16>,
    %c0_58 = arith.constant 0 : index
    %c0_59 = arith.constant 0 : index
    %58 = vector.load %arg12[%c0_58, %c0_59] : memref<256x24xbf16, #tpu.memory_space<vmem>>, vector<256x24xbf16>
    %c0_60 = arith.constant 0 : index
    %c0_61 = arith.constant 0 : index
    %c0_62 = arith.constant 0 : index
    %59 = vector.load %arg5[%c0_60, %c0_61, %c0_62] : memref<3x24x8xbf16, #tpu.memory_space<vmem>>, vector<1x24x8xbf16>
    %60 = vector.shape_cast %59 : vector<1x24x8xbf16> to vector<24x8xbf16>
    %cst_63 = arith.constant dense<0.000000e+00> : vector<256x8xf32>
    %61 = tpu.matmul %58, %60, %cst_63 {dimension_numbers = #tpu.dot_dimension_numbers<[1], [0], [0], [1], [0, 0, 1, 1], [], []>} : vector<256x24xbf16>, vector<24x8xbf16>, vector<256x8xf32> -> vector<256x8xf32>
    %62 = arith.addf %48, %61 : vector<256x8xf32>
    %c1_64 = arith.constant 1 : index
    %c0_65 = arith.constant 0 : index
    %c0_66 = arith.constant 0 : index
    %63 = vector.load %arg10[%c1_64, %c0_65, %c0_66] : memref<18x18x8xbf16, #tpu.memory_space<vmem>>, vector<16x16x8xbf16>
    %64 = vector.shape_cast %63 : vector<16x16x8xbf16> to vector<256x8xbf16>
    %c0_67 = arith.constant 0 : index
    %c0_68 = arith.constant 0 : index
    %65 = vector.load %arg12[%c0_67, %c0_68] : memref<256x24xbf16, #tpu.memory_space<vmem>>, vector<256x8xbf16>
    tpu.vector_store %arg12[%c0_67, %c0_68], %64 {strides = array<i32>} : memref<256x24xbf16, #tpu.memory_space<vmem>>, vector<256x8xbf16>,
    %c1_69 = arith.constant 1 : index
    %c1_70 = arith.constant 1 : index
    %c0_71 = arith.constant 0 : index
    %66 = vector.load %arg10[%c1_69, %c1_70, %c0_71] : memref<18x18x8xbf16, #tpu.memory_space<vmem>>, vector<16x16x8xbf16>
    %67 = vector.shape_cast %66 : vector<16x16x8xbf16> to vector<256x8xbf16>
    %c0_72 = arith.constant 0 : index
    %c8_73 = arith.constant 8 : index
    %68 = vector.load %arg12[%c0_72, %c8_73] : memref<256x24xbf16, #tpu.memory_space<vmem>>, vector<256x8xbf16>
    tpu.vector_store %arg12[%c0_72, %c8_73], %67 {strides = array<i32>} : memref<256x24xbf16, #tpu.memory_space<vmem>>, vector<256x8xbf16>,
    %c1_74 = arith.constant 1 : index
    %c2_75 = arith.constant 2 : index
    %c0_76 = arith.constant 0 : index
    %69 = vector.load %arg10[%c1_74, %c2_75, %c0_76] : memref<18x18x8xbf16, #tpu.memory_space<vmem>>, vector<16x16x8xbf16>
    %70 = vector.shape_cast %69 : vector<16x16x8xbf16> to vector<256x8xbf16>
    %c0_77 = arith.constant 0 : index
    %c16_78 = arith.constant 16 : index
    %71 = vector.load %arg12[%c0_77, %c16_78] : memref<256x24xbf16, #tpu.memory_space<vmem>>, vector<256x8xbf16>
    tpu.vector_store %arg12[%c0_77, %c16_78], %70 {strides = array<i32>} : memref<256x24xbf16, #tpu.memory_space<vmem>>, vector<256x8xbf16>,
    %c0_79 = arith.constant 0 : index
    %c0_80 = arith.constant 0 : index
    %72 = vector.load %arg12[%c0_79, %c0_80] : memref<256x24xbf16, #tpu.memory_space<vmem>>, vector<256x24xbf16>
    %c1_81 = arith.constant 1 : index
    %c0_82 = arith.constant 0 : index
    %c0_83 = arith.constant 0 : index
    %73 = vector.load %arg5[%c1_81, %c0_82, %c0_83] : memref<3x24x8xbf16, #tpu.memory_space<vmem>>, vector<1x24x8xbf16>
    %74 = vector.shape_cast %73 : vector<1x24x8xbf16> to vector<24x8xbf16>
    %cst_84 = arith.constant dense<0.000000e+00> : vector<256x8xf32>
    %75 = tpu.matmul %72, %74, %cst_84 {dimension_numbers = #tpu.dot_dimension_numbers<[1], [0], [0], [1], [0, 0, 1, 1], [], []>} : vector<256x24xbf16>, vector<24x8xbf16>, vector<256x8xf32> -> vector<256x8xf32>
    %76 = arith.addf %62, %75 : vector<256x8xf32>
    %c2_85 = arith.constant 2 : index
    %c0_86 = arith.constant 0 : index
    %c0_87 = arith.constant 0 : index
    %77 = vector.load %arg10[%c2_85, %c0_86, %c0_87] : memref<18x18x8xbf16, #tpu.memory_space<vmem>>, vector<16x16x8xbf16>
    %78 = vector.shape_cast %77 : vector<16x16x8xbf16> to vector<256x8xbf16>
    %c0_88 = arith.constant 0 : index
    %c0_89 = arith.constant 0 : index
    %79 = vector.load %arg12[%c0_88, %c0_89] : memref<256x24xbf16, #tpu.memory_space<vmem>>, vector<256x8xbf16>
    tpu.vector_store %arg12[%c0_88, %c0_89], %78 {strides = array<i32>} : memref<256x24xbf16, #tpu.memory_space<vmem>>, vector<256x8xbf16>,
    %c2_90 = arith.constant 2 : index
    %c1_91 = arith.constant 1 : index
    %c0_92 = arith.constant 0 : index
    %80 = vector.load %arg10[%c2_90, %c1_91, %c0_92] : memref<18x18x8xbf16, #tpu.memory_space<vmem>>, vector<16x16x8xbf16>
    %81 = vector.shape_cast %80 : vector<16x16x8xbf16> to vector<256x8xbf16>
    %c0_93 = arith.constant 0 : index
    %c8_94 = arith.constant 8 : index
    %82 = vector.load %arg12[%c0_93, %c8_94] : memref<256x24xbf16, #tpu.memory_space<vmem>>, vector<256x8xbf16>
    tpu.vector_store %arg12[%c0_93, %c8_94], %81 {strides = array<i32>} : memref<256x24xbf16, #tpu.memory_space<vmem>>, vector<256x8xbf16>,
    %c2_95 = arith.constant 2 : index
    %c2_96 = arith.constant 2 : index
    %c0_97 = arith.constant 0 : index
    %83 = vector.load %arg10[%c2_95, %c2_96, %c0_97] : memref<18x18x8xbf16, #tpu.memory_space<vmem>>, vector<16x16x8xbf16>
    %84 = vector.shape_cast %83 : vector<16x16x8xbf16> to vector<256x8xbf16>
    %c0_98 = arith.constant 0 : index
    %c16_99 = arith.constant 16 : index
    %85 = vector.load %arg12[%c0_98, %c16_99] : memref<256x24xbf16, #tpu.memory_space<vmem>>, vector<256x8xbf16>
    tpu.vector_store %arg12[%c0_98, %c16_99], %84 {strides = array<i32>} : memref<256x24xbf16, #tpu.memory_space<vmem>>, vector<256x8xbf16>,
    %c0_100 = arith.constant 0 : index
    %c0_101 = arith.constant 0 : index
    %86 = vector.load %arg12[%c0_100, %c0_101] : memref<256x24xbf16, #tpu.memory_space<vmem>>, vector<256x24xbf16>
    %c2_102 = arith.constant 2 : index
    %c0_103 = arith.constant 0 : index
    %c0_104 = arith.constant 0 : index
    %87 = vector.load %arg5[%c2_102, %c0_103, %c0_104] : memref<3x24x8xbf16, #tpu.memory_space<vmem>>, vector<1x24x8xbf16>
    %88 = vector.shape_cast %87 : vector<1x24x8xbf16> to vector<24x8xbf16>
    %cst_105 = arith.constant dense<0.000000e+00> : vector<256x8xf32>
    %89 = tpu.matmul %86, %88, %cst_105 {dimension_numbers = #tpu.dot_dimension_numbers<[1], [0], [0], [1], [0, 0, 1, 1], [], []>} : vector<256x24xbf16>, vector<24x8xbf16>, vector<256x8xf32> -> vector<256x8xf32>
    %90 = arith.addf %76, %89 : vector<256x8xf32>
    %c0_106 = arith.constant 0 : index
    %c0_107 = arith.constant 0 : index
    %91 = vector.load %arg6[%c0_106, %c0_107] : memref<1x8xf32, #tpu.memory_space<vmem>>, vector<1x8xf32>
    %92 = vector.broadcast %91 : vector<1x8xf32> to vector<256x8xf32>
    %93 = arith.addf %90, %92 : vector<256x8xf32>
    %cst_108 = arith.constant 0.000000e+00 : f32
    %94 = vector.broadcast %cst_108 : f32 to vector<256x8xf32>
    %95 = arith.maximumf %93, %94 : vector<256x8xf32>
    %96 = arith.truncf %95 : vector<256x8xf32> to vector<256x8xbf16>
    %97 = vector.shape_cast %96 : vector<256x8xbf16> to vector<16x16x8xbf16>
    %c1_109 = arith.constant 1 : index
    %c1_110 = arith.constant 1 : index
    %c0_111 = arith.constant 0 : index
    %98 = vector.load %arg11[%c1_109, %c1_110, %c0_111] : memref<18x18x8xbf16, #tpu.memory_space<vmem>>, vector<16x16x8xbf16>
    tpu.vector_store %arg11[%c1_109, %c1_110, %c0_111], %97 {strides = array<i32>} : memref<18x18x8xbf16, #tpu.memory_space<vmem>>, vector<16x16x8xbf16>,
    %cst_112 = arith.constant 0.000000e+00 : f32
    %99 = vector.broadcast %cst_112 : f32 to vector<256x8xf32>
    %c0_113 = arith.constant 0 : index
    %c0_114 = arith.constant 0 : index
    %c0_115 = arith.constant 0 : index
    %100 = vector.load %arg11[%c0_113, %c0_114, %c0_115] : memref<18x18x8xbf16, #tpu.memory_space<vmem>>, vector<16x16x8xbf16>
    %101 = vector.shape_cast %100 : vector<16x16x8xbf16> to vector<256x8xbf16>
    %c0_116 = arith.constant 0 : index
    %c0_117 = arith.constant 0 : index
    %102 = vector.load %arg12[%c0_116, %c0_117] : memref<256x24xbf16, #tpu.memory_space<vmem>>, vector<256x8xbf16>
    tpu.vector_store %arg12[%c0_116, %c0_117], %101 {strides = array<i32>} : memref<256x24xbf16, #tpu.memory_space<vmem>>, vector<256x8xbf16>,
    %c0_118 = arith.constant 0 : index
    %c1_119 = arith.constant 1 : index
    %c0_120 = arith.constant 0 : index
    %103 = vector.load %arg11[%c0_118, %c1_119, %c0_120] : memref<18x18x8xbf16, #tpu.memory_space<vmem>>, vector<16x16x8xbf16>
    %104 = vector.shape_cast %103 : vector<16x16x8xbf16> to vector<256x8xbf16>
    %c0_121 = arith.constant 0 : index
    %c8_122 = arith.constant 8 : index
    %105 = vector.load %arg12[%c0_121, %c8_122] : memref<256x24xbf16, #tpu.memory_space<vmem>>, vector<256x8xbf16>
    tpu.vector_store %arg12[%c0_121, %c8_122], %104 {strides = array<i32>} : memref<256x24xbf16, #tpu.memory_space<vmem>>, vector<256x8xbf16>,
    %c0_123 = arith.constant 0 : index
    %c2_124 = arith.constant 2 : index
    %c0_125 = arith.constant 0 : index
    %106 = vector.load %arg11[%c0_123, %c2_124, %c0_125] : memref<18x18x8xbf16, #tpu.memory_space<vmem>>, vector<16x16x8xbf16>
    %107 = vector.shape_cast %106 : vector<16x16x8xbf16> to vector<256x8xbf16>
    %c0_126 = arith.constant 0 : index
    %c16_127 = arith.constant 16 : index
    %108 = vector.load %arg12[%c0_126, %c16_127] : memref<256x24xbf16, #tpu.memory_space<vmem>>, vector<256x8xbf16>
    tpu.vector_store %arg12[%c0_126, %c16_127], %107 {strides = array<i32>} : memref<256x24xbf16, #tpu.memory_space<vmem>>, vector<256x8xbf16>,
    %c0_128 = arith.constant 0 : index
    %c0_129 = arith.constant 0 : index
    %109 = vector.load %arg12[%c0_128, %c0_129] : memref<256x24xbf16, #tpu.memory_space<vmem>>, vector<256x24xbf16>
    %c0_130 = arith.constant 0 : index
    %c0_131 = arith.constant 0 : index
    %c0_132 = arith.constant 0 : index
    %110 = vector.load %arg7[%c0_130, %c0_131, %c0_132] : memref<3x24x8xbf16, #tpu.memory_space<vmem>>, vector<1x24x8xbf16>
    %111 = vector.shape_cast %110 : vector<1x24x8xbf16> to vector<24x8xbf16>
    %cst_133 = arith.constant dense<0.000000e+00> : vector<256x8xf32>
    %112 = tpu.matmul %109, %111, %cst_133 {dimension_numbers = #tpu.dot_dimension_numbers<[1], [0], [0], [1], [0, 0, 1, 1], [], []>} : vector<256x24xbf16>, vector<24x8xbf16>, vector<256x8xf32> -> vector<256x8xf32>
    %113 = arith.addf %99, %112 : vector<256x8xf32>
    %c1_134 = arith.constant 1 : index
    %c0_135 = arith.constant 0 : index
    %c0_136 = arith.constant 0 : index
    %114 = vector.load %arg11[%c1_134, %c0_135, %c0_136] : memref<18x18x8xbf16, #tpu.memory_space<vmem>>, vector<16x16x8xbf16>
    %115 = vector.shape_cast %114 : vector<16x16x8xbf16> to vector<256x8xbf16>
    %c0_137 = arith.constant 0 : index
    %c0_138 = arith.constant 0 : index
    %116 = vector.load %arg12[%c0_137, %c0_138] : memref<256x24xbf16, #tpu.memory_space<vmem>>, vector<256x8xbf16>
    tpu.vector_store %arg12[%c0_137, %c0_138], %115 {strides = array<i32>} : memref<256x24xbf16, #tpu.memory_space<vmem>>, vector<256x8xbf16>,
    %c1_139 = arith.constant 1 : index
    %c1_140 = arith.constant 1 : index
    %c0_141 = arith.constant 0 : index
    %117 = vector.load %arg11[%c1_139, %c1_140, %c0_141] : memref<18x18x8xbf16, #tpu.memory_space<vmem>>, vector<16x16x8xbf16>
    %118 = vector.shape_cast %117 : vector<16x16x8xbf16> to vector<256x8xbf16>
    %c0_142 = arith.constant 0 : index
    %c8_143 = arith.constant 8 : index
    %119 = vector.load %arg12[%c0_142, %c8_143] : memref<256x24xbf16, #tpu.memory_space<vmem>>, vector<256x8xbf16>
    tpu.vector_store %arg12[%c0_142, %c8_143], %118 {strides = array<i32>} : memref<256x24xbf16, #tpu.memory_space<vmem>>, vector<256x8xbf16>,
    %c1_144 = arith.constant 1 : index
    %c2_145 = arith.constant 2 : index
    %c0_146 = arith.constant 0 : index
    %120 = vector.load %arg11[%c1_144, %c2_145, %c0_146] : memref<18x18x8xbf16, #tpu.memory_space<vmem>>, vector<16x16x8xbf16>
    %121 = vector.shape_cast %120 : vector<16x16x8xbf16> to vector<256x8xbf16>
    %c0_147 = arith.constant 0 : index
    %c16_148 = arith.constant 16 : index
    %122 = vector.load %arg12[%c0_147, %c16_148] : memref<256x24xbf16, #tpu.memory_space<vmem>>, vector<256x8xbf16>
    tpu.vector_store %arg12[%c0_147, %c16_148], %121 {strides = array<i32>} : memref<256x24xbf16, #tpu.memory_space<vmem>>, vector<256x8xbf16>,
    %c0_149 = arith.constant 0 : index
    %c0_150 = arith.constant 0 : index
    %123 = vector.load %arg12[%c0_149, %c0_150] : memref<256x24xbf16, #tpu.memory_space<vmem>>, vector<256x24xbf16>
    %c1_151 = arith.constant 1 : index
    %c0_152 = arith.constant 0 : index
    %c0_153 = arith.constant 0 : index
    %124 = vector.load %arg7[%c1_151, %c0_152, %c0_153] : memref<3x24x8xbf16, #tpu.memory_space<vmem>>, vector<1x24x8xbf16>
    %125 = vector.shape_cast %124 : vector<1x24x8xbf16> to vector<24x8xbf16>
    %cst_154 = arith.constant dense<0.000000e+00> : vector<256x8xf32>
    %126 = tpu.matmul %123, %125, %cst_154 {dimension_numbers = #tpu.dot_dimension_numbers<[1], [0], [0], [1], [0, 0, 1, 1], [], []>} : vector<256x24xbf16>, vector<24x8xbf16>, vector<256x8xf32> -> vector<256x8xf32>
    %127 = arith.addf %113, %126 : vector<256x8xf32>
    %c2_155 = arith.constant 2 : index
    %c0_156 = arith.constant 0 : index
    %c0_157 = arith.constant 0 : index
    %128 = vector.load %arg11[%c2_155, %c0_156, %c0_157] : memref<18x18x8xbf16, #tpu.memory_space<vmem>>, vector<16x16x8xbf16>
    %129 = vector.shape_cast %128 : vector<16x16x8xbf16> to vector<256x8xbf16>
    %c0_158 = arith.constant 0 : index
    %c0_159 = arith.constant 0 : index
    %130 = vector.load %arg12[%c0_158, %c0_159] : memref<256x24xbf16, #tpu.memory_space<vmem>>, vector<256x8xbf16>
    tpu.vector_store %arg12[%c0_158, %c0_159], %129 {strides = array<i32>} : memref<256x24xbf16, #tpu.memory_space<vmem>>, vector<256x8xbf16>,
    %c2_160 = arith.constant 2 : index
    %c1_161 = arith.constant 1 : index
    %c0_162 = arith.constant 0 : index
    %131 = vector.load %arg11[%c2_160, %c1_161, %c0_162] : memref<18x18x8xbf16, #tpu.memory_space<vmem>>, vector<16x16x8xbf16>
    %132 = vector.shape_cast %131 : vector<16x16x8xbf16> to vector<256x8xbf16>
    %c0_163 = arith.constant 0 : index
    %c8_164 = arith.constant 8 : index
    %133 = vector.load %arg12[%c0_163, %c8_164] : memref<256x24xbf16, #tpu.memory_space<vmem>>, vector<256x8xbf16>
    tpu.vector_store %arg12[%c0_163, %c8_164], %132 {strides = array<i32>} : memref<256x24xbf16, #tpu.memory_space<vmem>>, vector<256x8xbf16>,
    %c2_165 = arith.constant 2 : index
    %c2_166 = arith.constant 2 : index
    %c0_167 = arith.constant 0 : index
    %134 = vector.load %arg11[%c2_165, %c2_166, %c0_167] : memref<18x18x8xbf16, #tpu.memory_space<vmem>>, vector<16x16x8xbf16>
    %135 = vector.shape_cast %134 : vector<16x16x8xbf16> to vector<256x8xbf16>
    %c0_168 = arith.constant 0 : index
    %c16_169 = arith.constant 16 : index
    %136 = vector.load %arg12[%c0_168, %c16_169] : memref<256x24xbf16, #tpu.memory_space<vmem>>, vector<256x8xbf16>
    tpu.vector_store %arg12[%c0_168, %c16_169], %135 {strides = array<i32>} : memref<256x24xbf16, #tpu.memory_space<vmem>>, vector<256x8xbf16>,
    %c0_170 = arith.constant 0 : index
    %c0_171 = arith.constant 0 : index
    %137 = vector.load %arg12[%c0_170, %c0_171] : memref<256x24xbf16, #tpu.memory_space<vmem>>, vector<256x24xbf16>
    %c2_172 = arith.constant 2 : index
    %c0_173 = arith.constant 0 : index
    %c0_174 = arith.constant 0 : index
    %138 = vector.load %arg7[%c2_172, %c0_173, %c0_174] : memref<3x24x8xbf16, #tpu.memory_space<vmem>>, vector<1x24x8xbf16>
    %139 = vector.shape_cast %138 : vector<1x24x8xbf16> to vector<24x8xbf16>
    %cst_175 = arith.constant dense<0.000000e+00> : vector<256x8xf32>
    %140 = tpu.matmul %137, %139, %cst_175 {dimension_numbers = #tpu.dot_dimension_numbers<[1], [0], [0], [1], [0, 0, 1, 1], [], []>} : vector<256x24xbf16>, vector<24x8xbf16>, vector<256x8xf32> -> vector<256x8xf32>
    %141 = arith.addf %127, %140 : vector<256x8xf32>
    %c0_176 = arith.constant 0 : index
    %c0_177 = arith.constant 0 : index
    %142 = vector.load %arg8[%c0_176, %c0_177] : memref<1x8xf32, #tpu.memory_space<vmem>>, vector<1x8xf32>
    %143 = vector.broadcast %142 : vector<1x8xf32> to vector<256x8xf32>
    %144 = arith.addf %141, %143 : vector<256x8xf32>
    %cst_178 = arith.constant 0.000000e+00 : f32
    %145 = vector.broadcast %cst_178 : f32 to vector<256x8xf32>
    %146 = arith.maximumf %144, %145 : vector<256x8xf32>
    %147 = vector.shape_cast %146 : vector<256x8xf32> to vector<1x256x8xf32>
    %c0_179 = arith.constant 0 : index
    %c0_180 = arith.constant 0 : index
    %c0_181 = arith.constant 0 : index
    %148 = vector.load %arg9[%c0_179, %c0_180, %c0_181] : memref<1x256x8xf32, #tpu.memory_space<vmem>>, vector<1x256x8xf32>
    tpu.vector_store %arg9[%c0_179, %c0_180, %c0_181], %147 {strides = array<i32>} : memref<1x256x8xf32, #tpu.memory_space<vmem>>, vector<1x256x8xf32>,
    return
  }
  func.func @transform_0(%arg0: i32) -> (i32, i32, i32) {
    %c0_i32 = arith.constant 0 : i32
    %c0_i32_0 = arith.constant 0 : i32
    %c0_i32_1 = arith.constant 0 : i32
    return %arg0, %c0_i32, %c0_i32_0 : i32, i32, i32
  }
  func.func @transform_1(%arg0: i32) -> (i32, i32, i32, i32) {
    %c0_i32 = arith.constant 0 : i32
    %c0_i32_0 = arith.constant 0 : i32
    %c0_i32_1 = arith.constant 0 : i32
    %c0_i32_2 = arith.constant 0 : i32
    return %arg0, %c0_i32, %c0_i32_0, %c0_i32_1 : i32, i32, i32, i32
  }
  func.func @transform_2(%arg0: i32) -> (i32, i32) {
    %c0_i32 = arith.constant 0 : i32
    %c0_i32_0 = arith.constant 0 : i32
    %c0_i32_1 = arith.constant 0 : i32
    return %c0_i32, %c0_i32_0 : i32, i32
  }
  func.func @transform_3(%arg0: i32) -> (i32, i32) {
    %c0_i32 = arith.constant 0 : i32
    %c0_i32_0 = arith.constant 0 : i32
    %c0_i32_1 = arith.constant 0 : i32
    return %c0_i32, %c0_i32_0 : i32, i32
  }
  func.func @transform_4(%arg0: i32) -> (i32, i32, i32) {
    %c0_i32 = arith.constant 0 : i32
    %c0_i32_0 = arith.constant 0 : i32
    %c0_i32_1 = arith.constant 0 : i32
    %c0_i32_2 = arith.constant 0 : i32
    return %c0_i32, %c0_i32_0, %c0_i32_1 : i32, i32, i32
  }
  func.func @transform_5(%arg0: i32) -> (i32, i32) {
    %c0_i32 = arith.constant 0 : i32
    %c0_i32_0 = arith.constant 0 : i32
    %c0_i32_1 = arith.constant 0 : i32
    return %c0_i32, %c0_i32_0 : i32, i32
  }
  func.func @transform_6(%arg0: i32) -> (i32, i32, i32) {
    %c0_i32 = arith.constant 0 : i32
    %c0_i32_0 = arith.constant 0 : i32
    %c0_i32_1 = arith.constant 0 : i32
    %c0_i32_2 = arith.constant 0 : i32
    return %c0_i32, %c0_i32_0, %c0_i32_1 : i32, i32, i32
  }
  func.func @transform_7(%arg0: i32) -> (i32, i32) {
    %c0_i32 = arith.constant 0 : i32
    %c0_i32_0 = arith.constant 0 : i32
    %c0_i32_1 = arith.constant 0 : i32
    return %c0_i32, %c0_i32_0 : i32, i32
  }
  func.func @transform_8(%arg0: i32) -> (i32, i32, i32) {
    %c0_i32 = arith.constant 0 : i32
    %c0_i32_0 = arith.constant 0 : i32
    %c0_i32_1 = arith.constant 0 : i32
    return %arg0, %c0_i32, %c0_i32_0 : i32, i32, i32
  }
}

</mosaic_0001>

<llo_original>
// kernel: tpu_custom_call.1
$region0: #{tpu_custom_call.1}
  #allocation0 [shape = 'u32[]', space=smem, size = 0x4, offset = 0x4, fixed_abs, tag = 'smem constant byte address 0x4 - core index']
  #allocation1 [shape = 'u32[144,128]{1,0:T(1,128)}', space=vmem, size = 0x12000, scoped, tag = 'internal scratch']
  #allocation2 [shape = 'bf16[18,18,8]{2,1,0:T(8,128)(2,1)}', space=vmem, size = 0x1b000, scoped, tag = 'scratch operand']
  #allocation3 [shape = 'bf16[18,18,8]{2,1,0:T(8,128)(2,1)}', space=vmem, size = 0x1b000, scoped, tag = 'scratch operand']
  #allocation4 [shape = 'bf16[256,24]{1,0:T(16,128)(2,1)}', space=vmem, size = 0x10000, scoped, tag = 'scratch operand']
  %s0 = inlined_call_operand.vmem [shape: bf16[2,64,8], index: 0, kind: input, shape index: {}]
  %s1 = inlined_call_operand.vmem [shape: bf16[2,16,16,4], index: 1, kind: input, shape index: {}]
  %s2 = inlined_call_operand.vmem [shape: bf16[8,16], index: 2, kind: input, shape index: {}]
  %s3 = inlined_call_operand.vmem [shape: f32[1,16], index: 3, kind: input, shape index: {}]
  %s4 = inlined_call_operand.vmem [shape: bf16[3,24,8], index: 4, kind: input, shape index: {}]
  %s5 = inlined_call_operand.vmem [shape: f32[1,8], index: 5, kind: input, shape index: {}]
  %s6 = inlined_call_operand.vmem [shape: bf16[3,24,8], index: 6, kind: input, shape index: {}]
  %s7 = inlined_call_operand.vmem [shape: f32[1,8], index: 7, kind: input, shape index: {}]
  %s8 = inlined_call_operand.vmem [shape: f32[2,256,8], index: 8, kind: output, shape index: {}]
  %s9 = sld [smem:[#allocation0]]
  $region65: #{tpu_custom_call.1} parent=0
    _
  %s11 = ssub.s32 1, %s9
  %s12 = scalar_select 0, %s11, %s9
  loop: start=0, step=1, limit=4
  $region2: #{tpu_custom_call.1} parent=0 // loop_pre_header
    _
  $region3: #{tpu_custom_call.1} parent=0 // loop_header
    %s14 = sphi 0, %s18
    %p15 = scmp.ge.s32.totalorder %s14, 4
    %s24 = sphi 0, %s26
    %s27 = sphi 0, %s24
    %s28 = sphi 0, %s27
    %s44 = sphi 0, %s28
    %s50 = sphi 0, %s52
    %s53 = sphi 0, %s50
    %s54 = sphi 0, %s53
    %s70 = sphi 0, %s54
    %s74 = sphi 0, %s74
    %s76 = sphi 0, %s74
    %s77 = sphi 0, %s76
    %s91 = sphi 0, %s77
    %s95 = sphi 0, %s95
    %s97 = sphi 0, %s95
    %s98 = sphi 0, %s97
    %s112 = sphi 0, %s98
    %s116 = sphi 0, %s116
    %s118 = sphi 0, %s116
    %s119 = sphi 0, %s118
    %s133 = sphi 0, %s119
    %s137 = sphi 0, %s137
    %s139 = sphi 0, %s137
    %s140 = sphi 0, %s139
    %s154 = sphi 0, %s140
    %s158 = sphi 0, %s158
    %s160 = sphi 0, %s158
    %s161 = sphi 0, %s160
    %s175 = sphi 0, %s161
    %s179 = sphi 0, %s179
    %s181 = sphi 0, %s179
    %s182 = sphi 0, %s181
    %s196 = sphi 0, %s182
    %s202 = sphi 0, %s204
    %s205 = sphi 0, %s202
    %s206 = sphi 0, %s205
    %s222 = sphi 0, %s206
  $region4: #{tpu_custom_call.1} parent=0 // loop_header_branch
    %17 = sbr.rel (%p15) target = $region8
  $region5: #{tpu_custom_call.1} parent=0 // loop_body
    %s19 = ssub.s32 %s14, 1
    %s20 = ssub.s32 %s14, 2
    %s21 = sadd.s32 %s14, 1
    %s22 = ssub.s32 %s14, %s21
    %p23 = scmp.eq.s32.totalorder %s22, 0
    %s25 = sadd.s32 %s24, 1
    %s26 = scalar_select %p23, %s24, %s25
    %p29 = pneg %p23
    %p30 = scmp.eq.s32.totalorder %s14, 1
    %p31 = por %p29, %p30
    %p32 = scmp.ne.s32.totalorder %s24, %s27
    %p33 = scmp.eq.s32.totalorder %s14, 0
    %p34 = por %p32, %p33
    %p35 = scmp.ne.s32.totalorder %s24, %s27
    %p36 = scmp.eq.s32.totalorder %s19, 1
    %p37 = por %p35, %p36
    %p38 = scmp.ne.s32.totalorder %s27, %s28
    %p39 = scmp.eq.s32.totalorder %s19, 0
    %p40 = por %p38, %p39
    %p41 = scmp.ne.s32.totalorder %s27, %s28
    %p42 = scmp.eq.s32.totalorder %s20, 1
    %p43 = por %p41, %p42
    %p45 = scmp.ne.s32.totalorder %s28, %s44
    %p46 = scmp.eq.s32.totalorder %s20, 0
    %p47 = por %p45, %p46
    %s48 = ssub.s32 %s14, %s21
    %p49 = scmp.eq.s32.totalorder %s48, 0
    %s51 = sadd.s32 %s50, 1
    %s52 = scalar_select %p49, %s50, %s51
    %p55 = pneg %p49
    %p56 = scmp.eq.s32.totalorder %s14, 1
    %p57 = por %p55, %p56
    %p58 = scmp.ne.s32.totalorder %s50, %s53
    %p59 = scmp.eq.s32.totalorder %s14, 0
    %p60 = por %p58, %p59
    %p61 = scmp.ne.s32.totalorder %s50, %s53
    %p62 = scmp.eq.s32.totalorder %s19, 1
    %p63 = por %p61, %p62
    %p64 = scmp.ne.s32.totalorder %s53, %s54
    %p65 = scmp.eq.s32.totalorder %s19, 0
    %p66 = por %p64, %p65
    %p67 = scmp.ne.s32.totalorder %s53, %s54
    %p68 = scmp.eq.s32.totalorder %s20, 1
    %p69 = por %p67, %p68
    %p71 = scmp.ne.s32.totalorder %s54, %s70
    %p72 = scmp.eq.s32.totalorder %s20, 0
    %p73 = por %p71, %p72
    %s75 = sadd.s32 %s74, 1
    %p78 = scmp.eq.s32.totalorder %s14, 1
    %p79 = scmp.ne.s32.totalorder %s74, %s76
    %p80 = scmp.eq.s32.totalorder %s14, 0
    %p81 = por %p79, %p80
    %p82 = scmp.ne.s32.totalorder %s74, %s76
    %p83 = scmp.eq.s32.totalorder %s19, 1
    %p84 = por %p82, %p83
    %p85 = scmp.ne.s32.totalorder %s76, %s77
    %p86 = scmp.eq.s32.totalorder %s19, 0
    %p87 = por %p85, %p86
    %p88 = scmp.ne.s32.totalorder %s76, %s77
    %p89 = scmp.eq.s32.totalorder %s20, 1
    %p90 = por %p88, %p89
    %p92 = scmp.ne.s32.totalorder %s77, %s91
    %p93 = scmp.eq.s32.totalorder %s20, 0
    %p94 = por %p92, %p93
    %s96 = sadd.s32 %s95, 1
    %p99 = scmp.eq.s32.totalorder %s14, 1
    %p100 = scmp.ne.s32.totalorder %s95, %s97
    %p101 = scmp.eq.s32.totalorder %s14, 0
    %p102 = por %p100, %p101
    %p103 = scmp.ne.s32.totalorder %s95, %s97
    %p104 = scmp.eq.s32.totalorder %s19, 1
    %p105 = por %p103, %p104
    %p106 = scmp.ne.s32.totalorder %s97, %s98
    %p107 = scmp.eq.s32.totalorder %s19, 0
    %p108 = por %p106, %p107
    %p109 = scmp.ne.s32.totalorder %s97, %s98
    %p110 = scmp.eq.s32.totalorder %s20, 1
    %p111 = por %p109, %p110
    %p113 = scmp.ne.s32.totalorder %s98, %s112
    %p114 = scmp.eq.s32.totalorder %s20, 0
    %p115 = por %p113, %p114
    %s117 = sadd.s32 %s116, 1
    %p120 = scmp.eq.s32.totalorder %s14, 1
    %p121 = scmp.ne.s32.totalorder %s116, %s118
    %p122 = scmp.eq.s32.totalorder %s14, 0
    %p123 = por %p121, %p122
    %p124 = scmp.ne.s32.totalorder %s116, %s118
    %p125 = scmp.eq.s32.totalorder %s19, 1
    %p126 = por %p124, %p125
    %p127 = scmp.ne.s32.totalorder %s118, %s119
    %p128 = scmp.eq.s32.totalorder %s19, 0
    %p129 = por %p127, %p128
    %p130 = scmp.ne.s32.totalorder %s118, %s119
    %p131 = scmp.eq.s32.totalorder %s20, 1
    %p132 = por %p130, %p131
    %p134 = scmp.ne.s32.totalorder %s119, %s133
    %p135 = scmp.eq.s32.totalorder %s20, 0
    %p136 = por %p134, %p135
    %s138 = sadd.s32 %s137, 1
    %p141 = scmp.eq.s32.totalorder %s14, 1
    %p142 = scmp.ne.s32.totalorder %s137, %s139
    %p143 = scmp.eq.s32.totalorder %s14, 0
    %p144 = por %p142, %p143
    %p145 = scmp.ne.s32.totalorder %s137, %s139
    %p146 = scmp.eq.s32.totalorder %s19, 1
    %p147 = por %p145, %p146
    %p148 = scmp.ne.s32.totalorder %s139, %s140
    %p149 = scmp.eq.s32.totalorder %s19, 0
    %p150 = por %p148, %p149
    %p151 = scmp.ne.s32.totalorder %s139, %s140
    %p152 = scmp.eq.s32.totalorder %s20, 1
    %p153 = por %p151, %p152
    %p155 = scmp.ne.s32.totalorder %s140, %s154
    %p156 = scmp.eq.s32.totalorder %s20, 0
    %p157 = por %p155, %p156
    %s159 = sadd.s32 %s158, 1
    %p162 = scmp.eq.s32.totalorder %s14, 1
    %p163 = scmp.ne.s32.totalorder %s158, %s160
    %p164 = scmp.eq.s32.totalorder %s14, 0
    %p165 = por %p163, %p164
    %p166 = scmp.ne.s32.totalorder %s158, %s160
    %p167 = scmp.eq.s32.totalorder %s19, 1
    %p168 = por %p166, %p167
    %p169 = scmp.ne.s32.totalorder %s160, %s161
    %p170 = scmp.eq.s32.totalorder %s19, 0
    %p171 = por %p169, %p170
    %p172 = scmp.ne.s32.totalorder %s160, %s161
    %p173 = scmp.eq.s32.totalorder %s20, 1
    %p174 = por %p172, %p173
    %p176 = scmp.ne.s32.totalorder %s161, %s175
    %p177 = scmp.eq.s32.totalorder %s20, 0
    %p178 = por %p176, %p177
    %s180 = sadd.s32 %s179, 1
    %p183 = scmp.eq.s32.totalorder %s14, 1
    %p184 = scmp.ne.s32.totalorder %s179, %s181
    %p185 = scmp.eq.s32.totalorder %s14, 0
    %p186 = por %p184, %p185
    %p187 = scmp.ne.s32.totalorder %s179, %s181
    %p188 = scmp.eq.s32.totalorder %s19, 1
    %p189 = por %p187, %p188
    %p190 = scmp.ne.s32.totalorder %s181, %s182
    %p191 = scmp.eq.s32.totalorder %s19, 0
    %p192 = por %p190, %p191
    %p193 = scmp.ne.s32.totalorder %s181, %s182
    %p194 = scmp.eq.s32.totalorder %s20, 1
    %p195 = por %p193, %p194
    %p197 = scmp.ne.s32.totalorder %s182, %s196
    %p198 = scmp.eq.s32.totalorder %s20, 0
    %p199 = por %p197, %p198
    %s200 = ssub.s32 %s14, %s21
    %p201 = scmp.eq.s32.totalorder %s200, 0
    %s203 = sadd.s32 %s202, 1
    %s204 = scalar_select %p201, %s202, %s203
    %p207 = pneg %p201
    %p208 = scmp.eq.s32.totalorder %s14, 1
    %p209 = por %p207, %p208
    %p210 = scmp.ne.s32.totalorder %s202, %s205
    %p211 = scmp.eq.s32.totalorder %s14, 0
    %p212 = por %p210, %p211
    %p213 = scmp.ne.s32.totalorder %s202, %s205
    %p214 = scmp.eq.s32.totalorder %s19, 1
    %p215 = por %p213, %p214
    %p216 = scmp.ne.s32.totalorder %s205, %s206
    %p217 = scmp.eq.s32.totalorder %s19, 0
    %p218 = por %p216, %p217
    %p219 = scmp.ne.s32.totalorder %s205, %s206
    %p220 = scmp.eq.s32.totalorder %s20, 1
    %p221 = por %p219, %p220
    %p223 = scmp.ne.s32.totalorder %s206, %s222
    %p224 = scmp.eq.s32.totalorder %s20, 0
    %p225 = por %p223, %p224
    %p226 = scmp.le.s32.totalorder 1, %s14
    %p227 = scmp.lt.s32.totalorder %s14, 3
    %p228 = pnand %p226, %p227
    %p229 = pneg %p228
    // Predicated region
    $region9: #{tpu_custom_call.1} parent=5 // pred_check
      _
    $region10: #{tpu_custom_call.1} parent=5 // pred_check_branch
      %231 = sbr.rel (%p228) target = $region12
    $region11: #{tpu_custom_call.1} parent=5 // pred_region
      %s232 = ssub.s32 %s14, 1
      // Predicated region
      $region13: #{tpu_custom_call.1} parent=11 // pred_check
        %p233 = pneg %p87
      $region14: #{tpu_custom_call.1} parent=11 // pred_check_branch
        %235 = sbr.rel (%p233) target = $region16
      $region15: #{tpu_custom_call.1} parent=11 // pred_region
        _
      $region16: #{tpu_custom_call.1} parent=11 // pred_fallthru
        _
      // Predicated region
      $region17: #{tpu_custom_call.1} parent=11 // pred_check
        %p236 = pneg %p108
      $region18: #{tpu_custom_call.1} parent=11 // pred_check_branch
        %238 = sbr.rel (%p236) target = $region20
      $region19: #{tpu_custom_call.1} parent=11 // pred_region
        _
      $region20: #{tpu_custom_call.1} parent=11 // pred_fallthru
        _
      // Predicated region
      $region21: #{tpu_custom_call.1} parent=11 // pred_check
        %p239 = pneg %p129
      $region22: #{tpu_custom_call.1} parent=11 // pred_check_branch
        %241 = sbr.rel (%p239) target = $region24
      $region23: #{tpu_custom_call.1} parent=11 // pred_region
        _
      $region24: #{tpu_custom_call.1} parent=11 // pred_fallthru
        _
      // Predicated region
      $region25: #{tpu_custom_call.1} parent=11 // pred_check
        %p242 = pneg %p150
      $region26: #{tpu_custom_call.1} parent=11 // pred_check_branch
        %244 = sbr.rel (%p242) target = $region28
      $region27: #{tpu_custom_call.1} parent=11 // pred_region
        _
      $region28: #{tpu_custom_call.1} parent=11 // pred_fallthru
        _
      // Predicated region
      $region29: #{tpu_custom_call.1} parent=11 // pred_check
        %p245 = pneg %p171
      $region30: #{tpu_custom_call.1} parent=11 // pred_check_branch
        %247 = sbr.rel (%p245) target = $region32
      $region31: #{tpu_custom_call.1} parent=11 // pred_region
        _
      $region32: #{tpu_custom_call.1} parent=11 // pred_fallthru
        _
      // Predicated region
      $region33: #{tpu_custom_call.1} parent=11 // pred_check
        %p248 = pneg %p192
      $region34: #{tpu_custom_call.1} parent=11 // pred_check_branch
        %250 = sbr.rel (%p248) target = $region36
      $region35: #{tpu_custom_call.1} parent=11 // pred_region
        _
      $region36: #{tpu_custom_call.1} parent=11 // pred_fallthru
        _
    $region12: #{tpu_custom_call.1} parent=5 // pred_fallthru
      _
    %p251 = scmp.lt.s32.totalorder %s14, 2
    // Predicated region
    $region37: #{tpu_custom_call.1} parent=5 // pred_check
      %p252 = pneg %p251
    $region38: #{tpu_custom_call.1} parent=5 // pred_check_branch
      %254 = sbr.rel (%p252) target = $region40
    $region39: #{tpu_custom_call.1} parent=5 // pred_region
      // Predicated region
      $region41: #{tpu_custom_call.1} parent=39 // pred_check
        %p255 = pneg %p34
      $region42: #{tpu_custom_call.1} parent=39 // pred_check_branch
        %257 = sbr.rel (%p255) target = $region44
      $region43: #{tpu_custom_call.1} parent=39 // pred_region
        %p258 = scmp.lt.s32.totalorder %s14, 1
        %s259 = scalar_select %p258, %s14, 1
        %s260 = smul.addr %s259, 8
        %s261 = smul.addr %s260, 4
        %s262 = scalar_lea.vmem %s0, %s261
      $region44: #{tpu_custom_call.1} parent=39 // pred_fallthru
        _
      // Predicated region
      $region45: #{tpu_custom_call.1} parent=39 // pred_check
        %p263 = pneg %p60
      $region46: #{tpu_custom_call.1} parent=39 // pred_check_branch
        %265 = sbr.rel (%p263) target = $region48
      $region47: #{tpu_custom_call.1} parent=39 // pred_region
        %p266 = scmp.lt.s32.totalorder %s14, 1
        %s267 = scalar_select %p266, %s14, 1
        %s268 = smul.addr %s267, 32
        %s269 = smul.addr %s268, 4
        %s270 = scalar_lea.vmem %s1, %s269
      $region48: #{tpu_custom_call.1} parent=39 // pred_fallthru
        _
    $region40: #{tpu_custom_call.1} parent=5 // pred_fallthru
      _
    %p271 = scmp.le.s32.totalorder 1, %s14
    %p272 = scmp.lt.s32.totalorder %s14, 3
    %p273 = pnand %p271, %p272
    %p274 = pneg %p273
    // Predicated region
    $region49: #{tpu_custom_call.1} parent=5 // pred_check
      _
    $region50: #{tpu_custom_call.1} parent=5 // pred_check_branch
      %276 = sbr.rel (%p273) target = $region52
    $region51: #{tpu_custom_call.1} parent=5 // pred_region
      %s277 = ssub.s32 %s14, 1
      %p278 = scmp.lt.s32.totalorder %s19, 1
      %s279 = scalar_select %p278, %s19, 1
      %s280 = smul.addr %s279, 8
      %s281 = smul.addr %s280, 4
      %s282 = scalar_lea.vmem %s0, %s281
      %p283 = pneg %p40
      %p284 = pneg %p37
      %p285 = scmp.lt.s32.totalorder %s19, 1
      %s286 = scalar_select %p285, %s19, 1
      %s287 = smul.addr %s286, 32
      %s288 = smul.addr %s287, 4
      %s289 = scalar_lea.vmem %s1, %s288
      %p290 = pneg %p66
      %p291 = pneg %p63
      %p292 = pneg %p87
      %p293 = pneg %p84
      %p294 = pneg %p108
      %p295 = pneg %p105
      %p296 = pneg %p129
      %p297 = pneg %p126
      %p298 = pneg %p150
      %p299 = pneg %p147
      %p300 = pneg %p171
      %p301 = pneg %p168
      %p302 = pneg %p192
      %p303 = pneg %p189
      %p304 = pneg %p218
      %p305 = pneg %p215
      %p306 = scmp.lt.s32.totalorder %s19, 1
      %s307 = scalar_select %p306, %s19, 1
      %s308 = smul.addr %s307, 32
      %s309 = smul.addr %s308, 8
      %s310 = scalar_lea.vmem %s8, %s309
      %p311 = scmp.lt.s32.totalorder %s19, 1
      %s312 = scalar_select %p311, %s19, 1
      %s313 = smul.addr %s312, 8
      %s314 = smul.addr %s313, 4
      %s315 = scalar_lea.vmem %s0, %s314
      %p316 = scmp.lt.s32.totalorder %s19, 1
      %s317 = scalar_select %p316, %s19, 1
      %s318 = smul.addr %s317, 32
      %s319 = smul.addr %s318, 4
      %s320 = scalar_lea.vmem %s1, %s319
      %p321 = scmp.lt.s32.totalorder %s19, 1
      %s322 = scalar_select %p321, %s19, 1
      %s323 = smul.addr %s322, 32
      %s324 = smul.addr %s323, 8
      %s325 = scalar_lea.vmem %s8, %s324
      %vm327 = vcmask 60416
      %328 = vst.msk [vmem:[#allocation2] sm:$0xf] %vm327, 0
      %329 = vst.msk [vmem:[#allocation2 + $0x4] sm:$0xf] %vm327, 0
      %vm330 = vcmask 57344
      %331 = vst.msk [vmem:[#allocation2 + $0x8] sm:$0x1] %vm330, 0
      %s332 = scalar_lea.vmem [#allocation2], 204
      %333 = vst.msk [vmem:[%s332] sm:$0xf] %vm327, 0
      %334 = vst.msk [vmem:[%s332 + $0x4] sm:$0xf] %vm327, 0
      %335 = vst.msk [vmem:[%s332 + $0x8] sm:$0x1] %vm330, 0
      %vm336 = vcmask 57344
      %vm337 = vsmask.f32 256
      %vm338 = vmand %vm336, %vm337
      %v339 = vld [vmem:[#allocation2] sm:$0x1]
      %v340 = vsel %vm338, 0, %v339
      %341 = vst [vmem:[#allocation2] sm:$0x1] %v340
      %v342 = vld [vmem:[#allocation2 + $0xc] sm:$0x1]
      %v343 = vsel %vm338, 0, %v342
      %344 = vst [vmem:[#allocation2 + $0xc] sm:$0x1] %v343
      %v345 = vld [vmem:[#allocation2 + $0x18] sm:$0x1]
      %v346 = vsel %vm338, 0, %v345
      %347 = vst [vmem:[#allocation2 + $0x18] sm:$0x1] %v346
      %v348 = vld [vmem:[#allocation2 + $0x24] sm:$0x1]
      %v349 = vsel %vm338, 0, %v348
      %350 = vst [vmem:[#allocation2 + $0x24] sm:$0x1] %v349
      %v351 = vld [vmem:[#allocation2 + $0x30] sm:$0x1]
      %v352 = vsel %vm338, 0, %v351
      %353 = vst [vmem:[#allocation2 + $0x30] sm:$0x1] %v352
      %v354 = vld [vmem:[#allocation2 + $0x3c] sm:$0x1]
      %v355 = vsel %vm338, 0, %v354
      %356 = vst [vmem:[#allocation2 + $0x3c] sm:$0x1] %v355
      %v357 = vld [vmem:[#allocation2 + $0x48] sm:$0x1]
      %v358 = vsel %vm338, 0, %v357
      %359 = vst [vmem:[#allocation2 + $0x48] sm:$0x1] %v358
      %v360 = vld [vmem:[#allocation2 + $0x54] sm:$0x1]
      %v361 = vsel %vm338, 0, %v360
      %362 = vst [vmem:[#allocation2 + $0x54] sm:$0x1] %v361
      %v363 = vld [vmem:[#allocation2 + $0x60] sm:$0x1]
      %v364 = vsel %vm338, 0, %v363
      %365 = vst [vmem:[#allocation2 + $0x60] sm:$0x1] %v364
      %v366 = vld [vmem:[#allocation2 + $0x6c] sm:$0x1]
      %v367 = vsel %vm338, 0, %v366
      %368 = vst [vmem:[#allocation2 + $0x6c] sm:$0x1] %v367
      %v369 = vld [vmem:[#allocation2 + $0x78] sm:$0x1]
      %v370 = vsel %vm338, 0, %v369
      %371 = vst [vmem:[#allocation2 + $0x78] sm:$0x1] %v370
      %v372 = vld [vmem:[#allocation2 + $0x84] sm:$0x1]
      %v373 = vsel %vm338, 0, %v372
      %374 = vst [vmem:[#allocation2 + $0x84] sm:$0x1] %v373
      %v375 = vld [vmem:[#allocation2 + $0x90] sm:$0x1]
      %v376 = vsel %vm338, 0, %v375
      %377 = vst [vmem:[#allocation2 + $0x90] sm:$0x1] %v376
      %v378 = vld [vmem:[#allocation2 + $0x9c] sm:$0x1]
      %v379 = vsel %vm338, 0, %v378
      %380 = vst [vmem:[#allocation2 + $0x9c] sm:$0x1] %v379
      %v381 = vld [vmem:[#allocation2 + $0xa8] sm:$0x1]
      %v382 = vsel %vm338, 0, %v381
      %383 = vst [vmem:[#allocation2 + $0xa8] sm:$0x1] %v382
      %v384 = vld [vmem:[#allocation2 + $0xb4] sm:$0x1]
      %v385 = vsel %vm338, 0, %v384
      %386 = vst [vmem:[#allocation2 + $0xb4] sm:$0x1] %v385
      %v387 = vld [vmem:[#allocation2 + $0xc0] sm:$0x1]
      %v388 = vsel %vm338, 0, %v387
      %389 = vst [vmem:[#allocation2 + $0xc0] sm:$0x1] %v388
      %v390 = vld [vmem:[#allocation2 + $0xcc] sm:$0x1]
      %v391 = vsel %vm338, 0, %v390
      %392 = vst [vmem:[#allocation2 + $0xcc] sm:$0x1] %v391
      %vm393 = vsmask.f32 7938
      %vm394 = vmand %vm336, %vm393
      %v395 = vld [vmem:[#allocation2 + $0x8] sm:$0x1]
      %v396 = vsel %vm394, 0, %v395
      %397 = vst [vmem:[#allocation2 + $0x8] sm:$0x1] %v396
      %v398 = vld [vmem:[#allocation2 + $0x14] sm:$0x1]
      %v399 = vsel %vm394, 0, %v398
      %400 = vst [vmem:[#allocation2 + $0x14] sm:$0x1] %v399
      %v401 = vld [vmem:[#allocation2 + $0x20] sm:$0x1]
      %v402 = vsel %vm394, 0, %v401
      %403 = vst [vmem:[#allocation2 + $0x20] sm:$0x1] %v402
      %v404 = vld [vmem:[#allocation2 + $0x2c] sm:$0x1]
      %v405 = vsel %vm394, 0, %v404
      %406 = vst [vmem:[#allocation2 + $0x2c] sm:$0x1] %v405
      %v407 = vld [vmem:[#allocation2 + $0x38] sm:$0x1]
      %v408 = vsel %vm394, 0, %v407
      %409 = vst [vmem:[#allocation2 + $0x38] sm:$0x1] %v408
      %v410 = vld [vmem:[#allocation2 + $0x44] sm:$0x1]
      %v411 = vsel %vm394, 0, %v410
      %412 = vst [vmem:[#allocation2 + $0x44] sm:$0x1] %v411
      %v413 = vld [vmem:[#allocation2 + $0x50] sm:$0x1]
      %v414 = vsel %vm394, 0, %v413
      %415 = vst [vmem:[#allocation2 + $0x50] sm:$0x1] %v414
      %v416 = vld [vmem:[#allocation2 + $0x5c] sm:$0x1]
      %v417 = vsel %vm394, 0, %v416
      %418 = vst [vmem:[#allocation2 + $0x5c] sm:$0x1] %v417
      %v419 = vld [vmem:[#allocation2 + $0x68] sm:$0x1]
      %v420 = vsel %vm394, 0, %v419
      %421 = vst [vmem:[#allocation2 + $0x68] sm:$0x1] %v420
      %v422 = vld [vmem:[#allocation2 + $0x74] sm:$0x1]
      %v423 = vsel %vm394, 0, %v422
      %424 = vst [vmem:[#allocation2 + $0x74] sm:$0x1] %v423
      %v425 = vld [vmem:[#allocation2 + $0x80] sm:$0x1]
      %v426 = vsel %vm394, 0, %v425
      %427 = vst [vmem:[#allocation2 + $0x80] sm:$0x1] %v426
      %v428 = vld [vmem:[#allocation2 + $0x8c] sm:$0x1]
      %v429 = vsel %vm394, 0, %v428
      %430 = vst [vmem:[#allocation2 + $0x8c] sm:$0x1] %v429
      %v431 = vld [vmem:[#allocation2 + $0x98] sm:$0x1]
      %v432 = vsel %vm394, 0, %v431
      %433 = vst [vmem:[#allocation2 + $0x98] sm:$0x1] %v432
      %v434 = vld [vmem:[#allocation2 + $0xa4] sm:$0x1]
      %v435 = vsel %vm394, 0, %v434
      %436 = vst [vmem:[#allocation2 + $0xa4] sm:$0x1] %v435
      %v437 = vld [vmem:[#allocation2 + $0xb0] sm:$0x1]
      %v438 = vsel %vm394, 0, %v437
      %439 = vst [vmem:[#allocation2 + $0xb0] sm:$0x1] %v438
      %v440 = vld [vmem:[#allocation2 + $0xbc] sm:$0x1]
      %v441 = vsel %vm394, 0, %v440
      %442 = vst [vmem:[#allocation2 + $0xbc] sm:$0x1] %v441
      %v443 = vld [vmem:[#allocation2 + $0xc8] sm:$0x1]
      %v444 = vsel %vm394, 0, %v443
      %445 = vst [vmem:[#allocation2 + $0xc8] sm:$0x1] %v444
      %v446 = vld [vmem:[#allocation2 + $0xd4] sm:$0x1]
      %v447 = vsel %vm394, 0, %v446
      %448 = vst [vmem:[#allocation2 + $0xd4] sm:$0x1] %v447
      %449 = vst.msk [vmem:[#allocation3] sm:$0xf] %vm327, 0
      %450 = vst.msk [vmem:[#allocation3 + $0x4] sm:$0xf] %vm327, 0
      %451 = vst.msk [vmem:[#allocation3 + $0x8] sm:$0x1] %vm330, 0
      %s452 = scalar_lea.vmem [#allocation3], 204
      %453 = vst.msk [vmem:[%s452] sm:$0xf] %vm327, 0
      %454 = vst.msk [vmem:[%s452 + $0x4] sm:$0xf] %vm327, 0
      %455 = vst.msk [vmem:[%s452 + $0x8] sm:$0x1] %vm330, 0
      %v456 = vld [vmem:[#allocation3] sm:$0x1]
      %v457 = vsel %vm338, 0, %v456
      %458 = vst [vmem:[#allocation3] sm:$0x1] %v457
      %v459 = vld [vmem:[#allocation3 + $0xc] sm:$0x1]
      %v460 = vsel %vm338, 0, %v459
      %461 = vst [vmem:[#allocation3 + $0xc] sm:$0x1] %v460
      %v462 = vld [vmem:[#allocation3 + $0x18] sm:$0x1]
      %v463 = vsel %vm338, 0, %v462
      %464 = vst [vmem:[#allocation3 + $0x18] sm:$0x1] %v463
      %v465 = vld [vmem:[#allocation3 + $0x24] sm:$0x1]
      %v466 = vsel %vm338, 0, %v465
      %467 = vst [vmem:[#allocation3 + $0x24] sm:$0x1] %v466
      %v468 = vld [vmem:[#allocation3 + $0x30] sm:$0x1]
      %v469 = vsel %vm338, 0, %v468
      %470 = vst [vmem:[#allocation3 + $0x30] sm:$0x1] %v469
      %v471 = vld [vmem:[#allocation3 + $0x3c] sm:$0x1]
      %v472 = vsel %vm338, 0, %v471
      %473 = vst [vmem:[#allocation3 + $0x3c] sm:$0x1] %v472
      %v474 = vld [vmem:[#allocation3 + $0x48] sm:$0x1]
      %v475 = vsel %vm338, 0, %v474
      %476 = vst [vmem:[#allocation3 + $0x48] sm:$0x1] %v475
      %v477 = vld [vmem:[#allocation3 + $0x54] sm:$0x1]
      %v478 = vsel %vm338, 0, %v477
      %479 = vst [vmem:[#allocation3 + $0x54] sm:$0x1] %v478
      %v480 = vld [vmem:[#allocation3 + $0x60] sm:$0x1]
      %v481 = vsel %vm338, 0, %v480
      %482 = vst [vmem:[#allocation3 + $0x60] sm:$0x1] %v481
      %v483 = vld [vmem:[#allocation3 + $0x6c] sm:$0x1]
      %v484 = vsel %vm338, 0, %v483
      %485 = vst [vmem:[#allocation3 + $0x6c] sm:$0x1] %v484
      %v486 = vld [vmem:[#allocation3 + $0x78] sm:$0x1]
      %v487 = vsel %vm338, 0, %v486
      %488 = vst [vmem:[#allocation3 + $0x78] sm:$0x1] %v487
      %v489 = vld [vmem:[#allocation3 + $0x84] sm:$0x1]
      %v490 = vsel %vm338, 0, %v489
      %491 = vst [vmem:[#allocation3 + $0x84] sm:$0x1] %v490
      %v492 = vld [vmem:[#allocation3 + $0x90] sm:$0x1]
      %v493 = vsel %vm338, 0, %v492
      %494 = vst [vmem:[#allocation3 + $0x90] sm:$0x1] %v493
      %v495 = vld [vmem:[#allocation3 + $0x9c] sm:$0x1]
      %v496 = vsel %vm338, 0, %v495
      %497 = vst [vmem:[#allocation3 + $0x9c] sm:$0x1] %v496
      %v498 = vld [vmem:[#allocation3 + $0xa8] sm:$0x1]
      %v499 = vsel %vm338, 0, %v498
      %500 = vst [vmem:[#allocation3 + $0xa8] sm:$0x1] %v499
      %v501 = vld [vmem:[#allocation3 + $0xb4] sm:$0x1]
      %v502 = vsel %vm338, 0, %v501
      %503 = vst [vmem:[#allocation3 + $0xb4] sm:$0x1] %v502
      %v504 = vld [vmem:[#allocation3 + $0xc0] sm:$0x1]
      %v505 = vsel %vm338, 0, %v504
      %506 = vst [vmem:[#allocation3 + $0xc0] sm:$0x1] %v505
      %v507 = vld [vmem:[#allocation3 + $0xcc] sm:$0x1]
      %v508 = vsel %vm338, 0, %v507
      %509 = vst [vmem:[#allocation3 + $0xcc] sm:$0x1] %v508
      %v510 = vld [vmem:[#allocation3 + $0x8] sm:$0x1]
      %v511 = vsel %vm394, 0, %v510
      %512 = vst [vmem:[#allocation3 + $0x8] sm:$0x1] %v511
      %v513 = vld [vmem:[#allocation3 + $0x14] sm:$0x1]
      %v514 = vsel %vm394, 0, %v513
      %515 = vst [vmem:[#allocation3 + $0x14] sm:$0x1] %v514
      %v516 = vld [vmem:[#allocation3 + $0x20] sm:$0x1]
      %v517 = vsel %vm394, 0, %v516
      %518 = vst [vmem:[#allocation3 + $0x20] sm:$0x1] %v517
      %v519 = vld [vmem:[#allocation3 + $0x2c] sm:$0x1]
      %v520 = vsel %vm394, 0, %v519
      %521 = vst [vmem:[#allocation3 + $0x2c] sm:$0x1] %v520
      %v522 = vld [vmem:[#allocation3 + $0x38] sm:$0x1]
      %v523 = vsel %vm394, 0, %v522
      %524 = vst [vmem:[#allocation3 + $0x38] sm:$0x1] %v523
      %v525 = vld [vmem:[#allocation3 + $0x44] sm:$0x1]
      %v526 = vsel %vm394, 0, %v525
      %527 = vst [vmem:[#allocation3 + $0x44] sm:$0x1] %v526
      %v528 = vld [vmem:[#allocation3 + $0x50] sm:$0x1]
      %v529 = vsel %vm394, 0, %v528
      %530 = vst [vmem:[#allocation3 + $0x50] sm:$0x1] %v529
      %v531 = vld [vmem:[#allocation3 + $0x5c] sm:$0x1]
      %v532 = vsel %vm394, 0, %v531
      %533 = vst [vmem:[#allocation3 + $0x5c] sm:$0x1] %v532
      %v534 = vld [vmem:[#allocation3 + $0x68] sm:$0x1]
      %v535 = vsel %vm394, 0, %v534
      %536 = vst [vmem:[#allocation3 + $0x68] sm:$0x1] %v535
      %v537 = vld [vmem:[#allocation3 + $0x74] sm:$0x1]
      %v538 = vsel %vm394, 0, %v537
      %539 = vst [vmem:[#allocation3 + $0x74] sm:$0x1] %v538
      %v540 = vld [vmem:[#allocation3 + $0x80] sm:$0x1]
      %v541 = vsel %vm394, 0, %v540
      %542 = vst [vmem:[#allocation3 + $0x80] sm:$0x1] %v541
      %v543 = vld [vmem:[#allocation3 + $0x8c] sm:$0x1]
      %v544 = vsel %vm394, 0, %v543
      %545 = vst [vmem:[#allocation3 + $0x8c] sm:$0x1] %v544
      %v546 = vld [vmem:[#allocation3 + $0x98] sm:$0x1]
      %v547 = vsel %vm394, 0, %v546
      %548 = vst [vmem:[#allocation3 + $0x98] sm:$0x1] %v547
      %v549 = vld [vmem:[#allocation3 + $0xa4] sm:$0x1]
      %v550 = vsel %vm394, 0, %v549
      %551 = vst [vmem:[#allocation3 + $0xa4] sm:$0x1] %v550
      %v552 = vld [vmem:[#allocation3 + $0xb0] sm:$0x1]
      %v553 = vsel %vm394, 0, %v552
      %554 = vst [vmem:[#allocation3 + $0xb0] sm:$0x1] %v553
      %v555 = vld [vmem:[#allocation3 + $0xbc] sm:$0x1]
      %v556 = vsel %vm394, 0, %v555
      %557 = vst [vmem:[#allocation3 + $0xbc] sm:$0x1] %v556
      %v558 = vld [vmem:[#allocation3 + $0xc8] sm:$0x1]
      %v559 = vsel %vm394, 0, %v558
      %560 = vst [vmem:[#allocation3 + $0xc8] sm:$0x1] %v559
      %v561 = vld [vmem:[#allocation3 + $0xd4] sm:$0x1]
      %v562 = vsel %vm394, 0, %v561
      %563 = vst [vmem:[#allocation3 + $0xd4] sm:$0x1] %v562
      %v564 = vld [vmem:[%s320] sm:$0xf]
      %v565 = vld [vmem:[%s320 + $0x4] sm:$0xf]
      %v566 = vld [vmem:[%s320 + $0x8] sm:$0xf]
      %v567 = vld [vmem:[%s320 + $0xc] sm:$0xf]
      %v568 = vld [vmem:[%s320 + $0x10] sm:$0xf]
      %v569 = vld [vmem:[%s320 + $0x14] sm:$0xf]
      %v570 = vld [vmem:[%s320 + $0x18] sm:$0xf]
      %v571 = vld [vmem:[%s320 + $0x1c] sm:$0xf]
      %v572 = vld [vmem:[%s320 + $0x20] sm:$0xf]
      %v573 = vld [vmem:[%s320 + $0x24] sm:$0xf]
      %v574 = vld [vmem:[%s320 + $0x28] sm:$0xf]
      %v575 = vld [vmem:[%s320 + $0x2c] sm:$0xf]
      %v576 = vld [vmem:[%s320 + $0x30] sm:$0xf]
      %v577 = vld [vmem:[%s320 + $0x34] sm:$0xf]
      %v578 = vld [vmem:[%s320 + $0x38] sm:$0xf]
      %v579 = vld [vmem:[%s320 + $0x3c] sm:$0xf]
      %v580 = vld [vmem:[%s320 + $0x40] sm:$0xf]
      %v581 = vld [vmem:[%s320 + $0x44] sm:$0xf]
      %v582 = vld [vmem:[%s320 + $0x48] sm:$0xf]
      %v583 = vld [vmem:[%s320 + $0x4c] sm:$0xf]
      %v584 = vld [vmem:[%s320 + $0x50] sm:$0xf]
      %v585 = vld [vmem:[%s320 + $0x54] sm:$0xf]
      %v586 = vld [vmem:[%s320 + $0x58] sm:$0xf]
      %v587 = vld [vmem:[%s320 + $0x5c] sm:$0xf]
      %v588 = vld [vmem:[%s320 + $0x60] sm:$0xf]
      %v589 = vld [vmem:[%s320 + $0x64] sm:$0xf]
      %v590 = vld [vmem:[%s320 + $0x68] sm:$0xf]
      %v591 = vld [vmem:[%s320 + $0x6c] sm:$0xf]
      %v592 = vld [vmem:[%s320 + $0x70] sm:$0xf]
      %v593 = vld [vmem:[%s320 + $0x74] sm:$0xf]
      %v594 = vld [vmem:[%s320 + $0x78] sm:$0xf]
      %v595 = vld [vmem:[%s320 + $0x7c] sm:$0xf]
      %vm596 = vsmask.f32 4368
      %vm597 = vmor %vm337, %vm596
      %v599 = vshrl.u32 %v564, 16
      %v601 = vrot.slane %v599, 7
      %v602 = vshll.u32 %v564, 16
      %v604 = vor.u32 %v601, %v602
      %v605 = vrot.slane %v601, 4
      %v607 = vshrl.u32 %v565, 16
      %v609 = vrot.slane %v607, 7
      %v610 = vshll.u32 %v565, 16
      %v612 = vor.u32 %v609, %v610
      %v613 = vsel %vm597, %v605, %v612
      %v614 = vrot.slane %v609, 4
      %v616 = vshrl.u32 %v566, 16
      %v618 = vrot.slane %v616, 7
      %v619 = vshll.u32 %v566, 16
      %v621 = vor.u32 %v618, %v619
      %v622 = vrot.slane %v618, 4
      %v624 = vshrl.u32 %v567, 16
      %v626 = vrot.slane %v624, 7
      %v627 = vshll.u32 %v567, 16
      %v629 = vor.u32 %v626, %v627
      %v630 = vsel %vm597, %v622, %v629
      %v631 = vrot.slane %v626, 4
      %v633 = vshrl.u32 %v568, 16
      %v635 = vrot.slane %v633, 7
      %v636 = vshll.u32 %v568, 16
      %v638 = vor.u32 %v635, %v636
      %v639 = vrot.slane %v635, 4
      %v641 = vshrl.u32 %v569, 16
      %v643 = vrot.slane %v641, 7
      %v644 = vshll.u32 %v569, 16
      %v646 = vor.u32 %v643, %v644
      %v647 = vsel %vm597, %v639, %v646
      %v648 = vrot.slane %v643, 4
      %v650 = vshrl.u32 %v570, 16
      %v652 = vrot.slane %v650, 7
      %v653 = vshll.u32 %v570, 16
      %v655 = vor.u32 %v652, %v653
      %v656 = vrot.slane %v652, 4
      %v658 = vshrl.u32 %v571, 16
      %v660 = vrot.slane %v658, 7
      %v661 = vshll.u32 %v571, 16
      %v663 = vor.u32 %v660, %v661
      %v664 = vsel %vm597, %v656, %v663
      %v665 = vrot.slane %v660, 4
      %v667 = vshrl.u32 %v572, 16
      %v669 = vrot.slane %v667, 7
      %v670 = vshll.u32 %v572, 16
      %v672 = vor.u32 %v669, %v670
      %v673 = vrot.slane %v669, 4
      %v675 = vshrl.u32 %v573, 16
      %v677 = vrot.slane %v675, 7
      %v678 = vshll.u32 %v573, 16
      %v680 = vor.u32 %v677, %v678
      %v681 = vsel %vm597, %v673, %v680
      %v682 = vrot.slane %v677, 4
      %v684 = vshrl.u32 %v574, 16
      %v686 = vrot.slane %v684, 7
      %v687 = vshll.u32 %v574, 16
      %v689 = vor.u32 %v686, %v687
      %v690 = vrot.slane %v686, 4
      %v692 = vshrl.u32 %v575, 16
      %v694 = vrot.slane %v692, 7
      %v695 = vshll.u32 %v575, 16
      %v697 = vor.u32 %v694, %v695
      %v698 = vsel %vm597, %v690, %v697
      %v699 = vrot.slane %v694, 4
      %v701 = vshrl.u32 %v576, 16
      %v703 = vrot.slane %v701, 7
      %v704 = vshll.u32 %v576, 16
      %v706 = vor.u32 %v703, %v704
      %v707 = vrot.slane %v703, 4
      %v709 = vshrl.u32 %v577, 16
      %v711 = vrot.slane %v709, 7
      %v712 = vshll.u32 %v577, 16
      %v714 = vor.u32 %v711, %v712
      %v715 = vsel %vm597, %v707, %v714
      %v716 = vrot.slane %v711, 4
      %v718 = vshrl.u32 %v578, 16
      %v720 = vrot.slane %v718, 7
      %v721 = vshll.u32 %v578, 16
      %v723 = vor.u32 %v720, %v721
      %v724 = vrot.slane %v720, 4
      %v726 = vshrl.u32 %v579, 16
      %v728 = vrot.slane %v726, 7
      %v729 = vshll.u32 %v579, 16
      %v731 = vor.u32 %v728, %v729
      %v732 = vsel %vm597, %v724, %v731
      %v733 = vrot.slane %v728, 4
      %v735 = vshrl.u32 %v580, 16
      %v737 = vrot.slane %v735, 7
      %v738 = vshll.u32 %v580, 16
      %v740 = vor.u32 %v737, %v738
      %v741 = vrot.slane %v737, 4
      %v743 = vshrl.u32 %v581, 16
      %v745 = vrot.slane %v743, 7
      %v746 = vshll.u32 %v581, 16
      %v748 = vor.u32 %v745, %v746
      %v749 = vsel %vm597, %v741, %v748
      %v750 = vrot.slane %v745, 4
      %v752 = vshrl.u32 %v582, 16
      %v754 = vrot.slane %v752, 7
      %v755 = vshll.u32 %v582, 16
      %v757 = vor.u32 %v754, %v755
      %v758 = vrot.slane %v754, 4
      %v760 = vshrl.u32 %v583, 16
      %v762 = vrot.slane %v760, 7
      %v763 = vshll.u32 %v583, 16
      %v765 = vor.u32 %v762, %v763
      %v766 = vsel %vm597, %v758, %v765
      %v767 = vrot.slane %v762, 4
      %v769 = vshrl.u32 %v584, 16
      %v771 = vrot.slane %v769, 7
      %v772 = vshll.u32 %v584, 16
      %v774 = vor.u32 %v771, %v772
      %v775 = vrot.slane %v771, 4
      %v777 = vshrl.u32 %v585, 16
      %v779 = vrot.slane %v777, 7
      %v780 = vshll.u32 %v585, 16
      %v782 = vor.u32 %v779, %v780
      %v783 = vsel %vm597, %v775, %v782
      %v784 = vrot.slane %v779, 4
      %v786 = vshrl.u32 %v586, 16
      %v788 = vrot.slane %v786, 7
      %v789 = vshll.u32 %v586, 16
      %v791 = vor.u32 %v788, %v789
      %v792 = vrot.slane %v788, 4
      %v794 = vshrl.u32 %v587, 16
      %v796 = vrot.slane %v794, 7
      %v797 = vshll.u32 %v587, 16
      %v799 = vor.u32 %v796, %v797
      %v800 = vsel %vm597, %v792, %v799
      %v801 = vrot.slane %v796, 4
      %v803 = vshrl.u32 %v588, 16
      %v805 = vrot.slane %v803, 7
      %v806 = vshll.u32 %v588, 16
      %v808 = vor.u32 %v805, %v806
      %v809 = vrot.slane %v805, 4
      %v811 = vshrl.u32 %v589, 16
      %v813 = vrot.slane %v811, 7
      %v814 = vshll.u32 %v589, 16
      %v816 = vor.u32 %v813, %v814
      %v817 = vsel %vm597, %v809, %v816
      %v818 = vrot.slane %v813, 4
      %v820 = vshrl.u32 %v590, 16
      %v822 = vrot.slane %v820, 7
      %v823 = vshll.u32 %v590, 16
      %v825 = vor.u32 %v822, %v823
      %v826 = vrot.slane %v822, 4
      %v828 = vshrl.u32 %v591, 16
      %v830 = vrot.slane %v828, 7
      %v831 = vshll.u32 %v591, 16
      %v833 = vor.u32 %v830, %v831
      %v834 = vsel %vm597, %v826, %v833
      %v835 = vrot.slane %v830, 4
      %v837 = vshrl.u32 %v592, 16
      %v839 = vrot.slane %v837, 7
      %v840 = vshll.u32 %v592, 16
      %v842 = vor.u32 %v839, %v840
      %v843 = vrot.slane %v839, 4
      %v845 = vshrl.u32 %v593, 16
      %v847 = vrot.slane %v845, 7
      %v848 = vshll.u32 %v593, 16
      %v850 = vor.u32 %v847, %v848
      %v851 = vsel %vm597, %v843, %v850
      %v852 = vrot.slane %v847, 4
      %v854 = vshrl.u32 %v594, 16
      %v856 = vrot.slane %v854, 7
      %v857 = vshll.u32 %v594, 16
      %v859 = vor.u32 %v856, %v857
      %v860 = vrot.slane %v856, 4
      %v862 = vshrl.u32 %v595, 16
      %v864 = vrot.slane %v862, 7
      %v865 = vshll.u32 %v595, 16
      %v867 = vor.u32 %v864, %v865
      %v868 = vsel %vm597, %v860, %v867
      %v869 = vrot.slane %v864, 4
      %870 = vrot.lane.b32.xlu0 %v604, 4
      %v871 = vpop.permute.xlu0 %870
      %872 = vrot.lane.b32.xlu0 %v613, 4
      %v873 = vpop.permute.xlu0 %872
      %874 = vrot.lane.b32.xlu0 %v614, 4
      %v875 = vpop.permute.xlu0 %874
      %876 = vrot.lane.b32.xlu0 %v621, 4
      %v877 = vpop.permute.xlu0 %876
      %878 = vrot.lane.b32.xlu0 %v630, 4
      %v879 = vpop.permute.xlu0 %878
      %880 = vrot.lane.b32.xlu0 %v631, 4
      %v881 = vpop.permute.xlu0 %880
      %882 = vrot.lane.b32.xlu0 %v638, 4
      %v883 = vpop.permute.xlu0 %882
      %884 = vrot.lane.b32.xlu0 %v647, 4
      %v885 = vpop.permute.xlu0 %884
      %886 = vrot.lane.b32.xlu0 %v648, 4
      %v887 = vpop.permute.xlu0 %886
      %888 = vrot.lane.b32.xlu0 %v655, 4
      %v889 = vpop.permute.xlu0 %888
      %890 = vrot.lane.b32.xlu0 %v664, 4
      %v891 = vpop.permute.xlu0 %890
      %892 = vrot.lane.b32.xlu0 %v665, 4
      %v893 = vpop.permute.xlu0 %892
      %894 = vrot.lane.b32.xlu0 %v672, 4
      %v895 = vpop.permute.xlu0 %894
      %896 = vrot.lane.b32.xlu0 %v681, 4
      %v897 = vpop.permute.xlu0 %896
      %898 = vrot.lane.b32.xlu0 %v682, 4
      %v899 = vpop.permute.xlu0 %898
      %900 = vrot.lane.b32.xlu0 %v689, 4
      %v901 = vpop.permute.xlu0 %900
      %902 = vrot.lane.b32.xlu0 %v698, 4
      %v903 = vpop.permute.xlu0 %902
      %904 = vrot.lane.b32.xlu0 %v699, 4
      %v905 = vpop.permute.xlu0 %904
      %906 = vrot.lane.b32.xlu0 %v706, 4
      %v907 = vpop.permute.xlu0 %906
      %908 = vrot.lane.b32.xlu0 %v715, 4
      %v909 = vpop.permute.xlu0 %908
      %910 = vrot.lane.b32.xlu0 %v716, 4
      %v911 = vpop.permute.xlu0 %910
      %912 = vrot.lane.b32.xlu0 %v723, 4
      %v913 = vpop.permute.xlu0 %912
      %914 = vrot.lane.b32.xlu0 %v732, 4
      %v915 = vpop.permute.xlu0 %914
      %916 = vrot.lane.b32.xlu0 %v733, 4
      %v917 = vpop.permute.xlu0 %916
      %918 = vrot.lane.b32.xlu0 %v740, 4
      %v919 = vpop.permute.xlu0 %918
      %920 = vrot.lane.b32.xlu0 %v749, 4
      %v921 = vpop.permute.xlu0 %920
      %922 = vrot.lane.b32.xlu0 %v750, 4
      %v923 = vpop.permute.xlu0 %922
      %924 = vrot.lane.b32.xlu0 %v757, 4
      %v925 = vpop.permute.xlu0 %924
      %926 = vrot.lane.b32.xlu0 %v766, 4
      %v927 = vpop.permute.xlu0 %926
      %928 = vrot.lane.b32.xlu0 %v767, 4
      %v929 = vpop.permute.xlu0 %928
      %930 = vrot.lane.b32.xlu0 %v774, 4
      %v931 = vpop.permute.xlu0 %930
      %932 = vrot.lane.b32.xlu0 %v783, 4
      %v933 = vpop.permute.xlu0 %932
      %934 = vrot.lane.b32.xlu0 %v784, 4
      %v935 = vpop.permute.xlu0 %934
      %936 = vrot.lane.b32.xlu0 %v791, 4
      %v937 = vpop.permute.xlu0 %936
      %938 = vrot.lane.b32.xlu0 %v800, 4
      %v939 = vpop.permute.xlu0 %938
      %940 = vrot.lane.b32.xlu0 %v801, 4
      %v941 = vpop.permute.xlu0 %940
      %942 = vrot.lane.b32.xlu0 %v808, 4
      %v943 = vpop.permute.xlu0 %942
      %944 = vrot.lane.b32.xlu0 %v817, 4
      %v945 = vpop.permute.xlu0 %944
      %946 = vrot.lane.b32.xlu0 %v818, 4
      %v947 = vpop.permute.xlu0 %946
      %948 = vrot.lane.b32.xlu0 %v825, 4
      %v949 = vpop.permute.xlu0 %948
      %950 = vrot.lane.b32.xlu0 %v834, 4
      %v951 = vpop.permute.xlu0 %950
      %952 = vrot.lane.b32.xlu0 %v835, 4
      %v953 = vpop.permute.xlu0 %952
      %954 = vrot.lane.b32.xlu0 %v842, 4
      %v955 = vpop.permute.xlu0 %954
      %956 = vrot.lane.b32.xlu0 %v851, 4
      %v957 = vpop.permute.xlu0 %956
      %958 = vrot.lane.b32.xlu0 %v852, 4
      %v959 = vpop.permute.xlu0 %958
      %960 = vrot.lane.b32.xlu0 %v859, 4
      %v961 = vpop.permute.xlu0 %960
      %962 = vrot.lane.b32.xlu0 %v868, 4
      %v963 = vpop.permute.xlu0 %962
      %964 = vrot.lane.b32.xlu0 %v869, 4
      %v965 = vpop.permute.xlu0 %964
      %s1014 = scalar_lea.vmem [#allocation2], 12
      %vm1015 = vcmask 60448
      %vm1016 = vmand %vm1015, %vm393
      %v1017 = vld [vmem:[%s1014] sm:$0xf]
      %v1018 = vsel %vm1016, %v871, %v1017
      %1019 = vst [vmem:[%s1014] sm:$0xf] %v1018
      %vm1020 = vcmask 60448
      %1021 = vst.msk [vmem:[%s1014 + $0x4] sm:$0xf] %vm1020, %v873
      %vm1022 = vcmask 57376
      %vm1023 = vmand %vm1022, %vm337
      %v1024 = vld [vmem:[%s1014 + $0x8] sm:$0x1]
      %v1025 = vsel %vm1023, %v875, %v1024
      %1026 = vst [vmem:[%s1014 + $0x8] sm:$0x1] %v1025
      %v1027 = vld [vmem:[%s1014 + $0xc] sm:$0xf]
      %v1028 = vsel %vm1016, %v877, %v1027
      %1029 = vst [vmem:[%s1014 + $0xc] sm:$0xf] %v1028
      %1030 = vst.msk [vmem:[%s1014 + $0x10] sm:$0xf] %vm1020, %v879
      %v1031 = vld [vmem:[%s1014 + $0x14] sm:$0x1]
      %v1032 = vsel %vm1023, %v881, %v1031
      %1033 = vst [vmem:[%s1014 + $0x14] sm:$0x1] %v1032
      %v1034 = vld [vmem:[%s1014 + $0x18] sm:$0xf]
      %v1035 = vsel %vm1016, %v883, %v1034
      %1036 = vst [vmem:[%s1014 + $0x18] sm:$0xf] %v1035
      %1037 = vst.msk [vmem:[%s1014 + $0x1c] sm:$0xf] %vm1020, %v885
      %v1038 = vld [vmem:[%s1014 + $0x20] sm:$0x1]
      %v1039 = vsel %vm1023, %v887, %v1038
      %1040 = vst [vmem:[%s1014 + $0x20] sm:$0x1] %v1039
      %v1041 = vld [vmem:[%s1014 + $0x24] sm:$0xf]
      %v1042 = vsel %vm1016, %v889, %v1041
      %1043 = vst [vmem:[%s1014 + $0x24] sm:$0xf] %v1042
      %1044 = vst.msk [vmem:[%s1014 + $0x28] sm:$0xf] %vm1020, %v891
      %v1045 = vld [vmem:[%s1014 + $0x2c] sm:$0x1]
      %v1046 = vsel %vm1023, %v893, %v1045
      %1047 = vst [vmem:[%s1014 + $0x2c] sm:$0x1] %v1046
      %v1048 = vld [vmem:[%s1014 + $0x30] sm:$0xf]
      %v1049 = vsel %vm1016, %v895, %v1048
      %1050 = vst [vmem:[%s1014 + $0x30] sm:$0xf] %v1049
      %1051 = vst.msk [vmem:[%s1014 + $0x34] sm:$0xf] %vm1020, %v897
      %v1052 = vld [vmem:[%s1014 + $0x38] sm:$0x1]
      %v1053 = vsel %vm1023, %v899, %v1052
      %1054 = vst [vmem:[%s1014 + $0x38] sm:$0x1] %v1053
      %v1055 = vld [vmem:[%s1014 + $0x3c] sm:$0xf]
      %v1056 = vsel %vm1016, %v901, %v1055
      %1057 = vst [vmem:[%s1014 + $0x3c] sm:$0xf] %v1056
      %1058 = vst.msk [vmem:[%s1014 + $0x40] sm:$0xf] %vm1020, %v903
      %v1059 = vld [vmem:[%s1014 + $0x44] sm:$0x1]
      %v1060 = vsel %vm1023, %v905, %v1059
      %1061 = vst [vmem:[%s1014 + $0x44] sm:$0x1] %v1060
      %v1062 = vld [vmem:[%s1014 + $0x48] sm:$0xf]
      %v1063 = vsel %vm1016, %v907, %v1062
      %1064 = vst [vmem:[%s1014 + $0x48] sm:$0xf] %v1063
      %1065 = vst.msk [vmem:[%s1014 + $0x4c] sm:$0xf] %vm1020, %v909
      %v1066 = vld [vmem:[%s1014 + $0x50] sm:$0x1]
      %v1067 = vsel %vm1023, %v911, %v1066
      %1068 = vst [vmem:[%s1014 + $0x50] sm:$0x1] %v1067
      %v1069 = vld [vmem:[%s1014 + $0x54] sm:$0xf]
      %v1070 = vsel %vm1016, %v913, %v1069
      %1071 = vst [vmem:[%s1014 + $0x54] sm:$0xf] %v1070
      %1072 = vst.msk [vmem:[%s1014 + $0x58] sm:$0xf] %vm1020, %v915
      %v1073 = vld [vmem:[%s1014 + $0x5c] sm:$0x1]
      %v1074 = vsel %vm1023, %v917, %v1073
      %1075 = vst [vmem:[%s1014 + $0x5c] sm:$0x1] %v1074
      %v1076 = vld [vmem:[%s1014 + $0x60] sm:$0xf]
      %v1077 = vsel %vm1016, %v919, %v1076
      %1078 = vst [vmem:[%s1014 + $0x60] sm:$0xf] %v1077
      %1079 = vst.msk [vmem:[%s1014 + $0x64] sm:$0xf] %vm1020, %v921
      %v1080 = vld [vmem:[%s1014 + $0x68] sm:$0x1]
      %v1081 = vsel %vm1023, %v923, %v1080
      %1082 = vst [vmem:[%s1014 + $0x68] sm:$0x1] %v1081
      %v1083 = vld [vmem:[%s1014 + $0x6c] sm:$0xf]
      %v1084 = vsel %vm1016, %v925, %v1083
      %1085 = vst [vmem:[%s1014 + $0x6c] sm:$0xf] %v1084
      %1086 = vst.msk [vmem:[%s1014 + $0x70] sm:$0xf] %vm1020, %v927
      %v1087 = vld [vmem:[%s1014 + $0x74] sm:$0x1]
      %v1088 = vsel %vm1023, %v929, %v1087
      %1089 = vst [vmem:[%s1014 + $0x74] sm:$0x1] %v1088
      %v1090 = vld [vmem:[%s1014 + $0x78] sm:$0xf]
      %v1091 = vsel %vm1016, %v931, %v1090
      %1092 = vst [vmem:[%s1014 + $0x78] sm:$0xf] %v1091
      %1093 = vst.msk [vmem:[%s1014 + $0x7c] sm:$0xf] %vm1020, %v933
      %v1094 = vld [vmem:[%s1014 + $0x80] sm:$0x1]
      %v1095 = vsel %vm1023, %v935, %v1094
      %1096 = vst [vmem:[%s1014 + $0x80] sm:$0x1] %v1095
      %v1097 = vld [vmem:[%s1014 + $0x84] sm:$0xf]
      %v1098 = vsel %vm1016, %v937, %v1097
      %1099 = vst [vmem:[%s1014 + $0x84] sm:$0xf] %v1098
      %1100 = vst.msk [vmem:[%s1014 + $0x88] sm:$0xf] %vm1020, %v939
      %v1101 = vld [vmem:[%s1014 + $0x8c] sm:$0x1]
      %v1102 = vsel %vm1023, %v941, %v1101
      %1103 = vst [vmem:[%s1014 + $0x8c] sm:$0x1] %v1102
      %v1104 = vld [vmem:[%s1014 + $0x90] sm:$0xf]
      %v1105 = vsel %vm1016, %v943, %v1104
      %1106 = vst [vmem:[%s1014 + $0x90] sm:$0xf] %v1105
      %1107 = vst.msk [vmem:[%s1014 + $0x94] sm:$0xf] %vm1020, %v945
      %v1108 = vld [vmem:[%s1014 + $0x98] sm:$0x1]
      %v1109 = vsel %vm1023, %v947, %v1108
      %1110 = vst [vmem:[%s1014 + $0x98] sm:$0x1] %v1109
      %v1111 = vld [vmem:[%s1014 + $0x9c] sm:$0xf]
      %v1112 = vsel %vm1016, %v949, %v1111
      %1113 = vst [vmem:[%s1014 + $0x9c] sm:$0xf] %v1112
      %1114 = vst.msk [vmem:[%s1014 + $0xa0] sm:$0xf] %vm1020, %v951
      %v1115 = vld [vmem:[%s1014 + $0xa4] sm:$0x1]
      %v1116 = vsel %vm1023, %v953, %v1115
      %1117 = vst [vmem:[%s1014 + $0xa4] sm:$0x1] %v1116
      %v1118 = vld [vmem:[%s1014 + $0xa8] sm:$0xf]
      %v1119 = vsel %vm1016, %v955, %v1118
      %1120 = vst [vmem:[%s1014 + $0xa8] sm:$0xf] %v1119
      %1121 = vst.msk [vmem:[%s1014 + $0xac] sm:$0xf] %vm1020, %v957
      %v1122 = vld [vmem:[%s1014 + $0xb0] sm:$0x1]
      %v1123 = vsel %vm1023, %v959, %v1122
      %1124 = vst [vmem:[%s1014 + $0xb0] sm:$0x1] %v1123
      %v1125 = vld [vmem:[%s1014 + $0xb4] sm:$0xf]
      %v1126 = vsel %vm1016, %v961, %v1125
      %1127 = vst [vmem:[%s1014 + $0xb4] sm:$0xf] %v1126
      %1128 = vst.msk [vmem:[%s1014 + $0xb8] sm:$0xf] %vm1020, %v963
      %v1129 = vld [vmem:[%s1014 + $0xbc] sm:$0x1]
      %v1130 = vsel %vm1023, %v965, %v1129
      %1131 = vst [vmem:[%s1014 + $0xbc] sm:$0x1] %v1130
      %v1132 = vld [vmem:[%s315] sm:$0xf]
      %v1133 = vld [vmem:[%s315 + $0x4] sm:$0xf]
      %v1134 = vld [vmem:[%s315 + $0x8] sm:$0xf]
      %v1135 = vld [vmem:[%s315 + $0xc] sm:$0xf]
      %v1136 = vld [vmem:[%s315 + $0x10] sm:$0xf]
      %v1137 = vld [vmem:[%s315 + $0x14] sm:$0xf]
      %v1138 = vld [vmem:[%s315 + $0x18] sm:$0xf]
      %v1139 = vld [vmem:[%s315 + $0x1c] sm:$0xf]
      %v1140 = vld [vmem:[%s2] sm:$0xf]
      %v1141 = vld [vmem:[%s3] sm:$0x1]
      %v1143 = vlaneseq
      %v1144 = vshrl.u32 %v1143, 7
      %v1145 = vsub.s32 0, %v1144
      %v1146 = vrot.slane %v1141, %v1145
      %v1156 = vunpack.c.l.b16 %v1132
      %v1157 = vunpack.c.l.b16 %v1133
      %v1158 = vunpack.c.l.b16 %v1134
      %v1159 = vunpack.c.l.b16 %v1135
      %v1160 = vunpack.c.l.b16 %v1136
      %v1161 = vunpack.c.l.b16 %v1137
      %v1162 = vunpack.c.l.b16 %v1138
      %v1163 = vunpack.c.l.b16 %v1139
      %v1164 = vpack.c.b16 %v1157, %v1156
      %v1165 = vpack.c.b16 %v1159, %v1158
      %v1166 = vpack.c.b16 %v1161, %v1160
      %v1167 = vpack.c.b16 %v1163, %v1162
      %vm1168 = vcmask 64512
      %v1170 = vsel %vm1168, %v1164, 0
      %v1173 = vsel %vm1168, %v1165, 0
      %v1176 = vsel %vm1168, %v1166, 0
      %v1179 = vsel %vm1168, %v1167, 0
      %vm1181 = vcmask 1043456
      %v1183 = vsel %vm1181, %v1140, 0
      %1185 = vmatprep.subr.bf16.mxu0 0
      %1186 = vmatpush1.bf16.msra.mxu0 %v1183
      %1187 = vmatprep.subr.bf16.mxu0 0
      %1188 = vmatpush1.bf16.msra.mxu0 0
      %1189 = vmatprep.subr.bf16.mxu0 0
      %1190 = vmatpush1.bf16.msra.mxu0 0
      %1191 = vmatprep.subr.bf16.mxu0 0
      %1192 = vmatpush1.bf16.msra.mxu0 0
      %1193 = vmatprep.subr.bf16.mxu0 0
      %1194 = vmatpush1.bf16.msra.mxu0 0
      %1195 = vmatprep.subr.bf16.mxu0 0
      %1196 = vmatpush1.bf16.msra.mxu0 0
      %1197 = vmatprep.subr.bf16.mxu0 0
      %1198 = vmatpush1.bf16.msra.mxu0 0
      %1199 = vmatprep.subr.bf16.mxu0 0
      %1200 = vmatpush1.bf16.msra.mxu0 0
      %1201 = vmatprep.subr.bf16.mxu0 0
      %1202 = vmatpush1.bf16.msra.mxu0 0
      %1203 = vmatprep.subr.bf16.mxu0 0
      %1204 = vmatpush1.bf16.msra.mxu0 0
      %1205 = vmatprep.subr.bf16.mxu0 0
      %1206 = vmatpush1.bf16.msra.mxu0 0
      %1207 = vmatprep.subr.bf16.mxu0 0
      %1208 = vmatpush1.bf16.msra.mxu0 0
      %1209 = vmatprep.subr.bf16.mxu0 0
      %1210 = vmatpush1.bf16.msra.mxu0 0
      %1211 = vmatprep.subr.bf16.mxu0 0
      %1212 = vmatpush1.bf16.msra.mxu0 0
      %1213 = vmatprep.subr.bf16.mxu0 0
      %1214 = vmatpush1.bf16.msra.mxu0 0
      %1215 = vmatprep.subr.bf16.mxu0 0
      %1216 = vmatpush1.bf16.msra.mxu0 0
      %1217 = vmatprep.mubr.bf16.mxu0 0
      %1218 = vmatmul.mubr.bf16.gmra.mrb[0].mxu0 %v1170
      %v1219 = vpop.f32.mrb[0].mxu0
      %v1220 = vadd.f32 %v1146, %v1219
      %v1221 = vpop.f32.mrb[0].mxu0
      %v1222 = vpop.f32.mrb[0].mxu0
      %v1223 = vadd.f32 %v1146, %v1222
      %v1224 = vpop.f32.mrb[0].mxu0
      %1225 = vmatprep.mubr.bf16.mxu0 0
      %1226 = vmatmul.mubr.bf16.gmra.mrb[0].mxu0 %v1173
      %v1227 = vpop.f32.mrb[0].mxu0
      %v1228 = vadd.f32 %v1146, %v1227
      %v1229 = vpop.f32.mrb[0].mxu0
      %v1230 = vpop.f32.mrb[0].mxu0
      %v1231 = vadd.f32 %v1146, %v1230
      %v1232 = vpop.f32.mrb[0].mxu0
      %1233 = vmatprep.mubr.bf16.mxu0 0
      %1234 = vmatmul.mubr.bf16.gmra.mrb[0].mxu0 %v1176
      %v1235 = vpop.f32.mrb[0].mxu0
      %v1236 = vadd.f32 %v1146, %v1235
      %v1237 = vpop.f32.mrb[0].mxu0
      %v1238 = vpop.f32.mrb[0].mxu0
      %v1239 = vadd.f32 %v1146, %v1238
      %v1240 = vpop.f32.mrb[0].mxu0
      %1241 = vmatprep.mubr.bf16.mxu0 0
      %1242 = vmatmul.mubr.bf16.gmra.mrb[0].mxu0 %v1179
      %v1243 = vpop.f32.mrb[0].mxu0
      %v1244 = vadd.f32 %v1146, %v1243
      %v1245 = vpop.f32.mrb[0].mxu0
      %v1246 = vpop.f32.mrb[0].mxu0
      %v1247 = vadd.f32 %v1146, %v1246
      %v1248 = vpop.f32.mrb[0].mxu0
      %1249 = vdwg.mxu0
      %v1250 = vpack.c.bf16 %v1223, %v1220
      %v1251 = vpack.c.bf16 %v1231, %v1228
      %v1252 = vpack.c.bf16 %v1239, %v1236
      %v1253 = vpack.c.bf16 %v1247, %v1244
      %v1258 = vcombine.high %v1250, %v1250
      %v1260 = vunpack.c.l.s4 1966171168
      %v1261 = vunpack.c.0.s8 %v1260
      %v1262 = vlaneseq
      %v1263 = vshrl.u32 %v1262, 7
      %v1264 = vsub.s32 %v1261, %v1263
      %v1265 = vrot.slane %v1250, %v1264
      %v1267 = vunpack.c.l.s4 1966171168
      %v1268 = vunpack.c.0.s8 %v1267
      %v1269 = vlaneseq
      %v1270 = vshrl.u32 %v1269, 7
      %v1271 = vsub.s32 %v1268, %v1270
      %v1272 = vrot.slane %v1258, %v1271
      %v1273 = vcombine.high %v1265, %v1265
      %v1274 = vcombine.high %v1272, %v1272
      %v1276 = vunpack.c.l.s4 1966171168
      %v1277 = vunpack.c.0.s8 %v1276
      %v1278 = vlaneseq
      %v1279 = vshrl.u32 %v1278, 7
      %v1280 = vsub.s32 %v1277, %v1279
      %v1281 = vrot.slane %v1265, %v1280
      %v1283 = vunpack.c.l.s4 1966171168
      %v1284 = vunpack.c.0.s8 %v1283
      %v1285 = vlaneseq
      %v1286 = vshrl.u32 %v1285, 7
      %v1287 = vsub.s32 %v1284, %v1286
      %v1288 = vrot.slane %v1272, %v1287
      %v1290 = vunpack.c.l.s4 1966171168
      %v1291 = vunpack.c.0.s8 %v1290
      %v1292 = vlaneseq
      %v1293 = vshrl.u32 %v1292, 7
      %v1294 = vsub.s32 %v1291, %v1293
      %v1295 = vrot.slane %v1273, %v1294
      %v1297 = vunpack.c.l.s4 1966171168
      %v1298 = vunpack.c.0.s8 %v1297
      %v1299 = vlaneseq
      %v1300 = vshrl.u32 %v1299, 7
      %v1301 = vsub.s32 %v1298, %v1300
      %v1302 = vrot.slane %v1274, %v1301
      %v1303 = vcombine.high %v1281, %v1281
      %v1304 = vcombine.high %v1288, %v1288
      %v1305 = vcombine.high %v1295, %v1295
      %v1306 = vcombine.high %v1302, %v1302
      %v1307 = vcombine.high %v1251, %v1251
      %v1309 = vunpack.c.l.s4 1966171168
      %v1310 = vunpack.c.0.s8 %v1309
      %v1311 = vlaneseq
      %v1312 = vshrl.u32 %v1311, 7
      %v1313 = vsub.s32 %v1310, %v1312
      %v1314 = vrot.slane %v1251, %v1313
      %v1316 = vunpack.c.l.s4 1966171168
      %v1317 = vunpack.c.0.s8 %v1316
      %v1318 = vlaneseq
      %v1319 = vshrl.u32 %v1318, 7
      %v1320 = vsub.s32 %v1317, %v1319
      %v1321 = vrot.slane %v1307, %v1320
      %v1322 = vcombine.high %v1314, %v1314
      %v1323 = vcombine.high %v1321, %v1321
      %v1325 = vunpack.c.l.s4 1966171168
      %v1326 = vunpack.c.0.s8 %v1325
      %v1327 = vlaneseq
      %v1328 = vshrl.u32 %v1327, 7
      %v1329 = vsub.s32 %v1326, %v1328
      %v1330 = vrot.slane %v1314, %v1329
      %v1332 = vunpack.c.l.s4 1966171168
      %v1333 = vunpack.c.0.s8 %v1332
      %v1334 = vlaneseq
      %v1335 = vshrl.u32 %v1334, 7
      %v1336 = vsub.s32 %v1333, %v1335
      %v1337 = vrot.slane %v1321, %v1336
      %v1339 = vunpack.c.l.s4 1966171168
      %v1340 = vunpack.c.0.s8 %v1339
      %v1341 = vlaneseq
      %v1342 = vshrl.u32 %v1341, 7
      %v1343 = vsub.s32 %v1340, %v1342
      %v1344 = vrot.slane %v1322, %v1343
      %v1346 = vunpack.c.l.s4 1966171168
      %v1347 = vunpack.c.0.s8 %v1346
      %v1348 = vlaneseq
      %v1349 = vshrl.u32 %v1348, 7
      %v1350 = vsub.s32 %v1347, %v1349
      %v1351 = vrot.slane %v1323, %v1350
      %v1352 = vcombine.high %v1330, %v1330
      %v1353 = vcombine.high %v1337, %v1337
      %v1354 = vcombine.high %v1344, %v1344
      %v1355 = vcombine.high %v1351, %v1351
      %v1356 = vcombine.high %v1252, %v1252
      %v1358 = vunpack.c.l.s4 1966171168
      %v1359 = vunpack.c.0.s8 %v1358
      %v1360 = vlaneseq
      %v1361 = vshrl.u32 %v1360, 7
      %v1362 = vsub.s32 %v1359, %v1361
      %v1363 = vrot.slane %v1252, %v1362
      %v1365 = vunpack.c.l.s4 1966171168
      %v1366 = vunpack.c.0.s8 %v1365
      %v1367 = vlaneseq
      %v1368 = vshrl.u32 %v1367, 7
      %v1369 = vsub.s32 %v1366, %v1368
      %v1370 = vrot.slane %v1356, %v1369
      %v1371 = vcombine.high %v1363, %v1363
      %v1372 = vcombine.high %v1370, %v1370
      %v1374 = vunpack.c.l.s4 1966171168
      %v1375 = vunpack.c.0.s8 %v1374
      %v1376 = vlaneseq
      %v1377 = vshrl.u32 %v1376, 7
      %v1378 = vsub.s32 %v1375, %v1377
      %v1379 = vrot.slane %v1363, %v1378
      %v1381 = vunpack.c.l.s4 1966171168
      %v1382 = vunpack.c.0.s8 %v1381
      %v1383 = vlaneseq
      %v1384 = vshrl.u32 %v1383, 7
      %v1385 = vsub.s32 %v1382, %v1384
      %v1386 = vrot.slane %v1370, %v1385
      %v1388 = vunpack.c.l.s4 1966171168
      %v1389 = vunpack.c.0.s8 %v1388
      %v1390 = vlaneseq
      %v1391 = vshrl.u32 %v1390, 7
      %v1392 = vsub.s32 %v1389, %v1391
      %v1393 = vrot.slane %v1371, %v1392
      %v1395 = vunpack.c.l.s4 1966171168
      %v1396 = vunpack.c.0.s8 %v1395
      %v1397 = vlaneseq
      %v1398 = vshrl.u32 %v1397, 7
      %v1399 = vsub.s32 %v1396, %v1398
      %v1400 = vrot.slane %v1372, %v1399
      %v1401 = vcombine.high %v1379, %v1379
      %v1402 = vcombine.high %v1386, %v1386
      %v1403 = vcombine.high %v1393, %v1393
      %v1404 = vcombine.high %v1400, %v1400
      %v1405 = vcombine.high %v1253, %v1253
      %v1407 = vunpack.c.l.s4 1966171168
      %v1408 = vunpack.c.0.s8 %v1407
      %v1409 = vlaneseq
      %v1410 = vshrl.u32 %v1409, 7
      %v1411 = vsub.s32 %v1408, %v1410
      %v1412 = vrot.slane %v1253, %v1411
      %v1414 = vunpack.c.l.s4 1966171168
      %v1415 = vunpack.c.0.s8 %v1414
      %v1416 = vlaneseq
      %v1417 = vshrl.u32 %v1416, 7
      %v1418 = vsub.s32 %v1415, %v1417
      %v1419 = vrot.slane %v1405, %v1418
      %v1420 = vcombine.high %v1412, %v1412
      %v1421 = vcombine.high %v1419, %v1419
      %v1423 = vunpack.c.l.s4 1966171168
      %v1424 = vunpack.c.0.s8 %v1423
      %v1425 = vlaneseq
      %v1426 = vshrl.u32 %v1425, 7
      %v1427 = vsub.s32 %v1424, %v1426
      %v1428 = vrot.slane %v1412, %v1427
      %v1430 = vunpack.c.l.s4 1966171168
      %v1431 = vunpack.c.0.s8 %v1430
      %v1432 = vlaneseq
      %v1433 = vshrl.u32 %v1432, 7
      %v1434 = vsub.s32 %v1431, %v1433
      %v1435 = vrot.slane %v1419, %v1434
      %v1437 = vunpack.c.l.s4 1966171168
      %v1438 = vunpack.c.0.s8 %v1437
      %v1439 = vlaneseq
      %v1440 = vshrl.u32 %v1439, 7
      %v1441 = vsub.s32 %v1438, %v1440
      %v1442 = vrot.slane %v1420, %v1441
      %v1444 = vunpack.c.l.s4 1966171168
      %v1445 = vunpack.c.0.s8 %v1444
      %v1446 = vlaneseq
      %v1447 = vshrl.u32 %v1446, 7
      %v1448 = vsub.s32 %v1445, %v1447
      %v1449 = vrot.slane %v1421, %v1448
      %v1450 = vcombine.high %v1428, %v1428
      %v1451 = vcombine.high %v1435, %v1435
      %v1452 = vcombine.high %v1442, %v1442
      %v1453 = vcombine.high %v1449, %v1449
      %v1454 = vunpack.i.l.s16 %v1281
      %v1455 = vunpack.i.h.s16 %v1281
      %v1456 = vunpack.i.l.s16 %v1295
      %v1457 = vunpack.i.h.s16 %v1295
      %v1458 = vunpack.i.l.s16 %v1303
      %v1459 = vunpack.i.h.s16 %v1303
      %v1460 = vunpack.i.l.s16 %v1305
      %v1461 = vunpack.i.h.s16 %v1305
      %v1462 = vunpack.i.l.s16 %v1288
      %v1463 = vunpack.i.h.s16 %v1288
      %v1464 = vunpack.i.l.s16 %v1302
      %v1465 = vunpack.i.h.s16 %v1302
      %v1466 = vunpack.i.l.s16 %v1304
      %v1467 = vunpack.i.h.s16 %v1304
      %v1468 = vunpack.i.l.s16 %v1306
      %v1469 = vunpack.i.h.s16 %v1306
      %v1470 = vunpack.i.l.s16 %v1330
      %v1471 = vunpack.i.h.s16 %v1330
      %v1472 = vunpack.i.l.s16 %v1344
      %v1473 = vunpack.i.h.s16 %v1344
      %v1474 = vunpack.i.l.s16 %v1352
      %v1475 = vunpack.i.h.s16 %v1352
      %v1476 = vunpack.i.l.s16 %v1354
      %v1477 = vunpack.i.h.s16 %v1354
      %v1478 = vunpack.i.l.s16 %v1337
      %v1479 = vunpack.i.h.s16 %v1337
      %v1480 = vunpack.i.l.s16 %v1351
      %v1481 = vunpack.i.h.s16 %v1351
      %v1482 = vunpack.i.l.s16 %v1353
      %v1483 = vunpack.i.h.s16 %v1353
      %v1484 = vunpack.i.l.s16 %v1355
      %v1485 = vunpack.i.h.s16 %v1355
      %v1486 = vunpack.i.l.s16 %v1379
      %v1487 = vunpack.i.h.s16 %v1379
      %v1488 = vunpack.i.l.s16 %v1393
      %v1489 = vunpack.i.h.s16 %v1393
      %v1490 = vunpack.i.l.s16 %v1401
      %v1491 = vunpack.i.h.s16 %v1401
      %v1492 = vunpack.i.l.s16 %v1403
      %v1493 = vunpack.i.h.s16 %v1403
      %v1494 = vunpack.i.l.s16 %v1386
      %v1495 = vunpack.i.h.s16 %v1386
      %v1496 = vunpack.i.l.s16 %v1400
      %v1497 = vunpack.i.h.s16 %v1400
      %v1498 = vunpack.i.l.s16 %v1402
      %v1499 = vunpack.i.h.s16 %v1402
      %v1500 = vunpack.i.l.s16 %v1404
      %v1501 = vunpack.i.h.s16 %v1404
      %v1502 = vunpack.i.l.s16 %v1428
      %v1503 = vunpack.i.h.s16 %v1428
      %v1504 = vunpack.i.l.s16 %v1442
      %v1505 = vunpack.i.h.s16 %v1442
      %v1506 = vunpack.i.l.s16 %v1450
      %v1507 = vunpack.i.h.s16 %v1450
      %v1508 = vunpack.i.l.s16 %v1452
      %v1509 = vunpack.i.h.s16 %v1452
      %v1510 = vunpack.i.l.s16 %v1435
      %v1511 = vunpack.i.h.s16 %v1435
      %v1512 = vunpack.i.l.s16 %v1449
      %v1513 = vunpack.i.h.s16 %v1449
      %v1514 = vunpack.i.l.s16 %v1451
      %v1515 = vunpack.i.h.s16 %v1451
      %v1516 = vunpack.i.l.s16 %v1453
      %v1517 = vunpack.i.h.s16 %v1453
      %v1518 = vpack.i.b16 %v1454, %v1454
      %v1519 = vpack.i.b16 %v1455, %v1455
      %v1520 = vpack.i.b16 %v1456, %v1456
      %v1521 = vpack.i.b16 %v1457, %v1457
      %v1522 = vpack.i.b16 %v1458, %v1458
      %v1523 = vpack.i.b16 %v1459, %v1459
      %v1524 = vpack.i.b16 %v1460, %v1460
      %v1525 = vpack.i.b16 %v1461, %v1461
      %v1526 = vpack.i.b16 %v1462, %v1462
      %v1527 = vpack.i.b16 %v1463, %v1463
      %v1528 = vpack.i.b16 %v1464, %v1464
      %v1529 = vpack.i.b16 %v1465, %v1465
      %v1530 = vpack.i.b16 %v1466, %v1466
      %v1531 = vpack.i.b16 %v1467, %v1467
      %v1532 = vpack.i.b16 %v1468, %v1468
      %v1533 = vpack.i.b16 %v1469, %v1469
      %v1534 = vpack.i.b16 %v1470, %v1470
      %v1535 = vpack.i.b16 %v1471, %v1471
      %v1536 = vpack.i.b16 %v1472, %v1472
      %v1537 = vpack.i.b16 %v1473, %v1473
      %v1538 = vpack.i.b16 %v1474, %v1474
      %v1539 = vpack.i.b16 %v1475, %v1475
      %v1540 = vpack.i.b16 %v1476, %v1476
      %v1541 = vpack.i.b16 %v1477, %v1477
      %v1542 = vpack.i.b16 %v1478, %v1478
      %v1543 = vpack.i.b16 %v1479, %v1479
      %v1544 = vpack.i.b16 %v1480, %v1480
      %v1545 = vpack.i.b16 %v1481, %v1481
      %v1546 = vpack.i.b16 %v1482, %v1482
      %v1547 = vpack.i.b16 %v1483, %v1483
      %v1548 = vpack.i.b16 %v1484, %v1484
      %v1549 = vpack.i.b16 %v1485, %v1485
      %v1550 = vpack.i.b16 %v1486, %v1486
      %v1551 = vpack.i.b16 %v1487, %v1487
      %v1552 = vpack.i.b16 %v1488, %v1488
      %v1553 = vpack.i.b16 %v1489, %v1489
      %v1554 = vpack.i.b16 %v1490, %v1490
      %v1555 = vpack.i.b16 %v1491, %v1491
      %v1556 = vpack.i.b16 %v1492, %v1492
      %v1557 = vpack.i.b16 %v1493, %v1493
      %v1558 = vpack.i.b16 %v1494, %v1494
      %v1559 = vpack.i.b16 %v1495, %v1495
      %v1560 = vpack.i.b16 %v1496, %v1496
      %v1561 = vpack.i.b16 %v1497, %v1497
      %v1562 = vpack.i.b16 %v1498, %v1498
      %v1563 = vpack.i.b16 %v1499, %v1499
      %v1564 = vpack.i.b16 %v1500, %v1500
      %v1565 = vpack.i.b16 %v1501, %v1501
      %v1566 = vpack.i.b16 %v1502, %v1502
      %v1567 = vpack.i.b16 %v1503, %v1503
      %v1568 = vpack.i.b16 %v1504, %v1504
      %v1569 = vpack.i.b16 %v1505, %v1505
      %v1570 = vpack.i.b16 %v1506, %v1506
      %v1571 = vpack.i.b16 %v1507, %v1507
      %v1572 = vpack.i.b16 %v1508, %v1508
      %v1573 = vpack.i.b16 %v1509, %v1509
      %v1574 = vpack.i.b16 %v1510, %v1510
      %v1575 = vpack.i.b16 %v1511, %v1511
      %v1576 = vpack.i.b16 %v1512, %v1512
      %v1577 = vpack.i.b16 %v1513, %v1513
      %v1578 = vpack.i.b16 %v1514, %v1514
      %v1579 = vpack.i.b16 %v1515, %v1515
      %v1580 = vpack.i.b16 %v1516, %v1516
      %v1581 = vpack.i.b16 %v1517, %v1517
      %v1582 = vlaneseq
      %v1583 = vshrl.u32 %v1582, 7
      %v1584 = vsub.s32 0, %v1583
      %v1585 = vrot.slane %v1518, %v1584
      %v1586 = vlaneseq
      %v1587 = vshrl.u32 %v1586, 7
      %v1588 = vsub.s32 0, %v1587
      %v1589 = vrot.slane %v1519, %v1588
      %v1590 = vlaneseq
      %v1591 = vshrl.u32 %v1590, 7
      %v1592 = vsub.s32 0, %v1591
      %v1593 = vrot.slane %v1520, %v1592
      %v1594 = vlaneseq
      %v1595 = vshrl.u32 %v1594, 7
      %v1596 = vsub.s32 0, %v1595
      %v1597 = vrot.slane %v1521, %v1596
      %v1598 = vlaneseq
      %v1599 = vshrl.u32 %v1598, 7
      %v1600 = vsub.s32 0, %v1599
      %v1601 = vrot.slane %v1522, %v1600
      %v1602 = vlaneseq
      %v1603 = vshrl.u32 %v1602, 7
      %v1604 = vsub.s32 0, %v1603
      %v1605 = vrot.slane %v1523, %v1604
      %v1606 = vlaneseq
      %v1607 = vshrl.u32 %v1606, 7
      %v1608 = vsub.s32 0, %v1607
      %v1609 = vrot.slane %v1524, %v1608
      %v1610 = vlaneseq
      %v1611 = vshrl.u32 %v1610, 7
      %v1612 = vsub.s32 0, %v1611
      %v1613 = vrot.slane %v1525, %v1612
      %v1614 = vlaneseq
      %v1615 = vshrl.u32 %v1614, 7
      %v1616 = vsub.s32 0, %v1615
      %v1617 = vrot.slane %v1526, %v1616
      %v1618 = vlaneseq
      %v1619 = vshrl.u32 %v1618, 7
      %v1620 = vsub.s32 0, %v1619
      %v1621 = vrot.slane %v1527, %v1620
      %v1622 = vlaneseq
      %v1623 = vshrl.u32 %v1622, 7
      %v1624 = vsub.s32 0, %v1623
      %v1625 = vrot.slane %v1528, %v1624
      %v1626 = vlaneseq
      %v1627 = vshrl.u32 %v1626, 7
      %v1628 = vsub.s32 0, %v1627
      %v1629 = vrot.slane %v1529, %v1628
      %v1630 = vlaneseq
      %v1631 = vshrl.u32 %v1630, 7
      %v1632 = vsub.s32 0, %v1631
      %v1633 = vrot.slane %v1530, %v1632
      %v1634 = vlaneseq
      %v1635 = vshrl.u32 %v1634, 7
      %v1636 = vsub.s32 0, %v1635
      %v1637 = vrot.slane %v1531, %v1636
      %v1638 = vlaneseq
      %v1639 = vshrl.u32 %v1638, 7
      %v1640 = vsub.s32 0, %v1639
      %v1641 = vrot.slane %v1532, %v1640
      %v1642 = vlaneseq
      %v1643 = vshrl.u32 %v1642, 7
      %v1644 = vsub.s32 0, %v1643
      %v1645 = vrot.slane %v1533, %v1644
      %v1646 = vlaneseq
      %v1647 = vshrl.u32 %v1646, 7
      %v1648 = vsub.s32 0, %v1647
      %v1649 = vrot.slane %v1534, %v1648
      %v1650 = vlaneseq
      %v1651 = vshrl.u32 %v1650, 7
      %v1652 = vsub.s32 0, %v1651
      %v1653 = vrot.slane %v1535, %v1652
      %v1654 = vlaneseq
      %v1655 = vshrl.u32 %v1654, 7
      %v1656 = vsub.s32 0, %v1655
      %v1657 = vrot.slane %v1536, %v1656
      %v1658 = vlaneseq
      %v1659 = vshrl.u32 %v1658, 7
      %v1660 = vsub.s32 0, %v1659
      %v1661 = vrot.slane %v1537, %v1660
      %v1662 = vlaneseq
      %v1663 = vshrl.u32 %v1662, 7
      %v1664 = vsub.s32 0, %v1663
      %v1665 = vrot.slane %v1538, %v1664
      %v1666 = vlaneseq
      %v1667 = vshrl.u32 %v1666, 7
      %v1668 = vsub.s32 0, %v1667
      %v1669 = vrot.slane %v1539, %v1668
      %v1670 = vlaneseq
      %v1671 = vshrl.u32 %v1670, 7
      %v1672 = vsub.s32 0, %v1671
      %v1673 = vrot.slane %v1540, %v1672
      %v1674 = vlaneseq
      %v1675 = vshrl.u32 %v1674, 7
      %v1676 = vsub.s32 0, %v1675
      %v1677 = vrot.slane %v1541, %v1676
      %v1678 = vlaneseq
      %v1679 = vshrl.u32 %v1678, 7
      %v1680 = vsub.s32 0, %v1679
      %v1681 = vrot.slane %v1542, %v1680
      %v1682 = vlaneseq
      %v1683 = vshrl.u32 %v1682, 7
      %v1684 = vsub.s32 0, %v1683
      %v1685 = vrot.slane %v1543, %v1684
      %v1686 = vlaneseq
      %v1687 = vshrl.u32 %v1686, 7
      %v1688 = vsub.s32 0, %v1687
      %v1689 = vrot.slane %v1544, %v1688
      %v1690 = vlaneseq
      %v1691 = vshrl.u32 %v1690, 7
      %v1692 = vsub.s32 0, %v1691
      %v1693 = vrot.slane %v1545, %v1692
      %v1694 = vlaneseq
      %v1695 = vshrl.u32 %v1694, 7
      %v1696 = vsub.s32 0, %v1695
      %v1697 = vrot.slane %v1546, %v1696
      %v1698 = vlaneseq
      %v1699 = vshrl.u32 %v1698, 7
      %v1700 = vsub.s32 0, %v1699
      %v1701 = vrot.slane %v1547, %v1700
      %v1702 = vlaneseq
      %v1703 = vshrl.u32 %v1702, 7
      %v1704 = vsub.s32 0, %v1703
      %v1705 = vrot.slane %v1548, %v1704
      %v1706 = vlaneseq
      %v1707 = vshrl.u32 %v1706, 7
      %v1708 = vsub.s32 0, %v1707
      %v1709 = vrot.slane %v1549, %v1708
      %v1710 = vlaneseq
      %v1711 = vshrl.u32 %v1710, 7
      %v1712 = vsub.s32 0, %v1711
      %v1713 = vrot.slane %v1550, %v1712
      %v1714 = vlaneseq
      %v1715 = vshrl.u32 %v1714, 7
      %v1716 = vsub.s32 0, %v1715
      %v1717 = vrot.slane %v1551, %v1716
      %v1718 = vlaneseq
      %v1719 = vshrl.u32 %v1718, 7
      %v1720 = vsub.s32 0, %v1719
      %v1721 = vrot.slane %v1552, %v1720
      %v1722 = vlaneseq
      %v1723 = vshrl.u32 %v1722, 7
      %v1724 = vsub.s32 0, %v1723
      %v1725 = vrot.slane %v1553, %v1724
      %v1726 = vlaneseq
      %v1727 = vshrl.u32 %v1726, 7
      %v1728 = vsub.s32 0, %v1727
      %v1729 = vrot.slane %v1554, %v1728
      %v1730 = vlaneseq
      %v1731 = vshrl.u32 %v1730, 7
      %v1732 = vsub.s32 0, %v1731
      %v1733 = vrot.slane %v1555, %v1732
      %v1734 = vlaneseq
      %v1735 = vshrl.u32 %v1734, 7
      %v1736 = vsub.s32 0, %v1735
      %v1737 = vrot.slane %v1556, %v1736
      %v1738 = vlaneseq
      %v1739 = vshrl.u32 %v1738, 7
      %v1740 = vsub.s32 0, %v1739
      %v1741 = vrot.slane %v1557, %v1740
      %v1742 = vlaneseq
      %v1743 = vshrl.u32 %v1742, 7
      %v1744 = vsub.s32 0, %v1743
      %v1745 = vrot.slane %v1558, %v1744
      %v1746 = vlaneseq
      %v1747 = vshrl.u32 %v1746, 7
      %v1748 = vsub.s32 0, %v1747
      %v1749 = vrot.slane %v1559, %v1748
      %v1750 = vlaneseq
      %v1751 = vshrl.u32 %v1750, 7
      %v1752 = vsub.s32 0, %v1751
      %v1753 = vrot.slane %v1560, %v1752
      %v1754 = vlaneseq
      %v1755 = vshrl.u32 %v1754, 7
      %v1756 = vsub.s32 0, %v1755
      %v1757 = vrot.slane %v1561, %v1756
      %v1758 = vlaneseq
      %v1759 = vshrl.u32 %v1758, 7
      %v1760 = vsub.s32 0, %v1759
      %v1761 = vrot.slane %v1562, %v1760
      %v1762 = vlaneseq
      %v1763 = vshrl.u32 %v1762, 7
      %v1764 = vsub.s32 0, %v1763
      %v1765 = vrot.slane %v1563, %v1764
      %v1766 = vlaneseq
      %v1767 = vshrl.u32 %v1766, 7
      %v1768 = vsub.s32 0, %v1767
      %v1769 = vrot.slane %v1564, %v1768
      %v1770 = vlaneseq
      %v1771 = vshrl.u32 %v1770, 7
      %v1772 = vsub.s32 0, %v1771
      %v1773 = vrot.slane %v1565, %v1772
      %v1774 = vlaneseq
      %v1775 = vshrl.u32 %v1774, 7
      %v1776 = vsub.s32 0, %v1775
      %v1777 = vrot.slane %v1566, %v1776
      %v1778 = vlaneseq
      %v1779 = vshrl.u32 %v1778, 7
      %v1780 = vsub.s32 0, %v1779
      %v1781 = vrot.slane %v1567, %v1780
      %v1782 = vlaneseq
      %v1783 = vshrl.u32 %v1782, 7
      %v1784 = vsub.s32 0, %v1783
      %v1785 = vrot.slane %v1568, %v1784
      %v1786 = vlaneseq
      %v1787 = vshrl.u32 %v1786, 7
      %v1788 = vsub.s32 0, %v1787
      %v1789 = vrot.slane %v1569, %v1788
      %v1790 = vlaneseq
      %v1791 = vshrl.u32 %v1790, 7
      %v1792 = vsub.s32 0, %v1791
      %v1793 = vrot.slane %v1570, %v1792
      %v1794 = vlaneseq
      %v1795 = vshrl.u32 %v1794, 7
      %v1796 = vsub.s32 0, %v1795
      %v1797 = vrot.slane %v1571, %v1796
      %v1798 = vlaneseq
      %v1799 = vshrl.u32 %v1798, 7
      %v1800 = vsub.s32 0, %v1799
      %v1801 = vrot.slane %v1572, %v1800
      %v1802 = vlaneseq
      %v1803 = vshrl.u32 %v1802, 7
      %v1804 = vsub.s32 0, %v1803
      %v1805 = vrot.slane %v1573, %v1804
      %v1806 = vlaneseq
      %v1807 = vshrl.u32 %v1806, 7
      %v1808 = vsub.s32 0, %v1807
      %v1809 = vrot.slane %v1574, %v1808
      %v1810 = vlaneseq
      %v1811 = vshrl.u32 %v1810, 7
      %v1812 = vsub.s32 0, %v1811
      %v1813 = vrot.slane %v1575, %v1812
      %v1814 = vlaneseq
      %v1815 = vshrl.u32 %v1814, 7
      %v1816 = vsub.s32 0, %v1815
      %v1817 = vrot.slane %v1576, %v1816
      %v1818 = vlaneseq
      %v1819 = vshrl.u32 %v1818, 7
      %v1820 = vsub.s32 0, %v1819
      %v1821 = vrot.slane %v1577, %v1820
      %v1822 = vlaneseq
      %v1823 = vshrl.u32 %v1822, 7
      %v1824 = vsub.s32 0, %v1823
      %v1825 = vrot.slane %v1578, %v1824
      %v1826 = vlaneseq
      %v1827 = vshrl.u32 %v1826, 7
      %v1828 = vsub.s32 0, %v1827
      %v1829 = vrot.slane %v1579, %v1828
      %v1830 = vlaneseq
      %v1831 = vshrl.u32 %v1830, 7
      %v1832 = vsub.s32 0, %v1831
      %v1833 = vrot.slane %v1580, %v1832
      %v1834 = vlaneseq
      %v1835 = vshrl.u32 %v1834, 7
      %v1836 = vsub.s32 0, %v1835
      %v1837 = vrot.slane %v1581, %v1836
      %1902 = vrot.lane.b32.xlu0 %v1585, 124
      %v1903 = vpop.permute.xlu0 %1902
      %1904 = vrot.lane.b32.xlu0 %v1589, 124
      %v1905 = vpop.permute.xlu0 %1904
      %1906 = vrot.lane.b32.xlu0 %v1593, 124
      %v1907 = vpop.permute.xlu0 %1906
      %1908 = vrot.lane.b32.xlu0 %v1597, 124
      %v1909 = vpop.permute.xlu0 %1908
      %1910 = vrot.lane.b32.xlu0 %v1601, 124
      %v1911 = vpop.permute.xlu0 %1910
      %1912 = vrot.lane.b32.xlu0 %v1605, 124
      %v1913 = vpop.permute.xlu0 %1912
      %1914 = vrot.lane.b32.xlu0 %v1609, 124
      %v1915 = vpop.permute.xlu0 %1914
      %1916 = vrot.lane.b32.xlu0 %v1613, 124
      %v1917 = vpop.permute.xlu0 %1916
      %1918 = vrot.lane.b32.xlu0 %v1617, 124
      %v1919 = vpop.permute.xlu0 %1918
      %1920 = vrot.lane.b32.xlu0 %v1621, 124
      %v1921 = vpop.permute.xlu0 %1920
      %1922 = vrot.lane.b32.xlu0 %v1625, 124
      %v1923 = vpop.permute.xlu0 %1922
      %1924 = vrot.lane.b32.xlu0 %v1629, 124
      %v1925 = vpop.permute.xlu0 %1924
      %1926 = vrot.lane.b32.xlu0 %v1633, 124
      %v1927 = vpop.permute.xlu0 %1926
      %1928 = vrot.lane.b32.xlu0 %v1637, 124
      %v1929 = vpop.permute.xlu0 %1928
      %1930 = vrot.lane.b32.xlu0 %v1641, 124
      %v1931 = vpop.permute.xlu0 %1930
      %1932 = vrot.lane.b32.xlu0 %v1645, 124
      %v1933 = vpop.permute.xlu0 %1932
      %1934 = vrot.lane.b32.xlu0 %v1649, 124
      %v1935 = vpop.permute.xlu0 %1934
      %1936 = vrot.lane.b32.xlu0 %v1653, 124
      %v1937 = vpop.permute.xlu0 %1936
      %1938 = vrot.lane.b32.xlu0 %v1657, 124
      %v1939 = vpop.permute.xlu0 %1938
      %1940 = vrot.lane.b32.xlu0 %v1661, 124
      %v1941 = vpop.permute.xlu0 %1940
      %1942 = vrot.lane.b32.xlu0 %v1665, 124
      %v1943 = vpop.permute.xlu0 %1942
      %1944 = vrot.lane.b32.xlu0 %v1669, 124
      %v1945 = vpop.permute.xlu0 %1944
      %1946 = vrot.lane.b32.xlu0 %v1673, 124
      %v1947 = vpop.permute.xlu0 %1946
      %1948 = vrot.lane.b32.xlu0 %v1677, 124
      %v1949 = vpop.permute.xlu0 %1948
      %1950 = vrot.lane.b32.xlu0 %v1681, 124
      %v1951 = vpop.permute.xlu0 %1950
      %1952 = vrot.lane.b32.xlu0 %v1685, 124
      %v1953 = vpop.permute.xlu0 %1952
      %1954 = vrot.lane.b32.xlu0 %v1689, 124
      %v1955 = vpop.permute.xlu0 %1954
      %1956 = vrot.lane.b32.xlu0 %v1693, 124
      %v1957 = vpop.permute.xlu0 %1956
      %1958 = vrot.lane.b32.xlu0 %v1697, 124
      %v1959 = vpop.permute.xlu0 %1958
      %1960 = vrot.lane.b32.xlu0 %v1701, 124
      %v1961 = vpop.permute.xlu0 %1960
      %1962 = vrot.lane.b32.xlu0 %v1705, 124
      %v1963 = vpop.permute.xlu0 %1962
      %1964 = vrot.lane.b32.xlu0 %v1709, 124
      %v1965 = vpop.permute.xlu0 %1964
      %1966 = vrot.lane.b32.xlu0 %v1713, 124
      %v1967 = vpop.permute.xlu0 %1966
      %1968 = vrot.lane.b32.xlu0 %v1717, 124
      %v1969 = vpop.permute.xlu0 %1968
      %1970 = vrot.lane.b32.xlu0 %v1721, 124
      %v1971 = vpop.permute.xlu0 %1970
      %1972 = vrot.lane.b32.xlu0 %v1725, 124
      %v1973 = vpop.permute.xlu0 %1972
      %1974 = vrot.lane.b32.xlu0 %v1729, 124
      %v1975 = vpop.permute.xlu0 %1974
      %1976 = vrot.lane.b32.xlu0 %v1733, 124
      %v1977 = vpop.permute.xlu0 %1976
      %1978 = vrot.lane.b32.xlu0 %v1737, 124
      %v1979 = vpop.permute.xlu0 %1978
      %1980 = vrot.lane.b32.xlu0 %v1741, 124
      %v1981 = vpop.permute.xlu0 %1980
      %1982 = vrot.lane.b32.xlu0 %v1745, 124
      %v1983 = vpop.permute.xlu0 %1982
      %1984 = vrot.lane.b32.xlu0 %v1749, 124
      %v1985 = vpop.permute.xlu0 %1984
      %1986 = vrot.lane.b32.xlu0 %v1753, 124
      %v1987 = vpop.permute.xlu0 %1986
      %1988 = vrot.lane.b32.xlu0 %v1757, 124
      %v1989 = vpop.permute.xlu0 %1988
      %1990 = vrot.lane.b32.xlu0 %v1761, 124
      %v1991 = vpop.permute.xlu0 %1990
      %1992 = vrot.lane.b32.xlu0 %v1765, 124
      %v1993 = vpop.permute.xlu0 %1992
      %1994 = vrot.lane.b32.xlu0 %v1769, 124
      %v1995 = vpop.permute.xlu0 %1994
      %1996 = vrot.lane.b32.xlu0 %v1773, 124
      %v1997 = vpop.permute.xlu0 %1996
      %1998 = vrot.lane.b32.xlu0 %v1777, 124
      %v1999 = vpop.permute.xlu0 %1998
      %2000 = vrot.lane.b32.xlu0 %v1781, 124
      %v2001 = vpop.permute.xlu0 %2000
      %2002 = vrot.lane.b32.xlu0 %v1785, 124
      %v2003 = vpop.permute.xlu0 %2002
      %2004 = vrot.lane.b32.xlu0 %v1789, 124
      %v2005 = vpop.permute.xlu0 %2004
      %2006 = vrot.lane.b32.xlu0 %v1793, 124
      %v2007 = vpop.permute.xlu0 %2006
      %2008 = vrot.lane.b32.xlu0 %v1797, 124
      %v2009 = vpop.permute.xlu0 %2008
      %2010 = vrot.lane.b32.xlu0 %v1801, 124
      %v2011 = vpop.permute.xlu0 %2010
      %2012 = vrot.lane.b32.xlu0 %v1805, 124
      %v2013 = vpop.permute.xlu0 %2012
      %2014 = vrot.lane.b32.xlu0 %v1809, 124
      %v2015 = vpop.permute.xlu0 %2014
      %2016 = vrot.lane.b32.xlu0 %v1813, 124
      %v2017 = vpop.permute.xlu0 %2016
      %2018 = vrot.lane.b32.xlu0 %v1817, 124
      %v2019 = vpop.permute.xlu0 %2018
      %2020 = vrot.lane.b32.xlu0 %v1821, 124
      %v2021 = vpop.permute.xlu0 %2020
      %2022 = vrot.lane.b32.xlu0 %v1825, 124
      %v2023 = vpop.permute.xlu0 %2022
      %2024 = vrot.lane.b32.xlu0 %v1829, 124
      %v2025 = vpop.permute.xlu0 %2024
      %2026 = vrot.lane.b32.xlu0 %v1833, 124
      %v2027 = vpop.permute.xlu0 %2026
      %2028 = vrot.lane.b32.xlu0 %v1837, 124
      %v2029 = vpop.permute.xlu0 %2028
      %vm2094 = vcmask 1040384
      %vm2095 = vmand %vm2094, %vm337
      %v2096 = vsel %vm2095, %v1585, %v1903
      %v2097 = vsel %vm2095, %v1589, %v1905
      %v2098 = vsel %vm2095, %v1593, %v1907
      %v2099 = vsel %vm2095, %v1597, %v1909
      %v2100 = vsel %vm2095, %v1601, %v1911
      %v2101 = vsel %vm2095, %v1605, %v1913
      %v2102 = vsel %vm2095, %v1609, %v1915
      %v2103 = vsel %vm2095, %v1613, %v1917
      %v2104 = vsel %vm2095, %v1617, %v1919
      %v2105 = vsel %vm2095, %v1621, %v1921
      %v2106 = vsel %vm2095, %v1625, %v1923
      %v2107 = vsel %vm2095, %v1629, %v1925
      %v2108 = vsel %vm2095, %v1633, %v1927
      %v2109 = vsel %vm2095, %v1637, %v1929
      %v2110 = vsel %vm2095, %v1641, %v1931
      %v2111 = vsel %vm2095, %v1645, %v1933
      %v2112 = vsel %vm2095, %v1649, %v1935
      %v2113 = vsel %vm2095, %v1653, %v1937
      %v2114 = vsel %vm2095, %v1657, %v1939
      %v2115 = vsel %vm2095, %v1661, %v1941
      %v2116 = vsel %vm2095, %v1665, %v1943
      %v2117 = vsel %vm2095, %v1669, %v1945
      %v2118 = vsel %vm2095, %v1673, %v1947
      %v2119 = vsel %vm2095, %v1677, %v1949
      %v2120 = vsel %vm2095, %v1681, %v1951
      %v2121 = vsel %vm2095, %v1685, %v1953
      %v2122 = vsel %vm2095, %v1689, %v1955
      %v2123 = vsel %vm2095, %v1693, %v1957
      %v2124 = vsel %vm2095, %v1697, %v1959
      %v2125 = vsel %vm2095, %v1701, %v1961
      %v2126 = vsel %vm2095, %v1705, %v1963
      %v2127 = vsel %vm2095, %v1709, %v1965
      %v2128 = vsel %vm2095, %v1713, %v1967
      %v2129 = vsel %vm2095, %v1717, %v1969
      %v2130 = vsel %vm2095, %v1721, %v1971
      %v2131 = vsel %vm2095, %v1725, %v1973
      %v2132 = vsel %vm2095, %v1729, %v1975
      %v2133 = vsel %vm2095, %v1733, %v1977
      %v2134 = vsel %vm2095, %v1737, %v1979
      %v2135 = vsel %vm2095, %v1741, %v1981
      %v2136 = vsel %vm2095, %v1745, %v1983
      %v2137 = vsel %vm2095, %v1749, %v1985
      %v2138 = vsel %vm2095, %v1753, %v1987
      %v2139 = vsel %vm2095, %v1757, %v1989
      %v2140 = vsel %vm2095, %v1761, %v1991
      %v2141 = vsel %vm2095, %v1765, %v1993
      %v2142 = vsel %vm2095, %v1769, %v1995
      %v2143 = vsel %vm2095, %v1773, %v1997
      %v2144 = vsel %vm2095, %v1777, %v1999
      %v2145 = vsel %vm2095, %v1781, %v2001
      %v2146 = vsel %vm2095, %v1785, %v2003
      %v2147 = vsel %vm2095, %v1789, %v2005
      %v2148 = vsel %vm2095, %v1793, %v2007
      %v2149 = vsel %vm2095, %v1797, %v2009
      %v2150 = vsel %vm2095, %v1801, %v2011
      %v2151 = vsel %vm2095, %v1805, %v2013
      %v2152 = vsel %vm2095, %v1809, %v2015
      %v2153 = vsel %vm2095, %v1813, %v2017
      %v2154 = vsel %vm2095, %v1817, %v2019
      %v2155 = vsel %vm2095, %v1821, %v2021
      %v2156 = vsel %vm2095, %v1825, %v2023
      %v2157 = vsel %vm2095, %v1829, %v2025
      %v2158 = vsel %vm2095, %v1833, %v2027
      %v2159 = vsel %vm2095, %v1837, %v2029
      %2224 = vrot.lane.b32.xlu0 %v2096, 120
      %v2225 = vpop.permute.xlu0 %2224
      %2226 = vrot.lane.b32.xlu0 %v2097, 120
      %v2227 = vpop.permute.xlu0 %2226
      %2228 = vrot.lane.b32.xlu0 %v2098, 120
      %v2229 = vpop.permute.xlu0 %2228
      %2230 = vrot.lane.b32.xlu0 %v2099, 120
      %v2231 = vpop.permute.xlu0 %2230
      %2232 = vrot.lane.b32.xlu0 %v2100, 120
      %v2233 = vpop.permute.xlu0 %2232
      %2234 = vrot.lane.b32.xlu0 %v2101, 120
      %v2235 = vpop.permute.xlu0 %2234
      %2236 = vrot.lane.b32.xlu0 %v2102, 120
      %v2237 = vpop.permute.xlu0 %2236
      %2238 = vrot.lane.b32.xlu0 %v2103, 120
      %v2239 = vpop.permute.xlu0 %2238
      %2240 = vrot.lane.b32.xlu0 %v2104, 120
      %v2241 = vpop.permute.xlu0 %2240
      %2242 = vrot.lane.b32.xlu0 %v2105, 120
      %v2243 = vpop.permute.xlu0 %2242
      %2244 = vrot.lane.b32.xlu0 %v2106, 120
      %v2245 = vpop.permute.xlu0 %2244
      %2246 = vrot.lane.b32.xlu0 %v2107, 120
      %v2247 = vpop.permute.xlu0 %2246
      %2248 = vrot.lane.b32.xlu0 %v2108, 120
      %v2249 = vpop.permute.xlu0 %2248
      %2250 = vrot.lane.b32.xlu0 %v2109, 120
      %v2251 = vpop.permute.xlu0 %2250
      %2252 = vrot.lane.b32.xlu0 %v2110, 120
      %v2253 = vpop.permute.xlu0 %2252
      %2254 = vrot.lane.b32.xlu0 %v2111, 120
      %v2255 = vpop.permute.xlu0 %2254
      %2256 = vrot.lane.b32.xlu0 %v2112, 120
      %v2257 = vpop.permute.xlu0 %2256
      %2258 = vrot.lane.b32.xlu0 %v2113, 120
      %v2259 = vpop.permute.xlu0 %2258
      %2260 = vrot.lane.b32.xlu0 %v2114, 120
      %v2261 = vpop.permute.xlu0 %2260
      %2262 = vrot.lane.b32.xlu0 %v2115, 120
      %v2263 = vpop.permute.xlu0 %2262
      %2264 = vrot.lane.b32.xlu0 %v2116, 120
      %v2265 = vpop.permute.xlu0 %2264
      %2266 = vrot.lane.b32.xlu0 %v2117, 120
      %v2267 = vpop.permute.xlu0 %2266
      %2268 = vrot.lane.b32.xlu0 %v2118, 120
      %v2269 = vpop.permute.xlu0 %2268
      %2270 = vrot.lane.b32.xlu0 %v2119, 120
      %v2271 = vpop.permute.xlu0 %2270
      %2272 = vrot.lane.b32.xlu0 %v2120, 120
      %v2273 = vpop.permute.xlu0 %2272
      %2274 = vrot.lane.b32.xlu0 %v2121, 120
      %v2275 = vpop.permute.xlu0 %2274
      %2276 = vrot.lane.b32.xlu0 %v2122, 120
      %v2277 = vpop.permute.xlu0 %2276
      %2278 = vrot.lane.b32.xlu0 %v2123, 120
      %v2279 = vpop.permute.xlu0 %2278
      %2280 = vrot.lane.b32.xlu0 %v2124, 120
      %v2281 = vpop.permute.xlu0 %2280
      %2282 = vrot.lane.b32.xlu0 %v2125, 120
      %v2283 = vpop.permute.xlu0 %2282
      %2284 = vrot.lane.b32.xlu0 %v2126, 120
      %v2285 = vpop.permute.xlu0 %2284
      %2286 = vrot.lane.b32.xlu0 %v2127, 120
      %v2287 = vpop.permute.xlu0 %2286
      %2288 = vrot.lane.b32.xlu0 %v2128, 120
      %v2289 = vpop.permute.xlu0 %2288
      %2290 = vrot.lane.b32.xlu0 %v2129, 120
      %v2291 = vpop.permute.xlu0 %2290
      %2292 = vrot.lane.b32.xlu0 %v2130, 120
      %v2293 = vpop.permute.xlu0 %2292
      %2294 = vrot.lane.b32.xlu0 %v2131, 120
      %v2295 = vpop.permute.xlu0 %2294
      %2296 = vrot.lane.b32.xlu0 %v2132, 120
      %v2297 = vpop.permute.xlu0 %2296
      %2298 = vrot.lane.b32.xlu0 %v2133, 120
      %v2299 = vpop.permute.xlu0 %2298
      %2300 = vrot.lane.b32.xlu0 %v2134, 120
      %v2301 = vpop.permute.xlu0 %2300
      %2302 = vrot.lane.b32.xlu0 %v2135, 120
      %v2303 = vpop.permute.xlu0 %2302
      %2304 = vrot.lane.b32.xlu0 %v2136, 120
      %v2305 = vpop.permute.xlu0 %2304
      %2306 = vrot.lane.b32.xlu0 %v2137, 120
      %v2307 = vpop.permute.xlu0 %2306
      %2308 = vrot.lane.b32.xlu0 %v2138, 120
      %v2309 = vpop.permute.xlu0 %2308
      %2310 = vrot.lane.b32.xlu0 %v2139, 120
      %v2311 = vpop.permute.xlu0 %2310
      %2312 = vrot.lane.b32.xlu0 %v2140, 120
      %v2313 = vpop.permute.xlu0 %2312
      %2314 = vrot.lane.b32.xlu0 %v2141, 120
      %v2315 = vpop.permute.xlu0 %2314
      %2316 = vrot.lane.b32.xlu0 %v2142, 120
      %v2317 = vpop.permute.xlu0 %2316
      %2318 = vrot.lane.b32.xlu0 %v2143, 120
      %v2319 = vpop.permute.xlu0 %2318
      %2320 = vrot.lane.b32.xlu0 %v2144, 120
      %v2321 = vpop.permute.xlu0 %2320
      %2322 = vrot.lane.b32.xlu0 %v2145, 120
      %v2323 = vpop.permute.xlu0 %2322
      %2324 = vrot.lane.b32.xlu0 %v2146, 120
      %v2325 = vpop.permute.xlu0 %2324
      %2326 = vrot.lane.b32.xlu0 %v2147, 120
      %v2327 = vpop.permute.xlu0 %2326
      %2328 = vrot.lane.b32.xlu0 %v2148, 120
      %v2329 = vpop.permute.xlu0 %2328
      %2330 = vrot.lane.b32.xlu0 %v2149, 120
      %v2331 = vpop.permute.xlu0 %2330
      %2332 = vrot.lane.b32.xlu0 %v2150, 120
      %v2333 = vpop.permute.xlu0 %2332
      %2334 = vrot.lane.b32.xlu0 %v2151, 120
      %v2335 = vpop.permute.xlu0 %2334
      %2336 = vrot.lane.b32.xlu0 %v2152, 120
      %v2337 = vpop.permute.xlu0 %2336
      %2338 = vrot.lane.b32.xlu0 %v2153, 120
      %v2339 = vpop.permute.xlu0 %2338
      %2340 = vrot.lane.b32.xlu0 %v2154, 120
      %v2341 = vpop.permute.xlu0 %2340
      %2342 = vrot.lane.b32.xlu0 %v2155, 120
      %v2343 = vpop.permute.xlu0 %2342
      %2344 = vrot.lane.b32.xlu0 %v2156, 120
      %v2345 = vpop.permute.xlu0 %2344
      %2346 = vrot.lane.b32.xlu0 %v2157, 120
      %v2347 = vpop.permute.xlu0 %2346
      %2348 = vrot.lane.b32.xlu0 %v2158, 120
      %v2349 = vpop.permute.xlu0 %2348
      %2350 = vrot.lane.b32.xlu0 %v2159, 120
      %v2351 = vpop.permute.xlu0 %2350
      %v2352 = vcombine.low %v2096, %v2098
      %v2353 = vcombine.low %v2097, %v2099
      %v2355 = vunpack.c.l.s4 1935823168
      %v2356 = vunpack.c.0.s8 %v2355
      %v2357 = vlaneseq
      %v2358 = vshrl.u32 %v2357, 7
      %v2359 = vsub.s32 %v2356, %v2358
      %v2360 = vrot.slane %v2352, %v2359
      %v2362 = vunpack.c.l.s4 1935823168
      %v2363 = vunpack.c.0.s8 %v2362
      %v2364 = vlaneseq
      %v2365 = vshrl.u32 %v2364, 7
      %v2366 = vsub.s32 %v2363, %v2365
      %v2367 = vrot.slane %v2353, %v2366
      %v2368 = vcombine.low %v2360, %v2367
      %v2370 = vunpack.c.l.s4 1935823168
      %v2371 = vunpack.c.0.s8 %v2370
      %v2372 = vlaneseq
      %v2373 = vshrl.u32 %v2372, 7
      %v2374 = vsub.s32 %v2371, %v2373
      %v2375 = vrot.slane %v2368, %v2374
      %v2376 = vcombine.low %v2100, %v2102
      %v2377 = vcombine.low %v2101, %v2103
      %v2379 = vunpack.c.l.s4 1935823168
      %v2380 = vunpack.c.0.s8 %v2379
      %v2381 = vlaneseq
      %v2382 = vshrl.u32 %v2381, 7
      %v2383 = vsub.s32 %v2380, %v2382
      %v2384 = vrot.slane %v2376, %v2383
      %v2386 = vunpack.c.l.s4 1935823168
      %v2387 = vunpack.c.0.s8 %v2386
      %v2388 = vlaneseq
      %v2389 = vshrl.u32 %v2388, 7
      %v2390 = vsub.s32 %v2387, %v2389
      %v2391 = vrot.slane %v2377, %v2390
      %v2392 = vcombine.low %v2384, %v2391
      %v2394 = vunpack.c.l.s4 1935823168
      %v2395 = vunpack.c.0.s8 %v2394
      %v2396 = vlaneseq
      %v2397 = vshrl.u32 %v2396, 7
      %v2398 = vsub.s32 %v2395, %v2397
      %v2399 = vrot.slane %v2392, %v2398
      %v2400 = vcombine.low %v2225, %v2229
      %v2401 = vcombine.low %v2227, %v2231
      %v2403 = vunpack.c.l.s4 1935823168
      %v2404 = vunpack.c.0.s8 %v2403
      %v2405 = vlaneseq
      %v2406 = vshrl.u32 %v2405, 7
      %v2407 = vsub.s32 %v2404, %v2406
      %v2408 = vrot.slane %v2400, %v2407
      %v2410 = vunpack.c.l.s4 1935823168
      %v2411 = vunpack.c.0.s8 %v2410
      %v2412 = vlaneseq
      %v2413 = vshrl.u32 %v2412, 7
      %v2414 = vsub.s32 %v2411, %v2413
      %v2415 = vrot.slane %v2401, %v2414
      %v2416 = vcombine.low %v2408, %v2415
      %v2418 = vunpack.c.l.s4 1935823168
      %v2419 = vunpack.c.0.s8 %v2418
      %v2420 = vlaneseq
      %v2421 = vshrl.u32 %v2420, 7
      %v2422 = vsub.s32 %v2419, %v2421
      %v2423 = vrot.slane %v2416, %v2422
      %v2424 = vcombine.low %v2233, %v2237
      %v2425 = vcombine.low %v2235, %v2239
      %v2427 = vunpack.c.l.s4 1935823168
      %v2428 = vunpack.c.0.s8 %v2427
      %v2429 = vlaneseq
      %v2430 = vshrl.u32 %v2429, 7
      %v2431 = vsub.s32 %v2428, %v2430
      %v2432 = vrot.slane %v2424, %v2431
      %v2434 = vunpack.c.l.s4 1935823168
      %v2435 = vunpack.c.0.s8 %v2434
      %v2436 = vlaneseq
      %v2437 = vshrl.u32 %v2436, 7
      %v2438 = vsub.s32 %v2435, %v2437
      %v2439 = vrot.slane %v2425, %v2438
      %v2440 = vcombine.low %v2432, %v2439
      %v2442 = vunpack.c.l.s4 1935823168
      %v2443 = vunpack.c.0.s8 %v2442
      %v2444 = vlaneseq
      %v2445 = vshrl.u32 %v2444, 7
      %v2446 = vsub.s32 %v2443, %v2445
      %v2447 = vrot.slane %v2440, %v2446
      %v2448 = vcombine.low %v2104, %v2106
      %v2449 = vcombine.low %v2105, %v2107
      %v2451 = vunpack.c.l.s4 1935823168
      %v2452 = vunpack.c.0.s8 %v2451
      %v2453 = vlaneseq
      %v2454 = vshrl.u32 %v2453, 7
      %v2455 = vsub.s32 %v2452, %v2454
      %v2456 = vrot.slane %v2448, %v2455
      %v2458 = vunpack.c.l.s4 1935823168
      %v2459 = vunpack.c.0.s8 %v2458
      %v2460 = vlaneseq
      %v2461 = vshrl.u32 %v2460, 7
      %v2462 = vsub.s32 %v2459, %v2461
      %v2463 = vrot.slane %v2449, %v2462
      %v2464 = vcombine.low %v2456, %v2463
      %v2466 = vunpack.c.l.s4 1935823168
      %v2467 = vunpack.c.0.s8 %v2466
      %v2468 = vlaneseq
      %v2469 = vshrl.u32 %v2468, 7
      %v2470 = vsub.s32 %v2467, %v2469
      %v2471 = vrot.slane %v2464, %v2470
      %v2472 = vcombine.low %v2108, %v2110
      %v2473 = vcombine.low %v2109, %v2111
      %v2475 = vunpack.c.l.s4 1935823168
      %v2476 = vunpack.c.0.s8 %v2475
      %v2477 = vlaneseq
      %v2478 = vshrl.u32 %v2477, 7
      %v2479 = vsub.s32 %v2476, %v2478
      %v2480 = vrot.slane %v2472, %v2479
      %v2482 = vunpack.c.l.s4 1935823168
      %v2483 = vunpack.c.0.s8 %v2482
      %v2484 = vlaneseq
      %v2485 = vshrl.u32 %v2484, 7
      %v2486 = vsub.s32 %v2483, %v2485
      %v2487 = vrot.slane %v2473, %v2486
      %v2488 = vcombine.low %v2480, %v2487
      %v2490 = vunpack.c.l.s4 1935823168
      %v2491 = vunpack.c.0.s8 %v2490
      %v2492 = vlaneseq
      %v2493 = vshrl.u32 %v2492, 7
      %v2494 = vsub.s32 %v2491, %v2493
      %v2495 = vrot.slane %v2488, %v2494
      %v2496 = vcombine.low %v2241, %v2245
      %v2497 = vcombine.low %v2243, %v2247
      %v2499 = vunpack.c.l.s4 1935823168
      %v2500 = vunpack.c.0.s8 %v2499
      %v2501 = vlaneseq
      %v2502 = vshrl.u32 %v2501, 7
      %v2503 = vsub.s32 %v2500, %v2502
      %v2504 = vrot.slane %v2496, %v2503
      %v2506 = vunpack.c.l.s4 1935823168
      %v2507 = vunpack.c.0.s8 %v2506
      %v2508 = vlaneseq
      %v2509 = vshrl.u32 %v2508, 7
      %v2510 = vsub.s32 %v2507, %v2509
      %v2511 = vrot.slane %v2497, %v2510
      %v2512 = vcombine.low %v2504, %v2511
      %v2514 = vunpack.c.l.s4 1935823168
      %v2515 = vunpack.c.0.s8 %v2514
      %v2516 = vlaneseq
      %v2517 = vshrl.u32 %v2516, 7
      %v2518 = vsub.s32 %v2515, %v2517
      %v2519 = vrot.slane %v2512, %v2518
      %v2520 = vcombine.low %v2249, %v2253
      %v2521 = vcombine.low %v2251, %v2255
      %v2523 = vunpack.c.l.s4 1935823168
      %v2524 = vunpack.c.0.s8 %v2523
      %v2525 = vlaneseq
      %v2526 = vshrl.u32 %v2525, 7
      %v2527 = vsub.s32 %v2524, %v2526
      %v2528 = vrot.slane %v2520, %v2527
      %v2530 = vunpack.c.l.s4 1935823168
      %v2531 = vunpack.c.0.s8 %v2530
      %v2532 = vlaneseq
      %v2533 = vshrl.u32 %v2532, 7
      %v2534 = vsub.s32 %v2531, %v2533
      %v2535 = vrot.slane %v2521, %v2534
      %v2536 = vcombine.low %v2528, %v2535
      %v2538 = vunpack.c.l.s4 1935823168
      %v2539 = vunpack.c.0.s8 %v2538
      %v2540 = vlaneseq
      %v2541 = vshrl.u32 %v2540, 7
      %v2542 = vsub.s32 %v2539, %v2541
      %v2543 = vrot.slane %v2536, %v2542
      %v2544 = vcombine.low %v2112, %v2114
      %v2545 = vcombine.low %v2113, %v2115
      %v2547 = vunpack.c.l.s4 1935823168
      %v2548 = vunpack.c.0.s8 %v2547
      %v2549 = vlaneseq
      %v2550 = vshrl.u32 %v2549, 7
      %v2551 = vsub.s32 %v2548, %v2550
      %v2552 = vrot.slane %v2544, %v2551
      %v2554 = vunpack.c.l.s4 1935823168
      %v2555 = vunpack.c.0.s8 %v2554
      %v2556 = vlaneseq
      %v2557 = vshrl.u32 %v2556, 7
      %v2558 = vsub.s32 %v2555, %v2557
      %v2559 = vrot.slane %v2545, %v2558
      %v2560 = vcombine.low %v2552, %v2559
      %v2562 = vunpack.c.l.s4 1935823168
      %v2563 = vunpack.c.0.s8 %v2562
      %v2564 = vlaneseq
      %v2565 = vshrl.u32 %v2564, 7
      %v2566 = vsub.s32 %v2563, %v2565
      %v2567 = vrot.slane %v2560, %v2566
      %v2568 = vcombine.low %v2116, %v2118
      %v2569 = vcombine.low %v2117, %v2119
      %v2571 = vunpack.c.l.s4 1935823168
      %v2572 = vunpack.c.0.s8 %v2571
      %v2573 = vlaneseq
      %v2574 = vshrl.u32 %v2573, 7
      %v2575 = vsub.s32 %v2572, %v2574
      %v2576 = vrot.slane %v2568, %v2575
      %v2578 = vunpack.c.l.s4 1935823168
      %v2579 = vunpack.c.0.s8 %v2578
      %v2580 = vlaneseq
      %v2581 = vshrl.u32 %v2580, 7
      %v2582 = vsub.s32 %v2579, %v2581
      %v2583 = vrot.slane %v2569, %v2582
      %v2584 = vcombine.low %v2576, %v2583
      %v2586 = vunpack.c.l.s4 1935823168
      %v2587 = vunpack.c.0.s8 %v2586
      %v2588 = vlaneseq
      %v2589 = vshrl.u32 %v2588, 7
      %v2590 = vsub.s32 %v2587, %v2589
      %v2591 = vrot.slane %v2584, %v2590
      %v2592 = vcombine.low %v2257, %v2261
      %v2593 = vcombine.low %v2259, %v2263
      %v2595 = vunpack.c.l.s4 1935823168
      %v2596 = vunpack.c.0.s8 %v2595
      %v2597 = vlaneseq
      %v2598 = vshrl.u32 %v2597, 7
      %v2599 = vsub.s32 %v2596, %v2598
      %v2600 = vrot.slane %v2592, %v2599
      %v2602 = vunpack.c.l.s4 1935823168
      %v2603 = vunpack.c.0.s8 %v2602
      %v2604 = vlaneseq
      %v2605 = vshrl.u32 %v2604, 7
      %v2606 = vsub.s32 %v2603, %v2605
      %v2607 = vrot.slane %v2593, %v2606
      %v2608 = vcombine.low %v2600, %v2607
      %v2610 = vunpack.c.l.s4 1935823168
      %v2611 = vunpack.c.0.s8 %v2610
      %v2612 = vlaneseq
      %v2613 = vshrl.u32 %v2612, 7
      %v2614 = vsub.s32 %v2611, %v2613
      %v2615 = vrot.slane %v2608, %v2614
      %v2616 = vcombine.low %v2265, %v2269
      %v2617 = vcombine.low %v2267, %v2271
      %v2619 = vunpack.c.l.s4 1935823168
      %v2620 = vunpack.c.0.s8 %v2619
      %v2621 = vlaneseq
      %v2622 = vshrl.u32 %v2621, 7
      %v2623 = vsub.s32 %v2620, %v2622
      %v2624 = vrot.slane %v2616, %v2623
      %v2626 = vunpack.c.l.s4 1935823168
      %v2627 = vunpack.c.0.s8 %v2626
      %v2628 = vlaneseq
      %v2629 = vshrl.u32 %v2628, 7
      %v2630 = vsub.s32 %v2627, %v2629
      %v2631 = vrot.slane %v2617, %v2630
      %v2632 = vcombine.low %v2624, %v2631
      %v2634 = vunpack.c.l.s4 1935823168
      %v2635 = vunpack.c.0.s8 %v2634
      %v2636 = vlaneseq
      %v2637 = vshrl.u32 %v2636, 7
      %v2638 = vsub.s32 %v2635, %v2637
      %v2639 = vrot.slane %v2632, %v2638
      %v2640 = vcombine.low %v2120, %v2122
      %v2641 = vcombine.low %v2121, %v2123
      %v2643 = vunpack.c.l.s4 1935823168
      %v2644 = vunpack.c.0.s8 %v2643
      %v2645 = vlaneseq
      %v2646 = vshrl.u32 %v2645, 7
      %v2647 = vsub.s32 %v2644, %v2646
      %v2648 = vrot.slane %v2640, %v2647
      %v2650 = vunpack.c.l.s4 1935823168
      %v2651 = vunpack.c.0.s8 %v2650
      %v2652 = vlaneseq
      %v2653 = vshrl.u32 %v2652, 7
      %v2654 = vsub.s32 %v2651, %v2653
      %v2655 = vrot.slane %v2641, %v2654
      %v2656 = vcombine.low %v2648, %v2655
      %v2658 = vunpack.c.l.s4 1935823168
      %v2659 = vunpack.c.0.s8 %v2658
      %v2660 = vlaneseq
      %v2661 = vshrl.u32 %v2660, 7
      %v2662 = vsub.s32 %v2659, %v2661
      %v2663 = vrot.slane %v2656, %v2662
      %v2664 = vcombine.low %v2124, %v2126
      %v2665 = vcombine.low %v2125, %v2127
      %v2667 = vunpack.c.l.s4 1935823168
      %v2668 = vunpack.c.0.s8 %v2667
      %v2669 = vlaneseq
      %v2670 = vshrl.u32 %v2669, 7
      %v2671 = vsub.s32 %v2668, %v2670
      %v2672 = vrot.slane %v2664, %v2671
      %v2674 = vunpack.c.l.s4 1935823168
      %v2675 = vunpack.c.0.s8 %v2674
      %v2676 = vlaneseq
      %v2677 = vshrl.u32 %v2676, 7
      %v2678 = vsub.s32 %v2675, %v2677
      %v2679 = vrot.slane %v2665, %v2678
      %v2680 = vcombine.low %v2672, %v2679
      %v2682 = vunpack.c.l.s4 1935823168
      %v2683 = vunpack.c.0.s8 %v2682
      %v2684 = vlaneseq
      %v2685 = vshrl.u32 %v2684, 7
      %v2686 = vsub.s32 %v2683, %v2685
      %v2687 = vrot.slane %v2680, %v2686
      %v2688 = vcombine.low %v2273, %v2277
      %v2689 = vcombine.low %v2275, %v2279
      %v2691 = vunpack.c.l.s4 1935823168
      %v2692 = vunpack.c.0.s8 %v2691
      %v2693 = vlaneseq
      %v2694 = vshrl.u32 %v2693, 7
      %v2695 = vsub.s32 %v2692, %v2694
      %v2696 = vrot.slane %v2688, %v2695
      %v2698 = vunpack.c.l.s4 1935823168
      %v2699 = vunpack.c.0.s8 %v2698
      %v2700 = vlaneseq
      %v2701 = vshrl.u32 %v2700, 7
      %v2702 = vsub.s32 %v2699, %v2701
      %v2703 = vrot.slane %v2689, %v2702
      %v2704 = vcombine.low %v2696, %v2703
      %v2706 = vunpack.c.l.s4 1935823168
      %v2707 = vunpack.c.0.s8 %v2706
      %v2708 = vlaneseq
      %v2709 = vshrl.u32 %v2708, 7
      %v2710 = vsub.s32 %v2707, %v2709
      %v2711 = vrot.slane %v2704, %v2710
      %v2712 = vcombine.low %v2281, %v2285
      %v2713 = vcombine.low %v2283, %v2287
      %v2715 = vunpack.c.l.s4 1935823168
      %v2716 = vunpack.c.0.s8 %v2715
      %v2717 = vlaneseq
      %v2718 = vshrl.u32 %v2717, 7
      %v2719 = vsub.s32 %v2716, %v2718
      %v2720 = vrot.slane %v2712, %v2719
      %v2722 = vunpack.c.l.s4 1935823168
      %v2723 = vunpack.c.0.s8 %v2722
      %v2724 = vlaneseq
      %v2725 = vshrl.u32 %v2724, 7
      %v2726 = vsub.s32 %v2723, %v2725
      %v2727 = vrot.slane %v2713, %v2726
      %v2728 = vcombine.low %v2720, %v2727
      %v2730 = vunpack.c.l.s4 1935823168
      %v2731 = vunpack.c.0.s8 %v2730
      %v2732 = vlaneseq
      %v2733 = vshrl.u32 %v2732, 7
      %v2734 = vsub.s32 %v2731, %v2733
      %v2735 = vrot.slane %v2728, %v2734
      %v2736 = vcombine.low %v2128, %v2130
      %v2737 = vcombine.low %v2129, %v2131
      %v2739 = vunpack.c.l.s4 1935823168
      %v2740 = vunpack.c.0.s8 %v2739
      %v2741 = vlaneseq
      %v2742 = vshrl.u32 %v2741, 7
      %v2743 = vsub.s32 %v2740, %v2742
      %v2744 = vrot.slane %v2736, %v2743
      %v2746 = vunpack.c.l.s4 1935823168
      %v2747 = vunpack.c.0.s8 %v2746
      %v2748 = vlaneseq
      %v2749 = vshrl.u32 %v2748, 7
      %v2750 = vsub.s32 %v2747, %v2749
      %v2751 = vrot.slane %v2737, %v2750
      %v2752 = vcombine.low %v2744, %v2751
      %v2754 = vunpack.c.l.s4 1935823168
      %v2755 = vunpack.c.0.s8 %v2754
      %v2756 = vlaneseq
      %v2757 = vshrl.u32 %v2756, 7
      %v2758 = vsub.s32 %v2755, %v2757
      %v2759 = vrot.slane %v2752, %v2758
      %v2760 = vcombine.low %v2132, %v2134
      %v2761 = vcombine.low %v2133, %v2135
      %v2763 = vunpack.c.l.s4 1935823168
      %v2764 = vunpack.c.0.s8 %v2763
      %v2765 = vlaneseq
      %v2766 = vshrl.u32 %v2765, 7
      %v2767 = vsub.s32 %v2764, %v2766
      %v2768 = vrot.slane %v2760, %v2767
      %v2770 = vunpack.c.l.s4 1935823168
      %v2771 = vunpack.c.0.s8 %v2770
      %v2772 = vlaneseq
      %v2773 = vshrl.u32 %v2772, 7
      %v2774 = vsub.s32 %v2771, %v2773
      %v2775 = vrot.slane %v2761, %v2774
      %v2776 = vcombine.low %v2768, %v2775
      %v2778 = vunpack.c.l.s4 1935823168
      %v2779 = vunpack.c.0.s8 %v2778
      %v2780 = vlaneseq
      %v2781 = vshrl.u32 %v2780, 7
      %v2782 = vsub.s32 %v2779, %v2781
      %v2783 = vrot.slane %v2776, %v2782
      %v2784 = vcombine.low %v2289, %v2293
      %v2785 = vcombine.low %v2291, %v2295
      %v2787 = vunpack.c.l.s4 1935823168
      %v2788 = vunpack.c.0.s8 %v2787
      %v2789 = vlaneseq
      %v2790 = vshrl.u32 %v2789, 7
      %v2791 = vsub.s32 %v2788, %v2790
      %v2792 = vrot.slane %v2784, %v2791
      %v2794 = vunpack.c.l.s4 1935823168
      %v2795 = vunpack.c.0.s8 %v2794
      %v2796 = vlaneseq
      %v2797 = vshrl.u32 %v2796, 7
      %v2798 = vsub.s32 %v2795, %v2797
      %v2799 = vrot.slane %v2785, %v2798
      %v2800 = vcombine.low %v2792, %v2799
      %v2802 = vunpack.c.l.s4 1935823168
      %v2803 = vunpack.c.0.s8 %v2802
      %v2804 = vlaneseq
      %v2805 = vshrl.u32 %v2804, 7
      %v2806 = vsub.s32 %v2803, %v2805
      %v2807 = vrot.slane %v2800, %v2806
      %v2808 = vcombine.low %v2297, %v2301
      %v2809 = vcombine.low %v2299, %v2303
      %v2811 = vunpack.c.l.s4 1935823168
      %v2812 = vunpack.c.0.s8 %v2811
      %v2813 = vlaneseq
      %v2814 = vshrl.u32 %v2813, 7
      %v2815 = vsub.s32 %v2812, %v2814
      %v2816 = vrot.slane %v2808, %v2815
      %v2818 = vunpack.c.l.s4 1935823168
      %v2819 = vunpack.c.0.s8 %v2818
      %v2820 = vlaneseq
      %v2821 = vshrl.u32 %v2820, 7
      %v2822 = vsub.s32 %v2819, %v2821
      %v2823 = vrot.slane %v2809, %v2822
      %v2824 = vcombine.low %v2816, %v2823
      %v2826 = vunpack.c.l.s4 1935823168
      %v2827 = vunpack.c.0.s8 %v2826
      %v2828 = vlaneseq
      %v2829 = vshrl.u32 %v2828, 7
      %v2830 = vsub.s32 %v2827, %v2829
      %v2831 = vrot.slane %v2824, %v2830
      %v2832 = vcombine.low %v2136, %v2138
      %v2833 = vcombine.low %v2137, %v2139
      %v2835 = vunpack.c.l.s4 1935823168
      %v2836 = vunpack.c.0.s8 %v2835
      %v2837 = vlaneseq
      %v2838 = vshrl.u32 %v2837, 7
      %v2839 = vsub.s32 %v2836, %v2838
      %v2840 = vrot.slane %v2832, %v2839
      %v2842 = vunpack.c.l.s4 1935823168
      %v2843 = vunpack.c.0.s8 %v2842
      %v2844 = vlaneseq
      %v2845 = vshrl.u32 %v2844, 7
      %v2846 = vsub.s32 %v2843, %v2845
      %v2847 = vrot.slane %v2833, %v2846
      %v2848 = vcombine.low %v2840, %v2847
      %v2850 = vunpack.c.l.s4 1935823168
      %v2851 = vunpack.c.0.s8 %v2850
      %v2852 = vlaneseq
      %v2853 = vshrl.u32 %v2852, 7
      %v2854 = vsub.s32 %v2851, %v2853
      %v2855 = vrot.slane %v2848, %v2854
      %v2856 = vcombine.low %v2140, %v2142
      %v2857 = vcombine.low %v2141, %v2143
      %v2859 = vunpack.c.l.s4 1935823168
      %v2860 = vunpack.c.0.s8 %v2859
      %v2861 = vlaneseq
      %v2862 = vshrl.u32 %v2861, 7
      %v2863 = vsub.s32 %v2860, %v2862
      %v2864 = vrot.slane %v2856, %v2863
      %v2866 = vunpack.c.l.s4 1935823168
      %v2867 = vunpack.c.0.s8 %v2866
      %v2868 = vlaneseq
      %v2869 = vshrl.u32 %v2868, 7
      %v2870 = vsub.s32 %v2867, %v2869
      %v2871 = vrot.slane %v2857, %v2870
      %v2872 = vcombine.low %v2864, %v2871
      %v2874 = vunpack.c.l.s4 1935823168
      %v2875 = vunpack.c.0.s8 %v2874
      %v2876 = vlaneseq
      %v2877 = vshrl.u32 %v2876, 7
      %v2878 = vsub.s32 %v2875, %v2877
      %v2879 = vrot.slane %v2872, %v2878
      %v2880 = vcombine.low %v2305, %v2309
      %v2881 = vcombine.low %v2307, %v2311
      %v2883 = vunpack.c.l.s4 1935823168
      %v2884 = vunpack.c.0.s8 %v2883
      %v2885 = vlaneseq
      %v2886 = vshrl.u32 %v2885, 7
      %v2887 = vsub.s32 %v2884, %v2886
      %v2888 = vrot.slane %v2880, %v2887
      %v2890 = vunpack.c.l.s4 1935823168
      %v2891 = vunpack.c.0.s8 %v2890
      %v2892 = vlaneseq
      %v2893 = vshrl.u32 %v2892, 7
      %v2894 = vsub.s32 %v2891, %v2893
      %v2895 = vrot.slane %v2881, %v2894
      %v2896 = vcombine.low %v2888, %v2895
      %v2898 = vunpack.c.l.s4 1935823168
      %v2899 = vunpack.c.0.s8 %v2898
      %v2900 = vlaneseq
      %v2901 = vshrl.u32 %v2900, 7
      %v2902 = vsub.s32 %v2899, %v2901
      %v2903 = vrot.slane %v2896, %v2902
      %v2904 = vcombine.low %v2313, %v2317
      %v2905 = vcombine.low %v2315, %v2319
      %v2907 = vunpack.c.l.s4 1935823168
      %v2908 = vunpack.c.0.s8 %v2907
      %v2909 = vlaneseq
      %v2910 = vshrl.u32 %v2909, 7
      %v2911 = vsub.s32 %v2908, %v2910
      %v2912 = vrot.slane %v2904, %v2911
      %v2914 = vunpack.c.l.s4 1935823168
      %v2915 = vunpack.c.0.s8 %v2914
      %v2916 = vlaneseq
      %v2917 = vshrl.u32 %v2916, 7
      %v2918 = vsub.s32 %v2915, %v2917
      %v2919 = vrot.slane %v2905, %v2918
      %v2920 = vcombine.low %v2912, %v2919
      %v2922 = vunpack.c.l.s4 1935823168
      %v2923 = vunpack.c.0.s8 %v2922
      %v2924 = vlaneseq
      %v2925 = vshrl.u32 %v2924, 7
      %v2926 = vsub.s32 %v2923, %v2925
      %v2927 = vrot.slane %v2920, %v2926
      %v2928 = vcombine.low %v2144, %v2146
      %v2929 = vcombine.low %v2145, %v2147
      %v2931 = vunpack.c.l.s4 1935823168
      %v2932 = vunpack.c.0.s8 %v2931
      %v2933 = vlaneseq
      %v2934 = vshrl.u32 %v2933, 7
      %v2935 = vsub.s32 %v2932, %v2934
      %v2936 = vrot.slane %v2928, %v2935
      %v2938 = vunpack.c.l.s4 1935823168
      %v2939 = vunpack.c.0.s8 %v2938
      %v2940 = vlaneseq
      %v2941 = vshrl.u32 %v2940, 7
      %v2942 = vsub.s32 %v2939, %v2941
      %v2943 = vrot.slane %v2929, %v2942
      %v2944 = vcombine.low %v2936, %v2943
      %v2946 = vunpack.c.l.s4 1935823168
      %v2947 = vunpack.c.0.s8 %v2946
      %v2948 = vlaneseq
      %v2949 = vshrl.u32 %v2948, 7
      %v2950 = vsub.s32 %v2947, %v2949
      %v2951 = vrot.slane %v2944, %v2950
      %v2952 = vcombine.low %v2148, %v2150
      %v2953 = vcombine.low %v2149, %v2151
      %v2955 = vunpack.c.l.s4 1935823168
      %v2956 = vunpack.c.0.s8 %v2955
      %v2957 = vlaneseq
      %v2958 = vshrl.u32 %v2957, 7
      %v2959 = vsub.s32 %v2956, %v2958
      %v2960 = vrot.slane %v2952, %v2959
      %v2962 = vunpack.c.l.s4 1935823168
      %v2963 = vunpack.c.0.s8 %v2962
      %v2964 = vlaneseq
      %v2965 = vshrl.u32 %v2964, 7
      %v2966 = vsub.s32 %v2963, %v2965
      %v2967 = vrot.slane %v2953, %v2966
      %v2968 = vcombine.low %v2960, %v2967
      %v2970 = vunpack.c.l.s4 1935823168
      %v2971 = vunpack.c.0.s8 %v2970
      %v2972 = vlaneseq
      %v2973 = vshrl.u32 %v2972, 7
      %v2974 = vsub.s32 %v2971, %v2973
      %v2975 = vrot.slane %v2968, %v2974
      %v2976 = vcombine.low %v2321, %v2325
      %v2977 = vcombine.low %v2323, %v2327
      %v2979 = vunpack.c.l.s4 1935823168
      %v2980 = vunpack.c.0.s8 %v2979
      %v2981 = vlaneseq
      %v2982 = vshrl.u32 %v2981, 7
      %v2983 = vsub.s32 %v2980, %v2982
      %v2984 = vrot.slane %v2976, %v2983
      %v2986 = vunpack.c.l.s4 1935823168
      %v2987 = vunpack.c.0.s8 %v2986
      %v2988 = vlaneseq
      %v2989 = vshrl.u32 %v2988, 7
      %v2990 = vsub.s32 %v2987, %v2989
      %v2991 = vrot.slane %v2977, %v2990
      %v2992 = vcombine.low %v2984, %v2991
      %v2994 = vunpack.c.l.s4 1935823168
      %v2995 = vunpack.c.0.s8 %v2994
      %v2996 = vlaneseq
      %v2997 = vshrl.u32 %v2996, 7
      %v2998 = vsub.s32 %v2995, %v2997
      %v2999 = vrot.slane %v2992, %v2998
      %v3000 = vcombine.low %v2329, %v2333
      %v3001 = vcombine.low %v2331, %v2335
      %v3003 = vunpack.c.l.s4 1935823168
      %v3004 = vunpack.c.0.s8 %v3003
      %v3005 = vlaneseq
      %v3006 = vshrl.u32 %v3005, 7
      %v3007 = vsub.s32 %v3004, %v3006
      %v3008 = vrot.slane %v3000, %v3007
      %v3010 = vunpack.c.l.s4 1935823168
      %v3011 = vunpack.c.0.s8 %v3010
      %v3012 = vlaneseq
      %v3013 = vshrl.u32 %v3012, 7
      %v3014 = vsub.s32 %v3011, %v3013
      %v3015 = vrot.slane %v3001, %v3014
      %v3016 = vcombine.low %v3008, %v3015
      %v3018 = vunpack.c.l.s4 1935823168
      %v3019 = vunpack.c.0.s8 %v3018
      %v3020 = vlaneseq
      %v3021 = vshrl.u32 %v3020, 7
      %v3022 = vsub.s32 %v3019, %v3021
      %v3023 = vrot.slane %v3016, %v3022
      %v3024 = vcombine.low %v2152, %v2154
      %v3025 = vcombine.low %v2153, %v2155
      %v3027 = vunpack.c.l.s4 1935823168
      %v3028 = vunpack.c.0.s8 %v3027
      %v3029 = vlaneseq
      %v3030 = vshrl.u32 %v3029, 7
      %v3031 = vsub.s32 %v3028, %v3030
      %v3032 = vrot.slane %v3024, %v3031
      %v3034 = vunpack.c.l.s4 1935823168
      %v3035 = vunpack.c.0.s8 %v3034
      %v3036 = vlaneseq
      %v3037 = vshrl.u32 %v3036, 7
      %v3038 = vsub.s32 %v3035, %v3037
      %v3039 = vrot.slane %v3025, %v3038
      %v3040 = vcombine.low %v3032, %v3039
      %v3042 = vunpack.c.l.s4 1935823168
      %v3043 = vunpack.c.0.s8 %v3042
      %v3044 = vlaneseq
      %v3045 = vshrl.u32 %v3044, 7
      %v3046 = vsub.s32 %v3043, %v3045
      %v3047 = vrot.slane %v3040, %v3046
      %v3048 = vcombine.low %v2156, %v2158
      %v3049 = vcombine.low %v2157, %v2159
      %v3051 = vunpack.c.l.s4 1935823168
      %v3052 = vunpack.c.0.s8 %v3051
      %v3053 = vlaneseq
      %v3054 = vshrl.u32 %v3053, 7
      %v3055 = vsub.s32 %v3052, %v3054
      %v3056 = vrot.slane %v3048, %v3055
      %v3058 = vunpack.c.l.s4 1935823168
      %v3059 = vunpack.c.0.s8 %v3058
      %v3060 = vlaneseq
      %v3061 = vshrl.u32 %v3060, 7
      %v3062 = vsub.s32 %v3059, %v3061
      %v3063 = vrot.slane %v3049, %v3062
      %v3064 = vcombine.low %v3056, %v3063
      %v3066 = vunpack.c.l.s4 1935823168
      %v3067 = vunpack.c.0.s8 %v3066
      %v3068 = vlaneseq
      %v3069 = vshrl.u32 %v3068, 7
      %v3070 = vsub.s32 %v3067, %v3069
      %v3071 = vrot.slane %v3064, %v3070
      %v3072 = vcombine.low %v2337, %v2341
      %v3073 = vcombine.low %v2339, %v2343
      %v3075 = vunpack.c.l.s4 1935823168
      %v3076 = vunpack.c.0.s8 %v3075
      %v3077 = vlaneseq
      %v3078 = vshrl.u32 %v3077, 7
      %v3079 = vsub.s32 %v3076, %v3078
      %v3080 = vrot.slane %v3072, %v3079
      %v3082 = vunpack.c.l.s4 1935823168
      %v3083 = vunpack.c.0.s8 %v3082
      %v3084 = vlaneseq
      %v3085 = vshrl.u32 %v3084, 7
      %v3086 = vsub.s32 %v3083, %v3085
      %v3087 = vrot.slane %v3073, %v3086
      %v3088 = vcombine.low %v3080, %v3087
      %v3090 = vunpack.c.l.s4 1935823168
      %v3091 = vunpack.c.0.s8 %v3090
      %v3092 = vlaneseq
      %v3093 = vshrl.u32 %v3092, 7
      %v3094 = vsub.s32 %v3091, %v3093
      %v3095 = vrot.slane %v3088, %v3094
      %v3096 = vcombine.low %v2345, %v2349
      %v3097 = vcombine.low %v2347, %v2351
      %v3099 = vunpack.c.l.s4 1935823168
      %v3100 = vunpack.c.0.s8 %v3099
      %v3101 = vlaneseq
      %v3102 = vshrl.u32 %v3101, 7
      %v3103 = vsub.s32 %v3100, %v3102
      %v3104 = vrot.slane %v3096, %v3103
      %v3106 = vunpack.c.l.s4 1935823168
      %v3107 = vunpack.c.0.s8 %v3106
      %v3108 = vlaneseq
      %v3109 = vshrl.u32 %v3108, 7
      %v3110 = vsub.s32 %v3107, %v3109
      %v3111 = vrot.slane %v3097, %v3110
      %v3112 = vcombine.low %v3104, %v3111
      %v3114 = vunpack.c.l.s4 1935823168
      %v3115 = vunpack.c.0.s8 %v3114
      %v3116 = vlaneseq
      %v3117 = vshrl.u32 %v3116, 7
      %v3118 = vsub.s32 %v3115, %v3117
      %v3119 = vrot.slane %v3112, %v3118
      %v3121 = vshrl.u32 %v2375, 16
      %v3123 = vrot.slane %v3121, 7
      %v3124 = vshll.u32 %v2375, 16
      %v3126 = vor.u32 %v3123, %v3124
      %v3127 = vrot.slane %v3123, 4
      %v3129 = vshrl.u32 %v2399, 16
      %v3131 = vrot.slane %v3129, 7
      %v3132 = vshll.u32 %v2399, 16
      %v3134 = vor.u32 %v3131, %v3132
      %v3135 = vsel %vm597, %v3127, %v3134
      %v3136 = vrot.slane %v3131, 4
      %v3138 = vshrl.u32 %v2423, 16
      %v3140 = vrot.slane %v3138, 7
      %v3141 = vshll.u32 %v2423, 16
      %v3143 = vor.u32 %v3140, %v3141
      %v3144 = vrot.slane %v3140, 4
      %v3146 = vshrl.u32 %v2447, 16
      %v3148 = vrot.slane %v3146, 7
      %v3149 = vshll.u32 %v2447, 16
      %v3151 = vor.u32 %v3148, %v3149
      %v3152 = vsel %vm597, %v3144, %v3151
      %v3153 = vrot.slane %v3148, 4
      %v3155 = vshrl.u32 %v2471, 16
      %v3157 = vrot.slane %v3155, 7
      %v3158 = vshll.u32 %v2471, 16
      %v3160 = vor.u32 %v3157, %v3158
      %v3161 = vrot.slane %v3157, 4
      %v3163 = vshrl.u32 %v2495, 16
      %v3165 = vrot.slane %v3163, 7
      %v3166 = vshll.u32 %v2495, 16
      %v3168 = vor.u32 %v3165, %v3166
      %v3169 = vsel %vm597, %v3161, %v3168
      %v3170 = vrot.slane %v3165, 4
      %v3172 = vshrl.u32 %v2519, 16
      %v3174 = vrot.slane %v3172, 7
      %v3175 = vshll.u32 %v2519, 16
      %v3177 = vor.u32 %v3174, %v3175
      %v3178 = vrot.slane %v3174, 4
      %v3180 = vshrl.u32 %v2543, 16
      %v3182 = vrot.slane %v3180, 7
      %v3183 = vshll.u32 %v2543, 16
      %v3185 = vor.u32 %v3182, %v3183
      %v3186 = vsel %vm597, %v3178, %v3185
      %v3187 = vrot.slane %v3182, 4
      %v3189 = vshrl.u32 %v2567, 16
      %v3191 = vrot.slane %v3189, 7
      %v3192 = vshll.u32 %v2567, 16
      %v3194 = vor.u32 %v3191, %v3192
      %v3195 = vrot.slane %v3191, 4
      %v3197 = vshrl.u32 %v2591, 16
      %v3199 = vrot.slane %v3197, 7
      %v3200 = vshll.u32 %v2591, 16
      %v3202 = vor.u32 %v3199, %v3200
      %v3203 = vsel %vm597, %v3195, %v3202
      %v3204 = vrot.slane %v3199, 4
      %v3206 = vshrl.u32 %v2615, 16
      %v3208 = vrot.slane %v3206, 7
      %v3209 = vshll.u32 %v2615, 16
      %v3211 = vor.u32 %v3208, %v3209
      %v3212 = vrot.slane %v3208, 4
      %v3214 = vshrl.u32 %v2639, 16
      %v3216 = vrot.slane %v3214, 7
      %v3217 = vshll.u32 %v2639, 16
      %v3219 = vor.u32 %v3216, %v3217
      %v3220 = vsel %vm597, %v3212, %v3219
      %v3221 = vrot.slane %v3216, 4
      %v3223 = vshrl.u32 %v2663, 16
      %v3225 = vrot.slane %v3223, 7
      %v3226 = vshll.u32 %v2663, 16
      %v3228 = vor.u32 %v3225, %v3226
      %v3229 = vrot.slane %v3225, 4
      %v3231 = vshrl.u32 %v2687, 16
      %v3233 = vrot.slane %v3231, 7
      %v3234 = vshll.u32 %v2687, 16
      %v3236 = vor.u32 %v3233, %v3234
      %v3237 = vsel %vm597, %v3229, %v3236
      %v3238 = vrot.slane %v3233, 4
      %v3240 = vshrl.u32 %v2711, 16
      %v3242 = vrot.slane %v3240, 7
      %v3243 = vshll.u32 %v2711, 16
      %v3245 = vor.u32 %v3242, %v3243
      %v3246 = vrot.slane %v3242, 4
      %v3248 = vshrl.u32 %v2735, 16
      %v3250 = vrot.slane %v3248, 7
      %v3251 = vshll.u32 %v2735, 16
      %v3253 = vor.u32 %v3250, %v3251
      %v3254 = vsel %vm597, %v3246, %v3253
      %v3255 = vrot.slane %v3250, 4
      %v3257 = vshrl.u32 %v2759, 16
      %v3259 = vrot.slane %v3257, 7
      %v3260 = vshll.u32 %v2759, 16
      %v3262 = vor.u32 %v3259, %v3260
      %v3263 = vrot.slane %v3259, 4
      %v3265 = vshrl.u32 %v2783, 16
      %v3267 = vrot.slane %v3265, 7
      %v3268 = vshll.u32 %v2783, 16
      %v3270 = vor.u32 %v3267, %v3268
      %v3271 = vsel %vm597, %v3263, %v3270
      %v3272 = vrot.slane %v3267, 4
      %v3274 = vshrl.u32 %v2807, 16
      %v3276 = vrot.slane %v3274, 7
      %v3277 = vshll.u32 %v2807, 16
      %v3279 = vor.u32 %v3276, %v3277
      %v3280 = vrot.slane %v3276, 4
      %v3282 = vshrl.u32 %v2831, 16
      %v3284 = vrot.slane %v3282, 7
      %v3285 = vshll.u32 %v2831, 16
      %v3287 = vor.u32 %v3284, %v3285
      %v3288 = vsel %vm597, %v3280, %v3287
      %v3289 = vrot.slane %v3284, 4
      %v3291 = vshrl.u32 %v2855, 16
      %v3293 = vrot.slane %v3291, 7
      %v3294 = vshll.u32 %v2855, 16
      %v3296 = vor.u32 %v3293, %v3294
      %v3297 = vrot.slane %v3293, 4
      %v3299 = vshrl.u32 %v2879, 16
      %v3301 = vrot.slane %v3299, 7
      %v3302 = vshll.u32 %v2879, 16
      %v3304 = vor.u32 %v3301, %v3302
      %v3305 = vsel %vm597, %v3297, %v3304
      %v3306 = vrot.slane %v3301, 4
      %v3308 = vshrl.u32 %v2903, 16
      %v3310 = vrot.slane %v3308, 7
      %v3311 = vshll.u32 %v2903, 16
      %v3313 = vor.u32 %v3310, %v3311
      %v3314 = vrot.slane %v3310, 4
      %v3316 = vshrl.u32 %v2927, 16
      %v3318 = vrot.slane %v3316, 7
      %v3319 = vshll.u32 %v2927, 16
      %v3321 = vor.u32 %v3318, %v3319
      %v3322 = vsel %vm597, %v3314, %v3321
      %v3323 = vrot.slane %v3318, 4
      %v3325 = vshrl.u32 %v2951, 16
      %v3327 = vrot.slane %v3325, 7
      %v3328 = vshll.u32 %v2951, 16
      %v3330 = vor.u32 %v3327, %v3328
      %v3331 = vrot.slane %v3327, 4
      %v3333 = vshrl.u32 %v2975, 16
      %v3335 = vrot.slane %v3333, 7
      %v3336 = vshll.u32 %v2975, 16
      %v3338 = vor.u32 %v3335, %v3336
      %v3339 = vsel %vm597, %v3331, %v3338
      %v3340 = vrot.slane %v3335, 4
      %v3342 = vshrl.u32 %v2999, 16
      %v3344 = vrot.slane %v3342, 7
      %v3345 = vshll.u32 %v2999, 16
      %v3347 = vor.u32 %v3344, %v3345
      %v3348 = vrot.slane %v3344, 4
      %v3350 = vshrl.u32 %v3023, 16
      %v3352 = vrot.slane %v3350, 7
      %v3353 = vshll.u32 %v3023, 16
      %v3355 = vor.u32 %v3352, %v3353
      %v3356 = vsel %vm597, %v3348, %v3355
      %v3357 = vrot.slane %v3352, 4
      %v3359 = vshrl.u32 %v3047, 16
      %v3361 = vrot.slane %v3359, 7
      %v3362 = vshll.u32 %v3047, 16
      %v3364 = vor.u32 %v3361, %v3362
      %v3365 = vrot.slane %v3361, 4
      %v3367 = vshrl.u32 %v3071, 16
      %v3369 = vrot.slane %v3367, 7
      %v3370 = vshll.u32 %v3071, 16
      %v3372 = vor.u32 %v3369, %v3370
      %v3373 = vsel %vm597, %v3365, %v3372
      %v3374 = vrot.slane %v3369, 4
      %v3376 = vshrl.u32 %v3095, 16
      %v3378 = vrot.slane %v3376, 7
      %v3379 = vshll.u32 %v3095, 16
      %v3381 = vor.u32 %v3378, %v3379
      %v3382 = vrot.slane %v3378, 4
      %v3384 = vshrl.u32 %v3119, 16
      %v3386 = vrot.slane %v3384, 7
      %v3387 = vshll.u32 %v3119, 16
      %v3389 = vor.u32 %v3386, %v3387
      %v3390 = vsel %vm597, %v3382, %v3389
      %v3391 = vrot.slane %v3386, 4
      %vm3440 = vcmask 27648
      %vm3441 = vmand %vm3440, %vm393
      %v3442 = vld [vmem:[%s1014] sm:$0xf]
      %v3443 = vsel %vm3441, %v3126, %v3442
      %3444 = vst [vmem:[%s1014] sm:$0xf] %v3443
      %vm3445 = vcmask 27648
      %3446 = vst.msk [vmem:[%s1014 + $0x4] sm:$0xf] %vm3445, %v3135
      %vm3447 = vcmask 24576
      %vm3448 = vmand %vm3447, %vm337
      %v3449 = vld [vmem:[%s1014 + $0x8] sm:$0x1]
      %v3450 = vsel %vm3448, %v3136, %v3449
      %3451 = vst [vmem:[%s1014 + $0x8] sm:$0x1] %v3450
      %v3452 = vld [vmem:[%s1014 + $0xc] sm:$0xf]
      %v3453 = vsel %vm3441, %v3143, %v3452
      %3454 = vst [vmem:[%s1014 + $0xc] sm:$0xf] %v3453
      %3455 = vst.msk [vmem:[%s1014 + $0x10] sm:$0xf] %vm3445, %v3152
      %v3456 = vld [vmem:[%s1014 + $0x14] sm:$0x1]
      %v3457 = vsel %vm3448, %v3153, %v3456
      %3458 = vst [vmem:[%s1014 + $0x14] sm:$0x1] %v3457
      %v3459 = vld [vmem:[%s1014 + $0x18] sm:$0xf]
      %v3460 = vsel %vm3441, %v3160, %v3459
      %3461 = vst [vmem:[%s1014 + $0x18] sm:$0xf] %v3460
      %3462 = vst.msk [vmem:[%s1014 + $0x1c] sm:$0xf] %vm3445, %v3169
      %v3463 = vld [vmem:[%s1014 + $0x20] sm:$0x1]
      %v3464 = vsel %vm3448, %v3170, %v3463
      %3465 = vst [vmem:[%s1014 + $0x20] sm:$0x1] %v3464
      %v3466 = vld [vmem:[%s1014 + $0x24] sm:$0xf]
      %v3467 = vsel %vm3441, %v3177, %v3466
      %3468 = vst [vmem:[%s1014 + $0x24] sm:$0xf] %v3467
      %3469 = vst.msk [vmem:[%s1014 + $0x28] sm:$0xf] %vm3445, %v3186
      %v3470 = vld [vmem:[%s1014 + $0x2c] sm:$0x1]
      %v3471 = vsel %vm3448, %v3187, %v3470
      %3472 = vst [vmem:[%s1014 + $0x2c] sm:$0x1] %v3471
      %v3473 = vld [vmem:[%s1014 + $0x30] sm:$0xf]
      %v3474 = vsel %vm3441, %v3194, %v3473
      %3475 = vst [vmem:[%s1014 + $0x30] sm:$0xf] %v3474
      %3476 = vst.msk [vmem:[%s1014 + $0x34] sm:$0xf] %vm3445, %v3203
      %v3477 = vld [vmem:[%s1014 + $0x38] sm:$0x1]
      %v3478 = vsel %vm3448, %v3204, %v3477
      %3479 = vst [vmem:[%s1014 + $0x38] sm:$0x1] %v3478
      %v3480 = vld [vmem:[%s1014 + $0x3c] sm:$0xf]
      %v3481 = vsel %vm3441, %v3211, %v3480
      %3482 = vst [vmem:[%s1014 + $0x3c] sm:$0xf] %v3481
      %3483 = vst.msk [vmem:[%s1014 + $0x40] sm:$0xf] %vm3445, %v3220
      %v3484 = vld [vmem:[%s1014 + $0x44] sm:$0x1]
      %v3485 = vsel %vm3448, %v3221, %v3484
      %3486 = vst [vmem:[%s1014 + $0x44] sm:$0x1] %v3485
      %v3487 = vld [vmem:[%s1014 + $0x48] sm:$0xf]
      %v3488 = vsel %vm3441, %v3228, %v3487
      %3489 = vst [vmem:[%s1014 + $0x48] sm:$0xf] %v3488
      %3490 = vst.msk [vmem:[%s1014 + $0x4c] sm:$0xf] %vm3445, %v3237
      %v3491 = vld [vmem:[%s1014 + $0x50] sm:$0x1]
      %v3492 = vsel %vm3448, %v3238, %v3491
      %3493 = vst [vmem:[%s1014 + $0x50] sm:$0x1] %v3492
      %v3494 = vld [vmem:[%s1014 + $0x54] sm:$0xf]
      %v3495 = vsel %vm3441, %v3245, %v3494
      %3496 = vst [vmem:[%s1014 + $0x54] sm:$0xf] %v3495
      %3497 = vst.msk [vmem:[%s1014 + $0x58] sm:$0xf] %vm3445, %v3254
      %v3498 = vld [vmem:[%s1014 + $0x5c] sm:$0x1]
      %v3499 = vsel %vm3448, %v3255, %v3498
      %3500 = vst [vmem:[%s1014 + $0x5c] sm:$0x1] %v3499
      %v3501 = vld [vmem:[%s1014 + $0x60] sm:$0xf]
      %v3502 = vsel %vm3441, %v3262, %v3501
      %3503 = vst [vmem:[%s1014 + $0x60] sm:$0xf] %v3502
      %3504 = vst.msk [vmem:[%s1014 + $0x64] sm:$0xf] %vm3445, %v3271
      %v3505 = vld [vmem:[%s1014 + $0x68] sm:$0x1]
      %v3506 = vsel %vm3448, %v3272, %v3505
      %3507 = vst [vmem:[%s1014 + $0x68] sm:$0x1] %v3506
      %v3508 = vld [vmem:[%s1014 + $0x6c] sm:$0xf]
      %v3509 = vsel %vm3441, %v3279, %v3508
      %3510 = vst [vmem:[%s1014 + $0x6c] sm:$0xf] %v3509
      %3511 = vst.msk [vmem:[%s1014 + $0x70] sm:$0xf] %vm3445, %v3288
      %v3512 = vld [vmem:[%s1014 + $0x74] sm:$0x1]
      %v3513 = vsel %vm3448, %v3289, %v3512
      %3514 = vst [vmem:[%s1014 + $0x74] sm:$0x1] %v3513
      %v3515 = vld [vmem:[%s1014 + $0x78] sm:$0xf]
      %v3516 = vsel %vm3441, %v3296, %v3515
      %3517 = vst [vmem:[%s1014 + $0x78] sm:$0xf] %v3516
      %3518 = vst.msk [vmem:[%s1014 + $0x7c] sm:$0xf] %vm3445, %v3305
      %v3519 = vld [vmem:[%s1014 + $0x80] sm:$0x1]
      %v3520 = vsel %vm3448, %v3306, %v3519
      %3521 = vst [vmem:[%s1014 + $0x80] sm:$0x1] %v3520
      %v3522 = vld [vmem:[%s1014 + $0x84] sm:$0xf]
      %v3523 = vsel %vm3441, %v3313, %v3522
      %3524 = vst [vmem:[%s1014 + $0x84] sm:$0xf] %v3523
      %3525 = vst.msk [vmem:[%s1014 + $0x88] sm:$0xf] %vm3445, %v3322
      %v3526 = vld [vmem:[%s1014 + $0x8c] sm:$0x1]
      %v3527 = vsel %vm3448, %v3323, %v3526
      %3528 = vst [vmem:[%s1014 + $0x8c] sm:$0x1] %v3527
      %v3529 = vld [vmem:[%s1014 + $0x90] sm:$0xf]
      %v3530 = vsel %vm3441, %v3330, %v3529
      %3531 = vst [vmem:[%s1014 + $0x90] sm:$0xf] %v3530
      %3532 = vst.msk [vmem:[%s1014 + $0x94] sm:$0xf] %vm3445, %v3339
      %v3533 = vld [vmem:[%s1014 + $0x98] sm:$0x1]
      %v3534 = vsel %vm3448, %v3340, %v3533
      %3535 = vst [vmem:[%s1014 + $0x98] sm:$0x1] %v3534
      %v3536 = vld [vmem:[%s1014 + $0x9c] sm:$0xf]
      %v3537 = vsel %vm3441, %v3347, %v3536
      %3538 = vst [vmem:[%s1014 + $0x9c] sm:$0xf] %v3537
      %3539 = vst.msk [vmem:[%s1014 + $0xa0] sm:$0xf] %vm3445, %v3356
      %v3540 = vld [vmem:[%s1014 + $0xa4] sm:$0x1]
      %v3541 = vsel %vm3448, %v3357, %v3540
      %3542 = vst [vmem:[%s1014 + $0xa4] sm:$0x1] %v3541
      %v3543 = vld [vmem:[%s1014 + $0xa8] sm:$0xf]
      %v3544 = vsel %vm3441, %v3364, %v3543
      %3545 = vst [vmem:[%s1014 + $0xa8] sm:$0xf] %v3544
      %3546 = vst.msk [vmem:[%s1014 + $0xac] sm:$0xf] %vm3445, %v3373
      %v3547 = vld [vmem:[%s1014 + $0xb0] sm:$0x1]
      %v3548 = vsel %vm3448, %v3374, %v3547
      %3549 = vst [vmem:[%s1014 + $0xb0] sm:$0x1] %v3548
      %v3550 = vld [vmem:[%s1014 + $0xb4] sm:$0xf]
      %v3551 = vsel %vm3441, %v3381, %v3550
      %3552 = vst [vmem:[%s1014 + $0xb4] sm:$0xf] %v3551
      %3553 = vst.msk [vmem:[%s1014 + $0xb8] sm:$0xf] %vm3445, %v3390
      %v3554 = vld [vmem:[%s1014 + $0xbc] sm:$0x1]
      %v3555 = vsel %vm3448, %v3391, %v3554
      %3556 = vst [vmem:[%s1014 + $0xbc] sm:$0x1] %v3555
      %v3557 = vld [vmem:[#allocation2] sm:$0xf]
      %v3558 = vld [vmem:[#allocation2 + $0x4] sm:$0xf]
      %v3559 = vld [vmem:[#allocation2 + $0xc] sm:$0xf]
      %v3560 = vld [vmem:[#allocation2 + $0x10] sm:$0xf]
      %v3561 = vld [vmem:[#allocation2 + $0x18] sm:$0xf]
      %v3562 = vld [vmem:[#allocation2 + $0x1c] sm:$0xf]
      %v3563 = vld [vmem:[#allocation2 + $0x24] sm:$0xf]
      %v3564 = vld [vmem:[#allocation2 + $0x28] sm:$0xf]
      %v3565 = vld [vmem:[#allocation2 + $0x30] sm:$0xf]
      %v3566 = vld [vmem:[#allocation2 + $0x34] sm:$0xf]
      %v3567 = vld [vmem:[#allocation2 + $0x3c] sm:$0xf]
      %v3568 = vld [vmem:[#allocation2 + $0x40] sm:$0xf]
      %v3569 = vld [vmem:[#allocation2 + $0x48] sm:$0xf]
      %v3570 = vld [vmem:[#allocation2 + $0x4c] sm:$0xf]
      %v3571 = vld [vmem:[#allocation2 + $0x54] sm:$0xf]
      %v3572 = vld [vmem:[#allocation2 + $0x58] sm:$0xf]
      %v3573 = vld [vmem:[#allocation2 + $0x60] sm:$0xf]
      %v3574 = vld [vmem:[#allocation2 + $0x64] sm:$0xf]
      %v3575 = vld [vmem:[#allocation2 + $0x6c] sm:$0xf]
      %v3576 = vld [vmem:[#allocation2 + $0x70] sm:$0xf]
      %v3577 = vld [vmem:[#allocation2 + $0x78] sm:$0xf]
      %v3578 = vld [vmem:[#allocation2 + $0x7c] sm:$0xf]
      %v3579 = vld [vmem:[#allocation2 + $0x84] sm:$0xf]
      %v3580 = vld [vmem:[#allocation2 + $0x88] sm:$0xf]
      %v3581 = vld [vmem:[#allocation2 + $0x90] sm:$0xf]
      %v3582 = vld [vmem:[#allocation2 + $0x94] sm:$0xf]
      %v3583 = vld [vmem:[#allocation2 + $0x9c] sm:$0xf]
      %v3584 = vld [vmem:[#allocation2 + $0xa0] sm:$0xf]
      %v3585 = vld [vmem:[#allocation2 + $0xa8] sm:$0xf]
      %v3586 = vld [vmem:[#allocation2 + $0xac] sm:$0xf]
      %v3587 = vld [vmem:[#allocation2 + $0xb4] sm:$0xf]
      %v3588 = vld [vmem:[#allocation2 + $0xb8] sm:$0xf]
      %v3621 = vunpack.c.l.b16 %v3557
      %v3622 = vunpack.c.l.b16 %v3558
      %v3623 = vunpack.c.l.b16 %v3559
      %v3624 = vunpack.c.l.b16 %v3560
      %v3625 = vunpack.c.l.b16 %v3561
      %v3626 = vunpack.c.l.b16 %v3562
      %v3627 = vunpack.c.l.b16 %v3563
      %v3628 = vunpack.c.l.b16 %v3564
      %v3629 = vunpack.c.l.b16 %v3565
      %v3630 = vunpack.c.l.b16 %v3566
      %v3631 = vunpack.c.l.b16 %v3567
      %v3632 = vunpack.c.l.b16 %v3568
      %v3633 = vunpack.c.l.b16 %v3569
      %v3634 = vunpack.c.l.b16 %v3570
      %v3635 = vunpack.c.l.b16 %v3571
      %v3636 = vunpack.c.l.b16 %v3572
      %v3637 = vunpack.c.l.b16 %v3573
      %v3638 = vunpack.c.l.b16 %v3574
      %v3639 = vunpack.c.l.b16 %v3575
      %v3640 = vunpack.c.l.b16 %v3576
      %v3641 = vunpack.c.l.b16 %v3577
      %v3642 = vunpack.c.l.b16 %v3578
      %v3643 = vunpack.c.l.b16 %v3579
      %v3644 = vunpack.c.l.b16 %v3580
      %v3645 = vunpack.c.l.b16 %v3581
      %v3646 = vunpack.c.l.b16 %v3582
      %v3647 = vunpack.c.l.b16 %v3583
      %v3648 = vunpack.c.l.b16 %v3584
      %v3649 = vunpack.c.l.b16 %v3585
      %v3650 = vunpack.c.l.b16 %v3586
      %v3651 = vunpack.c.l.b16 %v3587
      %v3652 = vunpack.c.l.b16 %v3588
      %v3653 = vpack.c.b16 %v3622, %v3621
      %v3654 = vpack.c.b16 %v3624, %v3623
      %v3655 = vpack.c.b16 %v3626, %v3625
      %v3656 = vpack.c.b16 %v3628, %v3627
      %v3657 = vpack.c.b16 %v3630, %v3629
      %v3658 = vpack.c.b16 %v3632, %v3631
      %v3659 = vpack.c.b16 %v3634, %v3633
      %v3660 = vpack.c.b16 %v3636, %v3635
      %v3661 = vpack.c.b16 %v3638, %v3637
      %v3662 = vpack.c.b16 %v3640, %v3639
      %v3663 = vpack.c.b16 %v3642, %v3641
      %v3664 = vpack.c.b16 %v3644, %v3643
      %v3665 = vpack.c.b16 %v3646, %v3645
      %v3666 = vpack.c.b16 %v3648, %v3647
      %v3667 = vpack.c.b16 %v3650, %v3649
      %v3668 = vpack.c.b16 %v3652, %v3651
      %3685 = vst.msk [vmem:[#allocation4] sm:$0xff] %vm1168, %v3653
      %3686 = vst.msk [vmem:[#allocation4 + $0x8] sm:$0xff] %vm1168, %v3654
      %3687 = vst.msk [vmem:[#allocation4 + $0x10] sm:$0xff] %vm1168, %v3655
      %3688 = vst.msk [vmem:[#allocation4 + $0x18] sm:$0xff] %vm1168, %v3656
      %3689 = vst.msk [vmem:[#allocation4 + $0x20] sm:$0xff] %vm1168, %v3657
      %3690 = vst.msk [vmem:[#allocation4 + $0x28] sm:$0xff] %vm1168, %v3658
      %3691 = vst.msk [vmem:[#allocation4 + $0x30] sm:$0xff] %vm1168, %v3659
      %3692 = vst.msk [vmem:[#allocation4 + $0x38] sm:$0xff] %vm1168, %v3660
      %3693 = vst.msk [vmem:[#allocation4 + $0x40] sm:$0xff] %vm1168, %v3661
      %3694 = vst.msk [vmem:[#allocation4 + $0x48] sm:$0xff] %vm1168, %v3662
      %3695 = vst.msk [vmem:[#allocation4 + $0x50] sm:$0xff] %vm1168, %v3663
      %3696 = vst.msk [vmem:[#allocation4 + $0x58] sm:$0xff] %vm1168, %v3664
      %3697 = vst.msk [vmem:[#allocation4 + $0x60] sm:$0xff] %vm1168, %v3665
      %3698 = vst.msk [vmem:[#allocation4 + $0x68] sm:$0xff] %vm1168, %v3666
      %3699 = vst.msk [vmem:[#allocation4 + $0x70] sm:$0xff] %vm1168, %v3667
      %3700 = vst.msk [vmem:[#allocation4 + $0x78] sm:$0xff] %vm1168, %v3668
      %v3701 = vld [vmem:[#allocation2] sm:$0xf]
      %v3702 = vld [vmem:[#allocation2 + $0x4] sm:$0xf]
      %v3703 = vld [vmem:[#allocation2 + $0x8] sm:$0x1]
      %v3704 = vld [vmem:[#allocation2 + $0xc] sm:$0xf]
      %v3705 = vld [vmem:[#allocation2 + $0x10] sm:$0xf]
      %v3706 = vld [vmem:[#allocation2 + $0x14] sm:$0x1]
      %v3707 = vld [vmem:[#allocation2 + $0x18] sm:$0xf]
      %v3708 = vld [vmem:[#allocation2 + $0x1c] sm:$0xf]
      %v3709 = vld [vmem:[#allocation2 + $0x20] sm:$0x1]
      %v3710 = vld [vmem:[#allocation2 + $0x24] sm:$0xf]
      %v3711 = vld [vmem:[#allocation2 + $0x28] sm:$0xf]
      %v3712 = vld [vmem:[#allocation2 + $0x2c] sm:$0x1]
      %v3713 = vld [vmem:[#allocation2 + $0x30] sm:$0xf]
      %v3714 = vld [vmem:[#allocation2 + $0x34] sm:$0xf]
      %v3715 = vld [vmem:[#allocation2 + $0x38] sm:$0x1]
      %v3716 = vld [vmem:[#allocation2 + $0x3c] sm:$0xf]
      %v3717 = vld [vmem:[#allocation2 + $0x40] sm:$0xf]
      %v3718 = vld [vmem:[#allocation2 + $0x44] sm:$0x1]
      %v3719 = vld [vmem:[#allocation2 + $0x48] sm:$0xf]
      %v3720 = vld [vmem:[#allocation2 + $0x4c] sm:$0xf]
      %v3721 = vld [vmem:[#allocation2 + $0x50] sm:$0x1]
      %v3722 = vld [vmem:[#allocation2 + $0x54] sm:$0xf]
      %v3723 = vld [vmem:[#allocation2 + $0x58] sm:$0xf]
      %v3724 = vld [vmem:[#allocation2 + $0x5c] sm:$0x1]
      %v3725 = vld [vmem:[#allocation2 + $0x60] sm:$0xf]
      %v3726 = vld [vmem:[#allocation2 + $0x64] sm:$0xf]
      %v3727 = vld [vmem:[#allocation2 + $0x68] sm:$0x1]
      %v3728 = vld [vmem:[#allocation2 + $0x6c] sm:$0xf]
      %v3729 = vld [vmem:[#allocation2 + $0x70] sm:$0xf]
      %v3730 = vld [vmem:[#allocation2 + $0x74] sm:$0x1]
      %v3731 = vld [vmem:[#allocation2 + $0x78] sm:$0xf]
      %v3732 = vld [vmem:[#allocation2 + $0x7c] sm:$0xf]
      %v3733 = vld [vmem:[#allocation2 + $0x80] sm:$0x1]
      %v3734 = vld [vmem:[#allocation2 + $0x84] sm:$0xf]
      %v3735 = vld [vmem:[#allocation2 + $0x88] sm:$0xf]
      %v3736 = vld [vmem:[#allocation2 + $0x8c] sm:$0x1]
      %v3737 = vld [vmem:[#allocation2 + $0x90] sm:$0xf]
      %v3738 = vld [vmem:[#allocation2 + $0x94] sm:$0xf]
      %v3739 = vld [vmem:[#allocation2 + $0x98] sm:$0x1]
      %v3740 = vld [vmem:[#allocation2 + $0x9c] sm:$0xf]
      %v3741 = vld [vmem:[#allocation2 + $0xa0] sm:$0xf]
      %v3742 = vld [vmem:[#allocation2 + $0xa4] sm:$0x1]
      %v3743 = vld [vmem:[#allocation2 + $0xa8] sm:$0xf]
      %v3744 = vld [vmem:[#allocation2 + $0xac] sm:$0xf]
      %v3745 = vld [vmem:[#allocation2 + $0xb0] sm:$0x1]
      %v3746 = vld [vmem:[#allocation2 + $0xb4] sm:$0xf]
      %v3747 = vld [vmem:[#allocation2 + $0xb8] sm:$0xf]
      %v3748 = vld [vmem:[#allocation2 + $0xbc] sm:$0x1]
      %vm3749 = vsmask.f32 3328
      %vm3750 = vsmask.f32 7440
      %vm3751 = vmor %vm3749, %vm3750
      %v3753 = vshrl.u32 %v3701, 16
      %v3755 = vrot.slane %v3753, 4
      %v3756 = vshll.u32 %v3701, 16
      %v3758 = vrot.slane %v3756, 5
      %v3759 = vor.u32 %v3755, %v3758
      %v3760 = vrot.slane %v3759, 4
      %v3762 = vshll.u32 %v3702, 16
      %v3764 = vrot.slane %v3762, 5
      %v3765 = vsel %vm3751, %v3760, %v3764
      %v3766 = vshrl.u32 %v3702, 16
      %v3768 = vrot.slane %v3766, 4
      %v3769 = vor.u32 %v3768, %v3764
      %v3770 = vrot.slane %v3769, 4
      %v3772 = vshll.u32 %v3703, 16
      %v3774 = vrot.slane %v3772, 5
      %v3775 = vsel %vm3751, %v3770, %v3774
      %v3777 = vshrl.u32 %v3704, 16
      %v3779 = vrot.slane %v3777, 4
      %v3780 = vshll.u32 %v3704, 16
      %v3782 = vrot.slane %v3780, 5
      %v3783 = vor.u32 %v3779, %v3782
      %v3784 = vrot.slane %v3783, 4
      %v3786 = vshll.u32 %v3705, 16
      %v3788 = vrot.slane %v3786, 5
      %v3789 = vsel %vm3751, %v3784, %v3788
      %v3790 = vshrl.u32 %v3705, 16
      %v3792 = vrot.slane %v3790, 4
      %v3793 = vor.u32 %v3792, %v3788
      %v3794 = vrot.slane %v3793, 4
      %v3796 = vshll.u32 %v3706, 16
      %v3798 = vrot.slane %v3796, 5
      %v3799 = vsel %vm3751, %v3794, %v3798
      %v3801 = vshrl.u32 %v3707, 16
      %v3803 = vrot.slane %v3801, 4
      %v3804 = vshll.u32 %v3707, 16
      %v3806 = vrot.slane %v3804, 5
      %v3807 = vor.u32 %v3803, %v3806
      %v3808 = vrot.slane %v3807, 4
      %v3810 = vshll.u32 %v3708, 16
      %v3812 = vrot.slane %v3810, 5
      %v3813 = vsel %vm3751, %v3808, %v3812
      %v3814 = vshrl.u32 %v3708, 16
      %v3816 = vrot.slane %v3814, 4
      %v3817 = vor.u32 %v3816, %v3812
      %v3818 = vrot.slane %v3817, 4
      %v3820 = vshll.u32 %v3709, 16
      %v3822 = vrot.slane %v3820, 5
      %v3823 = vsel %vm3751, %v3818, %v3822
      %v3825 = vshrl.u32 %v3710, 16
      %v3827 = vrot.slane %v3825, 4
      %v3828 = vshll.u32 %v3710, 16
      %v3830 = vrot.slane %v3828, 5
      %v3831 = vor.u32 %v3827, %v3830
      %v3832 = vrot.slane %v3831, 4
      %v3834 = vshll.u32 %v3711, 16
      %v3836 = vrot.slane %v3834, 5
      %v3837 = vsel %vm3751, %v3832, %v3836
      %v3838 = vshrl.u32 %v3711, 16
      %v3840 = vrot.slane %v3838, 4
      %v3841 = vor.u32 %v3840, %v3836
      %v3842 = vrot.slane %v3841, 4
      %v3844 = vshll.u32 %v3712, 16
      %v3846 = vrot.slane %v3844, 5
      %v3847 = vsel %vm3751, %v3842, %v3846
      %v3849 = vshrl.u32 %v3713, 16
      %v3851 = vrot.slane %v3849, 4
      %v3852 = vshll.u32 %v3713, 16
      %v3854 = vrot.slane %v3852, 5
      %v3855 = vor.u32 %v3851, %v3854
      %v3856 = vrot.slane %v3855, 4
      %v3858 = vshll.u32 %v3714, 16
      %v3860 = vrot.slane %v3858, 5
      %v3861 = vsel %vm3751, %v3856, %v3860
      %v3862 = vshrl.u32 %v3714, 16
      %v3864 = vrot.slane %v3862, 4
      %v3865 = vor.u32 %v3864, %v3860
      %v3866 = vrot.slane %v3865, 4
      %v3868 = vshll.u32 %v3715, 16
      %v3870 = vrot.slane %v3868, 5
      %v3871 = vsel %vm3751, %v3866, %v3870
      %v3873 = vshrl.u32 %v3716, 16
      %v3875 = vrot.slane %v3873, 4
      %v3876 = vshll.u32 %v3716, 16
      %v3878 = vrot.slane %v3876, 5
      %v3879 = vor.u32 %v3875, %v3878
      %v3880 = vrot.slane %v3879, 4
      %v3882 = vshll.u32 %v3717, 16
      %v3884 = vrot.slane %v3882, 5
      %v3885 = vsel %vm3751, %v3880, %v3884
      %v3886 = vshrl.u32 %v3717, 16
      %v3888 = vrot.slane %v3886, 4
      %v3889 = vor.u32 %v3888, %v3884
      %v3890 = vrot.slane %v3889, 4
      %v3892 = vshll.u32 %v3718, 16
      %v3894 = vrot.slane %v3892, 5
      %v3895 = vsel %vm3751, %v3890, %v3894
      %v3897 = vshrl.u32 %v3719, 16
      %v3899 = vrot.slane %v3897, 4
      %v3900 = vshll.u32 %v3719, 16
      %v3902 = vrot.slane %v3900, 5
      %v3903 = vor.u32 %v3899, %v3902
      %v3904 = vrot.slane %v3903, 4
      %v3906 = vshll.u32 %v3720, 16
      %v3908 = vrot.slane %v3906, 5
      %v3909 = vsel %vm3751, %v3904, %v3908
      %v3910 = vshrl.u32 %v3720, 16
      %v3912 = vrot.slane %v3910, 4
      %v3913 = vor.u32 %v3912, %v3908
      %v3914 = vrot.slane %v3913, 4
      %v3916 = vshll.u32 %v3721, 16
      %v3918 = vrot.slane %v3916, 5
      %v3919 = vsel %vm3751, %v3914, %v3918
      %v3921 = vshrl.u32 %v3722, 16
      %v3923 = vrot.slane %v3921, 4
      %v3924 = vshll.u32 %v3722, 16
      %v3926 = vrot.slane %v3924, 5
      %v3927 = vor.u32 %v3923, %v3926
      %v3928 = vrot.slane %v3927, 4
      %v3930 = vshll.u32 %v3723, 16
      %v3932 = vrot.slane %v3930, 5
      %v3933 = vsel %vm3751, %v3928, %v3932
      %v3934 = vshrl.u32 %v3723, 16
      %v3936 = vrot.slane %v3934, 4
      %v3937 = vor.u32 %v3936, %v3932
      %v3938 = vrot.slane %v3937, 4
      %v3940 = vshll.u32 %v3724, 16
      %v3942 = vrot.slane %v3940, 5
      %v3943 = vsel %vm3751, %v3938, %v3942
      %v3945 = vshrl.u32 %v3725, 16
      %v3947 = vrot.slane %v3945, 4
      %v3948 = vshll.u32 %v3725, 16
      %v3950 = vrot.slane %v3948, 5
      %v3951 = vor.u32 %v3947, %v3950
      %v3952 = vrot.slane %v3951, 4
      %v3954 = vshll.u32 %v3726, 16
      %v3956 = vrot.slane %v3954, 5
      %v3957 = vsel %vm3751, %v3952, %v3956
      %v3958 = vshrl.u32 %v3726, 16
      %v3960 = vrot.slane %v3958, 4
      %v3961 = vor.u32 %v3960, %v3956
      %v3962 = vrot.slane %v3961, 4
      %v3964 = vshll.u32 %v3727, 16
      %v3966 = vrot.slane %v3964, 5
      %v3967 = vsel %vm3751, %v3962, %v3966
      %v3969 = vshrl.u32 %v3728, 16
      %v3971 = vrot.slane %v3969, 4
      %v3972 = vshll.u32 %v3728, 16
      %v3974 = vrot.slane %v3972, 5
      %v3975 = vor.u32 %v3971, %v3974
      %v3976 = vrot.slane %v3975, 4
      %v3978 = vshll.u32 %v3729, 16
      %v3980 = vrot.slane %v3978, 5
      %v3981 = vsel %vm3751, %v3976, %v3980
      %v3982 = vshrl.u32 %v3729, 16
      %v3984 = vrot.slane %v3982, 4
      %v3985 = vor.u32 %v3984, %v3980
      %v3986 = vrot.slane %v3985, 4
      %v3988 = vshll.u32 %v3730, 16
      %v3990 = vrot.slane %v3988, 5
      %v3991 = vsel %vm3751, %v3986, %v3990
      %v3993 = vshrl.u32 %v3731, 16
      %v3995 = vrot.slane %v3993, 4
      %v3996 = vshll.u32 %v3731, 16
      %v3998 = vrot.slane %v3996, 5
      %v3999 = vor.u32 %v3995, %v3998
      %v4000 = vrot.slane %v3999, 4
      %v4002 = vshll.u32 %v3732, 16
      %v4004 = vrot.slane %v4002, 5
      %v4005 = vsel %vm3751, %v4000, %v4004
      %v4006 = vshrl.u32 %v3732, 16
      %v4008 = vrot.slane %v4006, 4
      %v4009 = vor.u32 %v4008, %v4004
      %v4010 = vrot.slane %v4009, 4
      %v4012 = vshll.u32 %v3733, 16
      %v4014 = vrot.slane %v4012, 5
      %v4015 = vsel %vm3751, %v4010, %v4014
      %v4017 = vshrl.u32 %v3734, 16
      %v4019 = vrot.slane %v4017, 4
      %v4020 = vshll.u32 %v3734, 16
      %v4022 = vrot.slane %v4020, 5
      %v4023 = vor.u32 %v4019, %v4022
      %v4024 = vrot.slane %v4023, 4
      %v4026 = vshll.u32 %v3735, 16
      %v4028 = vrot.slane %v4026, 5
      %v4029 = vsel %vm3751, %v4024, %v4028
      %v4030 = vshrl.u32 %v3735, 16
      %v4032 = vrot.slane %v4030, 4
      %v4033 = vor.u32 %v4032, %v4028
      %v4034 = vrot.slane %v4033, 4
      %v4036 = vshll.u32 %v3736, 16
      %v4038 = vrot.slane %v4036, 5
      %v4039 = vsel %vm3751, %v4034, %v4038
      %v4041 = vshrl.u32 %v3737, 16
      %v4043 = vrot.slane %v4041, 4
      %v4044 = vshll.u32 %v3737, 16
      %v4046 = vrot.slane %v4044, 5
      %v4047 = vor.u32 %v4043, %v4046
      %v4048 = vrot.slane %v4047, 4
      %v4050 = vshll.u32 %v3738, 16
      %v4052 = vrot.slane %v4050, 5
      %v4053 = vsel %vm3751, %v4048, %v4052
      %v4054 = vshrl.u32 %v3738, 16
      %v4056 = vrot.slane %v4054, 4
      %v4057 = vor.u32 %v4056, %v4052
      %v4058 = vrot.slane %v4057, 4
      %v4060 = vshll.u32 %v3739, 16
      %v4062 = vrot.slane %v4060, 5
      %v4063 = vsel %vm3751, %v4058, %v4062
      %v4065 = vshrl.u32 %v3740, 16
      %v4067 = vrot.slane %v4065, 4
      %v4068 = vshll.u32 %v3740, 16
      %v4070 = vrot.slane %v4068, 5
      %v4071 = vor.u32 %v4067, %v4070
      %v4072 = vrot.slane %v4071, 4
      %v4074 = vshll.u32 %v3741, 16
      %v4076 = vrot.slane %v4074, 5
      %v4077 = vsel %vm3751, %v4072, %v4076
      %v4078 = vshrl.u32 %v3741, 16
      %v4080 = vrot.slane %v4078, 4
      %v4081 = vor.u32 %v4080, %v4076
      %v4082 = vrot.slane %v4081, 4
      %v4084 = vshll.u32 %v3742, 16
      %v4086 = vrot.slane %v4084, 5
      %v4087 = vsel %vm3751, %v4082, %v4086
      %v4089 = vshrl.u32 %v3743, 16
      %v4091 = vrot.slane %v4089, 4
      %v4092 = vshll.u32 %v3743, 16
      %v4094 = vrot.slane %v4092, 5
      %v4095 = vor.u32 %v4091, %v4094
      %v4096 = vrot.slane %v4095, 4
      %v4098 = vshll.u32 %v3744, 16
      %v4100 = vrot.slane %v4098, 5
      %v4101 = vsel %vm3751, %v4096, %v4100
      %v4102 = vshrl.u32 %v3744, 16
      %v4104 = vrot.slane %v4102, 4
      %v4105 = vor.u32 %v4104, %v4100
      %v4106 = vrot.slane %v4105, 4
      %v4108 = vshll.u32 %v3745, 16
      %v4110 = vrot.slane %v4108, 5
      %v4111 = vsel %vm3751, %v4106, %v4110
      %v4113 = vshrl.u32 %v3746, 16
      %v4115 = vrot.slane %v4113, 4
      %v4116 = vshll.u32 %v3746, 16
      %v4118 = vrot.slane %v4116, 5
      %v4119 = vor.u32 %v4115, %v4118
      %v4120 = vrot.slane %v4119, 4
      %v4122 = vshll.u32 %v3747, 16
      %v4124 = vrot.slane %v4122, 5
      %v4125 = vsel %vm3751, %v4120, %v4124
      %v4126 = vshrl.u32 %v3747, 16
      %v4128 = vrot.slane %v4126, 4
      %v4129 = vor.u32 %v4128, %v4124
      %v4130 = vrot.slane %v4129, 4
      %v4132 = vshll.u32 %v3748, 16
      %v4134 = vrot.slane %v4132, 5
      %v4135 = vsel %vm3751, %v4130, %v4134
      %v4136 = vunpack.c.l.b16 %v3765
      %v4137 = vunpack.c.l.b16 %v3775
      %v4138 = vunpack.c.l.b16 %v3789
      %v4139 = vunpack.c.l.b16 %v3799
      %v4140 = vunpack.c.l.b16 %v3813
      %v4141 = vunpack.c.l.b16 %v3823
      %v4142 = vunpack.c.l.b16 %v3837
      %v4143 = vunpack.c.l.b16 %v3847
      %v4144 = vunpack.c.l.b16 %v3861
      %v4145 = vunpack.c.l.b16 %v3871
      %v4146 = vunpack.c.l.b16 %v3885
      %v4147 = vunpack.c.l.b16 %v3895
      %v4148 = vunpack.c.l.b16 %v3909
      %v4149 = vunpack.c.l.b16 %v3919
      %v4150 = vunpack.c.l.b16 %v3933
      %v4151 = vunpack.c.l.b16 %v3943
      %v4152 = vunpack.c.l.b16 %v3957
      %v4153 = vunpack.c.l.b16 %v3967
      %v4154 = vunpack.c.l.b16 %v3981
      %v4155 = vunpack.c.l.b16 %v3991
      %v4156 = vunpack.c.l.b16 %v4005
      %v4157 = vunpack.c.l.b16 %v4015
      %v4158 = vunpack.c.l.b16 %v4029
      %v4159 = vunpack.c.l.b16 %v4039
      %v4160 = vunpack.c.l.b16 %v4053
      %v4161 = vunpack.c.l.b16 %v4063
      %v4162 = vunpack.c.l.b16 %v4077
      %v4163 = vunpack.c.l.b16 %v4087
      %v4164 = vunpack.c.l.b16 %v4101
      %v4165 = vunpack.c.l.b16 %v4111
      %v4166 = vunpack.c.l.b16 %v4125
      %v4167 = vunpack.c.l.b16 %v4135
      %v4168 = vpack.c.b16 %v4137, %v4136
      %v4169 = vpack.c.b16 %v4139, %v4138
      %v4170 = vpack.c.b16 %v4141, %v4140
      %v4171 = vpack.c.b16 %v4143, %v4142
      %v4172 = vpack.c.b16 %v4145, %v4144
      %v4173 = vpack.c.b16 %v4147, %v4146
      %v4174 = vpack.c.b16 %v4149, %v4148
      %v4175 = vpack.c.b16 %v4151, %v4150
      %v4176 = vpack.c.b16 %v4153, %v4152
      %v4177 = vpack.c.b16 %v4155, %v4154
      %v4178 = vpack.c.b16 %v4157, %v4156
      %v4179 = vpack.c.b16 %v4159, %v4158
      %v4180 = vpack.c.b16 %v4161, %v4160
      %v4181 = vpack.c.b16 %v4163, %v4162
      %v4182 = vpack.c.b16 %v4165, %v4164
      %v4183 = vpack.c.b16 %v4167, %v4166
      %4184 = vrot.lane.b32.xlu0 %v4168, 8
      %v4185 = vpop.permute.xlu0 %4184
      %4186 = vrot.lane.b32.xlu0 %v4169, 8
      %v4187 = vpop.permute.xlu0 %4186
      %4188 = vrot.lane.b32.xlu0 %v4170, 8
      %v4189 = vpop.permute.xlu0 %4188
      %4190 = vrot.lane.b32.xlu0 %v4171, 8
      %v4191 = vpop.permute.xlu0 %4190
      %4192 = vrot.lane.b32.xlu0 %v4172, 8
      %v4193 = vpop.permute.xlu0 %4192
      %4194 = vrot.lane.b32.xlu0 %v4173, 8
      %v4195 = vpop.permute.xlu0 %4194
      %4196 = vrot.lane.b32.xlu0 %v4174, 8
      %v4197 = vpop.permute.xlu0 %4196
      %4198 = vrot.lane.b32.xlu0 %v4175, 8
      %v4199 = vpop.permute.xlu0 %4198
      %4200 = vrot.lane.b32.xlu0 %v4176, 8
      %v4201 = vpop.permute.xlu0 %4200
      %4202 = vrot.lane.b32.xlu0 %v4177, 8
      %v4203 = vpop.permute.xlu0 %4202
      %4204 = vrot.lane.b32.xlu0 %v4178, 8
      %v4205 = vpop.permute.xlu0 %4204
      %4206 = vrot.lane.b32.xlu0 %v4179, 8
      %v4207 = vpop.permute.xlu0 %4206
      %4208 = vrot.lane.b32.xlu0 %v4180, 8
      %v4209 = vpop.permute.xlu0 %4208
      %4210 = vrot.lane.b32.xlu0 %v4181, 8
      %v4211 = vpop.permute.xlu0 %4210
      %4212 = vrot.lane.b32.xlu0 %v4182, 8
      %v4213 = vpop.permute.xlu0 %4212
      %4214 = vrot.lane.b32.xlu0 %v4183, 8
      %v4215 = vpop.permute.xlu0 %4214
      %vm4232 = vcmask 130112
      %4233 = vst.msk [vmem:[#allocation4] sm:$0xff] %vm4232, %v4185
      %4234 = vst.msk [vmem:[#allocation4 + $0x8] sm:$0xff] %vm4232, %v4187
      %4235 = vst.msk [vmem:[#allocation4 + $0x10] sm:$0xff] %vm4232, %v4189
      %4236 = vst.msk [vmem:[#allocation4 + $0x18] sm:$0xff] %vm4232, %v4191
      %4237 = vst.msk [vmem:[#allocation4 + $0x20] sm:$0xff] %vm4232, %v4193
      %4238 = vst.msk [vmem:[#allocation4 + $0x28] sm:$0xff] %vm4232, %v4195
      %4239 = vst.msk [vmem:[#allocation4 + $0x30] sm:$0xff] %vm4232, %v4197
      %4240 = vst.msk [vmem:[#allocation4 + $0x38] sm:$0xff] %vm4232, %v4199
      %4241 = vst.msk [vmem:[#allocation4 + $0x40] sm:$0xff] %vm4232, %v4201
      %4242 = vst.msk [vmem:[#allocation4 + $0x48] sm:$0xff] %vm4232, %v4203
      %4243 = vst.msk [vmem:[#allocation4 + $0x50] sm:$0xff] %vm4232, %v4205
      %4244 = vst.msk [vmem:[#allocation4 + $0x58] sm:$0xff] %vm4232, %v4207
      %4245 = vst.msk [vmem:[#allocation4 + $0x60] sm:$0xff] %vm4232, %v4209
      %4246 = vst.msk [vmem:[#allocation4 + $0x68] sm:$0xff] %vm4232, %v4211
      %4247 = vst.msk [vmem:[#allocation4 + $0x70] sm:$0xff] %vm4232, %v4213
      %4248 = vst.msk [vmem:[#allocation4 + $0x78] sm:$0xff] %vm4232, %v4215
      %v4249 = vld [vmem:[#allocation2] sm:$0xe]
      %v4250 = vld [vmem:[#allocation2 + $0x4] sm:$0xf]
      %v4251 = vld [vmem:[#allocation2 + $0x8] sm:$0x1]
      %v4252 = vld [vmem:[#allocation2 + $0xc] sm:$0xe]
      %v4253 = vld [vmem:[#allocation2 + $0x10] sm:$0xf]
      %v4254 = vld [vmem:[#allocation2 + $0x14] sm:$0x1]
      %v4255 = vld [vmem:[#allocation2 + $0x18] sm:$0xe]
      %v4256 = vld [vmem:[#allocation2 + $0x1c] sm:$0xf]
      %v4257 = vld [vmem:[#allocation2 + $0x20] sm:$0x1]
      %v4258 = vld [vmem:[#allocation2 + $0x24] sm:$0xe]
      %v4259 = vld [vmem:[#allocation2 + $0x28] sm:$0xf]
      %v4260 = vld [vmem:[#allocation2 + $0x2c] sm:$0x1]
      %v4261 = vld [vmem:[#allocation2 + $0x30] sm:$0xe]
      %v4262 = vld [vmem:[#allocation2 + $0x34] sm:$0xf]
      %v4263 = vld [vmem:[#allocation2 + $0x38] sm:$0x1]
      %v4264 = vld [vmem:[#allocation2 + $0x3c] sm:$0xe]
      %v4265 = vld [vmem:[#allocation2 + $0x40] sm:$0xf]
      %v4266 = vld [vmem:[#allocation2 + $0x44] sm:$0x1]
      %v4267 = vld [vmem:[#allocation2 + $0x48] sm:$0xe]
      %v4268 = vld [vmem:[#allocation2 + $0x4c] sm:$0xf]
      %v4269 = vld [vmem:[#allocation2 + $0x50] sm:$0x1]
      %v4270 = vld [vmem:[#allocation2 + $0x54] sm:$0xe]
      %v4271 = vld [vmem:[#allocation2 + $0x58] sm:$0xf]
      %v4272 = vld [vmem:[#allocation2 + $0x5c] sm:$0x1]
      %v4273 = vld [vmem:[#allocation2 + $0x60] sm:$0xe]
      %v4274 = vld [vmem:[#allocation2 + $0x64] sm:$0xf]
      %v4275 = vld [vmem:[#allocation2 + $0x68] sm:$0x1]
      %v4276 = vld [vmem:[#allocation2 + $0x6c] sm:$0xe]
      %v4277 = vld [vmem:[#allocation2 + $0x70] sm:$0xf]
      %v4278 = vld [vmem:[#allocation2 + $0x74] sm:$0x1]
      %v4279 = vld [vmem:[#allocation2 + $0x78] sm:$0xe]
      %v4280 = vld [vmem:[#allocation2 + $0x7c] sm:$0xf]
      %v4281 = vld [vmem:[#allocation2 + $0x80] sm:$0x1]
      %v4282 = vld [vmem:[#allocation2 + $0x84] sm:$0xe]
      %v4283 = vld [vmem:[#allocation2 + $0x88] sm:$0xf]
      %v4284 = vld [vmem:[#allocation2 + $0x8c] sm:$0x1]
      %v4285 = vld [vmem:[#allocation2 + $0x90] sm:$0xe]
      %v4286 = vld [vmem:[#allocation2 + $0x94] sm:$0xf]
      %v4287 = vld [vmem:[#allocation2 + $0x98] sm:$0x1]
      %v4288 = vld [vmem:[#allocation2 + $0x9c] sm:$0xe]
      %v4289 = vld [vmem:[#allocation2 + $0xa0] sm:$0xf]
      %v4290 = vld [vmem:[#allocation2 + $0xa4] sm:$0x1]
      %v4291 = vld [vmem:[#allocation2 + $0xa8] sm:$0xe]
      %v4292 = vld [vmem:[#allocation2 + $0xac] sm:$0xf]
      %v4293 = vld [vmem:[#allocation2 + $0xb0] sm:$0x1]
      %v4294 = vld [vmem:[#allocation2 + $0xb4] sm:$0xe]
      %v4295 = vld [vmem:[#allocation2 + $0xb8] sm:$0xf]
      %v4296 = vld [vmem:[#allocation2 + $0xbc] sm:$0x1]
      %vm4345 = vcmask 1042432
      %vm4346 = vcmask 1046532
      %vm4347 = vmor %vm4345, %vm4346
      %v4348 = vrot.slane %v4249, 5
      %v4349 = vrot.slane %v4348, 4
      %v4350 = vrot.slane %v4250, 5
      %v4351 = vsel %vm4347, %v4349, %v4350
      %v4352 = vrot.slane %v4350, 4
      %v4353 = vrot.slane %v4251, 5
      %v4354 = vsel %vm4347, %v4352, %v4353
      %v4355 = vrot.slane %v4252, 5
      %v4356 = vrot.slane %v4355, 4
      %v4357 = vrot.slane %v4253, 5
      %v4358 = vsel %vm4347, %v4356, %v4357
      %v4359 = vrot.slane %v4357, 4
      %v4360 = vrot.slane %v4254, 5
      %v4361 = vsel %vm4347, %v4359, %v4360
      %v4362 = vrot.slane %v4255, 5
      %v4363 = vrot.slane %v4362, 4
      %v4364 = vrot.slane %v4256, 5
      %v4365 = vsel %vm4347, %v4363, %v4364
      %v4366 = vrot.slane %v4364, 4
      %v4367 = vrot.slane %v4257, 5
      %v4368 = vsel %vm4347, %v4366, %v4367
      %v4369 = vrot.slane %v4258, 5
      %v4370 = vrot.slane %v4369, 4
      %v4371 = vrot.slane %v4259, 5
      %v4372 = vsel %vm4347, %v4370, %v4371
      %v4373 = vrot.slane %v4371, 4
      %v4374 = vrot.slane %v4260, 5
      %v4375 = vsel %vm4347, %v4373, %v4374
      %v4376 = vrot.slane %v4261, 5
      %v4377 = vrot.slane %v4376, 4
      %v4378 = vrot.slane %v4262, 5
      %v4379 = vsel %vm4347, %v4377, %v4378
      %v4380 = vrot.slane %v4378, 4
      %v4381 = vrot.slane %v4263, 5
      %v4382 = vsel %vm4347, %v4380, %v4381
      %v4383 = vrot.slane %v4264, 5
      %v4384 = vrot.slane %v4383, 4
      %v4385 = vrot.slane %v4265, 5
      %v4386 = vsel %vm4347, %v4384, %v4385
      %v4387 = vrot.slane %v4385, 4
      %v4388 = vrot.slane %v4266, 5
      %v4389 = vsel %vm4347, %v4387, %v4388
      %v4390 = vrot.slane %v4267, 5
      %v4391 = vrot.slane %v4390, 4
      %v4392 = vrot.slane %v4268, 5
      %v4393 = vsel %vm4347, %v4391, %v4392
      %v4394 = vrot.slane %v4392, 4
      %v4395 = vrot.slane %v4269, 5
      %v4396 = vsel %vm4347, %v4394, %v4395
      %v4397 = vrot.slane %v4270, 5
      %v4398 = vrot.slane %v4397, 4
      %v4399 = vrot.slane %v4271, 5
      %v4400 = vsel %vm4347, %v4398, %v4399
      %v4401 = vrot.slane %v4399, 4
      %v4402 = vrot.slane %v4272, 5
      %v4403 = vsel %vm4347, %v4401, %v4402
      %v4404 = vrot.slane %v4273, 5
      %v4405 = vrot.slane %v4404, 4
      %v4406 = vrot.slane %v4274, 5
      %v4407 = vsel %vm4347, %v4405, %v4406
      %v4408 = vrot.slane %v4406, 4
      %v4409 = vrot.slane %v4275, 5
      %v4410 = vsel %vm4347, %v4408, %v4409
      %v4411 = vrot.slane %v4276, 5
      %v4412 = vrot.slane %v4411, 4
      %v4413 = vrot.slane %v4277, 5
      %v4414 = vsel %vm4347, %v4412, %v4413
      %v4415 = vrot.slane %v4413, 4
      %v4416 = vrot.slane %v4278, 5
      %v4417 = vsel %vm4347, %v4415, %v4416
      %v4418 = vrot.slane %v4279, 5
      %v4419 = vrot.slane %v4418, 4
      %v4420 = vrot.slane %v4280, 5
      %v4421 = vsel %vm4347, %v4419, %v4420
      %v4422 = vrot.slane %v4420, 4
      %v4423 = vrot.slane %v4281, 5
      %v4424 = vsel %vm4347, %v4422, %v4423
      %v4425 = vrot.slane %v4282, 5
      %v4426 = vrot.slane %v4425, 4
      %v4427 = vrot.slane %v4283, 5
      %v4428 = vsel %vm4347, %v4426, %v4427
      %v4429 = vrot.slane %v4427, 4
      %v4430 = vrot.slane %v4284, 5
      %v4431 = vsel %vm4347, %v4429, %v4430
      %v4432 = vrot.slane %v4285, 5
      %v4433 = vrot.slane %v4432, 4
      %v4434 = vrot.slane %v4286, 5
      %v4435 = vsel %vm4347, %v4433, %v4434
      %v4436 = vrot.slane %v4434, 4
      %v4437 = vrot.slane %v4287, 5
      %v4438 = vsel %vm4347, %v4436, %v4437
      %v4439 = vrot.slane %v4288, 5
      %v4440 = vrot.slane %v4439, 4
      %v4441 = vrot.slane %v4289, 5
      %v4442 = vsel %vm4347, %v4440, %v4441
      %v4443 = vrot.slane %v4441, 4
      %v4444 = vrot.slane %v4290, 5
      %v4445 = vsel %vm4347, %v4443, %v4444
      %v4446 = vrot.slane %v4291, 5
      %v4447 = vrot.slane %v4446, 4
      %v4448 = vrot.slane %v4292, 5
      %v4449 = vsel %vm4347, %v4447, %v4448
      %v4450 = vrot.slane %v4448, 4
      %v4451 = vrot.slane %v4293, 5
      %v4452 = vsel %vm4347, %v4450, %v4451
      %v4453 = vrot.slane %v4294, 5
      %v4454 = vrot.slane %v4453, 4
      %v4455 = vrot.slane %v4295, 5
      %v4456 = vsel %vm4347, %v4454, %v4455
      %v4457 = vrot.slane %v4455, 4
      %v4458 = vrot.slane %v4296, 5
      %v4459 = vsel %vm4347, %v4457, %v4458
      %v4460 = vunpack.c.l.b16 %v4351
      %v4461 = vunpack.c.l.b16 %v4354
      %v4462 = vunpack.c.l.b16 %v4358
      %v4463 = vunpack.c.l.b16 %v4361
      %v4464 = vunpack.c.l.b16 %v4365
      %v4465 = vunpack.c.l.b16 %v4368
      %v4466 = vunpack.c.l.b16 %v4372
      %v4467 = vunpack.c.l.b16 %v4375
      %v4468 = vunpack.c.l.b16 %v4379
      %v4469 = vunpack.c.l.b16 %v4382
      %v4470 = vunpack.c.l.b16 %v4386
      %v4471 = vunpack.c.l.b16 %v4389
      %v4472 = vunpack.c.l.b16 %v4393
      %v4473 = vunpack.c.l.b16 %v4396
      %v4474 = vunpack.c.l.b16 %v4400
      %v4475 = vunpack.c.l.b16 %v4403
      %v4476 = vunpack.c.l.b16 %v4407
      %v4477 = vunpack.c.l.b16 %v4410
      %v4478 = vunpack.c.l.b16 %v4414
      %v4479 = vunpack.c.l.b16 %v4417
      %v4480 = vunpack.c.l.b16 %v4421
      %v4481 = vunpack.c.l.b16 %v4424
      %v4482 = vunpack.c.l.b16 %v4428
      %v4483 = vunpack.c.l.b16 %v4431
      %v4484 = vunpack.c.l.b16 %v4435
      %v4485 = vunpack.c.l.b16 %v4438
      %v4486 = vunpack.c.l.b16 %v4442
      %v4487 = vunpack.c.l.b16 %v4445
      %v4488 = vunpack.c.l.b16 %v4449
      %v4489 = vunpack.c.l.b16 %v4452
      %v4490 = vunpack.c.l.b16 %v4456
      %v4491 = vunpack.c.l.b16 %v4459
      %v4492 = vpack.c.b16 %v4461, %v4460
      %v4493 = vpack.c.b16 %v4463, %v4462
      %v4494 = vpack.c.b16 %v4465, %v4464
      %v4495 = vpack.c.b16 %v4467, %v4466
      %v4496 = vpack.c.b16 %v4469, %v4468
      %v4497 = vpack.c.b16 %v4471, %v4470
      %v4498 = vpack.c.b16 %v4473, %v4472
      %v4499 = vpack.c.b16 %v4475, %v4474
      %v4500 = vpack.c.b16 %v4477, %v4476
      %v4501 = vpack.c.b16 %v4479, %v4478
      %v4502 = vpack.c.b16 %v4481, %v4480
      %v4503 = vpack.c.b16 %v4483, %v4482
      %v4504 = vpack.c.b16 %v4485, %v4484
      %v4505 = vpack.c.b16 %v4487, %v4486
      %v4506 = vpack.c.b16 %v4489, %v4488
      %v4507 = vpack.c.b16 %v4491, %v4490
      %4508 = vrot.lane.b32.xlu0 %v4492, 16
      %v4509 = vpop.permute.xlu0 %4508
      %4510 = vrot.lane.b32.xlu0 %v4493, 16
      %v4511 = vpop.permute.xlu0 %4510
      %4512 = vrot.lane.b32.xlu0 %v4494, 16
      %v4513 = vpop.permute.xlu0 %4512
      %4514 = vrot.lane.b32.xlu0 %v4495, 16
      %v4515 = vpop.permute.xlu0 %4514
      %4516 = vrot.lane.b32.xlu0 %v4496, 16
      %v4517 = vpop.permute.xlu0 %4516
      %4518 = vrot.lane.b32.xlu0 %v4497, 16
      %v4519 = vpop.permute.xlu0 %4518
      %4520 = vrot.lane.b32.xlu0 %v4498, 16
      %v4521 = vpop.permute.xlu0 %4520
      %4522 = vrot.lane.b32.xlu0 %v4499, 16
      %v4523 = vpop.permute.xlu0 %4522
      %4524 = vrot.lane.b32.xlu0 %v4500, 16
      %v4525 = vpop.permute.xlu0 %4524
      %4526 = vrot.lane.b32.xlu0 %v4501, 16
      %v4527 = vpop.permute.xlu0 %4526
      %4528 = vrot.lane.b32.xlu0 %v4502, 16
      %v4529 = vpop.permute.xlu0 %4528
      %4530 = vrot.lane.b32.xlu0 %v4503, 16
      %v4531 = vpop.permute.xlu0 %4530
      %4532 = vrot.lane.b32.xlu0 %v4504, 16
      %v4533 = vpop.permute.xlu0 %4532
      %4534 = vrot.lane.b32.xlu0 %v4505, 16
      %v4535 = vpop.permute.xlu0 %4534
      %4536 = vrot.lane.b32.xlu0 %v4506, 16
      %v4537 = vpop.permute.xlu0 %4536
      %4538 = vrot.lane.b32.xlu0 %v4507, 16
      %v4539 = vpop.permute.xlu0 %4538
      %vm4556 = vcmask 195712
      %4557 = vst.msk [vmem:[#allocation4] sm:$0xff] %vm4556, %v4509
      %4558 = vst.msk [vmem:[#allocation4 + $0x8] sm:$0xff] %vm4556, %v4511
      %4559 = vst.msk [vmem:[#allocation4 + $0x10] sm:$0xff] %vm4556, %v4513
      %4560 = vst.msk [vmem:[#allocation4 + $0x18] sm:$0xff] %vm4556, %v4515
      %4561 = vst.msk [vmem:[#allocation4 + $0x20] sm:$0xff] %vm4556, %v4517
      %4562 = vst.msk [vmem:[#allocation4 + $0x28] sm:$0xff] %vm4556, %v4519
      %4563 = vst.msk [vmem:[#allocation4 + $0x30] sm:$0xff] %vm4556, %v4521
      %4564 = vst.msk [vmem:[#allocation4 + $0x38] sm:$0xff] %vm4556, %v4523
      %4565 = vst.msk [vmem:[#allocation4 + $0x40] sm:$0xff] %vm4556, %v4525
      %4566 = vst.msk [vmem:[#allocation4 + $0x48] sm:$0xff] %vm4556, %v4527
      %4567 = vst.msk [vmem:[#allocation4 + $0x50] sm:$0xff] %vm4556, %v4529
      %4568 = vst.msk [vmem:[#allocation4 + $0x58] sm:$0xff] %vm4556, %v4531
      %4569 = vst.msk [vmem:[#allocation4 + $0x60] sm:$0xff] %vm4556, %v4533
      %4570 = vst.msk [vmem:[#allocation4 + $0x68] sm:$0xff] %vm4556, %v4535
      %4571 = vst.msk [vmem:[#allocation4 + $0x70] sm:$0xff] %vm4556, %v4537
      %4572 = vst.msk [vmem:[#allocation4 + $0x78] sm:$0xff] %vm4556, %v4539
      %v4573 = vld [vmem:[#allocation4] sm:$0xff]
      %v4574 = vld [vmem:[#allocation4 + $0x8] sm:$0xff]
      %v4575 = vld [vmem:[#allocation4 + $0x10] sm:$0xff]
      %v4576 = vld [vmem:[#allocation4 + $0x18] sm:$0xff]
      %v4577 = vld [vmem:[#allocation4 + $0x20] sm:$0xff]
      %v4578 = vld [vmem:[#allocation4 + $0x28] sm:$0xff]
      %v4579 = vld [vmem:[#allocation4 + $0x30] sm:$0xff]
      %v4580 = vld [vmem:[#allocation4 + $0x38] sm:$0xff]
      %v4581 = vld [vmem:[#allocation4 + $0x40] sm:$0xff]
      %v4582 = vld [vmem:[#allocation4 + $0x48] sm:$0xff]
      %v4583 = vld [vmem:[#allocation4 + $0x50] sm:$0xff]
      %v4584 = vld [vmem:[#allocation4 + $0x58] sm:$0xff]
      %v4585 = vld [vmem:[#allocation4 + $0x60] sm:$0xff]
      %v4586 = vld [vmem:[#allocation4 + $0x68] sm:$0xff]
      %v4587 = vld [vmem:[#allocation4 + $0x70] sm:$0xff]
      %v4588 = vld [vmem:[#allocation4 + $0x78] sm:$0xff]
      %v4589 = vld [vmem:[%s4] sm:$0xf]
      %v4590 = vld [vmem:[%s4 + $0x4] sm:$0xf]
      %v4591 = vld [vmem:[%s4 + $0x8] sm:$0xf]
      %v4592 = vld [vmem:[%s1014] sm:$0xf]
      %v4593 = vld [vmem:[%s1014 + $0x4] sm:$0xf]
      %v4594 = vld [vmem:[%s1014 + $0xc] sm:$0xf]
      %v4595 = vld [vmem:[%s1014 + $0x10] sm:$0xf]
      %v4596 = vld [vmem:[%s1014 + $0x18] sm:$0xf]
      %v4597 = vld [vmem:[%s1014 + $0x1c] sm:$0xf]
      %v4598 = vld [vmem:[%s1014 + $0x24] sm:$0xf]
      %v4599 = vld [vmem:[%s1014 + $0x28] sm:$0xf]
      %v4600 = vld [vmem:[%s1014 + $0x30] sm:$0xf]
      %v4601 = vld [vmem:[%s1014 + $0x34] sm:$0xf]
      %v4602 = vld [vmem:[%s1014 + $0x3c] sm:$0xf]
      %v4603 = vld [vmem:[%s1014 + $0x40] sm:$0xf]
      %v4604 = vld [vmem:[%s1014 + $0x48] sm:$0xf]
      %v4605 = vld [vmem:[%s1014 + $0x4c] sm:$0xf]
      %v4606 = vld [vmem:[%s1014 + $0x54] sm:$0xf]
      %v4607 = vld [vmem:[%s1014 + $0x58] sm:$0xf]
      %v4608 = vld [vmem:[%s1014 + $0x60] sm:$0xf]
      %v4609 = vld [vmem:[%s1014 + $0x64] sm:$0xf]
      %v4610 = vld [vmem:[%s1014 + $0x6c] sm:$0xf]
      %v4611 = vld [vmem:[%s1014 + $0x70] sm:$0xf]
      %v4612 = vld [vmem:[%s1014 + $0x78] sm:$0xf]
      %v4613 = vld [vmem:[%s1014 + $0x7c] sm:$0xf]
      %v4614 = vld [vmem:[%s1014 + $0x84] sm:$0xf]
      %v4615 = vld [vmem:[%s1014 + $0x88] sm:$0xf]
      %v4616 = vld [vmem:[%s1014 + $0x90] sm:$0xf]
      %v4617 = vld [vmem:[%s1014 + $0x94] sm:$0xf]
      %v4618 = vld [vmem:[%s1014 + $0x9c] sm:$0xf]
      %v4619 = vld [vmem:[%s1014 + $0xa0] sm:$0xf]
      %v4620 = vld [vmem:[%s1014 + $0xa8] sm:$0xf]
      %v4621 = vld [vmem:[%s1014 + $0xac] sm:$0xf]
      %v4622 = vld [vmem:[%s1014 + $0xb4] sm:$0xf]
      %v4623 = vld [vmem:[%s1014 + $0xb8] sm:$0xf]
      %v4656 = vunpack.c.l.b16 %v4592
      %v4657 = vunpack.c.l.b16 %v4593
      %v4658 = vunpack.c.l.b16 %v4594
      %v4659 = vunpack.c.l.b16 %v4595
      %v4660 = vunpack.c.l.b16 %v4596
      %v4661 = vunpack.c.l.b16 %v4597
      %v4662 = vunpack.c.l.b16 %v4598
      %v4663 = vunpack.c.l.b16 %v4599
      %v4664 = vunpack.c.l.b16 %v4600
      %v4665 = vunpack.c.l.b16 %v4601
      %v4666 = vunpack.c.l.b16 %v4602
      %v4667 = vunpack.c.l.b16 %v4603
      %v4668 = vunpack.c.l.b16 %v4604
      %v4669 = vunpack.c.l.b16 %v4605
      %v4670 = vunpack.c.l.b16 %v4606
      %v4671 = vunpack.c.l.b16 %v4607
      %v4672 = vunpack.c.l.b16 %v4608
      %v4673 = vunpack.c.l.b16 %v4609
      %v4674 = vunpack.c.l.b16 %v4610
      %v4675 = vunpack.c.l.b16 %v4611
      %v4676 = vunpack.c.l.b16 %v4612
      %v4677 = vunpack.c.l.b16 %v4613
      %v4678 = vunpack.c.l.b16 %v4614
      %v4679 = vunpack.c.l.b16 %v4615
      %v4680 = vunpack.c.l.b16 %v4616
      %v4681 = vunpack.c.l.b16 %v4617
      %v4682 = vunpack.c.l.b16 %v4618
      %v4683 = vunpack.c.l.b16 %v4619
      %v4684 = vunpack.c.l.b16 %v4620
      %v4685 = vunpack.c.l.b16 %v4621
      %v4686 = vunpack.c.l.b16 %v4622
      %v4687 = vunpack.c.l.b16 %v4623
      %v4688 = vpack.c.b16 %v4657, %v4656
      %v4689 = vpack.c.b16 %v4659, %v4658
      %v4690 = vpack.c.b16 %v4661, %v4660
      %v4691 = vpack.c.b16 %v4663, %v4662
      %v4692 = vpack.c.b16 %v4665, %v4664
      %v4693 = vpack.c.b16 %v4667, %v4666
      %v4694 = vpack.c.b16 %v4669, %v4668
      %v4695 = vpack.c.b16 %v4671, %v4670
      %v4696 = vpack.c.b16 %v4673, %v4672
      %v4697 = vpack.c.b16 %v4675, %v4674
      %v4698 = vpack.c.b16 %v4677, %v4676
      %v4699 = vpack.c.b16 %v4679, %v4678
      %v4700 = vpack.c.b16 %v4681, %v4680
      %v4701 = vpack.c.b16 %v4683, %v4682
      %v4702 = vpack.c.b16 %v4685, %v4684
      %v4703 = vpack.c.b16 %v4687, %v4686
      %4720 = vst.msk [vmem:[#allocation4] sm:$0xff] %vm1168, %v4688
      %4721 = vst.msk [vmem:[#allocation4 + $0x8] sm:$0xff] %vm1168, %v4689
      %4722 = vst.msk [vmem:[#allocation4 + $0x10] sm:$0xff] %vm1168, %v4690
      %4723 = vst.msk [vmem:[#allocation4 + $0x18] sm:$0xff] %vm1168, %v4691
      %4724 = vst.msk [vmem:[#allocation4 + $0x20] sm:$0xff] %vm1168, %v4692
      %4725 = vst.msk [vmem:[#allocation4 + $0x28] sm:$0xff] %vm1168, %v4693
      %4726 = vst.msk [vmem:[#allocation4 + $0x30] sm:$0xff] %vm1168, %v4694
      %4727 = vst.msk [vmem:[#allocation4 + $0x38] sm:$0xff] %vm1168, %v4695
      %4728 = vst.msk [vmem:[#allocation4 + $0x40] sm:$0xff] %vm1168, %v4696
      %4729 = vst.msk [vmem:[#allocation4 + $0x48] sm:$0xff] %vm1168, %v4697
      %4730 = vst.msk [vmem:[#allocation4 + $0x50] sm:$0xff] %vm1168, %v4698
      %4731 = vst.msk [vmem:[#allocation4 + $0x58] sm:$0xff] %vm1168, %v4699
      %4732 = vst.msk [vmem:[#allocation4 + $0x60] sm:$0xff] %vm1168, %v4700
      %4733 = vst.msk [vmem:[#allocation4 + $0x68] sm:$0xff] %vm1168, %v4701
      %4734 = vst.msk [vmem:[#allocation4 + $0x70] sm:$0xff] %vm1168, %v4702
      %4735 = vst.msk [vmem:[#allocation4 + $0x78] sm:$0xff] %vm1168, %v4703
      %v4736 = vld [vmem:[%s1014] sm:$0xf]
      %v4737 = vld [vmem:[%s1014 + $0x4] sm:$0xf]
      %v4738 = vld [vmem:[%s1014 + $0x8] sm:$0x1]
      %v4739 = vld [vmem:[%s1014 + $0xc] sm:$0xf]
      %v4740 = vld [vmem:[%s1014 + $0x10] sm:$0xf]
      %v4741 = vld [vmem:[%s1014 + $0x14] sm:$0x1]
      %v4742 = vld [vmem:[%s1014 + $0x18] sm:$0xf]
      %v4743 = vld [vmem:[%s1014 + $0x1c] sm:$0xf]
      %v4744 = vld [vmem:[%s1014 + $0x20] sm:$0x1]
      %v4745 = vld [vmem:[%s1014 + $0x24] sm:$0xf]
      %v4746 = vld [vmem:[%s1014 + $0x28] sm:$0xf]
      %v4747 = vld [vmem:[%s1014 + $0x2c] sm:$0x1]
      %v4748 = vld [vmem:[%s1014 + $0x30] sm:$0xf]
      %v4749 = vld [vmem:[%s1014 + $0x34] sm:$0xf]
      %v4750 = vld [vmem:[%s1014 + $0x38] sm:$0x1]
      %v4751 = vld [vmem:[%s1014 + $0x3c] sm:$0xf]
      %v4752 = vld [vmem:[%s1014 + $0x40] sm:$0xf]
      %v4753 = vld [vmem:[%s1014 + $0x44] sm:$0x1]
      %v4754 = vld [vmem:[%s1014 + $0x48] sm:$0xf]
      %v4755 = vld [vmem:[%s1014 + $0x4c] sm:$0xf]
      %v4756 = vld [vmem:[%s1014 + $0x50] sm:$0x1]
      %v4757 = vld [vmem:[%s1014 + $0x54] sm:$0xf]
      %v4758 = vld [vmem:[%s1014 + $0x58] sm:$0xf]
      %v4759 = vld [vmem:[%s1014 + $0x5c] sm:$0x1]
      %v4760 = vld [vmem:[%s1014 + $0x60] sm:$0xf]
      %v4761 = vld [vmem:[%s1014 + $0x64] sm:$0xf]
      %v4762 = vld [vmem:[%s1014 + $0x68] sm:$0x1]
      %v4763 = vld [vmem:[%s1014 + $0x6c] sm:$0xf]
      %v4764 = vld [vmem:[%s1014 + $0x70] sm:$0xf]
      %v4765 = vld [vmem:[%s1014 + $0x74] sm:$0x1]
      %v4766 = vld [vmem:[%s1014 + $0x78] sm:$0xf]
      %v4767 = vld [vmem:[%s1014 + $0x7c] sm:$0xf]
      %v4768 = vld [vmem:[%s1014 + $0x80] sm:$0x1]
      %v4769 = vld [vmem:[%s1014 + $0x84] sm:$0xf]
      %v4770 = vld [vmem:[%s1014 + $0x88] sm:$0xf]
      %v4771 = vld [vmem:[%s1014 + $0x8c] sm:$0x1]
      %v4772 = vld [vmem:[%s1014 + $0x90] sm:$0xf]
      %v4773 = vld [vmem:[%s1014 + $0x94] sm:$0xf]
      %v4774 = vld [vmem:[%s1014 + $0x98] sm:$0x1]
      %v4775 = vld [vmem:[%s1014 + $0x9c] sm:$0xf]
      %v4776 = vld [vmem:[%s1014 + $0xa0] sm:$0xf]
      %v4777 = vld [vmem:[%s1014 + $0xa4] sm:$0x1]
      %v4778 = vld [vmem:[%s1014 + $0xa8] sm:$0xf]
      %v4779 = vld [vmem:[%s1014 + $0xac] sm:$0xf]
      %v4780 = vld [vmem:[%s1014 + $0xb0] sm:$0x1]
      %v4781 = vld [vmem:[%s1014 + $0xb4] sm:$0xf]
      %v4782 = vld [vmem:[%s1014 + $0xb8] sm:$0xf]
      %v4783 = vld [vmem:[%s1014 + $0xbc] sm:$0x1]
      %v4785 = vshrl.u32 %v4736, 16
      %v4787 = vrot.slane %v4785, 4
      %v4788 = vshll.u32 %v4736, 16
      %v4790 = vrot.slane %v4788, 5
      %v4791 = vor.u32 %v4787, %v4790
      %v4792 = vrot.slane %v4791, 4
      %v4794 = vshll.u32 %v4737, 16
      %v4796 = vrot.slane %v4794, 5
      %v4797 = vsel %vm3751, %v4792, %v4796
      %v4798 = vshrl.u32 %v4737, 16
      %v4800 = vrot.slane %v4798, 4
      %v4801 = vor.u32 %v4800, %v4796
      %v4802 = vrot.slane %v4801, 4
      %v4804 = vshll.u32 %v4738, 16
      %v4806 = vrot.slane %v4804, 5
      %v4807 = vsel %vm3751, %v4802, %v4806
      %v4809 = vshrl.u32 %v4739, 16
      %v4811 = vrot.slane %v4809, 4
      %v4812 = vshll.u32 %v4739, 16
      %v4814 = vrot.slane %v4812, 5
      %v4815 = vor.u32 %v4811, %v4814
      %v4816 = vrot.slane %v4815, 4
      %v4818 = vshll.u32 %v4740, 16
      %v4820 = vrot.slane %v4818, 5
      %v4821 = vsel %vm3751, %v4816, %v4820
      %v4822 = vshrl.u32 %v4740, 16
      %v4824 = vrot.slane %v4822, 4
      %v4825 = vor.u32 %v4824, %v4820
      %v4826 = vrot.slane %v4825, 4
      %v4828 = vshll.u32 %v4741, 16
      %v4830 = vrot.slane %v4828, 5
      %v4831 = vsel %vm3751, %v4826, %v4830
      %v4833 = vshrl.u32 %v4742, 16
      %v4835 = vrot.slane %v4833, 4
      %v4836 = vshll.u32 %v4742, 16
      %v4838 = vrot.slane %v4836, 5
      %v4839 = vor.u32 %v4835, %v4838
      %v4840 = vrot.slane %v4839, 4
      %v4842 = vshll.u32 %v4743, 16
      %v4844 = vrot.slane %v4842, 5
      %v4845 = vsel %vm3751, %v4840, %v4844
      %v4846 = vshrl.u32 %v4743, 16
      %v4848 = vrot.slane %v4846, 4
      %v4849 = vor.u32 %v4848, %v4844
      %v4850 = vrot.slane %v4849, 4
      %v4852 = vshll.u32 %v4744, 16
      %v4854 = vrot.slane %v4852, 5
      %v4855 = vsel %vm3751, %v4850, %v4854
      %v4857 = vshrl.u32 %v4745, 16
      %v4859 = vrot.slane %v4857, 4
      %v4860 = vshll.u32 %v4745, 16
      %v4862 = vrot.slane %v4860, 5
      %v4863 = vor.u32 %v4859, %v4862
      %v4864 = vrot.slane %v4863, 4
      %v4866 = vshll.u32 %v4746, 16
      %v4868 = vrot.slane %v4866, 5
      %v4869 = vsel %vm3751, %v4864, %v4868
      %v4870 = vshrl.u32 %v4746, 16
      %v4872 = vrot.slane %v4870, 4
      %v4873 = vor.u32 %v4872, %v4868
      %v4874 = vrot.slane %v4873, 4
      %v4876 = vshll.u32 %v4747, 16
      %v4878 = vrot.slane %v4876, 5
      %v4879 = vsel %vm3751, %v4874, %v4878
      %v4881 = vshrl.u32 %v4748, 16
      %v4883 = vrot.slane %v4881, 4
      %v4884 = vshll.u32 %v4748, 16
      %v4886 = vrot.slane %v4884, 5
      %v4887 = vor.u32 %v4883, %v4886
      %v4888 = vrot.slane %v4887, 4
      %v4890 = vshll.u32 %v4749, 16
      %v4892 = vrot.slane %v4890, 5
      %v4893 = vsel %vm3751, %v4888, %v4892
      %v4894 = vshrl.u32 %v4749, 16
      %v4896 = vrot.slane %v4894, 4
      %v4897 = vor.u32 %v4896, %v4892
      %v4898 = vrot.slane %v4897, 4
      %v4900 = vshll.u32 %v4750, 16
      %v4902 = vrot.slane %v4900, 5
      %v4903 = vsel %vm3751, %v4898, %v4902
      %v4905 = vshrl.u32 %v4751, 16
      %v4907 = vrot.slane %v4905, 4
      %v4908 = vshll.u32 %v4751, 16
      %v4910 = vrot.slane %v4908, 5
      %v4911 = vor.u32 %v4907, %v4910
      %v4912 = vrot.slane %v4911, 4
      %v4914 = vshll.u32 %v4752, 16
      %v4916 = vrot.slane %v4914, 5
      %v4917 = vsel %vm3751, %v4912, %v4916
      %v4918 = vshrl.u32 %v4752, 16
      %v4920 = vrot.slane %v4918, 4
      %v4921 = vor.u32 %v4920, %v4916
      %v4922 = vrot.slane %v4921, 4
      %v4924 = vshll.u32 %v4753, 16
      %v4926 = vrot.slane %v4924, 5
      %v4927 = vsel %vm3751, %v4922, %v4926
      %v4929 = vshrl.u32 %v4754, 16
      %v4931 = vrot.slane %v4929, 4
      %v4932 = vshll.u32 %v4754, 16
      %v4934 = vrot.slane %v4932, 5
      %v4935 = vor.u32 %v4931, %v4934
      %v4936 = vrot.slane %v4935, 4
      %v4938 = vshll.u32 %v4755, 16
      %v4940 = vrot.slane %v4938, 5
      %v4941 = vsel %vm3751, %v4936, %v4940
      %v4942 = vshrl.u32 %v4755, 16
      %v4944 = vrot.slane %v4942, 4
      %v4945 = vor.u32 %v4944, %v4940
      %v4946 = vrot.slane %v4945, 4
      %v4948 = vshll.u32 %v4756, 16
      %v4950 = vrot.slane %v4948, 5
      %v4951 = vsel %vm3751, %v4946, %v4950
      %v4953 = vshrl.u32 %v4757, 16
      %v4955 = vrot.slane %v4953, 4
      %v4956 = vshll.u32 %v4757, 16
      %v4958 = vrot.slane %v4956, 5
      %v4959 = vor.u32 %v4955, %v4958
      %v4960 = vrot.slane %v4959, 4
      %v4962 = vshll.u32 %v4758, 16
      %v4964 = vrot.slane %v4962, 5
      %v4965 = vsel %vm3751, %v4960, %v4964
      %v4966 = vshrl.u32 %v4758, 16
      %v4968 = vrot.slane %v4966, 4
      %v4969 = vor.u32 %v4968, %v4964
      %v4970 = vrot.slane %v4969, 4
      %v4972 = vshll.u32 %v4759, 16
      %v4974 = vrot.slane %v4972, 5
      %v4975 = vsel %vm3751, %v4970, %v4974
      %v4977 = vshrl.u32 %v4760, 16
      %v4979 = vrot.slane %v4977, 4
      %v4980 = vshll.u32 %v4760, 16
      %v4982 = vrot.slane %v4980, 5
      %v4983 = vor.u32 %v4979, %v4982
      %v4984 = vrot.slane %v4983, 4
      %v4986 = vshll.u32 %v4761, 16
      %v4988 = vrot.slane %v4986, 5
      %v4989 = vsel %vm3751, %v4984, %v4988
      %v4990 = vshrl.u32 %v4761, 16
      %v4992 = vrot.slane %v4990, 4
      %v4993 = vor.u32 %v4992, %v4988
      %v4994 = vrot.slane %v4993, 4
      %v4996 = vshll.u32 %v4762, 16
      %v4998 = vrot.slane %v4996, 5
      %v4999 = vsel %vm3751, %v4994, %v4998
      %v5001 = vshrl.u32 %v4763, 16
      %v5003 = vrot.slane %v5001, 4
      %v5004 = vshll.u32 %v4763, 16
      %v5006 = vrot.slane %v5004, 5
      %v5007 = vor.u32 %v5003, %v5006
      %v5008 = vrot.slane %v5007, 4
      %v5010 = vshll.u32 %v4764, 16
      %v5012 = vrot.slane %v5010, 5
      %v5013 = vsel %vm3751, %v5008, %v5012
      %v5014 = vshrl.u32 %v4764, 16
      %v5016 = vrot.slane %v5014, 4
      %v5017 = vor.u32 %v5016, %v5012
      %v5018 = vrot.slane %v5017, 4
      %v5020 = vshll.u32 %v4765, 16
      %v5022 = vrot.slane %v5020, 5
      %v5023 = vsel %vm3751, %v5018, %v5022
      %v5025 = vshrl.u32 %v4766, 16
      %v5027 = vrot.slane %v5025, 4
      %v5028 = vshll.u32 %v4766, 16
      %v5030 = vrot.slane %v5028, 5
      %v5031 = vor.u32 %v5027, %v5030
      %v5032 = vrot.slane %v5031, 4
      %v5034 = vshll.u32 %v4767, 16
      %v5036 = vrot.slane %v5034, 5
      %v5037 = vsel %vm3751, %v5032, %v5036
      %v5038 = vshrl.u32 %v4767, 16
      %v5040 = vrot.slane %v5038, 4
      %v5041 = vor.u32 %v5040, %v5036
      %v5042 = vrot.slane %v5041, 4
      %v5044 = vshll.u32 %v4768, 16
      %v5046 = vrot.slane %v5044, 5
      %v5047 = vsel %vm3751, %v5042, %v5046
      %v5049 = vshrl.u32 %v4769, 16
      %v5051 = vrot.slane %v5049, 4
      %v5052 = vshll.u32 %v4769, 16
      %v5054 = vrot.slane %v5052, 5
      %v5055 = vor.u32 %v5051, %v5054
      %v5056 = vrot.slane %v5055, 4
      %v5058 = vshll.u32 %v4770, 16
      %v5060 = vrot.slane %v5058, 5
      %v5061 = vsel %vm3751, %v5056, %v5060
      %v5062 = vshrl.u32 %v4770, 16
      %v5064 = vrot.slane %v5062, 4
      %v5065 = vor.u32 %v5064, %v5060
      %v5066 = vrot.slane %v5065, 4
      %v5068 = vshll.u32 %v4771, 16
      %v5070 = vrot.slane %v5068, 5
      %v5071 = vsel %vm3751, %v5066, %v5070
      %v5073 = vshrl.u32 %v4772, 16
      %v5075 = vrot.slane %v5073, 4
      %v5076 = vshll.u32 %v4772, 16
      %v5078 = vrot.slane %v5076, 5
      %v5079 = vor.u32 %v5075, %v5078
      %v5080 = vrot.slane %v5079, 4
      %v5082 = vshll.u32 %v4773, 16
      %v5084 = vrot.slane %v5082, 5
      %v5085 = vsel %vm3751, %v5080, %v5084
      %v5086 = vshrl.u32 %v4773, 16
      %v5088 = vrot.slane %v5086, 4
      %v5089 = vor.u32 %v5088, %v5084
      %v5090 = vrot.slane %v5089, 4
      %v5092 = vshll.u32 %v4774, 16
      %v5094 = vrot.slane %v5092, 5
      %v5095 = vsel %vm3751, %v5090, %v5094
      %v5097 = vshrl.u32 %v4775, 16
      %v5099 = vrot.slane %v5097, 4
      %v5100 = vshll.u32 %v4775, 16
      %v5102 = vrot.slane %v5100, 5
      %v5103 = vor.u32 %v5099, %v5102
      %v5104 = vrot.slane %v5103, 4
      %v5106 = vshll.u32 %v4776, 16
      %v5108 = vrot.slane %v5106, 5
      %v5109 = vsel %vm3751, %v5104, %v5108
      %v5110 = vshrl.u32 %v4776, 16
      %v5112 = vrot.slane %v5110, 4
      %v5113 = vor.u32 %v5112, %v5108
      %v5114 = vrot.slane %v5113, 4
      %v5116 = vshll.u32 %v4777, 16
      %v5118 = vrot.slane %v5116, 5
      %v5119 = vsel %vm3751, %v5114, %v5118
      %v5121 = vshrl.u32 %v4778, 16
      %v5123 = vrot.slane %v5121, 4
      %v5124 = vshll.u32 %v4778, 16
      %v5126 = vrot.slane %v5124, 5
      %v5127 = vor.u32 %v5123, %v5126
      %v5128 = vrot.slane %v5127, 4
      %v5130 = vshll.u32 %v4779, 16
      %v5132 = vrot.slane %v5130, 5
      %v5133 = vsel %vm3751, %v5128, %v5132
      %v5134 = vshrl.u32 %v4779, 16
      %v5136 = vrot.slane %v5134, 4
      %v5137 = vor.u32 %v5136, %v5132
      %v5138 = vrot.slane %v5137, 4
      %v5140 = vshll.u32 %v4780, 16
      %v5142 = vrot.slane %v5140, 5
      %v5143 = vsel %vm3751, %v5138, %v5142
      %v5145 = vshrl.u32 %v4781, 16
      %v5147 = vrot.slane %v5145, 4
      %v5148 = vshll.u32 %v4781, 16
      %v5150 = vrot.slane %v5148, 5
      %v5151 = vor.u32 %v5147, %v5150
      %v5152 = vrot.slane %v5151, 4
      %v5154 = vshll.u32 %v4782, 16
      %v5156 = vrot.slane %v5154, 5
      %v5157 = vsel %vm3751, %v5152, %v5156
      %v5158 = vshrl.u32 %v4782, 16
      %v5160 = vrot.slane %v5158, 4
      %v5161 = vor.u32 %v5160, %v5156
      %v5162 = vrot.slane %v5161, 4
      %v5164 = vshll.u32 %v4783, 16
      %v5166 = vrot.slane %v5164, 5
      %v5167 = vsel %vm3751, %v5162, %v5166
      %v5168 = vunpack.c.l.b16 %v4797
      %v5169 = vunpack.c.l.b16 %v4807
      %v5170 = vunpack.c.l.b16 %v4821
      %v5171 = vunpack.c.l.b16 %v4831
      %v5172 = vunpack.c.l.b16 %v4845
      %v5173 = vunpack.c.l.b16 %v4855
      %v5174 = vunpack.c.l.b16 %v4869
      %v5175 = vunpack.c.l.b16 %v4879
      %v5176 = vunpack.c.l.b16 %v4893
      %v5177 = vunpack.c.l.b16 %v4903
      %v5178 = vunpack.c.l.b16 %v4917
      %v5179 = vunpack.c.l.b16 %v4927
      %v5180 = vunpack.c.l.b16 %v4941
      %v5181 = vunpack.c.l.b16 %v4951
      %v5182 = vunpack.c.l.b16 %v4965
      %v5183 = vunpack.c.l.b16 %v4975
      %v5184 = vunpack.c.l.b16 %v4989
      %v5185 = vunpack.c.l.b16 %v4999
      %v5186 = vunpack.c.l.b16 %v5013
      %v5187 = vunpack.c.l.b16 %v5023
      %v5188 = vunpack.c.l.b16 %v5037
      %v5189 = vunpack.c.l.b16 %v5047
      %v5190 = vunpack.c.l.b16 %v5061
      %v5191 = vunpack.c.l.b16 %v5071
      %v5192 = vunpack.c.l.b16 %v5085
      %v5193 = vunpack.c.l.b16 %v5095
      %v5194 = vunpack.c.l.b16 %v5109
      %v5195 = vunpack.c.l.b16 %v5119
      %v5196 = vunpack.c.l.b16 %v5133
      %v5197 = vunpack.c.l.b16 %v5143
      %v5198 = vunpack.c.l.b16 %v5157
      %v5199 = vunpack.c.l.b16 %v5167
      %v5200 = vpack.c.b16 %v5169, %v5168
      %v5201 = vpack.c.b16 %v5171, %v5170
      %v5202 = vpack.c.b16 %v5173, %v5172
      %v5203 = vpack.c.b16 %v5175, %v5174
      %v5204 = vpack.c.b16 %v5177, %v5176
      %v5205 = vpack.c.b16 %v5179, %v5178
      %v5206 = vpack.c.b16 %v5181, %v5180
      %v5207 = vpack.c.b16 %v5183, %v5182
      %v5208 = vpack.c.b16 %v5185, %v5184
      %v5209 = vpack.c.b16 %v5187, %v5186
      %v5210 = vpack.c.b16 %v5189, %v5188
      %v5211 = vpack.c.b16 %v5191, %v5190
      %v5212 = vpack.c.b16 %v5193, %v5192
      %v5213 = vpack.c.b16 %v5195, %v5194
      %v5214 = vpack.c.b16 %v5197, %v5196
      %v5215 = vpack.c.b16 %v5199, %v5198
      %5216 = vrot.lane.b32.xlu0 %v5200, 8
      %v5217 = vpop.permute.xlu0 %5216
      %5218 = vrot.lane.b32.xlu0 %v5201, 8
      %v5219 = vpop.permute.xlu0 %5218
      %5220 = vrot.lane.b32.xlu0 %v5202, 8
      %v5221 = vpop.permute.xlu0 %5220
      %5222 = vrot.lane.b32.xlu0 %v5203, 8
      %v5223 = vpop.permute.xlu0 %5222
      %5224 = vrot.lane.b32.xlu0 %v5204, 8
      %v5225 = vpop.permute.xlu0 %5224
      %5226 = vrot.lane.b32.xlu0 %v5205, 8
      %v5227 = vpop.permute.xlu0 %5226
      %5228 = vrot.lane.b32.xlu0 %v5206, 8
      %v5229 = vpop.permute.xlu0 %5228
      %5230 = vrot.lane.b32.xlu0 %v5207, 8
      %v5231 = vpop.permute.xlu0 %5230
      %5232 = vrot.lane.b32.xlu0 %v5208, 8
      %v5233 = vpop.permute.xlu0 %5232
      %5234 = vrot.lane.b32.xlu0 %v5209, 8
      %v5235 = vpop.permute.xlu0 %5234
      %5236 = vrot.lane.b32.xlu0 %v5210, 8
      %v5237 = vpop.permute.xlu0 %5236
      %5238 = vrot.lane.b32.xlu0 %v5211, 8
      %v5239 = vpop.permute.xlu0 %5238
      %5240 = vrot.lane.b32.xlu0 %v5212, 8
      %v5241 = vpop.permute.xlu0 %5240
      %5242 = vrot.lane.b32.xlu0 %v5213, 8
      %v5243 = vpop.permute.xlu0 %5242
      %5244 = vrot.lane.b32.xlu0 %v5214, 8
      %v5245 = vpop.permute.xlu0 %5244
      %5246 = vrot.lane.b32.xlu0 %v5215, 8
      %v5247 = vpop.permute.xlu0 %5246
      %5264 = vst.msk [vmem:[#allocation4] sm:$0xff] %vm4232, %v5217
      %5265 = vst.msk [vmem:[#allocation4 + $0x8] sm:$0xff] %vm4232, %v5219
      %5266 = vst.msk [vmem:[#allocation4 + $0x10] sm:$0xff] %vm4232, %v5221
      %5267 = vst.msk [vmem:[#allocation4 + $0x18] sm:$0xff] %vm4232, %v5223
      %5268 = vst.msk [vmem:[#allocation4 + $0x20] sm:$0xff] %vm4232, %v5225
      %5269 = vst.msk [vmem:[#allocation4 + $0x28] sm:$0xff] %vm4232, %v5227
      %5270 = vst.msk [vmem:[#allocation4 + $0x30] sm:$0xff] %vm4232, %v5229
      %5271 = vst.msk [vmem:[#allocation4 + $0x38] sm:$0xff] %vm4232, %v5231
      %5272 = vst.msk [vmem:[#allocation4 + $0x40] sm:$0xff] %vm4232, %v5233
      %5273 = vst.msk [vmem:[#allocation4 + $0x48] sm:$0xff] %vm4232, %v5235
      %5274 = vst.msk [vmem:[#allocation4 + $0x50] sm:$0xff] %vm4232, %v5237
      %5275 = vst.msk [vmem:[#allocation4 + $0x58] sm:$0xff] %vm4232, %v5239
      %5276 = vst.msk [vmem:[#allocation4 + $0x60] sm:$0xff] %vm4232, %v5241
      %5277 = vst.msk [vmem:[#allocation4 + $0x68] sm:$0xff] %vm4232, %v5243
      %5278 = vst.msk [vmem:[#allocation4 + $0x70] sm:$0xff] %vm4232, %v5245
      %5279 = vst.msk [vmem:[#allocation4 + $0x78] sm:$0xff] %vm4232, %v5247
      %v5280 = vld [vmem:[%s1014] sm:$0xe]
      %v5281 = vld [vmem:[%s1014 + $0x4] sm:$0xf]
      %v5282 = vld [vmem:[%s1014 + $0x8] sm:$0x1]
      %v5283 = vld [vmem:[%s1014 + $0xc] sm:$0xe]
      %v5284 = vld [vmem:[%s1014 + $0x10] sm:$0xf]
      %v5285 = vld [vmem:[%s1014 + $0x14] sm:$0x1]
      %v5286 = vld [vmem:[%s1014 + $0x18] sm:$0xe]
      %v5287 = vld [vmem:[%s1014 + $0x1c] sm:$0xf]
      %v5288 = vld [vmem:[%s1014 + $0x20] sm:$0x1]
      %v5289 = vld [vmem:[%s1014 + $0x24] sm:$0xe]
      %v5290 = vld [vmem:[%s1014 + $0x28] sm:$0xf]
      %v5291 = vld [vmem:[%s1014 + $0x2c] sm:$0x1]
      %v5292 = vld [vmem:[%s1014 + $0x30] sm:$0xe]
      %v5293 = vld [vmem:[%s1014 + $0x34] sm:$0xf]
      %v5294 = vld [vmem:[%s1014 + $0x38] sm:$0x1]
      %v5295 = vld [vmem:[%s1014 + $0x3c] sm:$0xe]
      %v5296 = vld [vmem:[%s1014 + $0x40] sm:$0xf]
      %v5297 = vld [vmem:[%s1014 + $0x44] sm:$0x1]
      %v5298 = vld [vmem:[%s1014 + $0x48] sm:$0xe]
      %v5299 = vld [vmem:[%s1014 + $0x4c] sm:$0xf]
      %v5300 = vld [vmem:[%s1014 + $0x50] sm:$0x1]
      %v5301 = vld [vmem:[%s1014 + $0x54] sm:$0xe]
      %v5302 = vld [vmem:[%s1014 + $0x58] sm:$0xf]
      %v5303 = vld [vmem:[%s1014 + $0x5c] sm:$0x1]
      %v5304 = vld [vmem:[%s1014 + $0x60] sm:$0xe]
      %v5305 = vld [vmem:[%s1014 + $0x64] sm:$0xf]
      %v5306 = vld [vmem:[%s1014 + $0x68] sm:$0x1]
      %v5307 = vld [vmem:[%s1014 + $0x6c] sm:$0xe]
      %v5308 = vld [vmem:[%s1014 + $0x70] sm:$0xf]
      %v5309 = vld [vmem:[%s1014 + $0x74] sm:$0x1]
      %v5310 = vld [vmem:[%s1014 + $0x78] sm:$0xe]
      %v5311 = vld [vmem:[%s1014 + $0x7c] sm:$0xf]
      %v5312 = vld [vmem:[%s1014 + $0x80] sm:$0x1]
      %v5313 = vld [vmem:[%s1014 + $0x84] sm:$0xe]
      %v5314 = vld [vmem:[%s1014 + $0x88] sm:$0xf]
      %v5315 = vld [vmem:[%s1014 + $0x8c] sm:$0x1]
      %v5316 = vld [vmem:[%s1014 + $0x90] sm:$0xe]
      %v5317 = vld [vmem:[%s1014 + $0x94] sm:$0xf]
      %v5318 = vld [vmem:[%s1014 + $0x98] sm:$0x1]
      %v5319 = vld [vmem:[%s1014 + $0x9c] sm:$0xe]
      %v5320 = vld [vmem:[%s1014 + $0xa0] sm:$0xf]
      %v5321 = vld [vmem:[%s1014 + $0xa4] sm:$0x1]
      %v5322 = vld [vmem:[%s1014 + $0xa8] sm:$0xe]
      %v5323 = vld [vmem:[%s1014 + $0xac] sm:$0xf]
      %v5324 = vld [vmem:[%s1014 + $0xb0] sm:$0x1]
      %v5325 = vld [vmem:[%s1014 + $0xb4] sm:$0xe]
      %v5326 = vld [vmem:[%s1014 + $0xb8] sm:$0xf]
      %v5327 = vld [vmem:[%s1014 + $0xbc] sm:$0x1]
      %v5376 = vrot.slane %v5280, 5
      %v5377 = vrot.slane %v5376, 4
      %v5378 = vrot.slane %v5281, 5
      %v5379 = vsel %vm4347, %v5377, %v5378
      %v5380 = vrot.slane %v5378, 4
      %v5381 = vrot.slane %v5282, 5
      %v5382 = vsel %vm4347, %v5380, %v5381
      %v5383 = vrot.slane %v5283, 5
      %v5384 = vrot.slane %v5383, 4
      %v5385 = vrot.slane %v5284, 5
      %v5386 = vsel %vm4347, %v5384, %v5385
      %v5387 = vrot.slane %v5385, 4
      %v5388 = vrot.slane %v5285, 5
      %v5389 = vsel %vm4347, %v5387, %v5388
      %v5390 = vrot.slane %v5286, 5
      %v5391 = vrot.slane %v5390, 4
      %v5392 = vrot.slane %v5287, 5
      %v5393 = vsel %vm4347, %v5391, %v5392
      %v5394 = vrot.slane %v5392, 4
      %v5395 = vrot.slane %v5288, 5
      %v5396 = vsel %vm4347, %v5394, %v5395
      %v5397 = vrot.slane %v5289, 5
      %v5398 = vrot.slane %v5397, 4
      %v5399 = vrot.slane %v5290, 5
      %v5400 = vsel %vm4347, %v5398, %v5399
      %v5401 = vrot.slane %v5399, 4
      %v5402 = vrot.slane %v5291, 5
      %v5403 = vsel %vm4347, %v5401, %v5402
      %v5404 = vrot.slane %v5292, 5
      %v5405 = vrot.slane %v5404, 4
      %v5406 = vrot.slane %v5293, 5
      %v5407 = vsel %vm4347, %v5405, %v5406
      %v5408 = vrot.slane %v5406, 4
      %v5409 = vrot.slane %v5294, 5
      %v5410 = vsel %vm4347, %v5408, %v5409
      %v5411 = vrot.slane %v5295, 5
      %v5412 = vrot.slane %v5411, 4
      %v5413 = vrot.slane %v5296, 5
      %v5414 = vsel %vm4347, %v5412, %v5413
      %v5415 = vrot.slane %v5413, 4
      %v5416 = vrot.slane %v5297, 5
      %v5417 = vsel %vm4347, %v5415, %v5416
      %v5418 = vrot.slane %v5298, 5
      %v5419 = vrot.slane %v5418, 4
      %v5420 = vrot.slane %v5299, 5
      %v5421 = vsel %vm4347, %v5419, %v5420
      %v5422 = vrot.slane %v5420, 4
      %v5423 = vrot.slane %v5300, 5
      %v5424 = vsel %vm4347, %v5422, %v5423
      %v5425 = vrot.slane %v5301, 5
      %v5426 = vrot.slane %v5425, 4
      %v5427 = vrot.slane %v5302, 5
      %v5428 = vsel %vm4347, %v5426, %v5427
      %v5429 = vrot.slane %v5427, 4
      %v5430 = vrot.slane %v5303, 5
      %v5431 = vsel %vm4347, %v5429, %v5430
      %v5432 = vrot.slane %v5304, 5
      %v5433 = vrot.slane %v5432, 4
      %v5434 = vrot.slane %v5305, 5
      %v5435 = vsel %vm4347, %v5433, %v5434
      %v5436 = vrot.slane %v5434, 4
      %v5437 = vrot.slane %v5306, 5
      %v5438 = vsel %vm4347, %v5436, %v5437
      %v5439 = vrot.slane %v5307, 5
      %v5440 = vrot.slane %v5439, 4
      %v5441 = vrot.slane %v5308, 5
      %v5442 = vsel %vm4347, %v5440, %v5441
      %v5443 = vrot.slane %v5441, 4
      %v5444 = vrot.slane %v5309, 5
      %v5445 = vsel %vm4347, %v5443, %v5444
      %v5446 = vrot.slane %v5310, 5
      %v5447 = vrot.slane %v5446, 4
      %v5448 = vrot.slane %v5311, 5
      %v5449 = vsel %vm4347, %v5447, %v5448
      %v5450 = vrot.slane %v5448, 4
      %v5451 = vrot.slane %v5312, 5
      %v5452 = vsel %vm4347, %v5450, %v5451
      %v5453 = vrot.slane %v5313, 5
      %v5454 = vrot.slane %v5453, 4
      %v5455 = vrot.slane %v5314, 5
      %v5456 = vsel %vm4347, %v5454, %v5455
      %v5457 = vrot.slane %v5455, 4
      %v5458 = vrot.slane %v5315, 5
      %v5459 = vsel %vm4347, %v5457, %v5458
      %v5460 = vrot.slane %v5316, 5
      %v5461 = vrot.slane %v5460, 4
      %v5462 = vrot.slane %v5317, 5
      %v5463 = vsel %vm4347, %v5461, %v5462
      %v5464 = vrot.slane %v5462, 4
      %v5465 = vrot.slane %v5318, 5
      %v5466 = vsel %vm4347, %v5464, %v5465
      %v5467 = vrot.slane %v5319, 5
      %v5468 = vrot.slane %v5467, 4
      %v5469 = vrot.slane %v5320, 5
      %v5470 = vsel %vm4347, %v5468, %v5469
      %v5471 = vrot.slane %v5469, 4
      %v5472 = vrot.slane %v5321, 5
      %v5473 = vsel %vm4347, %v5471, %v5472
      %v5474 = vrot.slane %v5322, 5
      %v5475 = vrot.slane %v5474, 4
      %v5476 = vrot.slane %v5323, 5
      %v5477 = vsel %vm4347, %v5475, %v5476
      %v5478 = vrot.slane %v5476, 4
      %v5479 = vrot.slane %v5324, 5
      %v5480 = vsel %vm4347, %v5478, %v5479
      %v5481 = vrot.slane %v5325, 5
      %v5482 = vrot.slane %v5481, 4
      %v5483 = vrot.slane %v5326, 5
      %v5484 = vsel %vm4347, %v5482, %v5483
      %v5485 = vrot.slane %v5483, 4
      %v5486 = vrot.slane %v5327, 5
      %v5487 = vsel %vm4347, %v5485, %v5486
      %v5488 = vunpack.c.l.b16 %v5379
      %v5489 = vunpack.c.l.b16 %v5382
      %v5490 = vunpack.c.l.b16 %v5386
      %v5491 = vunpack.c.l.b16 %v5389
      %v5492 = vunpack.c.l.b16 %v5393
      %v5493 = vunpack.c.l.b16 %v5396
      %v5494 = vunpack.c.l.b16 %v5400
      %v5495 = vunpack.c.l.b16 %v5403
      %v5496 = vunpack.c.l.b16 %v5407
      %v5497 = vunpack.c.l.b16 %v5410
      %v5498 = vunpack.c.l.b16 %v5414
      %v5499 = vunpack.c.l.b16 %v5417
      %v5500 = vunpack.c.l.b16 %v5421
      %v5501 = vunpack.c.l.b16 %v5424
      %v5502 = vunpack.c.l.b16 %v5428
      %v5503 = vunpack.c.l.b16 %v5431
      %v5504 = vunpack.c.l.b16 %v5435
      %v5505 = vunpack.c.l.b16 %v5438
      %v5506 = vunpack.c.l.b16 %v5442
      %v5507 = vunpack.c.l.b16 %v5445
      %v5508 = vunpack.c.l.b16 %v5449
      %v5509 = vunpack.c.l.b16 %v5452
      %v5510 = vunpack.c.l.b16 %v5456
      %v5511 = vunpack.c.l.b16 %v5459
      %v5512 = vunpack.c.l.b16 %v5463
      %v5513 = vunpack.c.l.b16 %v5466
      %v5514 = vunpack.c.l.b16 %v5470
      %v5515 = vunpack.c.l.b16 %v5473
      %v5516 = vunpack.c.l.b16 %v5477
      %v5517 = vunpack.c.l.b16 %v5480
      %v5518 = vunpack.c.l.b16 %v5484
      %v5519 = vunpack.c.l.b16 %v5487
      %v5520 = vpack.c.b16 %v5489, %v5488
      %v5521 = vpack.c.b16 %v5491, %v5490
      %v5522 = vpack.c.b16 %v5493, %v5492
      %v5523 = vpack.c.b16 %v5495, %v5494
      %v5524 = vpack.c.b16 %v5497, %v5496
      %v5525 = vpack.c.b16 %v5499, %v5498
      %v5526 = vpack.c.b16 %v5501, %v5500
      %v5527 = vpack.c.b16 %v5503, %v5502
      %v5528 = vpack.c.b16 %v5505, %v5504
      %v5529 = vpack.c.b16 %v5507, %v5506
      %v5530 = vpack.c.b16 %v5509, %v5508
      %v5531 = vpack.c.b16 %v5511, %v5510
      %v5532 = vpack.c.b16 %v5513, %v5512
      %v5533 = vpack.c.b16 %v5515, %v5514
      %v5534 = vpack.c.b16 %v5517, %v5516
      %v5535 = vpack.c.b16 %v5519, %v5518
      %5536 = vrot.lane.b32.xlu0 %v5520, 16
      %v5537 = vpop.permute.xlu0 %5536
      %5538 = vrot.lane.b32.xlu0 %v5521, 16
      %v5539 = vpop.permute.xlu0 %5538
      %5540 = vrot.lane.b32.xlu0 %v5522, 16
      %v5541 = vpop.permute.xlu0 %5540
      %5542 = vrot.lane.b32.xlu0 %v5523, 16
      %v5543 = vpop.permute.xlu0 %5542
      %5544 = vrot.lane.b32.xlu0 %v5524, 16
      %v5545 = vpop.permute.xlu0 %5544
      %5546 = vrot.lane.b32.xlu0 %v5525, 16
      %v5547 = vpop.permute.xlu0 %5546
      %5548 = vrot.lane.b32.xlu0 %v5526, 16
      %v5549 = vpop.permute.xlu0 %5548
      %5550 = vrot.lane.b32.xlu0 %v5527, 16
      %v5551 = vpop.permute.xlu0 %5550
      %5552 = vrot.lane.b32.xlu0 %v5528, 16
      %v5553 = vpop.permute.xlu0 %5552
      %5554 = vrot.lane.b32.xlu0 %v5529, 16
      %v5555 = vpop.permute.xlu0 %5554
      %5556 = vrot.lane.b32.xlu0 %v5530, 16
      %v5557 = vpop.permute.xlu0 %5556
      %5558 = vrot.lane.b32.xlu0 %v5531, 16
      %v5559 = vpop.permute.xlu0 %5558
      %5560 = vrot.lane.b32.xlu0 %v5532, 16
      %v5561 = vpop.permute.xlu0 %5560
      %5562 = vrot.lane.b32.xlu0 %v5533, 16
      %v5563 = vpop.permute.xlu0 %5562
      %5564 = vrot.lane.b32.xlu0 %v5534, 16
      %v5565 = vpop.permute.xlu0 %5564
      %5566 = vrot.lane.b32.xlu0 %v5535, 16
      %v5567 = vpop.permute.xlu0 %5566
      %5584 = vst.msk [vmem:[#allocation4] sm:$0xff] %vm4556, %v5537
      %5585 = vst.msk [vmem:[#allocation4 + $0x8] sm:$0xff] %vm4556, %v5539
      %5586 = vst.msk [vmem:[#allocation4 + $0x10] sm:$0xff] %vm4556, %v5541
      %5587 = vst.msk [vmem:[#allocation4 + $0x18] sm:$0xff] %vm4556, %v5543
      %5588 = vst.msk [vmem:[#allocation4 + $0x20] sm:$0xff] %vm4556, %v5545
      %5589 = vst.msk [vmem:[#allocation4 + $0x28] sm:$0xff] %vm4556, %v5547
      %5590 = vst.msk [vmem:[#allocation4 + $0x30] sm:$0xff] %vm4556, %v5549
      %5591 = vst.msk [vmem:[#allocation4 + $0x38] sm:$0xff] %vm4556, %v5551
      %5592 = vst.msk [vmem:[#allocation4 + $0x40] sm:$0xff] %vm4556, %v5553
      %5593 = vst.msk [vmem:[#allocation4 + $0x48] sm:$0xff] %vm4556, %v5555
      %5594 = vst.msk [vmem:[#allocation4 + $0x50] sm:$0xff] %vm4556, %v5557
      %5595 = vst.msk [vmem:[#allocation4 + $0x58] sm:$0xff] %vm4556, %v5559
      %5596 = vst.msk [vmem:[#allocation4 + $0x60] sm:$0xff] %vm4556, %v5561
      %5597 = vst.msk [vmem:[#allocation4 + $0x68] sm:$0xff] %vm4556, %v5563
      %5598 = vst.msk [vmem:[#allocation4 + $0x70] sm:$0xff] %vm4556, %v5565
      %5599 = vst.msk [vmem:[#allocation4 + $0x78] sm:$0xff] %vm4556, %v5567
      %v5600 = vld [vmem:[#allocation4] sm:$0xff]
      %v5601 = vld [vmem:[#allocation4 + $0x8] sm:$0xff]
      %v5602 = vld [vmem:[#allocation4 + $0x10] sm:$0xff]
      %v5603 = vld [vmem:[#allocation4 + $0x18] sm:$0xff]
      %v5604 = vld [vmem:[#allocation4 + $0x20] sm:$0xff]
      %v5605 = vld [vmem:[#allocation4 + $0x28] sm:$0xff]
      %v5606 = vld [vmem:[#allocation4 + $0x30] sm:$0xff]
      %v5607 = vld [vmem:[#allocation4 + $0x38] sm:$0xff]
      %v5608 = vld [vmem:[#allocation4 + $0x40] sm:$0xff]
      %v5609 = vld [vmem:[#allocation4 + $0x48] sm:$0xff]
      %v5610 = vld [vmem:[#allocation4 + $0x50] sm:$0xff]
      %v5611 = vld [vmem:[#allocation4 + $0x58] sm:$0xff]
      %v5612 = vld [vmem:[#allocation4 + $0x60] sm:$0xff]
      %v5613 = vld [vmem:[#allocation4 + $0x68] sm:$0xff]
      %v5614 = vld [vmem:[#allocation4 + $0x70] sm:$0xff]
      %v5615 = vld [vmem:[#allocation4 + $0x78] sm:$0xff]
      %s5616 = scalar_lea.vmem %s4, 12
      %v5617 = vld [vmem:[%s5616] sm:$0xf]
      %v5618 = vld [vmem:[%s5616 + $0x4] sm:$0xf]
      %v5619 = vld [vmem:[%s5616 + $0x8] sm:$0xf]
      %v5623 = vunpack.c.l.b16 %v5617
      %v5624 = vunpack.c.l.b16 %v5618
      %v5625 = vunpack.c.l.b16 %v5619
      %v5626 = vpack.c.b16 %v5624, %v5623
      %v5627 = vpack.c.b16 %v5625, %v5625
      %vm5629 = vcmask 195584
      %v5631 = vsel %vm5629, %v5600, 0
      %v5634 = vsel %vm5629, %v5601, 0
      %v5637 = vsel %vm5629, %v5602, 0
      %v5640 = vsel %vm5629, %v5603, 0
      %v5643 = vsel %vm5629, %v5604, 0
      %v5646 = vsel %vm5629, %v5605, 0
      %v5649 = vsel %vm5629, %v5606, 0
      %v5652 = vsel %vm5629, %v5607, 0
      %v5655 = vsel %vm5629, %v5608, 0
      %v5658 = vsel %vm5629, %v5609, 0
      %v5661 = vsel %vm5629, %v5610, 0
      %v5664 = vsel %vm5629, %v5611, 0
      %v5667 = vsel %vm5629, %v5612, 0
      %v5670 = vsel %vm5629, %v5613, 0
      %v5673 = vsel %vm5629, %v5614, 0
      %v5676 = vsel %vm5629, %v5615, 0
      %v5679 = vsel %vm1181, %v5627, 0
      %5681 = vmatprep.subr.bf16.mxu0 0
      %5682 = vmatpush1.bf16.msra.mxu0 %v5626
      %5683 = vmatprep.subr.bf16.mxu0 0
      %5684 = vmatpush1.bf16.msra.mxu0 %v5679
      %5685 = vmatprep.subr.bf16.mxu0 0
      %5686 = vmatpush1.bf16.msra.mxu0 0
      %5687 = vmatprep.subr.bf16.mxu0 0
      %5688 = vmatpush1.bf16.msra.mxu0 0
      %5689 = vmatprep.subr.bf16.mxu0 0
      %5690 = vmatpush1.bf16.msra.mxu0 0
      %5691 = vmatprep.subr.bf16.mxu0 0
      %5692 = vmatpush1.bf16.msra.mxu0 0
      %5693 = vmatprep.subr.bf16.mxu0 0
      %5694 = vmatpush1.bf16.msra.mxu0 0
      %5695 = vmatprep.subr.bf16.mxu0 0
      %5696 = vmatpush1.bf16.msra.mxu0 0
      %5697 = vmatprep.subr.bf16.mxu0 0
      %5698 = vmatpush1.bf16.msra.mxu0 0
      %5699 = vmatprep.subr.bf16.mxu0 0
      %5700 = vmatpush1.bf16.msra.mxu0 0
      %5701 = vmatprep.subr.bf16.mxu0 0
      %5702 = vmatpush1.bf16.msra.mxu0 0
      %5703 = vmatprep.subr.bf16.mxu0 0
      %5704 = vmatpush1.bf16.msra.mxu0 0
      %5705 = vmatprep.subr.bf16.mxu0 0
      %5706 = vmatpush1.bf16.msra.mxu0 0
      %5707 = vmatprep.subr.bf16.mxu0 0
      %5708 = vmatpush1.bf16.msra.mxu0 0
      %5709 = vmatprep.subr.bf16.mxu0 0
      %5710 = vmatpush1.bf16.msra.mxu0 0
      %5711 = vmatprep.subr.bf16.mxu0 0
      %5712 = vmatpush1.bf16.msra.mxu0 0
      %5713 = vmatprep.mubr.bf16.mxu0 0
      %5714 = vmatmul.mubr.bf16.gmra.mrb[0].mxu0 %v5631
      %v5715 = vpop.f32.mrb[0].mxu0
      %v5716 = vadd.f32 0.0, %v5715
      %v5717 = vpop.f32.mrb[0].mxu0
      %v5718 = vpop.f32.mrb[0].mxu0
      %v5719 = vadd.f32 0.0, %v5718
      %v5720 = vpop.f32.mrb[0].mxu0
      %5721 = vmatprep.mubr.bf16.mxu0 0
      %5722 = vmatmul.mubr.bf16.gmra.mrb[0].mxu0 %v5634
      %v5723 = vpop.f32.mrb[0].mxu0
      %v5724 = vadd.f32 0.0, %v5723
      %v5725 = vpop.f32.mrb[0].mxu0
      %v5726 = vpop.f32.mrb[0].mxu0
      %v5727 = vadd.f32 0.0, %v5726
      %v5728 = vpop.f32.mrb[0].mxu0
      %5729 = vmatprep.mubr.bf16.mxu0 0
      %5730 = vmatmul.mubr.bf16.gmra.mrb[0].mxu0 %v5637
      %v5731 = vpop.f32.mrb[0].mxu0
      %v5732 = vadd.f32 0.0, %v5731
      %v5733 = vpop.f32.mrb[0].mxu0
      %v5734 = vpop.f32.mrb[0].mxu0
      %v5735 = vadd.f32 0.0, %v5734
      %v5736 = vpop.f32.mrb[0].mxu0
      %5737 = vmatprep.mubr.bf16.mxu0 0
      %5738 = vmatmul.mubr.bf16.gmra.mrb[0].mxu0 %v5640
      %v5739 = vpop.f32.mrb[0].mxu0
      %v5740 = vadd.f32 0.0, %v5739
      %v5741 = vpop.f32.mrb[0].mxu0
      %v5742 = vpop.f32.mrb[0].mxu0
      %v5743 = vadd.f32 0.0, %v5742
      %v5744 = vpop.f32.mrb[0].mxu0
      %5745 = vmatprep.mubr.bf16.mxu0 0
      %5746 = vmatmul.mubr.bf16.gmra.mrb[0].mxu0 %v5643
      %v5747 = vpop.f32.mrb[0].mxu0
      %v5748 = vadd.f32 0.0, %v5747
      %v5749 = vpop.f32.mrb[0].mxu0
      %v5750 = vpop.f32.mrb[0].mxu0
      %v5751 = vadd.f32 0.0, %v5750
      %v5752 = vpop.f32.mrb[0].mxu0
      %5753 = vmatprep.mubr.bf16.mxu0 0
      %5754 = vmatmul.mubr.bf16.gmra.mrb[0].mxu0 %v5646
      %v5755 = vpop.f32.mrb[0].mxu0
      %v5756 = vadd.f32 0.0, %v5755
      %v5757 = vpop.f32.mrb[0].mxu0
      %v5758 = vpop.f32.mrb[0].mxu0
      %v5759 = vadd.f32 0.0, %v5758
      %v5760 = vpop.f32.mrb[0].mxu0
      %5761 = vmatprep.mubr.bf16.mxu0 0
      %5762 = vmatmul.mubr.bf16.gmra.mrb[0].mxu0 %v5649
      %v5763 = vpop.f32.mrb[0].mxu0
      %v5764 = vadd.f32 0.0, %v5763
      %v5765 = vpop.f32.mrb[0].mxu0
      %v5766 = vpop.f32.mrb[0].mxu0
      %v5767 = vadd.f32 0.0, %v5766
      %v5768 = vpop.f32.mrb[0].mxu0
      %5769 = vmatprep.mubr.bf16.mxu0 0
      %5770 = vmatmul.mubr.bf16.gmra.mrb[0].mxu0 %v5652
      %v5771 = vpop.f32.mrb[0].mxu0
      %v5772 = vadd.f32 0.0, %v5771
      %v5773 = vpop.f32.mrb[0].mxu0
      %v5774 = vpop.f32.mrb[0].mxu0
      %v5775 = vadd.f32 0.0, %v5774
      %v5776 = vpop.f32.mrb[0].mxu0
      %5777 = vmatprep.mubr.bf16.mxu0 0
      %5778 = vmatmul.mubr.bf16.gmra.mrb[0].mxu0 %v5655
      %v5779 = vpop.f32.mrb[0].mxu0
      %v5780 = vadd.f32 0.0, %v5779
      %v5781 = vpop.f32.mrb[0].mxu0
      %v5782 = vpop.f32.mrb[0].mxu0
      %v5783 = vadd.f32 0.0, %v5782
      %v5784 = vpop.f32.mrb[0].mxu0
      %5785 = vmatprep.mubr.bf16.mxu0 0
      %5786 = vmatmul.mubr.bf16.gmra.mrb[0].mxu0 %v5658
      %v5787 = vpop.f32.mrb[0].mxu0
      %v5788 = vadd.f32 0.0, %v5787
      %v5789 = vpop.f32.mrb[0].mxu0
      %v5790 = vpop.f32.mrb[0].mxu0
      %v5791 = vadd.f32 0.0, %v5790
      %v5792 = vpop.f32.mrb[0].mxu0
      %5793 = vmatprep.mubr.bf16.mxu0 0
      %5794 = vmatmul.mubr.bf16.gmra.mrb[0].mxu0 %v5661
      %v5795 = vpop.f32.mrb[0].mxu0
      %v5796 = vadd.f32 0.0, %v5795
      %v5797 = vpop.f32.mrb[0].mxu0
      %v5798 = vpop.f32.mrb[0].mxu0
      %v5799 = vadd.f32 0.0, %v5798
      %v5800 = vpop.f32.mrb[0].mxu0
      %5801 = vmatprep.mubr.bf16.mxu0 0
      %5802 = vmatmul.mubr.bf16.gmra.mrb[0].mxu0 %v5664
      %v5803 = vpop.f32.mrb[0].mxu0
      %v5804 = vadd.f32 0.0, %v5803
      %v5805 = vpop.f32.mrb[0].mxu0
      %v5806 = vpop.f32.mrb[0].mxu0
      %v5807 = vadd.f32 0.0, %v5806
      %v5808 = vpop.f32.mrb[0].mxu0
      %5809 = vmatprep.mubr.bf16.mxu0 0
      %5810 = vmatmul.mubr.bf16.gmra.mrb[0].mxu0 %v5667
      %v5811 = vpop.f32.mrb[0].mxu0
      %v5812 = vadd.f32 0.0, %v5811
      %v5813 = vpop.f32.mrb[0].mxu0
      %v5814 = vpop.f32.mrb[0].mxu0
      %v5815 = vadd.f32 0.0, %v5814
      %v5816 = vpop.f32.mrb[0].mxu0
      %5817 = vmatprep.mubr.bf16.mxu0 0
      %5818 = vmatmul.mubr.bf16.gmra.mrb[0].mxu0 %v5670
      %v5819 = vpop.f32.mrb[0].mxu0
      %v5820 = vadd.f32 0.0, %v5819
      %v5821 = vpop.f32.mrb[0].mxu0
      %v5822 = vpop.f32.mrb[0].mxu0
      %v5823 = vadd.f32 0.0, %v5822
      %v5824 = vpop.f32.mrb[0].mxu0
      %5825 = vmatprep.mubr.bf16.mxu0 0
      %5826 = vmatmul.mubr.bf16.gmra.mrb[0].mxu0 %v5673
      %v5827 = vpop.f32.mrb[0].mxu0
      %v5828 = vadd.f32 0.0, %v5827
      %v5829 = vpop.f32.mrb[0].mxu0
      %v5830 = vpop.f32.mrb[0].mxu0
      %v5831 = vadd.f32 0.0, %v5830
      %v5832 = vpop.f32.mrb[0].mxu0
      %5833 = vmatprep.mubr.bf16.mxu0 0
      %5834 = vmatmul.mubr.bf16.gmra.mrb[0].mxu0 %v5676
      %v5835 = vpop.f32.mrb[0].mxu0
      %v5836 = vadd.f32 0.0, %v5835
      %v5837 = vpop.f32.mrb[0].mxu0
      %v5838 = vpop.f32.mrb[0].mxu0
      %v5839 = vadd.f32 0.0, %v5838
      %v5840 = vpop.f32.mrb[0].mxu0
      %5841 = vdwg.mxu0
      %v5845 = vunpack.c.l.b16 %v4589
      %v5846 = vunpack.c.l.b16 %v4590
      %v5847 = vunpack.c.l.b16 %v4591
      %v5848 = vpack.c.b16 %v5846, %v5845
      %v5849 = vpack.c.b16 %v5847, %v5847
      %v5852 = vsel %vm5629, %v4573, 0
      %v5855 = vsel %vm5629, %v4574, 0
      %v5858 = vsel %vm5629, %v4575, 0
      %v5861 = vsel %vm5629, %v4576, 0
      %v5864 = vsel %vm5629, %v4577, 0
      %v5867 = vsel %vm5629, %v4578, 0
      %v5870 = vsel %vm5629, %v4579, 0
      %v5873 = vsel %vm5629, %v4580, 0
      %v5876 = vsel %vm5629, %v4581, 0
      %v5879 = vsel %vm5629, %v4582, 0
      %v5882 = vsel %vm5629, %v4583, 0
      %v5885 = vsel %vm5629, %v4584, 0
      %v5888 = vsel %vm5629, %v4585, 0
      %v5891 = vsel %vm5629, %v4586, 0
      %v5894 = vsel %vm5629, %v4587, 0
      %v5897 = vsel %vm5629, %v4588, 0
      %v5900 = vsel %vm1181, %v5849, 0
      %5902 = vmatprep.subr.bf16.mxu0 0
      %5903 = vmatpush1.bf16.msra.mxu0 %v5848
      %5904 = vmatprep.subr.bf16.mxu0 0
      %5905 = vmatpush1.bf16.msra.mxu0 %v5900
      %5906 = vmatprep.subr.bf16.mxu0 0
      %5907 = vmatpush1.bf16.msra.mxu0 0
      %5908 = vmatprep.subr.bf16.mxu0 0
      %5909 = vmatpush1.bf16.msra.mxu0 0
      %5910 = vmatprep.subr.bf16.mxu0 0
      %5911 = vmatpush1.bf16.msra.mxu0 0
      %5912 = vmatprep.subr.bf16.mxu0 0
      %5913 = vmatpush1.bf16.msra.mxu0 0
      %5914 = vmatprep.subr.bf16.mxu0 0
      %5915 = vmatpush1.bf16.msra.mxu0 0
      %5916 = vmatprep.subr.bf16.mxu0 0
      %5917 = vmatpush1.bf16.msra.mxu0 0
      %5918 = vmatprep.subr.bf16.mxu0 0
      %5919 = vmatpush1.bf16.msra.mxu0 0
      %5920 = vmatprep.subr.bf16.mxu0 0
      %5921 = vmatpush1.bf16.msra.mxu0 0
      %5922 = vmatprep.subr.bf16.mxu0 0
      %5923 = vmatpush1.bf16.msra.mxu0 0
      %5924 = vmatprep.subr.bf16.mxu0 0
      %5925 = vmatpush1.bf16.msra.mxu0 0
      %5926 = vmatprep.subr.bf16.mxu0 0
      %5927 = vmatpush1.bf16.msra.mxu0 0
      %5928 = vmatprep.subr.bf16.mxu0 0
      %5929 = vmatpush1.bf16.msra.mxu0 0
      %5930 = vmatprep.subr.bf16.mxu0 0
      %5931 = vmatpush1.bf16.msra.mxu0 0
      %5932 = vmatprep.subr.bf16.mxu0 0
      %5933 = vmatpush1.bf16.msra.mxu0 0
      %5934 = vmatprep.mubr.bf16.mxu0 0
      %5935 = vmatmul.mubr.bf16.gmra.mrb[0].mxu0 %v5852
      %v5936 = vpop.f32.mrb[0].mxu0
      %v5937 = vadd.f32 %v5716, %v5936
      %v5938 = vpop.f32.mrb[0].mxu0
      %v5939 = vpop.f32.mrb[0].mxu0
      %v5940 = vadd.f32 %v5719, %v5939
      %v5941 = vpop.f32.mrb[0].mxu0
      %5942 = vmatprep.mubr.bf16.mxu0 0
      %5943 = vmatmul.mubr.bf16.gmra.mrb[0].mxu0 %v5855
      %v5944 = vpop.f32.mrb[0].mxu0
      %v5945 = vadd.f32 %v5724, %v5944
      %v5946 = vpop.f32.mrb[0].mxu0
      %v5947 = vpop.f32.mrb[0].mxu0
      %v5948 = vadd.f32 %v5727, %v5947
      %v5949 = vpop.f32.mrb[0].mxu0
      %5950 = vmatprep.mubr.bf16.mxu0 0
      %5951 = vmatmul.mubr.bf16.gmra.mrb[0].mxu0 %v5858
      %v5952 = vpop.f32.mrb[0].mxu0
      %v5953 = vadd.f32 %v5732, %v5952
      %v5954 = vpop.f32.mrb[0].mxu0
      %v5955 = vpop.f32.mrb[0].mxu0
      %v5956 = vadd.f32 %v5735, %v5955
      %v5957 = vpop.f32.mrb[0].mxu0
      %5958 = vmatprep.mubr.bf16.mxu0 0
      %5959 = vmatmul.mubr.bf16.gmra.mrb[0].mxu0 %v5861
      %v5960 = vpop.f32.mrb[0].mxu0
      %v5961 = vadd.f32 %v5740, %v5960
      %v5962 = vpop.f32.mrb[0].mxu0
      %v5963 = vpop.f32.mrb[0].mxu0
      %v5964 = vadd.f32 %v5743, %v5963
      %v5965 = vpop.f32.mrb[0].mxu0
      %5966 = vmatprep.mubr.bf16.mxu0 0
      %5967 = vmatmul.mubr.bf16.gmra.mrb[0].mxu0 %v5864
      %v5968 = vpop.f32.mrb[0].mxu0
      %v5969 = vadd.f32 %v5748, %v5968
      %v5970 = vpop.f32.mrb[0].mxu0
      %v5971 = vpop.f32.mrb[0].mxu0
      %v5972 = vadd.f32 %v5751, %v5971
      %v5973 = vpop.f32.mrb[0].mxu0
      %5974 = vmatprep.mubr.bf16.mxu0 0
      %5975 = vmatmul.mubr.bf16.gmra.mrb[0].mxu0 %v5867
      %v5976 = vpop.f32.mrb[0].mxu0
      %v5977 = vadd.f32 %v5756, %v5976
      %v5978 = vpop.f32.mrb[0].mxu0
      %v5979 = vpop.f32.mrb[0].mxu0
      %v5980 = vadd.f32 %v5759, %v5979
      %v5981 = vpop.f32.mrb[0].mxu0
      %5982 = vmatprep.mubr.bf16.mxu0 0
      %5983 = vmatmul.mubr.bf16.gmra.mrb[0].mxu0 %v5870
      %v5984 = vpop.f32.mrb[0].mxu0
      %v5985 = vadd.f32 %v5764, %v5984
      %v5986 = vpop.f32.mrb[0].mxu0
      %v5987 = vpop.f32.mrb[0].mxu0
      %v5988 = vadd.f32 %v5767, %v5987
      %v5989 = vpop.f32.mrb[0].mxu0
      %5990 = vmatprep.mubr.bf16.mxu0 0
      %5991 = vmatmul.mubr.bf16.gmra.mrb[0].mxu0 %v5873
      %v5992 = vpop.f32.mrb[0].mxu0
      %v5993 = vadd.f32 %v5772, %v5992
      %v5994 = vpop.f32.mrb[0].mxu0
      %v5995 = vpop.f32.mrb[0].mxu0
      %v5996 = vadd.f32 %v5775, %v5995
      %v5997 = vpop.f32.mrb[0].mxu0
      %5998 = vmatprep.mubr.bf16.mxu0 0
      %5999 = vmatmul.mubr.bf16.gmra.mrb[0].mxu0 %v5876
      %v6000 = vpop.f32.mrb[0].mxu0
      %v6001 = vadd.f32 %v5780, %v6000
      %v6002 = vpop.f32.mrb[0].mxu0
      %v6003 = vpop.f32.mrb[0].mxu0
      %v6004 = vadd.f32 %v5783, %v6003
      %v6005 = vpop.f32.mrb[0].mxu0
      %6006 = vmatprep.mubr.bf16.mxu0 0
      %6007 = vmatmul.mubr.bf16.gmra.mrb[0].mxu0 %v5879
      %v6008 = vpop.f32.mrb[0].mxu0
      %v6009 = vadd.f32 %v5788, %v6008
      %v6010 = vpop.f32.mrb[0].mxu0
      %v6011 = vpop.f32.mrb[0].mxu0
      %v6012 = vadd.f32 %v5791, %v6011
      %v6013 = vpop.f32.mrb[0].mxu0
      %6014 = vmatprep.mubr.bf16.mxu0 0
      %6015 = vmatmul.mubr.bf16.gmra.mrb[0].mxu0 %v5882
      %v6016 = vpop.f32.mrb[0].mxu0
      %v6017 = vadd.f32 %v5796, %v6016
      %v6018 = vpop.f32.mrb[0].mxu0
      %v6019 = vpop.f32.mrb[0].mxu0
      %v6020 = vadd.f32 %v5799, %v6019
      %v6021 = vpop.f32.mrb[0].mxu0
      %6022 = vmatprep.mubr.bf16.mxu0 0
      %6023 = vmatmul.mubr.bf16.gmra.mrb[0].mxu0 %v5885
      %v6024 = vpop.f32.mrb[0].mxu0
      %v6025 = vadd.f32 %v5804, %v6024
      %v6026 = vpop.f32.mrb[0].mxu0
      %v6027 = vpop.f32.mrb[0].mxu0
      %v6028 = vadd.f32 %v5807, %v6027
      %v6029 = vpop.f32.mrb[0].mxu0
      %6030 = vmatprep.mubr.bf16.mxu0 0
      %6031 = vmatmul.mubr.bf16.gmra.mrb[0].mxu0 %v5888
      %v6032 = vpop.f32.mrb[0].mxu0
      %v6033 = vadd.f32 %v5812, %v6032
      %v6034 = vpop.f32.mrb[0].mxu0
      %v6035 = vpop.f32.mrb[0].mxu0
      %v6036 = vadd.f32 %v5815, %v6035
      %v6037 = vpop.f32.mrb[0].mxu0
      %6038 = vmatprep.mubr.bf16.mxu0 0
      %6039 = vmatmul.mubr.bf16.gmra.mrb[0].mxu0 %v5891
      %v6040 = vpop.f32.mrb[0].mxu0
      %v6041 = vadd.f32 %v5820, %v6040
      %v6042 = vpop.f32.mrb[0].mxu0
      %v6043 = vpop.f32.mrb[0].mxu0
      %v6044 = vadd.f32 %v5823, %v6043
      %v6045 = vpop.f32.mrb[0].mxu0
      %6046 = vmatprep.mubr.bf16.mxu0 0
      %6047 = vmatmul.mubr.bf16.gmra.mrb[0].mxu0 %v5894
      %v6048 = vpop.f32.mrb[0].mxu0
      %v6049 = vadd.f32 %v5828, %v6048
      %v6050 = vpop.f32.mrb[0].mxu0
      %v6051 = vpop.f32.mrb[0].mxu0
      %v6052 = vadd.f32 %v5831, %v6051
      %v6053 = vpop.f32.mrb[0].mxu0
      %6054 = vmatprep.mubr.bf16.mxu0 0
      %6055 = vmatmul.mubr.bf16.gmra.mrb[0].mxu0 %v5897
      %v6056 = vpop.f32.mrb[0].mxu0
      %v6057 = vadd.f32 %v5836, %v6056
      %v6058 = vpop.f32.mrb[0].mxu0
      %v6059 = vpop.f32.mrb[0].mxu0
      %v6060 = vadd.f32 %v5839, %v6059
      %v6061 = vpop.f32.mrb[0].mxu0
      %6062 = vdwg.mxu0
      %s6063 = scalar_lea.vmem [#allocation2], 24
      %v6064 = vld [vmem:[%s6063] sm:$0xf]
      %v6065 = vld [vmem:[%s6063 + $0x4] sm:$0xf]
      %v6066 = vld [vmem:[%s6063 + $0xc] sm:$0xf]
      %v6067 = vld [vmem:[%s6063 + $0x10] sm:$0xf]
      %v6068 = vld [vmem:[%s6063 + $0x18] sm:$0xf]
      %v6069 = vld [vmem:[%s6063 + $0x1c] sm:$0xf]
      %v6070 = vld [vmem:[%s6063 + $0x24] sm:$0xf]
      %v6071 = vld [vmem:[%s6063 + $0x28] sm:$0xf]
      %v6072 = vld [vmem:[%s6063 + $0x30] sm:$0xf]
      %v6073 = vld [vmem:[%s6063 + $0x34] sm:$0xf]
      %v6074 = vld [vmem:[%s6063 + $0x3c] sm:$0xf]
      %v6075 = vld [vmem:[%s6063 + $0x40] sm:$0xf]
      %v6076 = vld [vmem:[%s6063 + $0x48] sm:$0xf]
      %v6077 = vld [vmem:[%s6063 + $0x4c] sm:$0xf]
      %v6078 = vld [vmem:[%s6063 + $0x54] sm:$0xf]
      %v6079 = vld [vmem:[%s6063 + $0x58] sm:$0xf]
      %v6080 = vld [vmem:[%s6063 + $0x60] sm:$0xf]
      %v6081 = vld [vmem:[%s6063 + $0x64] sm:$0xf]
      %v6082 = vld [vmem:[%s6063 + $0x6c] sm:$0xf]
      %v6083 = vld [vmem:[%s6063 + $0x70] sm:$0xf]
      %v6084 = vld [vmem:[%s6063 + $0x78] sm:$0xf]
      %v6085 = vld [vmem:[%s6063 + $0x7c] sm:$0xf]
      %v6086 = vld [vmem:[%s6063 + $0x84] sm:$0xf]
      %v6087 = vld [vmem:[%s6063 + $0x88] sm:$0xf]
      %v6088 = vld [vmem:[%s6063 + $0x90] sm:$0xf]
      %v6089 = vld [vmem:[%s6063 + $0x94] sm:$0xf]
      %v6090 = vld [vmem:[%s6063 + $0x9c] sm:$0xf]
      %v6091 = vld [vmem:[%s6063 + $0xa0] sm:$0xf]
      %v6092 = vld [vmem:[%s6063 + $0xa8] sm:$0xf]
      %v6093 = vld [vmem:[%s6063 + $0xac] sm:$0xf]
      %v6094 = vld [vmem:[%s6063 + $0xb4] sm:$0xf]
      %v6095 = vld [vmem:[%s6063 + $0xb8] sm:$0xf]
      %v6128 = vunpack.c.l.b16 %v6064
      %v6129 = vunpack.c.l.b16 %v6065
      %v6130 = vunpack.c.l.b16 %v6066
      %v6131 = vunpack.c.l.b16 %v6067
      %v6132 = vunpack.c.l.b16 %v6068
      %v6133 = vunpack.c.l.b16 %v6069
      %v6134 = vunpack.c.l.b16 %v6070
      %v6135 = vunpack.c.l.b16 %v6071
      %v6136 = vunpack.c.l.b16 %v6072
      %v6137 = vunpack.c.l.b16 %v6073
      %v6138 = vunpack.c.l.b16 %v6074
      %v6139 = vunpack.c.l.b16 %v6075
      %v6140 = vunpack.c.l.b16 %v6076
      %v6141 = vunpack.c.l.b16 %v6077
      %v6142 = vunpack.c.l.b16 %v6078
      %v6143 = vunpack.c.l.b16 %v6079
      %v6144 = vunpack.c.l.b16 %v6080
      %v6145 = vunpack.c.l.b16 %v6081
      %v6146 = vunpack.c.l.b16 %v6082
      %v6147 = vunpack.c.l.b16 %v6083
      %v6148 = vunpack.c.l.b16 %v6084
      %v6149 = vunpack.c.l.b16 %v6085
      %v6150 = vunpack.c.l.b16 %v6086
      %v6151 = vunpack.c.l.b16 %v6087
      %v6152 = vunpack.c.l.b16 %v6088
      %v6153 = vunpack.c.l.b16 %v6089
      %v6154 = vunpack.c.l.b16 %v6090
      %v6155 = vunpack.c.l.b16 %v6091
      %v6156 = vunpack.c.l.b16 %v6092
      %v6157 = vunpack.c.l.b16 %v6093
      %v6158 = vunpack.c.l.b16 %v6094
      %v6159 = vunpack.c.l.b16 %v6095
      %v6160 = vpack.c.b16 %v6129, %v6128
      %v6161 = vpack.c.b16 %v6131, %v6130
      %v6162 = vpack.c.b16 %v6133, %v6132
      %v6163 = vpack.c.b16 %v6135, %v6134
      %v6164 = vpack.c.b16 %v6137, %v6136
      %v6165 = vpack.c.b16 %v6139, %v6138
      %v6166 = vpack.c.b16 %v6141, %v6140
      %v6167 = vpack.c.b16 %v6143, %v6142
      %v6168 = vpack.c.b16 %v6145, %v6144
      %v6169 = vpack.c.b16 %v6147, %v6146
      %v6170 = vpack.c.b16 %v6149, %v6148
      %v6171 = vpack.c.b16 %v6151, %v6150
      %v6172 = vpack.c.b16 %v6153, %v6152
      %v6173 = vpack.c.b16 %v6155, %v6154
      %v6174 = vpack.c.b16 %v6157, %v6156
      %v6175 = vpack.c.b16 %v6159, %v6158
      %6192 = vst.msk [vmem:[#allocation4] sm:$0xff] %vm1168, %v6160
      %6193 = vst.msk [vmem:[#allocation4 + $0x8] sm:$0xff] %vm1168, %v6161
      %6194 = vst.msk [vmem:[#allocation4 + $0x10] sm:$0xff] %vm1168, %v6162
      %6195 = vst.msk [vmem:[#allocation4 + $0x18] sm:$0xff] %vm1168, %v6163
      %6196 = vst.msk [vmem:[#allocation4 + $0x20] sm:$0xff] %vm1168, %v6164
      %6197 = vst.msk [vmem:[#allocation4 + $0x28] sm:$0xff] %vm1168, %v6165
      %6198 = vst.msk [vmem:[#allocation4 + $0x30] sm:$0xff] %vm1168, %v6166
      %6199 = vst.msk [vmem:[#allocation4 + $0x38] sm:$0xff] %vm1168, %v6167
      %6200 = vst.msk [vmem:[#allocation4 + $0x40] sm:$0xff] %vm1168, %v6168
      %6201 = vst.msk [vmem:[#allocation4 + $0x48] sm:$0xff] %vm1168, %v6169
      %6202 = vst.msk [vmem:[#allocation4 + $0x50] sm:$0xff] %vm1168, %v6170
      %6203 = vst.msk [vmem:[#allocation4 + $0x58] sm:$0xff] %vm1168, %v6171
      %6204 = vst.msk [vmem:[#allocation4 + $0x60] sm:$0xff] %vm1168, %v6172
      %6205 = vst.msk [vmem:[#allocation4 + $0x68] sm:$0xff] %vm1168, %v6173
      %6206 = vst.msk [vmem:[#allocation4 + $0x70] sm:$0xff] %vm1168, %v6174
      %6207 = vst.msk [vmem:[#allocation4 + $0x78] sm:$0xff] %vm1168, %v6175
      %v6208 = vld [vmem:[%s6063] sm:$0xf]
      %v6209 = vld [vmem:[%s6063 + $0x4] sm:$0xf]
      %v6210 = vld [vmem:[%s6063 + $0x8] sm:$0x1]
      %v6211 = vld [vmem:[%s6063 + $0xc] sm:$0xf]
      %v6212 = vld [vmem:[%s6063 + $0x10] sm:$0xf]
      %v6213 = vld [vmem:[%s6063 + $0x14] sm:$0x1]
      %v6214 = vld [vmem:[%s6063 + $0x18] sm:$0xf]
      %v6215 = vld [vmem:[%s6063 + $0x1c] sm:$0xf]
      %v6216 = vld [vmem:[%s6063 + $0x20] sm:$0x1]
      %v6217 = vld [vmem:[%s6063 + $0x24] sm:$0xf]
      %v6218 = vld [vmem:[%s6063 + $0x28] sm:$0xf]
      %v6219 = vld [vmem:[%s6063 + $0x2c] sm:$0x1]
      %v6220 = vld [vmem:[%s6063 + $0x30] sm:$0xf]
      %v6221 = vld [vmem:[%s6063 + $0x34] sm:$0xf]
      %v6222 = vld [vmem:[%s6063 + $0x38] sm:$0x1]
      %v6223 = vld [vmem:[%s6063 + $0x3c] sm:$0xf]
      %v6224 = vld [vmem:[%s6063 + $0x40] sm:$0xf]
      %v6225 = vld [vmem:[%s6063 + $0x44] sm:$0x1]
      %v6226 = vld [vmem:[%s6063 + $0x48] sm:$0xf]
      %v6227 = vld [vmem:[%s6063 + $0x4c] sm:$0xf]
      %v6228 = vld [vmem:[%s6063 + $0x50] sm:$0x1]
      %v6229 = vld [vmem:[%s6063 + $0x54] sm:$0xf]
      %v6230 = vld [vmem:[%s6063 + $0x58] sm:$0xf]
      %v6231 = vld [vmem:[%s6063 + $0x5c] sm:$0x1]
      %v6232 = vld [vmem:[%s6063 + $0x60] sm:$0xf]
      %v6233 = vld [vmem:[%s6063 + $0x64] sm:$0xf]
      %v6234 = vld [vmem:[%s6063 + $0x68] sm:$0x1]
      %v6235 = vld [vmem:[%s6063 + $0x6c] sm:$0xf]
      %v6236 = vld [vmem:[%s6063 + $0x70] sm:$0xf]
      %v6237 = vld [vmem:[%s6063 + $0x74] sm:$0x1]
      %v6238 = vld [vmem:[%s6063 + $0x78] sm:$0xf]
      %v6239 = vld [vmem:[%s6063 + $0x7c] sm:$0xf]
      %v6240 = vld [vmem:[%s6063 + $0x80] sm:$0x1]
      %v6241 = vld [vmem:[%s6063 + $0x84] sm:$0xf]
      %v6242 = vld [vmem:[%s6063 + $0x88] sm:$0xf]
      %v6243 = vld [vmem:[%s6063 + $0x8c] sm:$0x1]
      %v6244 = vld [vmem:[%s6063 + $0x90] sm:$0xf]
      %v6245 = vld [vmem:[%s6063 + $0x94] sm:$0xf]
      %v6246 = vld [vmem:[%s6063 + $0x98] sm:$0x1]
      %v6247 = vld [vmem:[%s6063 + $0x9c] sm:$0xf]
      %v6248 = vld [vmem:[%s6063 + $0xa0] sm:$0xf]
      %v6249 = vld [vmem:[%s6063 + $0xa4] sm:$0x1]
      %v6250 = vld [vmem:[%s6063 + $0xa8] sm:$0xf]
      %v6251 = vld [vmem:[%s6063 + $0xac] sm:$0xf]
      %v6252 = vld [vmem:[%s6063 + $0xb0] sm:$0x1]
      %v6253 = vld [vmem:[%s6063 + $0xb4] sm:$0xf]
      %v6254 = vld [vmem:[%s6063 + $0xb8] sm:$0xf]
      %v6255 = vld [vmem:[%s6063 + $0xbc] sm:$0x1]
      %v6257 = vshrl.u32 %v6208, 16
      %v6259 = vrot.slane %v6257, 4
      %v6260 = vshll.u32 %v6208, 16
      %v6262 = vrot.slane %v6260, 5
      %v6263 = vor.u32 %v6259, %v6262
      %v6264 = vrot.slane %v6263, 4
      %v6266 = vshll.u32 %v6209, 16
      %v6268 = vrot.slane %v6266, 5
      %v6269 = vsel %vm3751, %v6264, %v6268
      %v6270 = vshrl.u32 %v6209, 16
      %v6272 = vrot.slane %v6270, 4
      %v6273 = vor.u32 %v6272, %v6268
      %v6274 = vrot.slane %v6273, 4
      %v6276 = vshll.u32 %v6210, 16
      %v6278 = vrot.slane %v6276, 5
      %v6279 = vsel %vm3751, %v6274, %v6278
      %v6281 = vshrl.u32 %v6211, 16
      %v6283 = vrot.slane %v6281, 4
      %v6284 = vshll.u32 %v6211, 16
      %v6286 = vrot.slane %v6284, 5
      %v6287 = vor.u32 %v6283, %v6286
      %v6288 = vrot.slane %v6287, 4
      %v6290 = vshll.u32 %v6212, 16
      %v6292 = vrot.slane %v6290, 5
      %v6293 = vsel %vm3751, %v6288, %v6292
      %v6294 = vshrl.u32 %v6212, 16
      %v6296 = vrot.slane %v6294, 4
      %v6297 = vor.u32 %v6296, %v6292
      %v6298 = vrot.slane %v6297, 4
      %v6300 = vshll.u32 %v6213, 16
      %v6302 = vrot.slane %v6300, 5
      %v6303 = vsel %vm3751, %v6298, %v6302
      %v6305 = vshrl.u32 %v6214, 16
      %v6307 = vrot.slane %v6305, 4
      %v6308 = vshll.u32 %v6214, 16
      %v6310 = vrot.slane %v6308, 5
      %v6311 = vor.u32 %v6307, %v6310
      %v6312 = vrot.slane %v6311, 4
      %v6314 = vshll.u32 %v6215, 16
      %v6316 = vrot.slane %v6314, 5
      %v6317 = vsel %vm3751, %v6312, %v6316
      %v6318 = vshrl.u32 %v6215, 16
      %v6320 = vrot.slane %v6318, 4
      %v6321 = vor.u32 %v6320, %v6316
      %v6322 = vrot.slane %v6321, 4
      %v6324 = vshll.u32 %v6216, 16
      %v6326 = vrot.slane %v6324, 5
      %v6327 = vsel %vm3751, %v6322, %v6326
      %v6329 = vshrl.u32 %v6217, 16
      %v6331 = vrot.slane %v6329, 4
      %v6332 = vshll.u32 %v6217, 16
      %v6334 = vrot.slane %v6332, 5
      %v6335 = vor.u32 %v6331, %v6334
      %v6336 = vrot.slane %v6335, 4
      %v6338 = vshll.u32 %v6218, 16
      %v6340 = vrot.slane %v6338, 5
      %v6341 = vsel %vm3751, %v6336, %v6340
      %v6342 = vshrl.u32 %v6218, 16
      %v6344 = vrot.slane %v6342, 4
      %v6345 = vor.u32 %v6344, %v6340
      %v6346 = vrot.slane %v6345, 4
      %v6348 = vshll.u32 %v6219, 16
      %v6350 = vrot.slane %v6348, 5
      %v6351 = vsel %vm3751, %v6346, %v6350
      %v6353 = vshrl.u32 %v6220, 16
      %v6355 = vrot.slane %v6353, 4
      %v6356 = vshll.u32 %v6220, 16
      %v6358 = vrot.slane %v6356, 5
      %v6359 = vor.u32 %v6355, %v6358
      %v6360 = vrot.slane %v6359, 4
      %v6362 = vshll.u32 %v6221, 16
      %v6364 = vrot.slane %v6362, 5
      %v6365 = vsel %vm3751, %v6360, %v6364
      %v6366 = vshrl.u32 %v6221, 16
      %v6368 = vrot.slane %v6366, 4
      %v6369 = vor.u32 %v6368, %v6364
      %v6370 = vrot.slane %v6369, 4
      %v6372 = vshll.u32 %v6222, 16
      %v6374 = vrot.slane %v6372, 5
      %v6375 = vsel %vm3751, %v6370, %v6374
      %v6377 = vshrl.u32 %v6223, 16
      %v6379 = vrot.slane %v6377, 4
      %v6380 = vshll.u32 %v6223, 16
      %v6382 = vrot.slane %v6380, 5
      %v6383 = vor.u32 %v6379, %v6382
      %v6384 = vrot.slane %v6383, 4
      %v6386 = vshll.u32 %v6224, 16
      %v6388 = vrot.slane %v6386, 5
      %v6389 = vsel %vm3751, %v6384, %v6388
      %v6390 = vshrl.u32 %v6224, 16
      %v6392 = vrot.slane %v6390, 4
      %v6393 = vor.u32 %v6392, %v6388
      %v6394 = vrot.slane %v6393, 4
      %v6396 = vshll.u32 %v6225, 16
      %v6398 = vrot.slane %v6396, 5
      %v6399 = vsel %vm3751, %v6394, %v6398
      %v6401 = vshrl.u32 %v6226, 16
      %v6403 = vrot.slane %v6401, 4
      %v6404 = vshll.u32 %v6226, 16
      %v6406 = vrot.slane %v6404, 5
      %v6407 = vor.u32 %v6403, %v6406
      %v6408 = vrot.slane %v6407, 4
      %v6410 = vshll.u32 %v6227, 16
      %v6412 = vrot.slane %v6410, 5
      %v6413 = vsel %vm3751, %v6408, %v6412
      %v6414 = vshrl.u32 %v6227, 16
      %v6416 = vrot.slane %v6414, 4
      %v6417 = vor.u32 %v6416, %v6412
      %v6418 = vrot.slane %v6417, 4
      %v6420 = vshll.u32 %v6228, 16
      %v6422 = vrot.slane %v6420, 5
      %v6423 = vsel %vm3751, %v6418, %v6422
      %v6425 = vshrl.u32 %v6229, 16
      %v6427 = vrot.slane %v6425, 4
      %v6428 = vshll.u32 %v6229, 16
      %v6430 = vrot.slane %v6428, 5
      %v6431 = vor.u32 %v6427, %v6430
      %v6432 = vrot.slane %v6431, 4
      %v6434 = vshll.u32 %v6230, 16
      %v6436 = vrot.slane %v6434, 5
      %v6437 = vsel %vm3751, %v6432, %v6436
      %v6438 = vshrl.u32 %v6230, 16
      %v6440 = vrot.slane %v6438, 4
      %v6441 = vor.u32 %v6440, %v6436
      %v6442 = vrot.slane %v6441, 4
      %v6444 = vshll.u32 %v6231, 16
      %v6446 = vrot.slane %v6444, 5
      %v6447 = vsel %vm3751, %v6442, %v6446
      %v6449 = vshrl.u32 %v6232, 16
      %v6451 = vrot.slane %v6449, 4
      %v6452 = vshll.u32 %v6232, 16
      %v6454 = vrot.slane %v6452, 5
      %v6455 = vor.u32 %v6451, %v6454
      %v6456 = vrot.slane %v6455, 4
      %v6458 = vshll.u32 %v6233, 16
      %v6460 = vrot.slane %v6458, 5
      %v6461 = vsel %vm3751, %v6456, %v6460
      %v6462 = vshrl.u32 %v6233, 16
      %v6464 = vrot.slane %v6462, 4
      %v6465 = vor.u32 %v6464, %v6460
      %v6466 = vrot.slane %v6465, 4
      %v6468 = vshll.u32 %v6234, 16
      %v6470 = vrot.slane %v6468, 5
      %v6471 = vsel %vm3751, %v6466, %v6470
      %v6473 = vshrl.u32 %v6235, 16
      %v6475 = vrot.slane %v6473, 4
      %v6476 = vshll.u32 %v6235, 16
      %v6478 = vrot.slane %v6476, 5
      %v6479 = vor.u32 %v6475, %v6478
      %v6480 = vrot.slane %v6479, 4
      %v6482 = vshll.u32 %v6236, 16
      %v6484 = vrot.slane %v6482, 5
      %v6485 = vsel %vm3751, %v6480, %v6484
      %v6486 = vshrl.u32 %v6236, 16
      %v6488 = vrot.slane %v6486, 4
      %v6489 = vor.u32 %v6488, %v6484
      %v6490 = vrot.slane %v6489, 4
      %v6492 = vshll.u32 %v6237, 16
      %v6494 = vrot.slane %v6492, 5
      %v6495 = vsel %vm3751, %v6490, %v6494
      %v6497 = vshrl.u32 %v6238, 16
      %v6499 = vrot.slane %v6497, 4
      %v6500 = vshll.u32 %v6238, 16
      %v6502 = vrot.slane %v6500, 5
      %v6503 = vor.u32 %v6499, %v6502
      %v6504 = vrot.slane %v6503, 4
      %v6506 = vshll.u32 %v6239, 16
      %v6508 = vrot.slane %v6506, 5
      %v6509 = vsel %vm3751, %v6504, %v6508
      %v6510 = vshrl.u32 %v6239, 16
      %v6512 = vrot.slane %v6510, 4
      %v6513 = vor.u32 %v6512, %v6508
      %v6514 = vrot.slane %v6513, 4
      %v6516 = vshll.u32 %v6240, 16
      %v6518 = vrot.slane %v6516, 5
      %v6519 = vsel %vm3751, %v6514, %v6518
      %v6521 = vshrl.u32 %v6241, 16
      %v6523 = vrot.slane %v6521, 4
      %v6524 = vshll.u32 %v6241, 16
      %v6526 = vrot.slane %v6524, 5
      %v6527 = vor.u32 %v6523, %v6526
      %v6528 = vrot.slane %v6527, 4
      %v6530 = vshll.u32 %v6242, 16
      %v6532 = vrot.slane %v6530, 5
      %v6533 = vsel %vm3751, %v6528, %v6532
      %v6534 = vshrl.u32 %v6242, 16
      %v6536 = vrot.slane %v6534, 4
      %v6537 = vor.u32 %v6536, %v6532
      %v6538 = vrot.slane %v6537, 4
      %v6540 = vshll.u32 %v6243, 16
      %v6542 = vrot.slane %v6540, 5
      %v6543 = vsel %vm3751, %v6538, %v6542
      %v6545 = vshrl.u32 %v6244, 16
      %v6547 = vrot.slane %v6545, 4
      %v6548 = vshll.u32 %v6244, 16
      %v6550 = vrot.slane %v6548, 5
      %v6551 = vor.u32 %v6547, %v6550
      %v6552 = vrot.slane %v6551, 4
      %v6554 = vshll.u32 %v6245, 16
      %v6556 = vrot.slane %v6554, 5
      %v6557 = vsel %vm3751, %v6552, %v6556
      %v6558 = vshrl.u32 %v6245, 16
      %v6560 = vrot.slane %v6558, 4
      %v6561 = vor.u32 %v6560, %v6556
      %v6562 = vrot.slane %v6561, 4
      %v6564 = vshll.u32 %v6246, 16
      %v6566 = vrot.slane %v6564, 5
      %v6567 = vsel %vm3751, %v6562, %v6566
      %v6569 = vshrl.u32 %v6247, 16
      %v6571 = vrot.slane %v6569, 4
      %v6572 = vshll.u32 %v6247, 16
      %v6574 = vrot.slane %v6572, 5
      %v6575 = vor.u32 %v6571, %v6574
      %v6576 = vrot.slane %v6575, 4
      %v6578 = vshll.u32 %v6248, 16
      %v6580 = vrot.slane %v6578, 5
      %v6581 = vsel %vm3751, %v6576, %v6580
      %v6582 = vshrl.u32 %v6248, 16
      %v6584 = vrot.slane %v6582, 4
      %v6585 = vor.u32 %v6584, %v6580
      %v6586 = vrot.slane %v6585, 4
      %v6588 = vshll.u32 %v6249, 16
      %v6590 = vrot.slane %v6588, 5
      %v6591 = vsel %vm3751, %v6586, %v6590
      %v6593 = vshrl.u32 %v6250, 16
      %v6595 = vrot.slane %v6593, 4
      %v6596 = vshll.u32 %v6250, 16
      %v6598 = vrot.slane %v6596, 5
      %v6599 = vor.u32 %v6595, %v6598
      %v6600 = vrot.slane %v6599, 4
      %v6602 = vshll.u32 %v6251, 16
      %v6604 = vrot.slane %v6602, 5
      %v6605 = vsel %vm3751, %v6600, %v6604
      %v6606 = vshrl.u32 %v6251, 16
      %v6608 = vrot.slane %v6606, 4
      %v6609 = vor.u32 %v6608, %v6604
      %v6610 = vrot.slane %v6609, 4
      %v6612 = vshll.u32 %v6252, 16
      %v6614 = vrot.slane %v6612, 5
      %v6615 = vsel %vm3751, %v6610, %v6614
      %v6617 = vshrl.u32 %v6253, 16
      %v6619 = vrot.slane %v6617, 4
      %v6620 = vshll.u32 %v6253, 16
      %v6622 = vrot.slane %v6620, 5
      %v6623 = vor.u32 %v6619, %v6622
      %v6624 = vrot.slane %v6623, 4
      %v6626 = vshll.u32 %v6254, 16
      %v6628 = vrot.slane %v6626, 5
      %v6629 = vsel %vm3751, %v6624, %v6628
      %v6630 = vshrl.u32 %v6254, 16
      %v6632 = vrot.slane %v6630, 4
      %v6633 = vor.u32 %v6632, %v6628
      %v6634 = vrot.slane %v6633, 4
      %v6636 = vshll.u32 %v6255, 16
      %v6638 = vrot.slane %v6636, 5
      %v6639 = vsel %vm3751, %v6634, %v6638
      %v6640 = vunpack.c.l.b16 %v6269
      %v6641 = vunpack.c.l.b16 %v6279
      %v6642 = vunpack.c.l.b16 %v6293
      %v6643 = vunpack.c.l.b16 %v6303
      %v6644 = vunpack.c.l.b16 %v6317
      %v6645 = vunpack.c.l.b16 %v6327
      %v6646 = vunpack.c.l.b16 %v6341
      %v6647 = vunpack.c.l.b16 %v6351
      %v6648 = vunpack.c.l.b16 %v6365
      %v6649 = vunpack.c.l.b16 %v6375
      %v6650 = vunpack.c.l.b16 %v6389
      %v6651 = vunpack.c.l.b16 %v6399
      %v6652 = vunpack.c.l.b16 %v6413
      %v6653 = vunpack.c.l.b16 %v6423
      %v6654 = vunpack.c.l.b16 %v6437
      %v6655 = vunpack.c.l.b16 %v6447
      %v6656 = vunpack.c.l.b16 %v6461
      %v6657 = vunpack.c.l.b16 %v6471
      %v6658 = vunpack.c.l.b16 %v6485
      %v6659 = vunpack.c.l.b16 %v6495
      %v6660 = vunpack.c.l.b16 %v6509
      %v6661 = vunpack.c.l.b16 %v6519
      %v6662 = vunpack.c.l.b16 %v6533
      %v6663 = vunpack.c.l.b16 %v6543
      %v6664 = vunpack.c.l.b16 %v6557
      %v6665 = vunpack.c.l.b16 %v6567
      %v6666 = vunpack.c.l.b16 %v6581
      %v6667 = vunpack.c.l.b16 %v6591
      %v6668 = vunpack.c.l.b16 %v6605
      %v6669 = vunpack.c.l.b16 %v6615
      %v6670 = vunpack.c.l.b16 %v6629
      %v6671 = vunpack.c.l.b16 %v6639
      %v6672 = vpack.c.b16 %v6641, %v6640
      %v6673 = vpack.c.b16 %v6643, %v6642
      %v6674 = vpack.c.b16 %v6645, %v6644
      %v6675 = vpack.c.b16 %v6647, %v6646
      %v6676 = vpack.c.b16 %v6649, %v6648
      %v6677 = vpack.c.b16 %v6651, %v6650
      %v6678 = vpack.c.b16 %v6653, %v6652
      %v6679 = vpack.c.b16 %v6655, %v6654
      %v6680 = vpack.c.b16 %v6657, %v6656
      %v6681 = vpack.c.b16 %v6659, %v6658
      %v6682 = vpack.c.b16 %v6661, %v6660
      %v6683 = vpack.c.b16 %v6663, %v6662
      %v6684 = vpack.c.b16 %v6665, %v6664
      %v6685 = vpack.c.b16 %v6667, %v6666
      %v6686 = vpack.c.b16 %v6669, %v6668
      %v6687 = vpack.c.b16 %v6671, %v6670
      %6688 = vrot.lane.b32.xlu0 %v6672, 8
      %v6689 = vpop.permute.xlu0 %6688
      %6690 = vrot.lane.b32.xlu0 %v6673, 8
      %v6691 = vpop.permute.xlu0 %6690
      %6692 = vrot.lane.b32.xlu0 %v6674, 8
      %v6693 = vpop.permute.xlu0 %6692
      %6694 = vrot.lane.b32.xlu0 %v6675, 8
      %v6695 = vpop.permute.xlu0 %6694
      %6696 = vrot.lane.b32.xlu0 %v6676, 8
      %v6697 = vpop.permute.xlu0 %6696
      %6698 = vrot.lane.b32.xlu0 %v6677, 8
      %v6699 = vpop.permute.xlu0 %6698
      %6700 = vrot.lane.b32.xlu0 %v6678, 8
      %v6701 = vpop.permute.xlu0 %6700
      %6702 = vrot.lane.b32.xlu0 %v6679, 8
      %v6703 = vpop.permute.xlu0 %6702
      %6704 = vrot.lane.b32.xlu0 %v6680, 8
      %v6705 = vpop.permute.xlu0 %6704
      %6706 = vrot.lane.b32.xlu0 %v6681, 8
      %v6707 = vpop.permute.xlu0 %6706
      %6708 = vrot.lane.b32.xlu0 %v6682, 8
      %v6709 = vpop.permute.xlu0 %6708
      %6710 = vrot.lane.b32.xlu0 %v6683, 8
      %v6711 = vpop.permute.xlu0 %6710
      %6712 = vrot.lane.b32.xlu0 %v6684, 8
      %v6713 = vpop.permute.xlu0 %6712
      %6714 = vrot.lane.b32.xlu0 %v6685, 8
      %v6715 = vpop.permute.xlu0 %6714
      %6716 = vrot.lane.b32.xlu0 %v6686, 8
      %v6717 = vpop.permute.xlu0 %6716
      %6718 = vrot.lane.b32.xlu0 %v6687, 8
      %v6719 = vpop.permute.xlu0 %6718
      %6736 = vst.msk [vmem:[#allocation4] sm:$0xff] %vm4232, %v6689
      %6737 = vst.msk [vmem:[#allocation4 + $0x8] sm:$0xff] %vm4232, %v6691
      %6738 = vst.msk [vmem:[#allocation4 + $0x10] sm:$0xff] %vm4232, %v6693
      %6739 = vst.msk [vmem:[#allocation4 + $0x18] sm:$0xff] %vm4232, %v6695
      %6740 = vst.msk [vmem:[#allocation4 + $0x20] sm:$0xff] %vm4232, %v6697
      %6741 = vst.msk [vmem:[#allocation4 + $0x28] sm:$0xff] %vm4232, %v6699
      %6742 = vst.msk [vmem:[#allocation4 + $0x30] sm:$0xff] %vm4232, %v6701
      %6743 = vst.msk [vmem:[#allocation4 + $0x38] sm:$0xff] %vm4232, %v6703
      %6744 = vst.msk [vmem:[#allocation4 + $0x40] sm:$0xff] %vm4232, %v6705
      %6745 = vst.msk [vmem:[#allocation4 + $0x48] sm:$0xff] %vm4232, %v6707
      %6746 = vst.msk [vmem:[#allocation4 + $0x50] sm:$0xff] %vm4232, %v6709
      %6747 = vst.msk [vmem:[#allocation4 + $0x58] sm:$0xff] %vm4232, %v6711
      %6748 = vst.msk [vmem:[#allocation4 + $0x60] sm:$0xff] %vm4232, %v6713
      %6749 = vst.msk [vmem:[#allocation4 + $0x68] sm:$0xff] %vm4232, %v6715
      %6750 = vst.msk [vmem:[#allocation4 + $0x70] sm:$0xff] %vm4232, %v6717
      %6751 = vst.msk [vmem:[#allocation4 + $0x78] sm:$0xff] %vm4232, %v6719
      %v6752 = vld [vmem:[%s6063] sm:$0xe]
      %v6753 = vld [vmem:[%s6063 + $0x4] sm:$0xf]
      %v6754 = vld [vmem:[%s6063 + $0x8] sm:$0x1]
      %v6755 = vld [vmem:[%s6063 + $0xc] sm:$0xe]
      %v6756 = vld [vmem:[%s6063 + $0x10] sm:$0xf]
      %v6757 = vld [vmem:[%s6063 + $0x14] sm:$0x1]
      %v6758 = vld [vmem:[%s6063 + $0x18] sm:$0xe]
      %v6759 = vld [vmem:[%s6063 + $0x1c] sm:$0xf]
      %v6760 = vld [vmem:[%s6063 + $0x20] sm:$0x1]
      %v6761 = vld [vmem:[%s6063 + $0x24] sm:$0xe]
      %v6762 = vld [vmem:[%s6063 + $0x28] sm:$0xf]
      %v6763 = vld [vmem:[%s6063 + $0x2c] sm:$0x1]
      %v6764 = vld [vmem:[%s6063 + $0x30] sm:$0xe]
      %v6765 = vld [vmem:[%s6063 + $0x34] sm:$0xf]
      %v6766 = vld [vmem:[%s6063 + $0x38] sm:$0x1]
      %v6767 = vld [vmem:[%s6063 + $0x3c] sm:$0xe]
      %v6768 = vld [vmem:[%s6063 + $0x40] sm:$0xf]
      %v6769 = vld [vmem:[%s6063 + $0x44] sm:$0x1]
      %v6770 = vld [vmem:[%s6063 + $0x48] sm:$0xe]
      %v6771 = vld [vmem:[%s6063 + $0x4c] sm:$0xf]
      %v6772 = vld [vmem:[%s6063 + $0x50] sm:$0x1]
      %v6773 = vld [vmem:[%s6063 + $0x54] sm:$0xe]
      %v6774 = vld [vmem:[%s6063 + $0x58] sm:$0xf]
      %v6775 = vld [vmem:[%s6063 + $0x5c] sm:$0x1]
      %v6776 = vld [vmem:[%s6063 + $0x60] sm:$0xe]
      %v6777 = vld [vmem:[%s6063 + $0x64] sm:$0xf]
      %v6778 = vld [vmem:[%s6063 + $0x68] sm:$0x1]
      %v6779 = vld [vmem:[%s6063 + $0x6c] sm:$0xe]
      %v6780 = vld [vmem:[%s6063 + $0x70] sm:$0xf]
      %v6781 = vld [vmem:[%s6063 + $0x74] sm:$0x1]
      %v6782 = vld [vmem:[%s6063 + $0x78] sm:$0xe]
      %v6783 = vld [vmem:[%s6063 + $0x7c] sm:$0xf]
      %v6784 = vld [vmem:[%s6063 + $0x80] sm:$0x1]
      %v6785 = vld [vmem:[%s6063 + $0x84] sm:$0xe]
      %v6786 = vld [vmem:[%s6063 + $0x88] sm:$0xf]
      %v6787 = vld [vmem:[%s6063 + $0x8c] sm:$0x1]
      %v6788 = vld [vmem:[%s6063 + $0x90] sm:$0xe]
      %v6789 = vld [vmem:[%s6063 + $0x94] sm:$0xf]
      %v6790 = vld [vmem:[%s6063 + $0x98] sm:$0x1]
      %v6791 = vld [vmem:[%s6063 + $0x9c] sm:$0xe]
      %v6792 = vld [vmem:[%s6063 + $0xa0] sm:$0xf]
      %v6793 = vld [vmem:[%s6063 + $0xa4] sm:$0x1]
      %v6794 = vld [vmem:[%s6063 + $0xa8] sm:$0xe]
      %v6795 = vld [vmem:[%s6063 + $0xac] sm:$0xf]
      %v6796 = vld [vmem:[%s6063 + $0xb0] sm:$0x1]
      %v6797 = vld [vmem:[%s6063 + $0xb4] sm:$0xe]
      %v6798 = vld [vmem:[%s6063 + $0xb8] sm:$0xf]
      %v6799 = vld [vmem:[%s6063 + $0xbc] sm:$0x1]
      %v6848 = vrot.slane %v6752, 5
      %v6849 = vrot.slane %v6848, 4
      %v6850 = vrot.slane %v6753, 5
      %v6851 = vsel %vm4347, %v6849, %v6850
      %v6852 = vrot.slane %v6850, 4
      %v6853 = vrot.slane %v6754, 5
      %v6854 = vsel %vm4347, %v6852, %v6853
      %v6855 = vrot.slane %v6755, 5
      %v6856 = vrot.slane %v6855, 4
      %v6857 = vrot.slane %v6756, 5
      %v6858 = vsel %vm4347, %v6856, %v6857
      %v6859 = vrot.slane %v6857, 4
      %v6860 = vrot.slane %v6757, 5
      %v6861 = vsel %vm4347, %v6859, %v6860
      %v6862 = vrot.slane %v6758, 5
      %v6863 = vrot.slane %v6862, 4
      %v6864 = vrot.slane %v6759, 5
      %v6865 = vsel %vm4347, %v6863, %v6864
      %v6866 = vrot.slane %v6864, 4
      %v6867 = vrot.slane %v6760, 5
      %v6868 = vsel %vm4347, %v6866, %v6867
      %v6869 = vrot.slane %v6761, 5
      %v6870 = vrot.slane %v6869, 4
      %v6871 = vrot.slane %v6762, 5
      %v6872 = vsel %vm4347, %v6870, %v6871
      %v6873 = vrot.slane %v6871, 4
      %v6874 = vrot.slane %v6763, 5
      %v6875 = vsel %vm4347, %v6873, %v6874
      %v6876 = vrot.slane %v6764, 5
      %v6877 = vrot.slane %v6876, 4
      %v6878 = vrot.slane %v6765, 5
      %v6879 = vsel %vm4347, %v6877, %v6878
      %v6880 = vrot.slane %v6878, 4
      %v6881 = vrot.slane %v6766, 5
      %v6882 = vsel %vm4347, %v6880, %v6881
      %v6883 = vrot.slane %v6767, 5
      %v6884 = vrot.slane %v6883, 4
      %v6885 = vrot.slane %v6768, 5
      %v6886 = vsel %vm4347, %v6884, %v6885
      %v6887 = vrot.slane %v6885, 4
      %v6888 = vrot.slane %v6769, 5
      %v6889 = vsel %vm4347, %v6887, %v6888
      %v6890 = vrot.slane %v6770, 5
      %v6891 = vrot.slane %v6890, 4
      %v6892 = vrot.slane %v6771, 5
      %v6893 = vsel %vm4347, %v6891, %v6892
      %v6894 = vrot.slane %v6892, 4
      %v6895 = vrot.slane %v6772, 5
      %v6896 = vsel %vm4347, %v6894, %v6895
      %v6897 = vrot.slane %v6773, 5
      %v6898 = vrot.slane %v6897, 4
      %v6899 = vrot.slane %v6774, 5
      %v6900 = vsel %vm4347, %v6898, %v6899
      %v6901 = vrot.slane %v6899, 4
      %v6902 = vrot.slane %v6775, 5
      %v6903 = vsel %vm4347, %v6901, %v6902
      %v6904 = vrot.slane %v6776, 5
      %v6905 = vrot.slane %v6904, 4
      %v6906 = vrot.slane %v6777, 5
      %v6907 = vsel %vm4347, %v6905, %v6906
      %v6908 = vrot.slane %v6906, 4
      %v6909 = vrot.slane %v6778, 5
      %v6910 = vsel %vm4347, %v6908, %v6909
      %v6911 = vrot.slane %v6779, 5
      %v6912 = vrot.slane %v6911, 4
      %v6913 = vrot.slane %v6780, 5
      %v6914 = vsel %vm4347, %v6912, %v6913
      %v6915 = vrot.slane %v6913, 4
      %v6916 = vrot.slane %v6781, 5
      %v6917 = vsel %vm4347, %v6915, %v6916
      %v6918 = vrot.slane %v6782, 5
      %v6919 = vrot.slane %v6918, 4
      %v6920 = vrot.slane %v6783, 5
      %v6921 = vsel %vm4347, %v6919, %v6920
      %v6922 = vrot.slane %v6920, 4
      %v6923 = vrot.slane %v6784, 5
      %v6924 = vsel %vm4347, %v6922, %v6923
      %v6925 = vrot.slane %v6785, 5
      %v6926 = vrot.slane %v6925, 4
      %v6927 = vrot.slane %v6786, 5
      %v6928 = vsel %vm4347, %v6926, %v6927
      %v6929 = vrot.slane %v6927, 4
      %v6930 = vrot.slane %v6787, 5
      %v6931 = vsel %vm4347, %v6929, %v6930
      %v6932 = vrot.slane %v6788, 5
      %v6933 = vrot.slane %v6932, 4
      %v6934 = vrot.slane %v6789, 5
      %v6935 = vsel %vm4347, %v6933, %v6934
      %v6936 = vrot.slane %v6934, 4
      %v6937 = vrot.slane %v6790, 5
      %v6938 = vsel %vm4347, %v6936, %v6937
      %v6939 = vrot.slane %v6791, 5
      %v6940 = vrot.slane %v6939, 4
      %v6941 = vrot.slane %v6792, 5
      %v6942 = vsel %vm4347, %v6940, %v6941
      %v6943 = vrot.slane %v6941, 4
      %v6944 = vrot.slane %v6793, 5
      %v6945 = vsel %vm4347, %v6943, %v6944
      %v6946 = vrot.slane %v6794, 5
      %v6947 = vrot.slane %v6946, 4
      %v6948 = vrot.slane %v6795, 5
      %v6949 = vsel %vm4347, %v6947, %v6948
      %v6950 = vrot.slane %v6948, 4
      %v6951 = vrot.slane %v6796, 5
      %v6952 = vsel %vm4347, %v6950, %v6951
      %v6953 = vrot.slane %v6797, 5
      %v6954 = vrot.slane %v6953, 4
      %v6955 = vrot.slane %v6798, 5
      %v6956 = vsel %vm4347, %v6954, %v6955
      %v6957 = vrot.slane %v6955, 4
      %v6958 = vrot.slane %v6799, 5
      %v6959 = vsel %vm4347, %v6957, %v6958
      %v6960 = vunpack.c.l.b16 %v6851
      %v6961 = vunpack.c.l.b16 %v6854
      %v6962 = vunpack.c.l.b16 %v6858
      %v6963 = vunpack.c.l.b16 %v6861
      %v6964 = vunpack.c.l.b16 %v6865
      %v6965 = vunpack.c.l.b16 %v6868
      %v6966 = vunpack.c.l.b16 %v6872
      %v6967 = vunpack.c.l.b16 %v6875
      %v6968 = vunpack.c.l.b16 %v6879
      %v6969 = vunpack.c.l.b16 %v6882
      %v6970 = vunpack.c.l.b16 %v6886
      %v6971 = vunpack.c.l.b16 %v6889
      %v6972 = vunpack.c.l.b16 %v6893
      %v6973 = vunpack.c.l.b16 %v6896
      %v6974 = vunpack.c.l.b16 %v6900
      %v6975 = vunpack.c.l.b16 %v6903
      %v6976 = vunpack.c.l.b16 %v6907
      %v6977 = vunpack.c.l.b16 %v6910
      %v6978 = vunpack.c.l.b16 %v6914
      %v6979 = vunpack.c.l.b16 %v6917
      %v6980 = vunpack.c.l.b16 %v6921
      %v6981 = vunpack.c.l.b16 %v6924
      %v6982 = vunpack.c.l.b16 %v6928
      %v6983 = vunpack.c.l.b16 %v6931
      %v6984 = vunpack.c.l.b16 %v6935
      %v6985 = vunpack.c.l.b16 %v6938
      %v6986 = vunpack.c.l.b16 %v6942
      %v6987 = vunpack.c.l.b16 %v6945
      %v6988 = vunpack.c.l.b16 %v6949
      %v6989 = vunpack.c.l.b16 %v6952
      %v6990 = vunpack.c.l.b16 %v6956
      %v6991 = vunpack.c.l.b16 %v6959
      %v6992 = vpack.c.b16 %v6961, %v6960
      %v6993 = vpack.c.b16 %v6963, %v6962
      %v6994 = vpack.c.b16 %v6965, %v6964
      %v6995 = vpack.c.b16 %v6967, %v6966
      %v6996 = vpack.c.b16 %v6969, %v6968
      %v6997 = vpack.c.b16 %v6971, %v6970
      %v6998 = vpack.c.b16 %v6973, %v6972
      %v6999 = vpack.c.b16 %v6975, %v6974
      %v7000 = vpack.c.b16 %v6977, %v6976
      %v7001 = vpack.c.b16 %v6979, %v6978
      %v7002 = vpack.c.b16 %v6981, %v6980
      %v7003 = vpack.c.b16 %v6983, %v6982
      %v7004 = vpack.c.b16 %v6985, %v6984
      %v7005 = vpack.c.b16 %v6987, %v6986
      %v7006 = vpack.c.b16 %v6989, %v6988
      %v7007 = vpack.c.b16 %v6991, %v6990
      %7008 = vrot.lane.b32.xlu0 %v6992, 16
      %v7009 = vpop.permute.xlu0 %7008
      %7010 = vrot.lane.b32.xlu0 %v6993, 16
      %v7011 = vpop.permute.xlu0 %7010
      %7012 = vrot.lane.b32.xlu0 %v6994, 16
      %v7013 = vpop.permute.xlu0 %7012
      %7014 = vrot.lane.b32.xlu0 %v6995, 16
      %v7015 = vpop.permute.xlu0 %7014
      %7016 = vrot.lane.b32.xlu0 %v6996, 16
      %v7017 = vpop.permute.xlu0 %7016
      %7018 = vrot.lane.b32.xlu0 %v6997, 16
      %v7019 = vpop.permute.xlu0 %7018
      %7020 = vrot.lane.b32.xlu0 %v6998, 16
      %v7021 = vpop.permute.xlu0 %7020
      %7022 = vrot.lane.b32.xlu0 %v6999, 16
      %v7023 = vpop.permute.xlu0 %7022
      %7024 = vrot.lane.b32.xlu0 %v7000, 16
      %v7025 = vpop.permute.xlu0 %7024
      %7026 = vrot.lane.b32.xlu0 %v7001, 16
      %v7027 = vpop.permute.xlu0 %7026
      %7028 = vrot.lane.b32.xlu0 %v7002, 16
      %v7029 = vpop.permute.xlu0 %7028
      %7030 = vrot.lane.b32.xlu0 %v7003, 16
      %v7031 = vpop.permute.xlu0 %7030
      %7032 = vrot.lane.b32.xlu0 %v7004, 16
      %v7033 = vpop.permute.xlu0 %7032
      %7034 = vrot.lane.b32.xlu0 %v7005, 16
      %v7035 = vpop.permute.xlu0 %7034
      %7036 = vrot.lane.b32.xlu0 %v7006, 16
      %v7037 = vpop.permute.xlu0 %7036
      %7038 = vrot.lane.b32.xlu0 %v7007, 16
      %v7039 = vpop.permute.xlu0 %7038
      %7056 = vst.msk [vmem:[#allocation4] sm:$0xff] %vm4556, %v7009
      %7057 = vst.msk [vmem:[#allocation4 + $0x8] sm:$0xff] %vm4556, %v7011
      %7058 = vst.msk [vmem:[#allocation4 + $0x10] sm:$0xff] %vm4556, %v7013
      %7059 = vst.msk [vmem:[#allocation4 + $0x18] sm:$0xff] %vm4556, %v7015
      %7060 = vst.msk [vmem:[#allocation4 + $0x20] sm:$0xff] %vm4556, %v7017
      %7061 = vst.msk [vmem:[#allocation4 + $0x28] sm:$0xff] %vm4556, %v7019
      %7062 = vst.msk [vmem:[#allocation4 + $0x30] sm:$0xff] %vm4556, %v7021
      %7063 = vst.msk [vmem:[#allocation4 + $0x38] sm:$0xff] %vm4556, %v7023
      %7064 = vst.msk [vmem:[#allocation4 + $0x40] sm:$0xff] %vm4556, %v7025
      %7065 = vst.msk [vmem:[#allocation4 + $0x48] sm:$0xff] %vm4556, %v7027
      %7066 = vst.msk [vmem:[#allocation4 + $0x50] sm:$0xff] %vm4556, %v7029
      %7067 = vst.msk [vmem:[#allocation4 + $0x58] sm:$0xff] %vm4556, %v7031
      %7068 = vst.msk [vmem:[#allocation4 + $0x60] sm:$0xff] %vm4556, %v7033
      %7069 = vst.msk [vmem:[#allocation4 + $0x68] sm:$0xff] %vm4556, %v7035
      %7070 = vst.msk [vmem:[#allocation4 + $0x70] sm:$0xff] %vm4556, %v7037
      %7071 = vst.msk [vmem:[#allocation4 + $0x78] sm:$0xff] %vm4556, %v7039
      %v7072 = vld [vmem:[#allocation4] sm:$0xff]
      %v7073 = vld [vmem:[#allocation4 + $0x8] sm:$0xff]
      %v7074 = vld [vmem:[#allocation4 + $0x10] sm:$0xff]
      %v7075 = vld [vmem:[#allocation4 + $0x18] sm:$0xff]
      %v7076 = vld [vmem:[#allocation4 + $0x20] sm:$0xff]
      %v7077 = vld [vmem:[#allocation4 + $0x28] sm:$0xff]
      %v7078 = vld [vmem:[#allocation4 + $0x30] sm:$0xff]
      %v7079 = vld [vmem:[#allocation4 + $0x38] sm:$0xff]
      %v7080 = vld [vmem:[#allocation4 + $0x40] sm:$0xff]
      %v7081 = vld [vmem:[#allocation4 + $0x48] sm:$0xff]
      %v7082 = vld [vmem:[#allocation4 + $0x50] sm:$0xff]
      %v7083 = vld [vmem:[#allocation4 + $0x58] sm:$0xff]
      %v7084 = vld [vmem:[#allocation4 + $0x60] sm:$0xff]
      %v7085 = vld [vmem:[#allocation4 + $0x68] sm:$0xff]
      %v7086 = vld [vmem:[#allocation4 + $0x70] sm:$0xff]
      %v7087 = vld [vmem:[#allocation4 + $0x78] sm:$0xff]
      %s7088 = scalar_lea.vmem %s4, 24
      %v7089 = vld [vmem:[%s7088] sm:$0xf]
      %v7090 = vld [vmem:[%s7088 + $0x4] sm:$0xf]
      %v7091 = vld [vmem:[%s7088 + $0x8] sm:$0xf]
      %v7095 = vunpack.c.l.b16 %v7089
      %v7096 = vunpack.c.l.b16 %v7090
      %v7097 = vunpack.c.l.b16 %v7091
      %v7098 = vpack.c.b16 %v7096, %v7095
      %v7099 = vpack.c.b16 %v7097, %v7097
      %v7102 = vsel %vm5629, %v7072, 0
      %v7105 = vsel %vm5629, %v7073, 0
      %v7108 = vsel %vm5629, %v7074, 0
      %v7111 = vsel %vm5629, %v7075, 0
      %v7114 = vsel %vm5629, %v7076, 0
      %v7117 = vsel %vm5629, %v7077, 0
      %v7120 = vsel %vm5629, %v7078, 0
      %v7123 = vsel %vm5629, %v7079, 0
      %v7126 = vsel %vm5629, %v7080, 0
      %v7129 = vsel %vm5629, %v7081, 0
      %v7132 = vsel %vm5629, %v7082, 0
      %v7135 = vsel %vm5629, %v7083, 0
      %v7138 = vsel %vm5629, %v7084, 0
      %v7141 = vsel %vm5629, %v7085, 0
      %v7144 = vsel %vm5629, %v7086, 0
      %v7147 = vsel %vm5629, %v7087, 0
      %v7150 = vsel %vm1181, %v7099, 0
      %7152 = vmatprep.subr.bf16.mxu0 0
      %7153 = vmatpush1.bf16.msra.mxu0 %v7098
      %7154 = vmatprep.subr.bf16.mxu0 0
      %7155 = vmatpush1.bf16.msra.mxu0 %v7150
      %7156 = vmatprep.subr.bf16.mxu0 0
      %7157 = vmatpush1.bf16.msra.mxu0 0
      %7158 = vmatprep.subr.bf16.mxu0 0
      %7159 = vmatpush1.bf16.msra.mxu0 0
      %7160 = vmatprep.subr.bf16.mxu0 0
      %7161 = vmatpush1.bf16.msra.mxu0 0
      %7162 = vmatprep.subr.bf16.mxu0 0
      %7163 = vmatpush1.bf16.msra.mxu0 0
      %7164 = vmatprep.subr.bf16.mxu0 0
      %7165 = vmatpush1.bf16.msra.mxu0 0
      %7166 = vmatprep.subr.bf16.mxu0 0
      %7167 = vmatpush1.bf16.msra.mxu0 0
      %7168 = vmatprep.subr.bf16.mxu0 0
      %7169 = vmatpush1.bf16.msra.mxu0 0
      %7170 = vmatprep.subr.bf16.mxu0 0
      %7171 = vmatpush1.bf16.msra.mxu0 0
      %7172 = vmatprep.subr.bf16.mxu0 0
      %7173 = vmatpush1.bf16.msra.mxu0 0
      %7174 = vmatprep.subr.bf16.mxu0 0
      %7175 = vmatpush1.bf16.msra.mxu0 0
      %7176 = vmatprep.subr.bf16.mxu0 0
      %7177 = vmatpush1.bf16.msra.mxu0 0
      %7178 = vmatprep.subr.bf16.mxu0 0
      %7179 = vmatpush1.bf16.msra.mxu0 0
      %7180 = vmatprep.subr.bf16.mxu0 0
      %7181 = vmatpush1.bf16.msra.mxu0 0
      %7182 = vmatprep.subr.bf16.mxu0 0
      %7183 = vmatpush1.bf16.msra.mxu0 0
      %7184 = vmatprep.mubr.bf16.mxu0 0
      %7185 = vmatmul.mubr.bf16.gmra.mrb[0].mxu0 %v7102
      %v7186 = vpop.f32.mrb[0].mxu0
      %v7187 = vadd.f32 0.0, %v7186
      %v7188 = vpop.f32.mrb[0].mxu0
      %v7189 = vpop.f32.mrb[0].mxu0
      %v7190 = vadd.f32 0.0, %v7189
      %v7191 = vpop.f32.mrb[0].mxu0
      %7192 = vmatprep.mubr.bf16.mxu0 0
      %7193 = vmatmul.mubr.bf16.gmra.mrb[0].mxu0 %v7105
      %v7194 = vpop.f32.mrb[0].mxu0
      %v7195 = vadd.f32 0.0, %v7194
      %v7196 = vpop.f32.mrb[0].mxu0
      %v7197 = vpop.f32.mrb[0].mxu0
      %v7198 = vadd.f32 0.0, %v7197
      %v7199 = vpop.f32.mrb[0].mxu0
      %7200 = vmatprep.mubr.bf16.mxu0 0
      %7201 = vmatmul.mubr.bf16.gmra.mrb[0].mxu0 %v7108
      %v7202 = vpop.f32.mrb[0].mxu0
      %v7203 = vadd.f32 0.0, %v7202
      %v7204 = vpop.f32.mrb[0].mxu0
      %v7205 = vpop.f32.mrb[0].mxu0
      %v7206 = vadd.f32 0.0, %v7205
      %v7207 = vpop.f32.mrb[0].mxu0
      %7208 = vmatprep.mubr.bf16.mxu0 0
      %7209 = vmatmul.mubr.bf16.gmra.mrb[0].mxu0 %v7111
      %v7210 = vpop.f32.mrb[0].mxu0
      %v7211 = vadd.f32 0.0, %v7210
      %v7212 = vpop.f32.mrb[0].mxu0
      %v7213 = vpop.f32.mrb[0].mxu0
      %v7214 = vadd.f32 0.0, %v7213
      %v7215 = vpop.f32.mrb[0].mxu0
      %7216 = vmatprep.mubr.bf16.mxu0 0
      %7217 = vmatmul.mubr.bf16.gmra.mrb[0].mxu0 %v7114
      %v7218 = vpop.f32.mrb[0].mxu0
      %v7219 = vadd.f32 0.0, %v7218
      %v7220 = vpop.f32.mrb[0].mxu0
      %v7221 = vpop.f32.mrb[0].mxu0
      %v7222 = vadd.f32 0.0, %v7221
      %v7223 = vpop.f32.mrb[0].mxu0
      %7224 = vmatprep.mubr.bf16.mxu0 0
      %7225 = vmatmul.mubr.bf16.gmra.mrb[0].mxu0 %v7117
      %v7226 = vpop.f32.mrb[0].mxu0
      %v7227 = vadd.f32 0.0, %v7226
      %v7228 = vpop.f32.mrb[0].mxu0
      %v7229 = vpop.f32.mrb[0].mxu0
      %v7230 = vadd.f32 0.0, %v7229
      %v7231 = vpop.f32.mrb[0].mxu0
      %7232 = vmatprep.mubr.bf16.mxu0 0
      %7233 = vmatmul.mubr.bf16.gmra.mrb[0].mxu0 %v7120
      %v7234 = vpop.f32.mrb[0].mxu0
      %v7235 = vadd.f32 0.0, %v7234
      %v7236 = vpop.f32.mrb[0].mxu0
      %v7237 = vpop.f32.mrb[0].mxu0
      %v7238 = vadd.f32 0.0, %v7237
      %v7239 = vpop.f32.mrb[0].mxu0
      %7240 = vmatprep.mubr.bf16.mxu0 0
      %7241 = vmatmul.mubr.bf16.gmra.mrb[0].mxu0 %v7123
      %v7242 = vpop.f32.mrb[0].mxu0
      %v7243 = vadd.f32 0.0, %v7242
      %v7244 = vpop.f32.mrb[0].mxu0
      %v7245 = vpop.f32.mrb[0].mxu0
      %v7246 = vadd.f32 0.0, %v7245
      %v7247 = vpop.f32.mrb[0].mxu0
      %7248 = vmatprep.mubr.bf16.mxu0 0
      %7249 = vmatmul.mubr.bf16.gmra.mrb[0].mxu0 %v7126
      %v7250 = vpop.f32.mrb[0].mxu0
      %v7251 = vadd.f32 0.0, %v7250
      %v7252 = vpop.f32.mrb[0].mxu0
      %v7253 = vpop.f32.mrb[0].mxu0
      %v7254 = vadd.f32 0.0, %v7253
      %v7255 = vpop.f32.mrb[0].mxu0
      %7256 = vmatprep.mubr.bf16.mxu0 0
      %7257 = vmatmul.mubr.bf16.gmra.mrb[0].mxu0 %v7129
      %v7258 = vpop.f32.mrb[0].mxu0
      %v7259 = vadd.f32 0.0, %v7258
      %v7260 = vpop.f32.mrb[0].mxu0
      %v7261 = vpop.f32.mrb[0].mxu0
      %v7262 = vadd.f32 0.0, %v7261
      %v7263 = vpop.f32.mrb[0].mxu0
      %7264 = vmatprep.mubr.bf16.mxu0 0
      %7265 = vmatmul.mubr.bf16.gmra.mrb[0].mxu0 %v7132
      %v7266 = vpop.f32.mrb[0].mxu0
      %v7267 = vadd.f32 0.0, %v7266
      %v7268 = vpop.f32.mrb[0].mxu0
      %v7269 = vpop.f32.mrb[0].mxu0
      %v7270 = vadd.f32 0.0, %v7269
      %v7271 = vpop.f32.mrb[0].mxu0
      %7272 = vmatprep.mubr.bf16.mxu0 0
      %7273 = vmatmul.mubr.bf16.gmra.mrb[0].mxu0 %v7135
      %v7274 = vpop.f32.mrb[0].mxu0
      %v7275 = vadd.f32 0.0, %v7274
      %v7276 = vpop.f32.mrb[0].mxu0
      %v7277 = vpop.f32.mrb[0].mxu0
      %v7278 = vadd.f32 0.0, %v7277
      %v7279 = vpop.f32.mrb[0].mxu0
      %7280 = vmatprep.mubr.bf16.mxu0 0
      %7281 = vmatmul.mubr.bf16.gmra.mrb[0].mxu0 %v7138
      %v7282 = vpop.f32.mrb[0].mxu0
      %v7283 = vadd.f32 0.0, %v7282
      %v7284 = vpop.f32.mrb[0].mxu0
      %v7285 = vpop.f32.mrb[0].mxu0
      %v7286 = vadd.f32 0.0, %v7285
      %v7287 = vpop.f32.mrb[0].mxu0
      %7288 = vmatprep.mubr.bf16.mxu0 0
      %7289 = vmatmul.mubr.bf16.gmra.mrb[0].mxu0 %v7141
      %v7290 = vpop.f32.mrb[0].mxu0
      %v7291 = vadd.f32 0.0, %v7290
      %v7292 = vpop.f32.mrb[0].mxu0
      %v7293 = vpop.f32.mrb[0].mxu0
      %v7294 = vadd.f32 0.0, %v7293
      %v7295 = vpop.f32.mrb[0].mxu0
      %7296 = vmatprep.mubr.bf16.mxu0 0
      %7297 = vmatmul.mubr.bf16.gmra.mrb[0].mxu0 %v7144
      %v7298 = vpop.f32.mrb[0].mxu0
      %v7299 = vadd.f32 0.0, %v7298
      %v7300 = vpop.f32.mrb[0].mxu0
      %v7301 = vpop.f32.mrb[0].mxu0
      %v7302 = vadd.f32 0.0, %v7301
      %v7303 = vpop.f32.mrb[0].mxu0
      %7304 = vmatprep.mubr.bf16.mxu0 0
      %7305 = vmatmul.mubr.bf16.gmra.mrb[0].mxu0 %v7147
      %v7306 = vpop.f32.mrb[0].mxu0
      %v7307 = vadd.f32 0.0, %v7306
      %v7308 = vpop.f32.mrb[0].mxu0
      %v7309 = vpop.f32.mrb[0].mxu0
      %v7310 = vadd.f32 0.0, %v7309
      %v7311 = vpop.f32.mrb[0].mxu0
      %7312 = vdwg.mxu0
      %v7313 = vadd.f32 %v5937, %v7187
      %v7314 = vadd.f32 %v5940, %v7190
      %v7315 = vadd.f32 %v5945, %v7195
      %v7316 = vadd.f32 %v5948, %v7198
      %v7317 = vadd.f32 %v5953, %v7203
      %v7318 = vadd.f32 %v5956, %v7206
      %v7319 = vadd.f32 %v5961, %v7211
      %v7320 = vadd.f32 %v5964, %v7214
      %v7321 = vadd.f32 %v5969, %v7219
      %v7322 = vadd.f32 %v5972, %v7222
      %v7323 = vadd.f32 %v5977, %v7227
      %v7324 = vadd.f32 %v5980, %v7230
      %v7325 = vadd.f32 %v5985, %v7235
      %v7326 = vadd.f32 %v5988, %v7238
      %v7327 = vadd.f32 %v5993, %v7243
      %v7328 = vadd.f32 %v5996, %v7246
      %v7329 = vadd.f32 %v6001, %v7251
      %v7330 = vadd.f32 %v6004, %v7254
      %v7331 = vadd.f32 %v6009, %v7259
      %v7332 = vadd.f32 %v6012, %v7262
      %v7333 = vadd.f32 %v6017, %v7267
      %v7334 = vadd.f32 %v6020, %v7270
      %v7335 = vadd.f32 %v6025, %v7275
      %v7336 = vadd.f32 %v6028, %v7278
      %v7337 = vadd.f32 %v6033, %v7283
      %v7338 = vadd.f32 %v6036, %v7286
      %v7339 = vadd.f32 %v6041, %v7291
      %v7340 = vadd.f32 %v6044, %v7294
      %v7341 = vadd.f32 %v6049, %v7299
      %v7342 = vadd.f32 %v6052, %v7302
      %v7343 = vadd.f32 %v6057, %v7307
      %v7344 = vadd.f32 %v6060, %v7310
      %v7345 = vld [vmem:[%s5] sm:$0x1]
      %v7347 = vlaneseq
      %v7348 = vshrl.u32 %v7347, 7
      %v7349 = vsub.s32 0, %v7348
      %v7350 = vrot.slane %v7345, %v7349
      %v7352 = vadd.f32 %v7313, %v7350
      %v7353 = vadd.f32 %v7314, %v7350
      %v7354 = vadd.f32 %v7315, %v7350
      %v7355 = vadd.f32 %v7316, %v7350
      %v7356 = vadd.f32 %v7317, %v7350
      %v7357 = vadd.f32 %v7318, %v7350
      %v7358 = vadd.f32 %v7319, %v7350
      %v7359 = vadd.f32 %v7320, %v7350
      %v7360 = vadd.f32 %v7321, %v7350
      %v7361 = vadd.f32 %v7322, %v7350
      %v7362 = vadd.f32 %v7323, %v7350
      %v7363 = vadd.f32 %v7324, %v7350
      %v7364 = vadd.f32 %v7325, %v7350
      %v7365 = vadd.f32 %v7326, %v7350
      %v7366 = vadd.f32 %v7327, %v7350
      %v7367 = vadd.f32 %v7328, %v7350
      %v7368 = vadd.f32 %v7329, %v7350
      %v7369 = vadd.f32 %v7330, %v7350
      %v7370 = vadd.f32 %v7331, %v7350
      %v7371 = vadd.f32 %v7332, %v7350
      %v7372 = vadd.f32 %v7333, %v7350
      %v7373 = vadd.f32 %v7334, %v7350
      %v7374 = vadd.f32 %v7335, %v7350
      %v7375 = vadd.f32 %v7336, %v7350
      %v7376 = vadd.f32 %v7337, %v7350
      %v7377 = vadd.f32 %v7338, %v7350
      %v7378 = vadd.f32 %v7339, %v7350
      %v7379 = vadd.f32 %v7340, %v7350
      %v7380 = vadd.f32 %v7341, %v7350
      %v7381 = vadd.f32 %v7342, %v7350
      %v7382 = vadd.f32 %v7343, %v7350
      %v7383 = vadd.f32 %v7344, %v7350
      %v7384 = vmax.f32 %v7352, 0.0
      %v7385 = vmax.f32 %v7353, 0.0
      %v7386 = vmax.f32 %v7354, 0.0
      %v7387 = vmax.f32 %v7355, 0.0
      %v7388 = vmax.f32 %v7356, 0.0
      %v7389 = vmax.f32 %v7357, 0.0
      %v7390 = vmax.f32 %v7358, 0.0
      %v7391 = vmax.f32 %v7359, 0.0
      %v7392 = vmax.f32 %v7360, 0.0
      %v7393 = vmax.f32 %v7361, 0.0
      %v7394 = vmax.f32 %v7362, 0.0
      %v7395 = vmax.f32 %v7363, 0.0
      %v7396 = vmax.f32 %v7364, 0.0
      %v7397 = vmax.f32 %v7365, 0.0
      %v7398 = vmax.f32 %v7366, 0.0
      %v7399 = vmax.f32 %v7367, 0.0
      %v7400 = vmax.f32 %v7368, 0.0
      %v7401 = vmax.f32 %v7369, 0.0
      %v7402 = vmax.f32 %v7370, 0.0
      %v7403 = vmax.f32 %v7371, 0.0
      %v7404 = vmax.f32 %v7372, 0.0
      %v7405 = vmax.f32 %v7373, 0.0
      %v7406 = vmax.f32 %v7374, 0.0
      %v7407 = vmax.f32 %v7375, 0.0
      %v7408 = vmax.f32 %v7376, 0.0
      %v7409 = vmax.f32 %v7377, 0.0
      %v7410 = vmax.f32 %v7378, 0.0
      %v7411 = vmax.f32 %v7379, 0.0
      %v7412 = vmax.f32 %v7380, 0.0
      %v7413 = vmax.f32 %v7381, 0.0
      %v7414 = vmax.f32 %v7382, 0.0
      %v7415 = vmax.f32 %v7383, 0.0
      %v7416 = vpack.c.bf16 %v7385, %v7384
      %v7417 = vpack.c.bf16 %v7387, %v7386
      %v7418 = vpack.c.bf16 %v7389, %v7388
      %v7419 = vpack.c.bf16 %v7391, %v7390
      %v7420 = vpack.c.bf16 %v7393, %v7392
      %v7421 = vpack.c.bf16 %v7395, %v7394
      %v7422 = vpack.c.bf16 %v7397, %v7396
      %v7423 = vpack.c.bf16 %v7399, %v7398
      %v7424 = vpack.c.bf16 %v7401, %v7400
      %v7425 = vpack.c.bf16 %v7403, %v7402
      %v7426 = vpack.c.bf16 %v7405, %v7404
      %v7427 = vpack.c.bf16 %v7407, %v7406
      %v7428 = vpack.c.bf16 %v7409, %v7408
      %v7429 = vpack.c.bf16 %v7411, %v7410
      %v7430 = vpack.c.bf16 %v7413, %v7412
      %v7431 = vpack.c.bf16 %v7415, %v7414
      %v7448 = vunpack.c.l.b16 %v7416
      %v7449 = vunpack.c.h.b16 %v7416
      %v7450 = vunpack.c.l.b16 %v7417
      %v7451 = vunpack.c.h.b16 %v7417
      %v7452 = vunpack.c.l.b16 %v7418
      %v7453 = vunpack.c.h.b16 %v7418
      %v7454 = vunpack.c.l.b16 %v7419
      %v7455 = vunpack.c.h.b16 %v7419
      %v7456 = vunpack.c.l.b16 %v7420
      %v7457 = vunpack.c.h.b16 %v7420
      %v7458 = vunpack.c.l.b16 %v7421
      %v7459 = vunpack.c.h.b16 %v7421
      %v7460 = vunpack.c.l.b16 %v7422
      %v7461 = vunpack.c.h.b16 %v7422
      %v7462 = vunpack.c.l.b16 %v7423
      %v7463 = vunpack.c.h.b16 %v7423
      %v7464 = vunpack.c.l.b16 %v7424
      %v7465 = vunpack.c.h.b16 %v7424
      %v7466 = vunpack.c.l.b16 %v7425
      %v7467 = vunpack.c.h.b16 %v7425
      %v7468 = vunpack.c.l.b16 %v7426
      %v7469 = vunpack.c.h.b16 %v7426
      %v7470 = vunpack.c.l.b16 %v7427
      %v7471 = vunpack.c.h.b16 %v7427
      %v7472 = vunpack.c.l.b16 %v7428
      %v7473 = vunpack.c.h.b16 %v7428
      %v7474 = vunpack.c.l.b16 %v7429
      %v7475 = vunpack.c.h.b16 %v7429
      %v7476 = vunpack.c.l.b16 %v7430
      %v7477 = vunpack.c.h.b16 %v7430
      %v7478 = vunpack.c.l.b16 %v7431
      %v7479 = vunpack.c.h.b16 %v7431
      %v7480 = vpack.c.b16 %v7448, %v7448
      %v7481 = vpack.c.b16 %v7449, %v7449
      %v7482 = vpack.c.b16 %v7450, %v7450
      %v7483 = vpack.c.b16 %v7451, %v7451
      %v7484 = vpack.c.b16 %v7452, %v7452
      %v7485 = vpack.c.b16 %v7453, %v7453
      %v7486 = vpack.c.b16 %v7454, %v7454
      %v7487 = vpack.c.b16 %v7455, %v7455
      %v7488 = vpack.c.b16 %v7456, %v7456
      %v7489 = vpack.c.b16 %v7457, %v7457
      %v7490 = vpack.c.b16 %v7458, %v7458
      %v7491 = vpack.c.b16 %v7459, %v7459
      %v7492 = vpack.c.b16 %v7460, %v7460
      %v7493 = vpack.c.b16 %v7461, %v7461
      %v7494 = vpack.c.b16 %v7462, %v7462
      %v7495 = vpack.c.b16 %v7463, %v7463
      %v7496 = vpack.c.b16 %v7464, %v7464
      %v7497 = vpack.c.b16 %v7465, %v7465
      %v7498 = vpack.c.b16 %v7466, %v7466
      %v7499 = vpack.c.b16 %v7467, %v7467
      %v7500 = vpack.c.b16 %v7468, %v7468
      %v7501 = vpack.c.b16 %v7469, %v7469
      %v7502 = vpack.c.b16 %v7470, %v7470
      %v7503 = vpack.c.b16 %v7471, %v7471
      %v7504 = vpack.c.b16 %v7472, %v7472
      %v7505 = vpack.c.b16 %v7473, %v7473
      %v7506 = vpack.c.b16 %v7474, %v7474
      %v7507 = vpack.c.b16 %v7475, %v7475
      %v7508 = vpack.c.b16 %v7476, %v7476
      %v7509 = vpack.c.b16 %v7477, %v7477
      %v7510 = vpack.c.b16 %v7478, %v7478
      %v7511 = vpack.c.b16 %v7479, %v7479
      %v7513 = vshrl.u32 %v7480, 16
      %v7515 = vrot.slane %v7513, 7
      %v7516 = vshll.u32 %v7480, 16
      %v7518 = vor.u32 %v7515, %v7516
      %v7519 = vrot.slane %v7515, 4
      %v7521 = vshrl.u32 %v7481, 16
      %v7523 = vrot.slane %v7521, 7
      %v7524 = vshll.u32 %v7481, 16
      %v7526 = vor.u32 %v7523, %v7524
      %v7527 = vsel %vm597, %v7519, %v7526
      %v7528 = vrot.slane %v7523, 4
      %v7530 = vshrl.u32 %v7482, 16
      %v7532 = vrot.slane %v7530, 7
      %v7533 = vshll.u32 %v7482, 16
      %v7535 = vor.u32 %v7532, %v7533
      %v7536 = vrot.slane %v7532, 4
      %v7538 = vshrl.u32 %v7483, 16
      %v7540 = vrot.slane %v7538, 7
      %v7541 = vshll.u32 %v7483, 16
      %v7543 = vor.u32 %v7540, %v7541
      %v7544 = vsel %vm597, %v7536, %v7543
      %v7545 = vrot.slane %v7540, 4
      %v7547 = vshrl.u32 %v7484, 16
      %v7549 = vrot.slane %v7547, 7
      %v7550 = vshll.u32 %v7484, 16
      %v7552 = vor.u32 %v7549, %v7550
      %v7553 = vrot.slane %v7549, 4
      %v7555 = vshrl.u32 %v7485, 16
      %v7557 = vrot.slane %v7555, 7
      %v7558 = vshll.u32 %v7485, 16
      %v7560 = vor.u32 %v7557, %v7558
      %v7561 = vsel %vm597, %v7553, %v7560
      %v7562 = vrot.slane %v7557, 4
      %v7564 = vshrl.u32 %v7486, 16
      %v7566 = vrot.slane %v7564, 7
      %v7567 = vshll.u32 %v7486, 16
      %v7569 = vor.u32 %v7566, %v7567
      %v7570 = vrot.slane %v7566, 4
      %v7572 = vshrl.u32 %v7487, 16
      %v7574 = vrot.slane %v7572, 7
      %v7575 = vshll.u32 %v7487, 16
      %v7577 = vor.u32 %v7574, %v7575
      %v7578 = vsel %vm597, %v7570, %v7577
      %v7579 = vrot.slane %v7574, 4
      %v7581 = vshrl.u32 %v7488, 16
      %v7583 = vrot.slane %v7581, 7
      %v7584 = vshll.u32 %v7488, 16
      %v7586 = vor.u32 %v7583, %v7584
      %v7587 = vrot.slane %v7583, 4
      %v7589 = vshrl.u32 %v7489, 16
      %v7591 = vrot.slane %v7589, 7
      %v7592 = vshll.u32 %v7489, 16
      %v7594 = vor.u32 %v7591, %v7592
      %v7595 = vsel %vm597, %v7587, %v7594
      %v7596 = vrot.slane %v7591, 4
      %v7598 = vshrl.u32 %v7490, 16
      %v7600 = vrot.slane %v7598, 7
      %v7601 = vshll.u32 %v7490, 16
      %v7603 = vor.u32 %v7600, %v7601
      %v7604 = vrot.slane %v7600, 4
      %v7606 = vshrl.u32 %v7491, 16
      %v7608 = vrot.slane %v7606, 7
      %v7609 = vshll.u32 %v7491, 16
      %v7611 = vor.u32 %v7608, %v7609
      %v7612 = vsel %vm597, %v7604, %v7611
      %v7613 = vrot.slane %v7608, 4
      %v7615 = vshrl.u32 %v7492, 16
      %v7617 = vrot.slane %v7615, 7
      %v7618 = vshll.u32 %v7492, 16
      %v7620 = vor.u32 %v7617, %v7618
      %v7621 = vrot.slane %v7617, 4
      %v7623 = vshrl.u32 %v7493, 16
      %v7625 = vrot.slane %v7623, 7
      %v7626 = vshll.u32 %v7493, 16
      %v7628 = vor.u32 %v7625, %v7626
      %v7629 = vsel %vm597, %v7621, %v7628
      %v7630 = vrot.slane %v7625, 4
      %v7632 = vshrl.u32 %v7494, 16
      %v7634 = vrot.slane %v7632, 7
      %v7635 = vshll.u32 %v7494, 16
      %v7637 = vor.u32 %v7634, %v7635
      %v7638 = vrot.slane %v7634, 4
      %v7640 = vshrl.u32 %v7495, 16
      %v7642 = vrot.slane %v7640, 7
      %v7643 = vshll.u32 %v7495, 16
      %v7645 = vor.u32 %v7642, %v7643
      %v7646 = vsel %vm597, %v7638, %v7645
      %v7647 = vrot.slane %v7642, 4
      %v7649 = vshrl.u32 %v7496, 16
      %v7651 = vrot.slane %v7649, 7
      %v7652 = vshll.u32 %v7496, 16
      %v7654 = vor.u32 %v7651, %v7652
      %v7655 = vrot.slane %v7651, 4
      %v7657 = vshrl.u32 %v7497, 16
      %v7659 = vrot.slane %v7657, 7
      %v7660 = vshll.u32 %v7497, 16
      %v7662 = vor.u32 %v7659, %v7660
      %v7663 = vsel %vm597, %v7655, %v7662
      %v7664 = vrot.slane %v7659, 4
      %v7666 = vshrl.u32 %v7498, 16
      %v7668 = vrot.slane %v7666, 7
      %v7669 = vshll.u32 %v7498, 16
      %v7671 = vor.u32 %v7668, %v7669
      %v7672 = vrot.slane %v7668, 4
      %v7674 = vshrl.u32 %v7499, 16
      %v7676 = vrot.slane %v7674, 7
      %v7677 = vshll.u32 %v7499, 16
      %v7679 = vor.u32 %v7676, %v7677
      %v7680 = vsel %vm597, %v7672, %v7679
      %v7681 = vrot.slane %v7676, 4
      %v7683 = vshrl.u32 %v7500, 16
      %v7685 = vrot.slane %v7683, 7
      %v7686 = vshll.u32 %v7500, 16
      %v7688 = vor.u32 %v7685, %v7686
      %v7689 = vrot.slane %v7685, 4
      %v7691 = vshrl.u32 %v7501, 16
      %v7693 = vrot.slane %v7691, 7
      %v7694 = vshll.u32 %v7501, 16
      %v7696 = vor.u32 %v7693, %v7694
      %v7697 = vsel %vm597, %v7689, %v7696
      %v7698 = vrot.slane %v7693, 4
      %v7700 = vshrl.u32 %v7502, 16
      %v7702 = vrot.slane %v7700, 7
      %v7703 = vshll.u32 %v7502, 16
      %v7705 = vor.u32 %v7702, %v7703
      %v7706 = vrot.slane %v7702, 4
      %v7708 = vshrl.u32 %v7503, 16
      %v7710 = vrot.slane %v7708, 7
      %v7711 = vshll.u32 %v7503, 16
      %v7713 = vor.u32 %v7710, %v7711
      %v7714 = vsel %vm597, %v7706, %v7713
      %v7715 = vrot.slane %v7710, 4
      %v7717 = vshrl.u32 %v7504, 16
      %v7719 = vrot.slane %v7717, 7
      %v7720 = vshll.u32 %v7504, 16
      %v7722 = vor.u32 %v7719, %v7720
      %v7723 = vrot.slane %v7719, 4
      %v7725 = vshrl.u32 %v7505, 16
      %v7727 = vrot.slane %v7725, 7
      %v7728 = vshll.u32 %v7505, 16
      %v7730 = vor.u32 %v7727, %v7728
      %v7731 = vsel %vm597, %v7723, %v7730
      %v7732 = vrot.slane %v7727, 4
      %v7734 = vshrl.u32 %v7506, 16
      %v7736 = vrot.slane %v7734, 7
      %v7737 = vshll.u32 %v7506, 16
      %v7739 = vor.u32 %v7736, %v7737
      %v7740 = vrot.slane %v7736, 4
      %v7742 = vshrl.u32 %v7507, 16
      %v7744 = vrot.slane %v7742, 7
      %v7745 = vshll.u32 %v7507, 16
      %v7747 = vor.u32 %v7744, %v7745
      %v7748 = vsel %vm597, %v7740, %v7747
      %v7749 = vrot.slane %v7744, 4
      %v7751 = vshrl.u32 %v7508, 16
      %v7753 = vrot.slane %v7751, 7
      %v7754 = vshll.u32 %v7508, 16
      %v7756 = vor.u32 %v7753, %v7754
      %v7757 = vrot.slane %v7753, 4
      %v7759 = vshrl.u32 %v7509, 16
      %v7761 = vrot.slane %v7759, 7
      %v7762 = vshll.u32 %v7509, 16
      %v7764 = vor.u32 %v7761, %v7762
      %v7765 = vsel %vm597, %v7757, %v7764
      %v7766 = vrot.slane %v7761, 4
      %v7768 = vshrl.u32 %v7510, 16
      %v7770 = vrot.slane %v7768, 7
      %v7771 = vshll.u32 %v7510, 16
      %v7773 = vor.u32 %v7770, %v7771
      %v7774 = vrot.slane %v7770, 4
      %v7776 = vshrl.u32 %v7511, 16
      %v7778 = vrot.slane %v7776, 7
      %v7779 = vshll.u32 %v7511, 16
      %v7781 = vor.u32 %v7778, %v7779
      %v7782 = vsel %vm597, %v7774, %v7781
      %v7783 = vrot.slane %v7778, 4
      %s7832 = scalar_lea.vmem [#allocation3], 12
      %vm7833 = vcmask 60416
      %vm7834 = vmand %vm7833, %vm393
      %v7835 = vld [vmem:[%s7832] sm:$0xf]
      %v7836 = vsel %vm7834, %v7518, %v7835
      %7837 = vst [vmem:[%s7832] sm:$0xf] %v7836
      %7838 = vst.msk [vmem:[%s7832 + $0x4] sm:$0xf] %vm327, %v7527
      %v7839 = vld [vmem:[%s7832 + $0x8] sm:$0x1]
      %v7840 = vsel %vm338, %v7528, %v7839
      %7841 = vst [vmem:[%s7832 + $0x8] sm:$0x1] %v7840
      %v7842 = vld [vmem:[%s7832 + $0xc] sm:$0xf]
      %v7843 = vsel %vm7834, %v7535, %v7842
      %7844 = vst [vmem:[%s7832 + $0xc] sm:$0xf] %v7843
      %7845 = vst.msk [vmem:[%s7832 + $0x10] sm:$0xf] %vm327, %v7544
      %v7846 = vld [vmem:[%s7832 + $0x14] sm:$0x1]
      %v7847 = vsel %vm338, %v7545, %v7846
      %7848 = vst [vmem:[%s7832 + $0x14] sm:$0x1] %v7847
      %v7849 = vld [vmem:[%s7832 + $0x18] sm:$0xf]
      %v7850 = vsel %vm7834, %v7552, %v7849
      %7851 = vst [vmem:[%s7832 + $0x18] sm:$0xf] %v7850
      %7852 = vst.msk [vmem:[%s7832 + $0x1c] sm:$0xf] %vm327, %v7561
      %v7853 = vld [vmem:[%s7832 + $0x20] sm:$0x1]
      %v7854 = vsel %vm338, %v7562, %v7853
      %7855 = vst [vmem:[%s7832 + $0x20] sm:$0x1] %v7854
      %v7856 = vld [vmem:[%s7832 + $0x24] sm:$0xf]
      %v7857 = vsel %vm7834, %v7569, %v7856
      %7858 = vst [vmem:[%s7832 + $0x24] sm:$0xf] %v7857
      %7859 = vst.msk [vmem:[%s7832 + $0x28] sm:$0xf] %vm327, %v7578
      %v7860 = vld [vmem:[%s7832 + $0x2c] sm:$0x1]
      %v7861 = vsel %vm338, %v7579, %v7860
      %7862 = vst [vmem:[%s7832 + $0x2c] sm:$0x1] %v7861
      %v7863 = vld [vmem:[%s7832 + $0x30] sm:$0xf]
      %v7864 = vsel %vm7834, %v7586, %v7863
      %7865 = vst [vmem:[%s7832 + $0x30] sm:$0xf] %v7864
      %7866 = vst.msk [vmem:[%s7832 + $0x34] sm:$0xf] %vm327, %v7595
      %v7867 = vld [vmem:[%s7832 + $0x38] sm:$0x1]
      %v7868 = vsel %vm338, %v7596, %v7867
      %7869 = vst [vmem:[%s7832 + $0x38] sm:$0x1] %v7868
      %v7870 = vld [vmem:[%s7832 + $0x3c] sm:$0xf]
      %v7871 = vsel %vm7834, %v7603, %v7870
      %7872 = vst [vmem:[%s7832 + $0x3c] sm:$0xf] %v7871
      %7873 = vst.msk [vmem:[%s7832 + $0x40] sm:$0xf] %vm327, %v7612
      %v7874 = vld [vmem:[%s7832 + $0x44] sm:$0x1]
      %v7875 = vsel %vm338, %v7613, %v7874
      %7876 = vst [vmem:[%s7832 + $0x44] sm:$0x1] %v7875
      %v7877 = vld [vmem:[%s7832 + $0x48] sm:$0xf]
      %v7878 = vsel %vm7834, %v7620, %v7877
      %7879 = vst [vmem:[%s7832 + $0x48] sm:$0xf] %v7878
      %7880 = vst.msk [vmem:[%s7832 + $0x4c] sm:$0xf] %vm327, %v7629
      %v7881 = vld [vmem:[%s7832 + $0x50] sm:$0x1]
      %v7882 = vsel %vm338, %v7630, %v7881
      %7883 = vst [vmem:[%s7832 + $0x50] sm:$0x1] %v7882
      %v7884 = vld [vmem:[%s7832 + $0x54] sm:$0xf]
      %v7885 = vsel %vm7834, %v7637, %v7884
      %7886 = vst [vmem:[%s7832 + $0x54] sm:$0xf] %v7885
      %7887 = vst.msk [vmem:[%s7832 + $0x58] sm:$0xf] %vm327, %v7646
      %v7888 = vld [vmem:[%s7832 + $0x5c] sm:$0x1]
      %v7889 = vsel %vm338, %v7647, %v7888
      %7890 = vst [vmem:[%s7832 + $0x5c] sm:$0x1] %v7889
      %v7891 = vld [vmem:[%s7832 + $0x60] sm:$0xf]
      %v7892 = vsel %vm7834, %v7654, %v7891
      %7893 = vst [vmem:[%s7832 + $0x60] sm:$0xf] %v7892
      %7894 = vst.msk [vmem:[%s7832 + $0x64] sm:$0xf] %vm327, %v7663
      %v7895 = vld [vmem:[%s7832 + $0x68] sm:$0x1]
      %v7896 = vsel %vm338, %v7664, %v7895
      %7897 = vst [vmem:[%s7832 + $0x68] sm:$0x1] %v7896
      %v7898 = vld [vmem:[%s7832 + $0x6c] sm:$0xf]
      %v7899 = vsel %vm7834, %v7671, %v7898
      %7900 = vst [vmem:[%s7832 + $0x6c] sm:$0xf] %v7899
      %7901 = vst.msk [vmem:[%s7832 + $0x70] sm:$0xf] %vm327, %v7680
      %v7902 = vld [vmem:[%s7832 + $0x74] sm:$0x1]
      %v7903 = vsel %vm338, %v7681, %v7902
      %7904 = vst [vmem:[%s7832 + $0x74] sm:$0x1] %v7903
      %v7905 = vld [vmem:[%s7832 + $0x78] sm:$0xf]
      %v7906 = vsel %vm7834, %v7688, %v7905
      %7907 = vst [vmem:[%s7832 + $0x78] sm:$0xf] %v7906
      %7908 = vst.msk [vmem:[%s7832 + $0x7c] sm:$0xf] %vm327, %v7697
      %v7909 = vld [vmem:[%s7832 + $0x80] sm:$0x1]
      %v7910 = vsel %vm338, %v7698, %v7909
      %7911 = vst [vmem:[%s7832 + $0x80] sm:$0x1] %v7910
      %v7912 = vld [vmem:[%s7832 + $0x84] sm:$0xf]
      %v7913 = vsel %vm7834, %v7705, %v7912
      %7914 = vst [vmem:[%s7832 + $0x84] sm:$0xf] %v7913
      %7915 = vst.msk [vmem:[%s7832 + $0x88] sm:$0xf] %vm327, %v7714
      %v7916 = vld [vmem:[%s7832 + $0x8c] sm:$0x1]
      %v7917 = vsel %vm338, %v7715, %v7916
      %7918 = vst [vmem:[%s7832 + $0x8c] sm:$0x1] %v7917
      %v7919 = vld [vmem:[%s7832 + $0x90] sm:$0xf]
      %v7920 = vsel %vm7834, %v7722, %v7919
      %7921 = vst [vmem:[%s7832 + $0x90] sm:$0xf] %v7920
      %7922 = vst.msk [vmem:[%s7832 + $0x94] sm:$0xf] %vm327, %v7731
      %v7923 = vld [vmem:[%s7832 + $0x98] sm:$0x1]
      %v7924 = vsel %vm338, %v7732, %v7923
      %7925 = vst [vmem:[%s7832 + $0x98] sm:$0x1] %v7924
      %v7926 = vld [vmem:[%s7832 + $0x9c] sm:$0xf]
      %v7927 = vsel %vm7834, %v7739, %v7926
      %7928 = vst [vmem:[%s7832 + $0x9c] sm:$0xf] %v7927
      %7929 = vst.msk [vmem:[%s7832 + $0xa0] sm:$0xf] %vm327, %v7748
      %v7930 = vld [vmem:[%s7832 + $0xa4] sm:$0x1]
      %v7931 = vsel %vm338, %v7749, %v7930
      %7932 = vst [vmem:[%s7832 + $0xa4] sm:$0x1] %v7931
      %v7933 = vld [vmem:[%s7832 + $0xa8] sm:$0xf]
      %v7934 = vsel %vm7834, %v7756, %v7933
      %7935 = vst [vmem:[%s7832 + $0xa8] sm:$0xf] %v7934
      %7936 = vst.msk [vmem:[%s7832 + $0xac] sm:$0xf] %vm327, %v7765
      %v7937 = vld [vmem:[%s7832 + $0xb0] sm:$0x1]
      %v7938 = vsel %vm338, %v7766, %v7937
      %7939 = vst [vmem:[%s7832 + $0xb0] sm:$0x1] %v7938
      %v7940 = vld [vmem:[%s7832 + $0xb4] sm:$0xf]
      %v7941 = vsel %vm7834, %v7773, %v7940
      %7942 = vst [vmem:[%s7832 + $0xb4] sm:$0xf] %v7941
      %7943 = vst.msk [vmem:[%s7832 + $0xb8] sm:$0xf] %vm327, %v7782
      %v7944 = vld [vmem:[%s7832 + $0xbc] sm:$0x1]
      %v7945 = vsel %vm338, %v7783, %v7944
      %7946 = vst [vmem:[%s7832 + $0xbc] sm:$0x1] %v7945
      %v7947 = vld [vmem:[#allocation3] sm:$0xf]
      %v7948 = vld [vmem:[#allocation3 + $0x4] sm:$0xf]
      %v7949 = vld [vmem:[#allocation3 + $0xc] sm:$0xf]
      %v7950 = vld [vmem:[#allocation3 + $0x10] sm:$0xf]
      %v7951 = vld [vmem:[#allocation3 + $0x18] sm:$0xf]
      %v7952 = vld [vmem:[#allocation3 + $0x1c] sm:$0xf]
      %v7953 = vld [vmem:[#allocation3 + $0x24] sm:$0xf]
      %v7954 = vld [vmem:[#allocation3 + $0x28] sm:$0xf]
      %v7955 = vld [vmem:[#allocation3 + $0x30] sm:$0xf]
      %v7956 = vld [vmem:[#allocation3 + $0x34] sm:$0xf]
      %v7957 = vld [vmem:[#allocation3 + $0x3c] sm:$0xf]
      %v7958 = vld [vmem:[#allocation3 + $0x40] sm:$0xf]
      %v7959 = vld [vmem:[#allocation3 + $0x48] sm:$0xf]
      %v7960 = vld [vmem:[#allocation3 + $0x4c] sm:$0xf]
      %v7961 = vld [vmem:[#allocation3 + $0x54] sm:$0xf]
      %v7962 = vld [vmem:[#allocation3 + $0x58] sm:$0xf]
      %v7963 = vld [vmem:[#allocation3 + $0x60] sm:$0xf]
      %v7964 = vld [vmem:[#allocation3 + $0x64] sm:$0xf]
      %v7965 = vld [vmem:[#allocation3 + $0x6c] sm:$0xf]
      %v7966 = vld [vmem:[#allocation3 + $0x70] sm:$0xf]
      %v7967 = vld [vmem:[#allocation3 + $0x78] sm:$0xf]
      %v7968 = vld [vmem:[#allocation3 + $0x7c] sm:$0xf]
      %v7969 = vld [vmem:[#allocation3 + $0x84] sm:$0xf]
      %v7970 = vld [vmem:[#allocation3 + $0x88] sm:$0xf]
      %v7971 = vld [vmem:[#allocation3 + $0x90] sm:$0xf]
      %v7972 = vld [vmem:[#allocation3 + $0x94] sm:$0xf]
      %v7973 = vld [vmem:[#allocation3 + $0x9c] sm:$0xf]
      %v7974 = vld [vmem:[#allocation3 + $0xa0] sm:$0xf]
      %v7975 = vld [vmem:[#allocation3 + $0xa8] sm:$0xf]
      %v7976 = vld [vmem:[#allocation3 + $0xac] sm:$0xf]
      %v7977 = vld [vmem:[#allocation3 + $0xb4] sm:$0xf]
      %v7978 = vld [vmem:[#allocation3 + $0xb8] sm:$0xf]
      %v8011 = vunpack.c.l.b16 %v7947
      %v8012 = vunpack.c.l.b16 %v7948
      %v8013 = vunpack.c.l.b16 %v7949
      %v8014 = vunpack.c.l.b16 %v7950
      %v8015 = vunpack.c.l.b16 %v7951
      %v8016 = vunpack.c.l.b16 %v7952
      %v8017 = vunpack.c.l.b16 %v7953
      %v8018 = vunpack.c.l.b16 %v7954
      %v8019 = vunpack.c.l.b16 %v7955
      %v8020 = vunpack.c.l.b16 %v7956
      %v8021 = vunpack.c.l.b16 %v7957
      %v8022 = vunpack.c.l.b16 %v7958
      %v8023 = vunpack.c.l.b16 %v7959
      %v8024 = vunpack.c.l.b16 %v7960
      %v8025 = vunpack.c.l.b16 %v7961
      %v8026 = vunpack.c.l.b16 %v7962
      %v8027 = vunpack.c.l.b16 %v7963
      %v8028 = vunpack.c.l.b16 %v7964
      %v8029 = vunpack.c.l.b16 %v7965
      %v8030 = vunpack.c.l.b16 %v7966
      %v8031 = vunpack.c.l.b16 %v7967
      %v8032 = vunpack.c.l.b16 %v7968
      %v8033 = vunpack.c.l.b16 %v7969
      %v8034 = vunpack.c.l.b16 %v7970
      %v8035 = vunpack.c.l.b16 %v7971
      %v8036 = vunpack.c.l.b16 %v7972
      %v8037 = vunpack.c.l.b16 %v7973
      %v8038 = vunpack.c.l.b16 %v7974
      %v8039 = vunpack.c.l.b16 %v7975
      %v8040 = vunpack.c.l.b16 %v7976
      %v8041 = vunpack.c.l.b16 %v7977
      %v8042 = vunpack.c.l.b16 %v7978
      %v8043 = vpack.c.b16 %v8012, %v8011
      %v8044 = vpack.c.b16 %v8014, %v8013
      %v8045 = vpack.c.b16 %v8016, %v8015
      %v8046 = vpack.c.b16 %v8018, %v8017
      %v8047 = vpack.c.b16 %v8020, %v8019
      %v8048 = vpack.c.b16 %v8022, %v8021
      %v8049 = vpack.c.b16 %v8024, %v8023
      %v8050 = vpack.c.b16 %v8026, %v8025
      %v8051 = vpack.c.b16 %v8028, %v8027
      %v8052 = vpack.c.b16 %v8030, %v8029
      %v8053 = vpack.c.b16 %v8032, %v8031
      %v8054 = vpack.c.b16 %v8034, %v8033
      %v8055 = vpack.c.b16 %v8036, %v8035
      %v8056 = vpack.c.b16 %v8038, %v8037
      %v8057 = vpack.c.b16 %v8040, %v8039
      %v8058 = vpack.c.b16 %v8042, %v8041
      %8075 = vst.msk [vmem:[#allocation4] sm:$0xff] %vm1168, %v8043
      %8076 = vst.msk [vmem:[#allocation4 + $0x8] sm:$0xff] %vm1168, %v8044
      %8077 = vst.msk [vmem:[#allocation4 + $0x10] sm:$0xff] %vm1168, %v8045
      %8078 = vst.msk [vmem:[#allocation4 + $0x18] sm:$0xff] %vm1168, %v8046
      %8079 = vst.msk [vmem:[#allocation4 + $0x20] sm:$0xff] %vm1168, %v8047
      %8080 = vst.msk [vmem:[#allocation4 + $0x28] sm:$0xff] %vm1168, %v8048
      %8081 = vst.msk [vmem:[#allocation4 + $0x30] sm:$0xff] %vm1168, %v8049
      %8082 = vst.msk [vmem:[#allocation4 + $0x38] sm:$0xff] %vm1168, %v8050
      %8083 = vst.msk [vmem:[#allocation4 + $0x40] sm:$0xff] %vm1168, %v8051
      %8084 = vst.msk [vmem:[#allocation4 + $0x48] sm:$0xff] %vm1168, %v8052
      %8085 = vst.msk [vmem:[#allocation4 + $0x50] sm:$0xff] %vm1168, %v8053
      %8086 = vst.msk [vmem:[#allocation4 + $0x58] sm:$0xff] %vm1168, %v8054
      %8087 = vst.msk [vmem:[#allocation4 + $0x60] sm:$0xff] %vm1168, %v8055
      %8088 = vst.msk [vmem:[#allocation4 + $0x68] sm:$0xff] %vm1168, %v8056
      %8089 = vst.msk [vmem:[#allocation4 + $0x70] sm:$0xff] %vm1168, %v8057
      %8090 = vst.msk [vmem:[#allocation4 + $0x78] sm:$0xff] %vm1168, %v8058
      %v8091 = vld [vmem:[#allocation3] sm:$0xf]
      %v8092 = vld [vmem:[#allocation3 + $0x4] sm:$0xf]
      %v8093 = vld [vmem:[#allocation3 + $0x8] sm:$0x1]
      %v8094 = vld [vmem:[#allocation3 + $0xc] sm:$0xf]
      %v8095 = vld [vmem:[#allocation3 + $0x10] sm:$0xf]
      %v8096 = vld [vmem:[#allocation3 + $0x14] sm:$0x1]
      %v8097 = vld [vmem:[#allocation3 + $0x18] sm:$0xf]
      %v8098 = vld [vmem:[#allocation3 + $0x1c] sm:$0xf]
      %v8099 = vld [vmem:[#allocation3 + $0x20] sm:$0x1]
      %v8100 = vld [vmem:[#allocation3 + $0x24] sm:$0xf]
      %v8101 = vld [vmem:[#allocation3 + $0x28] sm:$0xf]
      %v8102 = vld [vmem:[#allocation3 + $0x2c] sm:$0x1]
      %v8103 = vld [vmem:[#allocation3 + $0x30] sm:$0xf]
      %v8104 = vld [vmem:[#allocation3 + $0x34] sm:$0xf]
      %v8105 = vld [vmem:[#allocation3 + $0x38] sm:$0x1]
      %v8106 = vld [vmem:[#allocation3 + $0x3c] sm:$0xf]
      %v8107 = vld [vmem:[#allocation3 + $0x40] sm:$0xf]
      %v8108 = vld [vmem:[#allocation3 + $0x44] sm:$0x1]
      %v8109 = vld [vmem:[#allocation3 + $0x48] sm:$0xf]
      %v8110 = vld [vmem:[#allocation3 + $0x4c] sm:$0xf]
      %v8111 = vld [vmem:[#allocation3 + $0x50] sm:$0x1]
      %v8112 = vld [vmem:[#allocation3 + $0x54] sm:$0xf]
      %v8113 = vld [vmem:[#allocation3 + $0x58] sm:$0xf]
      %v8114 = vld [vmem:[#allocation3 + $0x5c] sm:$0x1]
      %v8115 = vld [vmem:[#allocation3 + $0x60] sm:$0xf]
      %v8116 = vld [vmem:[#allocation3 + $0x64] sm:$0xf]
      %v8117 = vld [vmem:[#allocation3 + $0x68] sm:$0x1]
      %v8118 = vld [vmem:[#allocation3 + $0x6c] sm:$0xf]
      %v8119 = vld [vmem:[#allocation3 + $0x70] sm:$0xf]
      %v8120 = vld [vmem:[#allocation3 + $0x74] sm:$0x1]
      %v8121 = vld [vmem:[#allocation3 + $0x78] sm:$0xf]
      %v8122 = vld [vmem:[#allocation3 + $0x7c] sm:$0xf]
      %v8123 = vld [vmem:[#allocation3 + $0x80] sm:$0x1]
      %v8124 = vld [vmem:[#allocation3 + $0x84] sm:$0xf]
      %v8125 = vld [vmem:[#allocation3 + $0x88] sm:$0xf]
      %v8126 = vld [vmem:[#allocation3 + $0x8c] sm:$0x1]
      %v8127 = vld [vmem:[#allocation3 + $0x90] sm:$0xf]
      %v8128 = vld [vmem:[#allocation3 + $0x94] sm:$0xf]
      %v8129 = vld [vmem:[#allocation3 + $0x98] sm:$0x1]
      %v8130 = vld [vmem:[#allocation3 + $0x9c] sm:$0xf]
      %v8131 = vld [vmem:[#allocation3 + $0xa0] sm:$0xf]
      %v8132 = vld [vmem:[#allocation3 + $0xa4] sm:$0x1]
      %v8133 = vld [vmem:[#allocation3 + $0xa8] sm:$0xf]
      %v8134 = vld [vmem:[#allocation3 + $0xac] sm:$0xf]
      %v8135 = vld [vmem:[#allocation3 + $0xb0] sm:$0x1]
      %v8136 = vld [vmem:[#allocation3 + $0xb4] sm:$0xf]
      %v8137 = vld [vmem:[#allocation3 + $0xb8] sm:$0xf]
      %v8138 = vld [vmem:[#allocation3 + $0xbc] sm:$0x1]
      %v8140 = vshrl.u32 %v8091, 16
      %v8142 = vrot.slane %v8140, 4
      %v8143 = vshll.u32 %v8091, 16
      %v8145 = vrot.slane %v8143, 5
      %v8146 = vor.u32 %v8142, %v8145
      %v8147 = vrot.slane %v8146, 4
      %v8149 = vshll.u32 %v8092, 16
      %v8151 = vrot.slane %v8149, 5
      %v8152 = vsel %vm3751, %v8147, %v8151
      %v8153 = vshrl.u32 %v8092, 16
      %v8155 = vrot.slane %v8153, 4
      %v8156 = vor.u32 %v8155, %v8151
      %v8157 = vrot.slane %v8156, 4
      %v8159 = vshll.u32 %v8093, 16
      %v8161 = vrot.slane %v8159, 5
      %v8162 = vsel %vm3751, %v8157, %v8161
      %v8164 = vshrl.u32 %v8094, 16
      %v8166 = vrot.slane %v8164, 4
      %v8167 = vshll.u32 %v8094, 16
      %v8169 = vrot.slane %v8167, 5
      %v8170 = vor.u32 %v8166, %v8169
      %v8171 = vrot.slane %v8170, 4
      %v8173 = vshll.u32 %v8095, 16
      %v8175 = vrot.slane %v8173, 5
      %v8176 = vsel %vm3751, %v8171, %v8175
      %v8177 = vshrl.u32 %v8095, 16
      %v8179 = vrot.slane %v8177, 4
      %v8180 = vor.u32 %v8179, %v8175
      %v8181 = vrot.slane %v8180, 4
      %v8183 = vshll.u32 %v8096, 16
      %v8185 = vrot.slane %v8183, 5
      %v8186 = vsel %vm3751, %v8181, %v8185
      %v8188 = vshrl.u32 %v8097, 16
      %v8190 = vrot.slane %v8188, 4
      %v8191 = vshll.u32 %v8097, 16
      %v8193 = vrot.slane %v8191, 5
      %v8194 = vor.u32 %v8190, %v8193
      %v8195 = vrot.slane %v8194, 4
      %v8197 = vshll.u32 %v8098, 16
      %v8199 = vrot.slane %v8197, 5
      %v8200 = vsel %vm3751, %v8195, %v8199
      %v8201 = vshrl.u32 %v8098, 16
      %v8203 = vrot.slane %v8201, 4
      %v8204 = vor.u32 %v8203, %v8199
      %v8205 = vrot.slane %v8204, 4
      %v8207 = vshll.u32 %v8099, 16
      %v8209 = vrot.slane %v8207, 5
      %v8210 = vsel %vm3751, %v8205, %v8209
      %v8212 = vshrl.u32 %v8100, 16
      %v8214 = vrot.slane %v8212, 4
      %v8215 = vshll.u32 %v8100, 16
      %v8217 = vrot.slane %v8215, 5
      %v8218 = vor.u32 %v8214, %v8217
      %v8219 = vrot.slane %v8218, 4
      %v8221 = vshll.u32 %v8101, 16
      %v8223 = vrot.slane %v8221, 5
      %v8224 = vsel %vm3751, %v8219, %v8223
      %v8225 = vshrl.u32 %v8101, 16
      %v8227 = vrot.slane %v8225, 4
      %v8228 = vor.u32 %v8227, %v8223
      %v8229 = vrot.slane %v8228, 4
      %v8231 = vshll.u32 %v8102, 16
      %v8233 = vrot.slane %v8231, 5
      %v8234 = vsel %vm3751, %v8229, %v8233
      %v8236 = vshrl.u32 %v8103, 16
      %v8238 = vrot.slane %v8236, 4
      %v8239 = vshll.u32 %v8103, 16
      %v8241 = vrot.slane %v8239, 5
      %v8242 = vor.u32 %v8238, %v8241
      %v8243 = vrot.slane %v8242, 4
      %v8245 = vshll.u32 %v8104, 16
      %v8247 = vrot.slane %v8245, 5
      %v8248 = vsel %vm3751, %v8243, %v8247
      %v8249 = vshrl.u32 %v8104, 16
      %v8251 = vrot.slane %v8249, 4
      %v8252 = vor.u32 %v8251, %v8247
      %v8253 = vrot.slane %v8252, 4
      %v8255 = vshll.u32 %v8105, 16
      %v8257 = vrot.slane %v8255, 5
      %v8258 = vsel %vm3751, %v8253, %v8257
      %v8260 = vshrl.u32 %v8106, 16
      %v8262 = vrot.slane %v8260, 4
      %v8263 = vshll.u32 %v8106, 16
      %v8265 = vrot.slane %v8263, 5
      %v8266 = vor.u32 %v8262, %v8265
      %v8267 = vrot.slane %v8266, 4
      %v8269 = vshll.u32 %v8107, 16
      %v8271 = vrot.slane %v8269, 5
      %v8272 = vsel %vm3751, %v8267, %v8271
      %v8273 = vshrl.u32 %v8107, 16
      %v8275 = vrot.slane %v8273, 4
      %v8276 = vor.u32 %v8275, %v8271
      %v8277 = vrot.slane %v8276, 4
      %v8279 = vshll.u32 %v8108, 16
      %v8281 = vrot.slane %v8279, 5
      %v8282 = vsel %vm3751, %v8277, %v8281
      %v8284 = vshrl.u32 %v8109, 16
      %v8286 = vrot.slane %v8284, 4
      %v8287 = vshll.u32 %v8109, 16
      %v8289 = vrot.slane %v8287, 5
      %v8290 = vor.u32 %v8286, %v8289
      %v8291 = vrot.slane %v8290, 4
      %v8293 = vshll.u32 %v8110, 16
      %v8295 = vrot.slane %v8293, 5
      %v8296 = vsel %vm3751, %v8291, %v8295
      %v8297 = vshrl.u32 %v8110, 16
      %v8299 = vrot.slane %v8297, 4
      %v8300 = vor.u32 %v8299, %v8295
      %v8301 = vrot.slane %v8300, 4
      %v8303 = vshll.u32 %v8111, 16
      %v8305 = vrot.slane %v8303, 5
      %v8306 = vsel %vm3751, %v8301, %v8305
      %v8308 = vshrl.u32 %v8112, 16
      %v8310 = vrot.slane %v8308, 4
      %v8311 = vshll.u32 %v8112, 16
      %v8313 = vrot.slane %v8311, 5
      %v8314 = vor.u32 %v8310, %v8313
      %v8315 = vrot.slane %v8314, 4
      %v8317 = vshll.u32 %v8113, 16
      %v8319 = vrot.slane %v8317, 5
      %v8320 = vsel %vm3751, %v8315, %v8319
      %v8321 = vshrl.u32 %v8113, 16
      %v8323 = vrot.slane %v8321, 4
      %v8324 = vor.u32 %v8323, %v8319
      %v8325 = vrot.slane %v8324, 4
      %v8327 = vshll.u32 %v8114, 16
      %v8329 = vrot.slane %v8327, 5
      %v8330 = vsel %vm3751, %v8325, %v8329
      %v8332 = vshrl.u32 %v8115, 16
      %v8334 = vrot.slane %v8332, 4
      %v8335 = vshll.u32 %v8115, 16
      %v8337 = vrot.slane %v8335, 5
      %v8338 = vor.u32 %v8334, %v8337
      %v8339 = vrot.slane %v8338, 4
      %v8341 = vshll.u32 %v8116, 16
      %v8343 = vrot.slane %v8341, 5
      %v8344 = vsel %vm3751, %v8339, %v8343
      %v8345 = vshrl.u32 %v8116, 16
      %v8347 = vrot.slane %v8345, 4
      %v8348 = vor.u32 %v8347, %v8343
      %v8349 = vrot.slane %v8348, 4
      %v8351 = vshll.u32 %v8117, 16
      %v8353 = vrot.slane %v8351, 5
      %v8354 = vsel %vm3751, %v8349, %v8353
      %v8356 = vshrl.u32 %v8118, 16
      %v8358 = vrot.slane %v8356, 4
      %v8359 = vshll.u32 %v8118, 16
      %v8361 = vrot.slane %v8359, 5
      %v8362 = vor.u32 %v8358, %v8361
      %v8363 = vrot.slane %v8362, 4
      %v8365 = vshll.u32 %v8119, 16
      %v8367 = vrot.slane %v8365, 5
      %v8368 = vsel %vm3751, %v8363, %v8367
      %v8369 = vshrl.u32 %v8119, 16
      %v8371 = vrot.slane %v8369, 4
      %v8372 = vor.u32 %v8371, %v8367
      %v8373 = vrot.slane %v8372, 4
      %v8375 = vshll.u32 %v8120, 16
      %v8377 = vrot.slane %v8375, 5
      %v8378 = vsel %vm3751, %v8373, %v8377
      %v8380 = vshrl.u32 %v8121, 16
      %v8382 = vrot.slane %v8380, 4
      %v8383 = vshll.u32 %v8121, 16
      %v8385 = vrot.slane %v8383, 5
      %v8386 = vor.u32 %v8382, %v8385
      %v8387 = vrot.slane %v8386, 4
      %v8389 = vshll.u32 %v8122, 16
      %v8391 = vrot.slane %v8389, 5
      %v8392 = vsel %vm3751, %v8387, %v8391
      %v8393 = vshrl.u32 %v8122, 16
      %v8395 = vrot.slane %v8393, 4
      %v8396 = vor.u32 %v8395, %v8391
      %v8397 = vrot.slane %v8396, 4
      %v8399 = vshll.u32 %v8123, 16
      %v8401 = vrot.slane %v8399, 5
      %v8402 = vsel %vm3751, %v8397, %v8401
      %v8404 = vshrl.u32 %v8124, 16
      %v8406 = vrot.slane %v8404, 4
      %v8407 = vshll.u32 %v8124, 16
      %v8409 = vrot.slane %v8407, 5
      %v8410 = vor.u32 %v8406, %v8409
      %v8411 = vrot.slane %v8410, 4
      %v8413 = vshll.u32 %v8125, 16
      %v8415 = vrot.slane %v8413, 5
      %v8416 = vsel %vm3751, %v8411, %v8415
      %v8417 = vshrl.u32 %v8125, 16
      %v8419 = vrot.slane %v8417, 4
      %v8420 = vor.u32 %v8419, %v8415
      %v8421 = vrot.slane %v8420, 4
      %v8423 = vshll.u32 %v8126, 16
      %v8425 = vrot.slane %v8423, 5
      %v8426 = vsel %vm3751, %v8421, %v8425
      %v8428 = vshrl.u32 %v8127, 16
      %v8430 = vrot.slane %v8428, 4
      %v8431 = vshll.u32 %v8127, 16
      %v8433 = vrot.slane %v8431, 5
      %v8434 = vor.u32 %v8430, %v8433
      %v8435 = vrot.slane %v8434, 4
      %v8437 = vshll.u32 %v8128, 16
      %v8439 = vrot.slane %v8437, 5
      %v8440 = vsel %vm3751, %v8435, %v8439
      %v8441 = vshrl.u32 %v8128, 16
      %v8443 = vrot.slane %v8441, 4
      %v8444 = vor.u32 %v8443, %v8439
      %v8445 = vrot.slane %v8444, 4
      %v8447 = vshll.u32 %v8129, 16
      %v8449 = vrot.slane %v8447, 5
      %v8450 = vsel %vm3751, %v8445, %v8449
      %v8452 = vshrl.u32 %v8130, 16
      %v8454 = vrot.slane %v8452, 4
      %v8455 = vshll.u32 %v8130, 16
      %v8457 = vrot.slane %v8455, 5
      %v8458 = vor.u32 %v8454, %v8457
      %v8459 = vrot.slane %v8458, 4
      %v8461 = vshll.u32 %v8131, 16
      %v8463 = vrot.slane %v8461, 5
      %v8464 = vsel %vm3751, %v8459, %v8463
      %v8465 = vshrl.u32 %v8131, 16
      %v8467 = vrot.slane %v8465, 4
      %v8468 = vor.u32 %v8467, %v8463
      %v8469 = vrot.slane %v8468, 4
      %v8471 = vshll.u32 %v8132, 16
      %v8473 = vrot.slane %v8471, 5
      %v8474 = vsel %vm3751, %v8469, %v8473
      %v8476 = vshrl.u32 %v8133, 16
      %v8478 = vrot.slane %v8476, 4
      %v8479 = vshll.u32 %v8133, 16
      %v8481 = vrot.slane %v8479, 5
      %v8482 = vor.u32 %v8478, %v8481
      %v8483 = vrot.slane %v8482, 4
      %v8485 = vshll.u32 %v8134, 16
      %v8487 = vrot.slane %v8485, 5
      %v8488 = vsel %vm3751, %v8483, %v8487
      %v8489 = vshrl.u32 %v8134, 16
      %v8491 = vrot.slane %v8489, 4
      %v8492 = vor.u32 %v8491, %v8487
      %v8493 = vrot.slane %v8492, 4
      %v8495 = vshll.u32 %v8135, 16
      %v8497 = vrot.slane %v8495, 5
      %v8498 = vsel %vm3751, %v8493, %v8497
      %v8500 = vshrl.u32 %v8136, 16
      %v8502 = vrot.slane %v8500, 4
      %v8503 = vshll.u32 %v8136, 16
      %v8505 = vrot.slane %v8503, 5
      %v8506 = vor.u32 %v8502, %v8505
      %v8507 = vrot.slane %v8506, 4
      %v8509 = vshll.u32 %v8137, 16
      %v8511 = vrot.slane %v8509, 5
      %v8512 = vsel %vm3751, %v8507, %v8511
      %v8513 = vshrl.u32 %v8137, 16
      %v8515 = vrot.slane %v8513, 4
      %v8516 = vor.u32 %v8515, %v8511
      %v8517 = vrot.slane %v8516, 4
      %v8519 = vshll.u32 %v8138, 16
      %v8521 = vrot.slane %v8519, 5
      %v8522 = vsel %vm3751, %v8517, %v8521
      %v8523 = vunpack.c.l.b16 %v8152
      %v8524 = vunpack.c.l.b16 %v8162
      %v8525 = vunpack.c.l.b16 %v8176
      %v8526 = vunpack.c.l.b16 %v8186
      %v8527 = vunpack.c.l.b16 %v8200
      %v8528 = vunpack.c.l.b16 %v8210
      %v8529 = vunpack.c.l.b16 %v8224
      %v8530 = vunpack.c.l.b16 %v8234
      %v8531 = vunpack.c.l.b16 %v8248
      %v8532 = vunpack.c.l.b16 %v8258
      %v8533 = vunpack.c.l.b16 %v8272
      %v8534 = vunpack.c.l.b16 %v8282
      %v8535 = vunpack.c.l.b16 %v8296
      %v8536 = vunpack.c.l.b16 %v8306
      %v8537 = vunpack.c.l.b16 %v8320
      %v8538 = vunpack.c.l.b16 %v8330
      %v8539 = vunpack.c.l.b16 %v8344
      %v8540 = vunpack.c.l.b16 %v8354
      %v8541 = vunpack.c.l.b16 %v8368
      %v8542 = vunpack.c.l.b16 %v8378
      %v8543 = vunpack.c.l.b16 %v8392
      %v8544 = vunpack.c.l.b16 %v8402
      %v8545 = vunpack.c.l.b16 %v8416
      %v8546 = vunpack.c.l.b16 %v8426
      %v8547 = vunpack.c.l.b16 %v8440
      %v8548 = vunpack.c.l.b16 %v8450
      %v8549 = vunpack.c.l.b16 %v8464
      %v8550 = vunpack.c.l.b16 %v8474
      %v8551 = vunpack.c.l.b16 %v8488
      %v8552 = vunpack.c.l.b16 %v8498
      %v8553 = vunpack.c.l.b16 %v8512
      %v8554 = vunpack.c.l.b16 %v8522
      %v8555 = vpack.c.b16 %v8524, %v8523
      %v8556 = vpack.c.b16 %v8526, %v8525
      %v8557 = vpack.c.b16 %v8528, %v8527
      %v8558 = vpack.c.b16 %v8530, %v8529
      %v8559 = vpack.c.b16 %v8532, %v8531
      %v8560 = vpack.c.b16 %v8534, %v8533
      %v8561 = vpack.c.b16 %v8536, %v8535
      %v8562 = vpack.c.b16 %v8538, %v8537
      %v8563 = vpack.c.b16 %v8540, %v8539
      %v8564 = vpack.c.b16 %v8542, %v8541
      %v8565 = vpack.c.b16 %v8544, %v8543
      %v8566 = vpack.c.b16 %v8546, %v8545
      %v8567 = vpack.c.b16 %v8548, %v8547
      %v8568 = vpack.c.b16 %v8550, %v8549
      %v8569 = vpack.c.b16 %v8552, %v8551
      %v8570 = vpack.c.b16 %v8554, %v8553
      %8571 = vrot.lane.b32.xlu0 %v8555, 8
      %v8572 = vpop.permute.xlu0 %8571
      %8573 = vrot.lane.b32.xlu0 %v8556, 8
      %v8574 = vpop.permute.xlu0 %8573
      %8575 = vrot.lane.b32.xlu0 %v8557, 8
      %v8576 = vpop.permute.xlu0 %8575
      %8577 = vrot.lane.b32.xlu0 %v8558, 8
      %v8578 = vpop.permute.xlu0 %8577
      %8579 = vrot.lane.b32.xlu0 %v8559, 8
      %v8580 = vpop.permute.xlu0 %8579
      %8581 = vrot.lane.b32.xlu0 %v8560, 8
      %v8582 = vpop.permute.xlu0 %8581
      %8583 = vrot.lane.b32.xlu0 %v8561, 8
      %v8584 = vpop.permute.xlu0 %8583
      %8585 = vrot.lane.b32.xlu0 %v8562, 8
      %v8586 = vpop.permute.xlu0 %8585
      %8587 = vrot.lane.b32.xlu0 %v8563, 8
      %v8588 = vpop.permute.xlu0 %8587
      %8589 = vrot.lane.b32.xlu0 %v8564, 8
      %v8590 = vpop.permute.xlu0 %8589
      %8591 = vrot.lane.b32.xlu0 %v8565, 8
      %v8592 = vpop.permute.xlu0 %8591
      %8593 = vrot.lane.b32.xlu0 %v8566, 8
      %v8594 = vpop.permute.xlu0 %8593
      %8595 = vrot.lane.b32.xlu0 %v8567, 8
      %v8596 = vpop.permute.xlu0 %8595
      %8597 = vrot.lane.b32.xlu0 %v8568, 8
      %v8598 = vpop.permute.xlu0 %8597
      %8599 = vrot.lane.b32.xlu0 %v8569, 8
      %v8600 = vpop.permute.xlu0 %8599
      %8601 = vrot.lane.b32.xlu0 %v8570, 8
      %v8602 = vpop.permute.xlu0 %8601
      %8619 = vst.msk [vmem:[#allocation4] sm:$0xff] %vm4232, %v8572
      %8620 = vst.msk [vmem:[#allocation4 + $0x8] sm:$0xff] %vm4232, %v8574
      %8621 = vst.msk [vmem:[#allocation4 + $0x10] sm:$0xff] %vm4232, %v8576
      %8622 = vst.msk [vmem:[#allocation4 + $0x18] sm:$0xff] %vm4232, %v8578
      %8623 = vst.msk [vmem:[#allocation4 + $0x20] sm:$0xff] %vm4232, %v8580
      %8624 = vst.msk [vmem:[#allocation4 + $0x28] sm:$0xff] %vm4232, %v8582
      %8625 = vst.msk [vmem:[#allocation4 + $0x30] sm:$0xff] %vm4232, %v8584
      %8626 = vst.msk [vmem:[#allocation4 + $0x38] sm:$0xff] %vm4232, %v8586
      %8627 = vst.msk [vmem:[#allocation4 + $0x40] sm:$0xff] %vm4232, %v8588
      %8628 = vst.msk [vmem:[#allocation4 + $0x48] sm:$0xff] %vm4232, %v8590
      %8629 = vst.msk [vmem:[#allocation4 + $0x50] sm:$0xff] %vm4232, %v8592
      %8630 = vst.msk [vmem:[#allocation4 + $0x58] sm:$0xff] %vm4232, %v8594
      %8631 = vst.msk [vmem:[#allocation4 + $0x60] sm:$0xff] %vm4232, %v8596
      %8632 = vst.msk [vmem:[#allocation4 + $0x68] sm:$0xff] %vm4232, %v8598
      %8633 = vst.msk [vmem:[#allocation4 + $0x70] sm:$0xff] %vm4232, %v8600
      %8634 = vst.msk [vmem:[#allocation4 + $0x78] sm:$0xff] %vm4232, %v8602
      %v8635 = vld [vmem:[#allocation3] sm:$0xe]
      %v8636 = vld [vmem:[#allocation3 + $0x4] sm:$0xf]
      %v8637 = vld [vmem:[#allocation3 + $0x8] sm:$0x1]
      %v8638 = vld [vmem:[#allocation3 + $0xc] sm:$0xe]
      %v8639 = vld [vmem:[#allocation3 + $0x10] sm:$0xf]
      %v8640 = vld [vmem:[#allocation3 + $0x14] sm:$0x1]
      %v8641 = vld [vmem:[#allocation3 + $0x18] sm:$0xe]
      %v8642 = vld [vmem:[#allocation3 + $0x1c] sm:$0xf]
      %v8643 = vld [vmem:[#allocation3 + $0x20] sm:$0x1]
      %v8644 = vld [vmem:[#allocation3 + $0x24] sm:$0xe]
      %v8645 = vld [vmem:[#allocation3 + $0x28] sm:$0xf]
      %v8646 = vld [vmem:[#allocation3 + $0x2c] sm:$0x1]
      %v8647 = vld [vmem:[#allocation3 + $0x30] sm:$0xe]
      %v8648 = vld [vmem:[#allocation3 + $0x34] sm:$0xf]
      %v8649 = vld [vmem:[#allocation3 + $0x38] sm:$0x1]
      %v8650 = vld [vmem:[#allocation3 + $0x3c] sm:$0xe]
      %v8651 = vld [vmem:[#allocation3 + $0x40] sm:$0xf]
      %v8652 = vld [vmem:[#allocation3 + $0x44] sm:$0x1]
      %v8653 = vld [vmem:[#allocation3 + $0x48] sm:$0xe]
      %v8654 = vld [vmem:[#allocation3 + $0x4c] sm:$0xf]
      %v8655 = vld [vmem:[#allocation3 + $0x50] sm:$0x1]
      %v8656 = vld [vmem:[#allocation3 + $0x54] sm:$0xe]
      %v8657 = vld [vmem:[#allocation3 + $0x58] sm:$0xf]
      %v8658 = vld [vmem:[#allocation3 + $0x5c] sm:$0x1]
      %v8659 = vld [vmem:[#allocation3 + $0x60] sm:$0xe]
      %v8660 = vld [vmem:[#allocation3 + $0x64] sm:$0xf]
      %v8661 = vld [vmem:[#allocation3 + $0x68] sm:$0x1]
      %v8662 = vld [vmem:[#allocation3 + $0x6c] sm:$0xe]
      %v8663 = vld [vmem:[#allocation3 + $0x70] sm:$0xf]
      %v8664 = vld [vmem:[#allocation3 + $0x74] sm:$0x1]
      %v8665 = vld [vmem:[#allocation3 + $0x78] sm:$0xe]
      %v8666 = vld [vmem:[#allocation3 + $0x7c] sm:$0xf]
      %v8667 = vld [vmem:[#allocation3 + $0x80] sm:$0x1]
      %v8668 = vld [vmem:[#allocation3 + $0x84] sm:$0xe]
      %v8669 = vld [vmem:[#allocation3 + $0x88] sm:$0xf]
      %v8670 = vld [vmem:[#allocation3 + $0x8c] sm:$0x1]
      %v8671 = vld [vmem:[#allocation3 + $0x90] sm:$0xe]
      %v8672 = vld [vmem:[#allocation3 + $0x94] sm:$0xf]
      %v8673 = vld [vmem:[#allocation3 + $0x98] sm:$0x1]
      %v8674 = vld [vmem:[#allocation3 + $0x9c] sm:$0xe]
      %v8675 = vld [vmem:[#allocation3 + $0xa0] sm:$0xf]
      %v8676 = vld [vmem:[#allocation3 + $0xa4] sm:$0x1]
      %v8677 = vld [vmem:[#allocation3 + $0xa8] sm:$0xe]
      %v8678 = vld [vmem:[#allocation3 + $0xac] sm:$0xf]
      %v8679 = vld [vmem:[#allocation3 + $0xb0] sm:$0x1]
      %v8680 = vld [vmem:[#allocation3 + $0xb4] sm:$0xe]
      %v8681 = vld [vmem:[#allocation3 + $0xb8] sm:$0xf]
      %v8682 = vld [vmem:[#allocation3 + $0xbc] sm:$0x1]
      %v8731 = vrot.slane %v8635, 5
      %v8732 = vrot.slane %v8731, 4
      %v8733 = vrot.slane %v8636, 5
      %v8734 = vsel %vm4347, %v8732, %v8733
      %v8735 = vrot.slane %v8733, 4
      %v8736 = vrot.slane %v8637, 5
      %v8737 = vsel %vm4347, %v8735, %v8736
      %v8738 = vrot.slane %v8638, 5
      %v8739 = vrot.slane %v8738, 4
      %v8740 = vrot.slane %v8639, 5
      %v8741 = vsel %vm4347, %v8739, %v8740
      %v8742 = vrot.slane %v8740, 4
      %v8743 = vrot.slane %v8640, 5
      %v8744 = vsel %vm4347, %v8742, %v8743
      %v8745 = vrot.slane %v8641, 5
      %v8746 = vrot.slane %v8745, 4
      %v8747 = vrot.slane %v8642, 5
      %v8748 = vsel %vm4347, %v8746, %v8747
      %v8749 = vrot.slane %v8747, 4
      %v8750 = vrot.slane %v8643, 5
      %v8751 = vsel %vm4347, %v8749, %v8750
      %v8752 = vrot.slane %v8644, 5
      %v8753 = vrot.slane %v8752, 4
      %v8754 = vrot.slane %v8645, 5
      %v8755 = vsel %vm4347, %v8753, %v8754
      %v8756 = vrot.slane %v8754, 4
      %v8757 = vrot.slane %v8646, 5
      %v8758 = vsel %vm4347, %v8756, %v8757
      %v8759 = vrot.slane %v8647, 5
      %v8760 = vrot.slane %v8759, 4
      %v8761 = vrot.slane %v8648, 5
      %v8762 = vsel %vm4347, %v8760, %v8761
      %v8763 = vrot.slane %v8761, 4
      %v8764 = vrot.slane %v8649, 5
      %v8765 = vsel %vm4347, %v8763, %v8764
      %v8766 = vrot.slane %v8650, 5
      %v8767 = vrot.slane %v8766, 4
      %v8768 = vrot.slane %v8651, 5
      %v8769 = vsel %vm4347, %v8767, %v8768
      %v8770 = vrot.slane %v8768, 4
      %v8771 = vrot.slane %v8652, 5
      %v8772 = vsel %vm4347, %v8770, %v8771
      %v8773 = vrot.slane %v8653, 5
      %v8774 = vrot.slane %v8773, 4
      %v8775 = vrot.slane %v8654, 5
      %v8776 = vsel %vm4347, %v8774, %v8775
      %v8777 = vrot.slane %v8775, 4
      %v8778 = vrot.slane %v8655, 5
      %v8779 = vsel %vm4347, %v8777, %v8778
      %v8780 = vrot.slane %v8656, 5
      %v8781 = vrot.slane %v8780, 4
      %v8782 = vrot.slane %v8657, 5
      %v8783 = vsel %vm4347, %v8781, %v8782
      %v8784 = vrot.slane %v8782, 4
      %v8785 = vrot.slane %v8658, 5
      %v8786 = vsel %vm4347, %v8784, %v8785
      %v8787 = vrot.slane %v8659, 5
      %v8788 = vrot.slane %v8787, 4
      %v8789 = vrot.slane %v8660, 5
      %v8790 = vsel %vm4347, %v8788, %v8789
      %v8791 = vrot.slane %v8789, 4
      %v8792 = vrot.slane %v8661, 5
      %v8793 = vsel %vm4347, %v8791, %v8792
      %v8794 = vrot.slane %v8662, 5
      %v8795 = vrot.slane %v8794, 4
      %v8796 = vrot.slane %v8663, 5
      %v8797 = vsel %vm4347, %v8795, %v8796
      %v8798 = vrot.slane %v8796, 4
      %v8799 = vrot.slane %v8664, 5
      %v8800 = vsel %vm4347, %v8798, %v8799
      %v8801 = vrot.slane %v8665, 5
      %v8802 = vrot.slane %v8801, 4
      %v8803 = vrot.slane %v8666, 5
      %v8804 = vsel %vm4347, %v8802, %v8803
      %v8805 = vrot.slane %v8803, 4
      %v8806 = vrot.slane %v8667, 5
      %v8807 = vsel %vm4347, %v8805, %v8806
      %v8808 = vrot.slane %v8668, 5
      %v8809 = vrot.slane %v8808, 4
      %v8810 = vrot.slane %v8669, 5
      %v8811 = vsel %vm4347, %v8809, %v8810
      %v8812 = vrot.slane %v8810, 4
      %v8813 = vrot.slane %v8670, 5
      %v8814 = vsel %vm4347, %v8812, %v8813
      %v8815 = vrot.slane %v8671, 5
      %v8816 = vrot.slane %v8815, 4
      %v8817 = vrot.slane %v8672, 5
      %v8818 = vsel %vm4347, %v8816, %v8817
      %v8819 = vrot.slane %v8817, 4
      %v8820 = vrot.slane %v8673, 5
      %v8821 = vsel %vm4347, %v8819, %v8820
      %v8822 = vrot.slane %v8674, 5
      %v8823 = vrot.slane %v8822, 4
      %v8824 = vrot.slane %v8675, 5
      %v8825 = vsel %vm4347, %v8823, %v8824
      %v8826 = vrot.slane %v8824, 4
      %v8827 = vrot.slane %v8676, 5
      %v8828 = vsel %vm4347, %v8826, %v8827
      %v8829 = vrot.slane %v8677, 5
      %v8830 = vrot.slane %v8829, 4
      %v8831 = vrot.slane %v8678, 5
      %v8832 = vsel %vm4347, %v8830, %v8831
      %v8833 = vrot.slane %v8831, 4
      %v8834 = vrot.slane %v8679, 5
      %v8835 = vsel %vm4347, %v8833, %v8834
      %v8836 = vrot.slane %v8680, 5
      %v8837 = vrot.slane %v8836, 4
      %v8838 = vrot.slane %v8681, 5
      %v8839 = vsel %vm4347, %v8837, %v8838
      %v8840 = vrot.slane %v8838, 4
      %v8841 = vrot.slane %v8682, 5
      %v8842 = vsel %vm4347, %v8840, %v8841
      %v8843 = vunpack.c.l.b16 %v8734
      %v8844 = vunpack.c.l.b16 %v8737
      %v8845 = vunpack.c.l.b16 %v8741
      %v8846 = vunpack.c.l.b16 %v8744
      %v8847 = vunpack.c.l.b16 %v8748
      %v8848 = vunpack.c.l.b16 %v8751
      %v8849 = vunpack.c.l.b16 %v8755
      %v8850 = vunpack.c.l.b16 %v8758
      %v8851 = vunpack.c.l.b16 %v8762
      %v8852 = vunpack.c.l.b16 %v8765
      %v8853 = vunpack.c.l.b16 %v8769
      %v8854 = vunpack.c.l.b16 %v8772
      %v8855 = vunpack.c.l.b16 %v8776
      %v8856 = vunpack.c.l.b16 %v8779
      %v8857 = vunpack.c.l.b16 %v8783
      %v8858 = vunpack.c.l.b16 %v8786
      %v8859 = vunpack.c.l.b16 %v8790
      %v8860 = vunpack.c.l.b16 %v8793
      %v8861 = vunpack.c.l.b16 %v8797
      %v8862 = vunpack.c.l.b16 %v8800
      %v8863 = vunpack.c.l.b16 %v8804
      %v8864 = vunpack.c.l.b16 %v8807
      %v8865 = vunpack.c.l.b16 %v8811
      %v8866 = vunpack.c.l.b16 %v8814
      %v8867 = vunpack.c.l.b16 %v8818
      %v8868 = vunpack.c.l.b16 %v8821
      %v8869 = vunpack.c.l.b16 %v8825
      %v8870 = vunpack.c.l.b16 %v8828
      %v8871 = vunpack.c.l.b16 %v8832
      %v8872 = vunpack.c.l.b16 %v8835
      %v8873 = vunpack.c.l.b16 %v8839
      %v8874 = vunpack.c.l.b16 %v8842
      %v8875 = vpack.c.b16 %v8844, %v8843
      %v8876 = vpack.c.b16 %v8846, %v8845
      %v8877 = vpack.c.b16 %v8848, %v8847
      %v8878 = vpack.c.b16 %v8850, %v8849
      %v8879 = vpack.c.b16 %v8852, %v8851
      %v8880 = vpack.c.b16 %v8854, %v8853
      %v8881 = vpack.c.b16 %v8856, %v8855
      %v8882 = vpack.c.b16 %v8858, %v8857
      %v8883 = vpack.c.b16 %v8860, %v8859
      %v8884 = vpack.c.b16 %v8862, %v8861
      %v8885 = vpack.c.b16 %v8864, %v8863
      %v8886 = vpack.c.b16 %v8866, %v8865
      %v8887 = vpack.c.b16 %v8868, %v8867
      %v8888 = vpack.c.b16 %v8870, %v8869
      %v8889 = vpack.c.b16 %v8872, %v8871
      %v8890 = vpack.c.b16 %v8874, %v8873
      %8891 = vrot.lane.b32.xlu0 %v8875, 16
      %v8892 = vpop.permute.xlu0 %8891
      %8893 = vrot.lane.b32.xlu0 %v8876, 16
      %v8894 = vpop.permute.xlu0 %8893
      %8895 = vrot.lane.b32.xlu0 %v8877, 16
      %v8896 = vpop.permute.xlu0 %8895
      %8897 = vrot.lane.b32.xlu0 %v8878, 16
      %v8898 = vpop.permute.xlu0 %8897
      %8899 = vrot.lane.b32.xlu0 %v8879, 16
      %v8900 = vpop.permute.xlu0 %8899
      %8901 = vrot.lane.b32.xlu0 %v8880, 16
      %v8902 = vpop.permute.xlu0 %8901
      %8903 = vrot.lane.b32.xlu0 %v8881, 16
      %v8904 = vpop.permute.xlu0 %8903
      %8905 = vrot.lane.b32.xlu0 %v8882, 16
      %v8906 = vpop.permute.xlu0 %8905
      %8907 = vrot.lane.b32.xlu0 %v8883, 16
      %v8908 = vpop.permute.xlu0 %8907
      %8909 = vrot.lane.b32.xlu0 %v8884, 16
      %v8910 = vpop.permute.xlu0 %8909
      %8911 = vrot.lane.b32.xlu0 %v8885, 16
      %v8912 = vpop.permute.xlu0 %8911
      %8913 = vrot.lane.b32.xlu0 %v8886, 16
      %v8914 = vpop.permute.xlu0 %8913
      %8915 = vrot.lane.b32.xlu0 %v8887, 16
      %v8916 = vpop.permute.xlu0 %8915
      %8917 = vrot.lane.b32.xlu0 %v8888, 16
      %v8918 = vpop.permute.xlu0 %8917
      %8919 = vrot.lane.b32.xlu0 %v8889, 16
      %v8920 = vpop.permute.xlu0 %8919
      %8921 = vrot.lane.b32.xlu0 %v8890, 16
      %v8922 = vpop.permute.xlu0 %8921
      %8939 = vst.msk [vmem:[#allocation4] sm:$0xff] %vm4556, %v8892
      %8940 = vst.msk [vmem:[#allocation4 + $0x8] sm:$0xff] %vm4556, %v8894
      %8941 = vst.msk [vmem:[#allocation4 + $0x10] sm:$0xff] %vm4556, %v8896
      %8942 = vst.msk [vmem:[#allocation4 + $0x18] sm:$0xff] %vm4556, %v8898
      %8943 = vst.msk [vmem:[#allocation4 + $0x20] sm:$0xff] %vm4556, %v8900
      %8944 = vst.msk [vmem:[#allocation4 + $0x28] sm:$0xff] %vm4556, %v8902
      %8945 = vst.msk [vmem:[#allocation4 + $0x30] sm:$0xff] %vm4556, %v8904
      %8946 = vst.msk [vmem:[#allocation4 + $0x38] sm:$0xff] %vm4556, %v8906
      %8947 = vst.msk [vmem:[#allocation4 + $0x40] sm:$0xff] %vm4556, %v8908
      %8948 = vst.msk [vmem:[#allocation4 + $0x48] sm:$0xff] %vm4556, %v8910
      %8949 = vst.msk [vmem:[#allocation4 + $0x50] sm:$0xff] %vm4556, %v8912
      %8950 = vst.msk [vmem:[#allocation4 + $0x58] sm:$0xff] %vm4556, %v8914
      %8951 = vst.msk [vmem:[#allocation4 + $0x60] sm:$0xff] %vm4556, %v8916
      %8952 = vst.msk [vmem:[#allocation4 + $0x68] sm:$0xff] %vm4556, %v8918
      %8953 = vst.msk [vmem:[#allocation4 + $0x70] sm:$0xff] %vm4556, %v8920
      %8954 = vst.msk [vmem:[#allocation4 + $0x78] sm:$0xff] %vm4556, %v8922
      %v8955 = vld [vmem:[#allocation4] sm:$0xff]
      %v8956 = vld [vmem:[#allocation4 + $0x8] sm:$0xff]
      %v8957 = vld [vmem:[#allocation4 + $0x10] sm:$0xff]
      %v8958 = vld [vmem:[#allocation4 + $0x18] sm:$0xff]
      %v8959 = vld [vmem:[#allocation4 + $0x20] sm:$0xff]
      %v8960 = vld [vmem:[#allocation4 + $0x28] sm:$0xff]
      %v8961 = vld [vmem:[#allocation4 + $0x30] sm:$0xff]
      %v8962 = vld [vmem:[#allocation4 + $0x38] sm:$0xff]
      %v8963 = vld [vmem:[#allocation4 + $0x40] sm:$0xff]
      %v8964 = vld [vmem:[#allocation4 + $0x48] sm:$0xff]
      %v8965 = vld [vmem:[#allocation4 + $0x50] sm:$0xff]
      %v8966 = vld [vmem:[#allocation4 + $0x58] sm:$0xff]
      %v8967 = vld [vmem:[#allocation4 + $0x60] sm:$0xff]
      %v8968 = vld [vmem:[#allocation4 + $0x68] sm:$0xff]
      %v8969 = vld [vmem:[#allocation4 + $0x70] sm:$0xff]
      %v8970 = vld [vmem:[#allocation4 + $0x78] sm:$0xff]
      %v8971 = vld [vmem:[%s6] sm:$0xf]
      %v8972 = vld [vmem:[%s6 + $0x4] sm:$0xf]
      %v8973 = vld [vmem:[%s6 + $0x8] sm:$0xf]
      %v8974 = vld [vmem:[%s7832] sm:$0xf]
      %v8975 = vld [vmem:[%s7832 + $0x4] sm:$0xf]
      %v8976 = vld [vmem:[%s7832 + $0xc] sm:$0xf]
      %v8977 = vld [vmem:[%s7832 + $0x10] sm:$0xf]
      %v8978 = vld [vmem:[%s7832 + $0x18] sm:$0xf]
      %v8979 = vld [vmem:[%s7832 + $0x1c] sm:$0xf]
      %v8980 = vld [vmem:[%s7832 + $0x24] sm:$0xf]
      %v8981 = vld [vmem:[%s7832 + $0x28] sm:$0xf]
      %v8982 = vld [vmem:[%s7832 + $0x30] sm:$0xf]
      %v8983 = vld [vmem:[%s7832 + $0x34] sm:$0xf]
      %v8984 = vld [vmem:[%s7832 + $0x3c] sm:$0xf]
      %v8985 = vld [vmem:[%s7832 + $0x40] sm:$0xf]
      %v8986 = vld [vmem:[%s7832 + $0x48] sm:$0xf]
      %v8987 = vld [vmem:[%s7832 + $0x4c] sm:$0xf]
      %v8988 = vld [vmem:[%s7832 + $0x54] sm:$0xf]
      %v8989 = vld [vmem:[%s7832 + $0x58] sm:$0xf]
      %v8990 = vld [vmem:[%s7832 + $0x60] sm:$0xf]
      %v8991 = vld [vmem:[%s7832 + $0x64] sm:$0xf]
      %v8992 = vld [vmem:[%s7832 + $0x6c] sm:$0xf]
      %v8993 = vld [vmem:[%s7832 + $0x70] sm:$0xf]
      %v8994 = vld [vmem:[%s7832 + $0x78] sm:$0xf]
      %v8995 = vld [vmem:[%s7832 + $0x7c] sm:$0xf]
      %v8996 = vld [vmem:[%s7832 + $0x84] sm:$0xf]
      %v8997 = vld [vmem:[%s7832 + $0x88] sm:$0xf]
      %v8998 = vld [vmem:[%s7832 + $0x90] sm:$0xf]
      %v8999 = vld [vmem:[%s7832 + $0x94] sm:$0xf]
      %v9000 = vld [vmem:[%s7832 + $0x9c] sm:$0xf]
      %v9001 = vld [vmem:[%s7832 + $0xa0] sm:$0xf]
      %v9002 = vld [vmem:[%s7832 + $0xa8] sm:$0xf]
      %v9003 = vld [vmem:[%s7832 + $0xac] sm:$0xf]
      %v9004 = vld [vmem:[%s7832 + $0xb4] sm:$0xf]
      %v9005 = vld [vmem:[%s7832 + $0xb8] sm:$0xf]
      %v9038 = vunpack.c.l.b16 %v8974
      %v9039 = vunpack.c.l.b16 %v8975
      %v9040 = vunpack.c.l.b16 %v8976
      %v9041 = vunpack.c.l.b16 %v8977
      %v9042 = vunpack.c.l.b16 %v8978
      %v9043 = vunpack.c.l.b16 %v8979
      %v9044 = vunpack.c.l.b16 %v8980
      %v9045 = vunpack.c.l.b16 %v8981
      %v9046 = vunpack.c.l.b16 %v8982
      %v9047 = vunpack.c.l.b16 %v8983
      %v9048 = vunpack.c.l.b16 %v8984
      %v9049 = vunpack.c.l.b16 %v8985
      %v9050 = vunpack.c.l.b16 %v8986
      %v9051 = vunpack.c.l.b16 %v8987
      %v9052 = vunpack.c.l.b16 %v8988
      %v9053 = vunpack.c.l.b16 %v8989
      %v9054 = vunpack.c.l.b16 %v8990
      %v9055 = vunpack.c.l.b16 %v8991
      %v9056 = vunpack.c.l.b16 %v8992
      %v9057 = vunpack.c.l.b16 %v8993
      %v9058 = vunpack.c.l.b16 %v8994
      %v9059 = vunpack.c.l.b16 %v8995
      %v9060 = vunpack.c.l.b16 %v8996
      %v9061 = vunpack.c.l.b16 %v8997
      %v9062 = vunpack.c.l.b16 %v8998
      %v9063 = vunpack.c.l.b16 %v8999
      %v9064 = vunpack.c.l.b16 %v9000
      %v9065 = vunpack.c.l.b16 %v9001
      %v9066 = vunpack.c.l.b16 %v9002
      %v9067 = vunpack.c.l.b16 %v9003
      %v9068 = vunpack.c.l.b16 %v9004
      %v9069 = vunpack.c.l.b16 %v9005
      %v9070 = vpack.c.b16 %v9039, %v9038
      %v9071 = vpack.c.b16 %v9041, %v9040
      %v9072 = vpack.c.b16 %v9043, %v9042
      %v9073 = vpack.c.b16 %v9045, %v9044
      %v9074 = vpack.c.b16 %v9047, %v9046
      %v9075 = vpack.c.b16 %v9049, %v9048
      %v9076 = vpack.c.b16 %v9051, %v9050
      %v9077 = vpack.c.b16 %v9053, %v9052
      %v9078 = vpack.c.b16 %v9055, %v9054
      %v9079 = vpack.c.b16 %v9057, %v9056
      %v9080 = vpack.c.b16 %v9059, %v9058
      %v9081 = vpack.c.b16 %v9061, %v9060
      %v9082 = vpack.c.b16 %v9063, %v9062
      %v9083 = vpack.c.b16 %v9065, %v9064
      %v9084 = vpack.c.b16 %v9067, %v9066
      %v9085 = vpack.c.b16 %v9069, %v9068
      %9102 = vst.msk [vmem:[#allocation4] sm:$0xff] %vm1168, %v9070
      %9103 = vst.msk [vmem:[#allocation4 + $0x8] sm:$0xff] %vm1168, %v9071
      %9104 = vst.msk [vmem:[#allocation4 + $0x10] sm:$0xff] %vm1168, %v9072
      %9105 = vst.msk [vmem:[#allocation4 + $0x18] sm:$0xff] %vm1168, %v9073
      %9106 = vst.msk [vmem:[#allocation4 + $0x20] sm:$0xff] %vm1168, %v9074
      %9107 = vst.msk [vmem:[#allocation4 + $0x28] sm:$0xff] %vm1168, %v9075
      %9108 = vst.msk [vmem:[#allocation4 + $0x30] sm:$0xff] %vm1168, %v9076
      %9109 = vst.msk [vmem:[#allocation4 + $0x38] sm:$0xff] %vm1168, %v9077
      %9110 = vst.msk [vmem:[#allocation4 + $0x40] sm:$0xff] %vm1168, %v9078
      %9111 = vst.msk [vmem:[#allocation4 + $0x48] sm:$0xff] %vm1168, %v9079
      %9112 = vst.msk [vmem:[#allocation4 + $0x50] sm:$0xff] %vm1168, %v9080
      %9113 = vst.msk [vmem:[#allocation4 + $0x58] sm:$0xff] %vm1168, %v9081
      %9114 = vst.msk [vmem:[#allocation4 + $0x60] sm:$0xff] %vm1168, %v9082
      %9115 = vst.msk [vmem:[#allocation4 + $0x68] sm:$0xff] %vm1168, %v9083
      %9116 = vst.msk [vmem:[#allocation4 + $0x70] sm:$0xff] %vm1168, %v9084
      %9117 = vst.msk [vmem:[#allocation4 + $0x78] sm:$0xff] %vm1168, %v9085
      %v9118 = vld [vmem:[%s7832] sm:$0xf]
      %v9119 = vld [vmem:[%s7832 + $0x4] sm:$0xf]
      %v9120 = vld [vmem:[%s7832 + $0x8] sm:$0x1]
      %v9121 = vld [vmem:[%s7832 + $0xc] sm:$0xf]
      %v9122 = vld [vmem:[%s7832 + $0x10] sm:$0xf]
      %v9123 = vld [vmem:[%s7832 + $0x14] sm:$0x1]
      %v9124 = vld [vmem:[%s7832 + $0x18] sm:$0xf]
      %v9125 = vld [vmem:[%s7832 + $0x1c] sm:$0xf]
      %v9126 = vld [vmem:[%s7832 + $0x20] sm:$0x1]
      %v9127 = vld [vmem:[%s7832 + $0x24] sm:$0xf]
      %v9128 = vld [vmem:[%s7832 + $0x28] sm:$0xf]
      %v9129 = vld [vmem:[%s7832 + $0x2c] sm:$0x1]
      %v9130 = vld [vmem:[%s7832 + $0x30] sm:$0xf]
      %v9131 = vld [vmem:[%s7832 + $0x34] sm:$0xf]
      %v9132 = vld [vmem:[%s7832 + $0x38] sm:$0x1]
      %v9133 = vld [vmem:[%s7832 + $0x3c] sm:$0xf]
      %v9134 = vld [vmem:[%s7832 + $0x40] sm:$0xf]
      %v9135 = vld [vmem:[%s7832 + $0x44] sm:$0x1]
      %v9136 = vld [vmem:[%s7832 + $0x48] sm:$0xf]
      %v9137 = vld [vmem:[%s7832 + $0x4c] sm:$0xf]
      %v9138 = vld [vmem:[%s7832 + $0x50] sm:$0x1]
      %v9139 = vld [vmem:[%s7832 + $0x54] sm:$0xf]
      %v9140 = vld [vmem:[%s7832 + $0x58] sm:$0xf]
      %v9141 = vld [vmem:[%s7832 + $0x5c] sm:$0x1]
      %v9142 = vld [vmem:[%s7832 + $0x60] sm:$0xf]
      %v9143 = vld [vmem:[%s7832 + $0x64] sm:$0xf]
      %v9144 = vld [vmem:[%s7832 + $0x68] sm:$0x1]
      %v9145 = vld [vmem:[%s7832 + $0x6c] sm:$0xf]
      %v9146 = vld [vmem:[%s7832 + $0x70] sm:$0xf]
      %v9147 = vld [vmem:[%s7832 + $0x74] sm:$0x1]
      %v9148 = vld [vmem:[%s7832 + $0x78] sm:$0xf]
      %v9149 = vld [vmem:[%s7832 + $0x7c] sm:$0xf]
      %v9150 = vld [vmem:[%s7832 + $0x80] sm:$0x1]
      %v9151 = vld [vmem:[%s7832 + $0x84] sm:$0xf]
      %v9152 = vld [vmem:[%s7832 + $0x88] sm:$0xf]
      %v9153 = vld [vmem:[%s7832 + $0x8c] sm:$0x1]
      %v9154 = vld [vmem:[%s7832 + $0x90] sm:$0xf]
      %v9155 = vld [vmem:[%s7832 + $0x94] sm:$0xf]
      %v9156 = vld [vmem:[%s7832 + $0x98] sm:$0x1]
      %v9157 = vld [vmem:[%s7832 + $0x9c] sm:$0xf]
      %v9158 = vld [vmem:[%s7832 + $0xa0] sm:$0xf]
      %v9159 = vld [vmem:[%s7832 + $0xa4] sm:$0x1]
      %v9160 = vld [vmem:[%s7832 + $0xa8] sm:$0xf]
      %v9161 = vld [vmem:[%s7832 + $0xac] sm:$0xf]
      %v9162 = vld [vmem:[%s7832 + $0xb0] sm:$0x1]
      %v9163 = vld [vmem:[%s7832 + $0xb4] sm:$0xf]
      %v9164 = vld [vmem:[%s7832 + $0xb8] sm:$0xf]
      %v9165 = vld [vmem:[%s7832 + $0xbc] sm:$0x1]
      %v9167 = vshrl.u32 %v9118, 16
      %v9169 = vrot.slane %v9167, 4
      %v9170 = vshll.u32 %v9118, 16
      %v9172 = vrot.slane %v9170, 5
      %v9173 = vor.u32 %v9169, %v9172
      %v9174 = vrot.slane %v9173, 4
      %v9176 = vshll.u32 %v9119, 16
      %v9178 = vrot.slane %v9176, 5
      %v9179 = vsel %vm3751, %v9174, %v9178
      %v9180 = vshrl.u32 %v9119, 16
      %v9182 = vrot.slane %v9180, 4
      %v9183 = vor.u32 %v9182, %v9178
      %v9184 = vrot.slane %v9183, 4
      %v9186 = vshll.u32 %v9120, 16
      %v9188 = vrot.slane %v9186, 5
      %v9189 = vsel %vm3751, %v9184, %v9188
      %v9191 = vshrl.u32 %v9121, 16
      %v9193 = vrot.slane %v9191, 4
      %v9194 = vshll.u32 %v9121, 16
      %v9196 = vrot.slane %v9194, 5
      %v9197 = vor.u32 %v9193, %v9196
      %v9198 = vrot.slane %v9197, 4
      %v9200 = vshll.u32 %v9122, 16
      %v9202 = vrot.slane %v9200, 5
      %v9203 = vsel %vm3751, %v9198, %v9202
      %v9204 = vshrl.u32 %v9122, 16
      %v9206 = vrot.slane %v9204, 4
      %v9207 = vor.u32 %v9206, %v9202
      %v9208 = vrot.slane %v9207, 4
      %v9210 = vshll.u32 %v9123, 16
      %v9212 = vrot.slane %v9210, 5
      %v9213 = vsel %vm3751, %v9208, %v9212
      %v9215 = vshrl.u32 %v9124, 16
      %v9217 = vrot.slane %v9215, 4
      %v9218 = vshll.u32 %v9124, 16
      %v9220 = vrot.slane %v9218, 5
      %v9221 = vor.u32 %v9217, %v9220
      %v9222 = vrot.slane %v9221, 4
      %v9224 = vshll.u32 %v9125, 16
      %v9226 = vrot.slane %v9224, 5
      %v9227 = vsel %vm3751, %v9222, %v9226
      %v9228 = vshrl.u32 %v9125, 16
      %v9230 = vrot.slane %v9228, 4
      %v9231 = vor.u32 %v9230, %v9226
      %v9232 = vrot.slane %v9231, 4
      %v9234 = vshll.u32 %v9126, 16
      %v9236 = vrot.slane %v9234, 5
      %v9237 = vsel %vm3751, %v9232, %v9236
      %v9239 = vshrl.u32 %v9127, 16
      %v9241 = vrot.slane %v9239, 4
      %v9242 = vshll.u32 %v9127, 16
      %v9244 = vrot.slane %v9242, 5
      %v9245 = vor.u32 %v9241, %v9244
      %v9246 = vrot.slane %v9245, 4
      %v9248 = vshll.u32 %v9128, 16
      %v9250 = vrot.slane %v9248, 5
      %v9251 = vsel %vm3751, %v9246, %v9250
      %v9252 = vshrl.u32 %v9128, 16
      %v9254 = vrot.slane %v9252, 4
      %v9255 = vor.u32 %v9254, %v9250
      %v9256 = vrot.slane %v9255, 4
      %v9258 = vshll.u32 %v9129, 16
      %v9260 = vrot.slane %v9258, 5
      %v9261 = vsel %vm3751, %v9256, %v9260
      %v9263 = vshrl.u32 %v9130, 16
      %v9265 = vrot.slane %v9263, 4
      %v9266 = vshll.u32 %v9130, 16
      %v9268 = vrot.slane %v9266, 5
      %v9269 = vor.u32 %v9265, %v9268
      %v9270 = vrot.slane %v9269, 4
      %v9272 = vshll.u32 %v9131, 16
      %v9274 = vrot.slane %v9272, 5
      %v9275 = vsel %vm3751, %v9270, %v9274
      %v9276 = vshrl.u32 %v9131, 16
      %v9278 = vrot.slane %v9276, 4
      %v9279 = vor.u32 %v9278, %v9274
      %v9280 = vrot.slane %v9279, 4
      %v9282 = vshll.u32 %v9132, 16
      %v9284 = vrot.slane %v9282, 5
      %v9285 = vsel %vm3751, %v9280, %v9284
      %v9287 = vshrl.u32 %v9133, 16
      %v9289 = vrot.slane %v9287, 4
      %v9290 = vshll.u32 %v9133, 16
      %v9292 = vrot.slane %v9290, 5
      %v9293 = vor.u32 %v9289, %v9292
      %v9294 = vrot.slane %v9293, 4
      %v9296 = vshll.u32 %v9134, 16
      %v9298 = vrot.slane %v9296, 5
      %v9299 = vsel %vm3751, %v9294, %v9298
      %v9300 = vshrl.u32 %v9134, 16
      %v9302 = vrot.slane %v9300, 4
      %v9303 = vor.u32 %v9302, %v9298
      %v9304 = vrot.slane %v9303, 4
      %v9306 = vshll.u32 %v9135, 16
      %v9308 = vrot.slane %v9306, 5
      %v9309 = vsel %vm3751, %v9304, %v9308
      %v9311 = vshrl.u32 %v9136, 16
      %v9313 = vrot.slane %v9311, 4
      %v9314 = vshll.u32 %v9136, 16
      %v9316 = vrot.slane %v9314, 5
      %v9317 = vor.u32 %v9313, %v9316
      %v9318 = vrot.slane %v9317, 4
      %v9320 = vshll.u32 %v9137, 16
      %v9322 = vrot.slane %v9320, 5
      %v9323 = vsel %vm3751, %v9318, %v9322
      %v9324 = vshrl.u32 %v9137, 16
      %v9326 = vrot.slane %v9324, 4
      %v9327 = vor.u32 %v9326, %v9322
      %v9328 = vrot.slane %v9327, 4
      %v9330 = vshll.u32 %v9138, 16
      %v9332 = vrot.slane %v9330, 5
      %v9333 = vsel %vm3751, %v9328, %v9332
      %v9335 = vshrl.u32 %v9139, 16
      %v9337 = vrot.slane %v9335, 4
      %v9338 = vshll.u32 %v9139, 16
      %v9340 = vrot.slane %v9338, 5
      %v9341 = vor.u32 %v9337, %v9340
      %v9342 = vrot.slane %v9341, 4
      %v9344 = vshll.u32 %v9140, 16
      %v9346 = vrot.slane %v9344, 5
      %v9347 = vsel %vm3751, %v9342, %v9346
      %v9348 = vshrl.u32 %v9140, 16
      %v9350 = vrot.slane %v9348, 4
      %v9351 = vor.u32 %v9350, %v9346
      %v9352 = vrot.slane %v9351, 4
      %v9354 = vshll.u32 %v9141, 16
      %v9356 = vrot.slane %v9354, 5
      %v9357 = vsel %vm3751, %v9352, %v9356
      %v9359 = vshrl.u32 %v9142, 16
      %v9361 = vrot.slane %v9359, 4
      %v9362 = vshll.u32 %v9142, 16
      %v9364 = vrot.slane %v9362, 5
      %v9365 = vor.u32 %v9361, %v9364
      %v9366 = vrot.slane %v9365, 4
      %v9368 = vshll.u32 %v9143, 16
      %v9370 = vrot.slane %v9368, 5
      %v9371 = vsel %vm3751, %v9366, %v9370
      %v9372 = vshrl.u32 %v9143, 16
      %v9374 = vrot.slane %v9372, 4
      %v9375 = vor.u32 %v9374, %v9370
      %v9376 = vrot.slane %v9375, 4
      %v9378 = vshll.u32 %v9144, 16
      %v9380 = vrot.slane %v9378, 5
      %v9381 = vsel %vm3751, %v9376, %v9380
      %v9383 = vshrl.u32 %v9145, 16
      %v9385 = vrot.slane %v9383, 4
      %v9386 = vshll.u32 %v9145, 16
      %v9388 = vrot.slane %v9386, 5
      %v9389 = vor.u32 %v9385, %v9388
      %v9390 = vrot.slane %v9389, 4
      %v9392 = vshll.u32 %v9146, 16
      %v9394 = vrot.slane %v9392, 5
      %v9395 = vsel %vm3751, %v9390, %v9394
      %v9396 = vshrl.u32 %v9146, 16
      %v9398 = vrot.slane %v9396, 4
      %v9399 = vor.u32 %v9398, %v9394
      %v9400 = vrot.slane %v9399, 4
      %v9402 = vshll.u32 %v9147, 16
      %v9404 = vrot.slane %v9402, 5
      %v9405 = vsel %vm3751, %v9400, %v9404
      %v9407 = vshrl.u32 %v9148, 16
      %v9409 = vrot.slane %v9407, 4
      %v9410 = vshll.u32 %v9148, 16
      %v9412 = vrot.slane %v9410, 5
      %v9413 = vor.u32 %v9409, %v9412
      %v9414 = vrot.slane %v9413, 4
      %v9416 = vshll.u32 %v9149, 16
      %v9418 = vrot.slane %v9416, 5
      %v9419 = vsel %vm3751, %v9414, %v9418
      %v9420 = vshrl.u32 %v9149, 16
      %v9422 = vrot.slane %v9420, 4
      %v9423 = vor.u32 %v9422, %v9418
      %v9424 = vrot.slane %v9423, 4
      %v9426 = vshll.u32 %v9150, 16
      %v9428 = vrot.slane %v9426, 5
      %v9429 = vsel %vm3751, %v9424, %v9428
      %v9431 = vshrl.u32 %v9151, 16
      %v9433 = vrot.slane %v9431, 4
      %v9434 = vshll.u32 %v9151, 16
      %v9436 = vrot.slane %v9434, 5
      %v9437 = vor.u32 %v9433, %v9436
      %v9438 = vrot.slane %v9437, 4
      %v9440 = vshll.u32 %v9152, 16
      %v9442 = vrot.slane %v9440, 5
      %v9443 = vsel %vm3751, %v9438, %v9442
      %v9444 = vshrl.u32 %v9152, 16
      %v9446 = vrot.slane %v9444, 4
      %v9447 = vor.u32 %v9446, %v9442
      %v9448 = vrot.slane %v9447, 4
      %v9450 = vshll.u32 %v9153, 16
      %v9452 = vrot.slane %v9450, 5
      %v9453 = vsel %vm3751, %v9448, %v9452
      %v9455 = vshrl.u32 %v9154, 16
      %v9457 = vrot.slane %v9455, 4
      %v9458 = vshll.u32 %v9154, 16
      %v9460 = vrot.slane %v9458, 5
      %v9461 = vor.u32 %v9457, %v9460
      %v9462 = vrot.slane %v9461, 4
      %v9464 = vshll.u32 %v9155, 16
      %v9466 = vrot.slane %v9464, 5
      %v9467 = vsel %vm3751, %v9462, %v9466
      %v9468 = vshrl.u32 %v9155, 16
      %v9470 = vrot.slane %v9468, 4
      %v9471 = vor.u32 %v9470, %v9466
      %v9472 = vrot.slane %v9471, 4
      %v9474 = vshll.u32 %v9156, 16
      %v9476 = vrot.slane %v9474, 5
      %v9477 = vsel %vm3751, %v9472, %v9476
      %v9479 = vshrl.u32 %v9157, 16
      %v9481 = vrot.slane %v9479, 4
      %v9482 = vshll.u32 %v9157, 16
      %v9484 = vrot.slane %v9482, 5
      %v9485 = vor.u32 %v9481, %v9484
      %v9486 = vrot.slane %v9485, 4
      %v9488 = vshll.u32 %v9158, 16
      %v9490 = vrot.slane %v9488, 5
      %v9491 = vsel %vm3751, %v9486, %v9490
      %v9492 = vshrl.u32 %v9158, 16
      %v9494 = vrot.slane %v9492, 4
      %v9495 = vor.u32 %v9494, %v9490
      %v9496 = vrot.slane %v9495, 4
      %v9498 = vshll.u32 %v9159, 16
      %v9500 = vrot.slane %v9498, 5
      %v9501 = vsel %vm3751, %v9496, %v9500
      %v9503 = vshrl.u32 %v9160, 16
      %v9505 = vrot.slane %v9503, 4
      %v9506 = vshll.u32 %v9160, 16
      %v9508 = vrot.slane %v9506, 5
      %v9509 = vor.u32 %v9505, %v9508
      %v9510 = vrot.slane %v9509, 4
      %v9512 = vshll.u32 %v9161, 16
      %v9514 = vrot.slane %v9512, 5
      %v9515 = vsel %vm3751, %v9510, %v9514
      %v9516 = vshrl.u32 %v9161, 16
      %v9518 = vrot.slane %v9516, 4
      %v9519 = vor.u32 %v9518, %v9514
      %v9520 = vrot.slane %v9519, 4
      %v9522 = vshll.u32 %v9162, 16
      %v9524 = vrot.slane %v9522, 5
      %v9525 = vsel %vm3751, %v9520, %v9524
      %v9527 = vshrl.u32 %v9163, 16
      %v9529 = vrot.slane %v9527, 4
      %v9530 = vshll.u32 %v9163, 16
      %v9532 = vrot.slane %v9530, 5
      %v9533 = vor.u32 %v9529, %v9532
      %v9534 = vrot.slane %v9533, 4
      %v9536 = vshll.u32 %v9164, 16
      %v9538 = vrot.slane %v9536, 5
      %v9539 = vsel %vm3751, %v9534, %v9538
      %v9540 = vshrl.u32 %v9164, 16
      %v9542 = vrot.slane %v9540, 4
      %v9543 = vor.u32 %v9542, %v9538
      %v9544 = vrot.slane %v9543, 4
      %v9546 = vshll.u32 %v9165, 16
      %v9548 = vrot.slane %v9546, 5
      %v9549 = vsel %vm3751, %v9544, %v9548
      %v9550 = vunpack.c.l.b16 %v9179
      %v9551 = vunpack.c.l.b16 %v9189
      %v9552 = vunpack.c.l.b16 %v9203
      %v9553 = vunpack.c.l.b16 %v9213
      %v9554 = vunpack.c.l.b16 %v9227
      %v9555 = vunpack.c.l.b16 %v9237
      %v9556 = vunpack.c.l.b16 %v9251
      %v9557 = vunpack.c.l.b16 %v9261
      %v9558 = vunpack.c.l.b16 %v9275
      %v9559 = vunpack.c.l.b16 %v9285
      %v9560 = vunpack.c.l.b16 %v9299
      %v9561 = vunpack.c.l.b16 %v9309
      %v9562 = vunpack.c.l.b16 %v9323
      %v9563 = vunpack.c.l.b16 %v9333
      %v9564 = vunpack.c.l.b16 %v9347
      %v9565 = vunpack.c.l.b16 %v9357
      %v9566 = vunpack.c.l.b16 %v9371
      %v9567 = vunpack.c.l.b16 %v9381
      %v9568 = vunpack.c.l.b16 %v9395
      %v9569 = vunpack.c.l.b16 %v9405
      %v9570 = vunpack.c.l.b16 %v9419
      %v9571 = vunpack.c.l.b16 %v9429
      %v9572 = vunpack.c.l.b16 %v9443
      %v9573 = vunpack.c.l.b16 %v9453
      %v9574 = vunpack.c.l.b16 %v9467
      %v9575 = vunpack.c.l.b16 %v9477
      %v9576 = vunpack.c.l.b16 %v9491
      %v9577 = vunpack.c.l.b16 %v9501
      %v9578 = vunpack.c.l.b16 %v9515
      %v9579 = vunpack.c.l.b16 %v9525
      %v9580 = vunpack.c.l.b16 %v9539
      %v9581 = vunpack.c.l.b16 %v9549
      %v9582 = vpack.c.b16 %v9551, %v9550
      %v9583 = vpack.c.b16 %v9553, %v9552
      %v9584 = vpack.c.b16 %v9555, %v9554
      %v9585 = vpack.c.b16 %v9557, %v9556
      %v9586 = vpack.c.b16 %v9559, %v9558
      %v9587 = vpack.c.b16 %v9561, %v9560
      %v9588 = vpack.c.b16 %v9563, %v9562
      %v9589 = vpack.c.b16 %v9565, %v9564
      %v9590 = vpack.c.b16 %v9567, %v9566
      %v9591 = vpack.c.b16 %v9569, %v9568
      %v9592 = vpack.c.b16 %v9571, %v9570
      %v9593 = vpack.c.b16 %v9573, %v9572
      %v9594 = vpack.c.b16 %v9575, %v9574
      %v9595 = vpack.c.b16 %v9577, %v9576
      %v9596 = vpack.c.b16 %v9579, %v9578
      %v9597 = vpack.c.b16 %v9581, %v9580
      %9598 = vrot.lane.b32.xlu0 %v9582, 8
      %v9599 = vpop.permute.xlu0 %9598
      %9600 = vrot.lane.b32.xlu0 %v9583, 8
      %v9601 = vpop.permute.xlu0 %9600
      %9602 = vrot.lane.b32.xlu0 %v9584, 8
      %v9603 = vpop.permute.xlu0 %9602
      %9604 = vrot.lane.b32.xlu0 %v9585, 8
      %v9605 = vpop.permute.xlu0 %9604
      %9606 = vrot.lane.b32.xlu0 %v9586, 8
      %v9607 = vpop.permute.xlu0 %9606
      %9608 = vrot.lane.b32.xlu0 %v9587, 8
      %v9609 = vpop.permute.xlu0 %9608
      %9610 = vrot.lane.b32.xlu0 %v9588, 8
      %v9611 = vpop.permute.xlu0 %9610
      %9612 = vrot.lane.b32.xlu0 %v9589, 8
      %v9613 = vpop.permute.xlu0 %9612
      %9614 = vrot.lane.b32.xlu0 %v9590, 8
      %v9615 = vpop.permute.xlu0 %9614
      %9616 = vrot.lane.b32.xlu0 %v9591, 8
      %v9617 = vpop.permute.xlu0 %9616
      %9618 = vrot.lane.b32.xlu0 %v9592, 8
      %v9619 = vpop.permute.xlu0 %9618
      %9620 = vrot.lane.b32.xlu0 %v9593, 8
      %v9621 = vpop.permute.xlu0 %9620
      %9622 = vrot.lane.b32.xlu0 %v9594, 8
      %v9623 = vpop.permute.xlu0 %9622
      %9624 = vrot.lane.b32.xlu0 %v9595, 8
      %v9625 = vpop.permute.xlu0 %9624
      %9626 = vrot.lane.b32.xlu0 %v9596, 8
      %v9627 = vpop.permute.xlu0 %9626
      %9628 = vrot.lane.b32.xlu0 %v9597, 8
      %v9629 = vpop.permute.xlu0 %9628
      %9646 = vst.msk [vmem:[#allocation4] sm:$0xff] %vm4232, %v9599
      %9647 = vst.msk [vmem:[#allocation4 + $0x8] sm:$0xff] %vm4232, %v9601
      %9648 = vst.msk [vmem:[#allocation4 + $0x10] sm:$0xff] %vm4232, %v9603
      %9649 = vst.msk [vmem:[#allocation4 + $0x18] sm:$0xff] %vm4232, %v9605
      %9650 = vst.msk [vmem:[#allocation4 + $0x20] sm:$0xff] %vm4232, %v9607
      %9651 = vst.msk [vmem:[#allocation4 + $0x28] sm:$0xff] %vm4232, %v9609
      %9652 = vst.msk [vmem:[#allocation4 + $0x30] sm:$0xff] %vm4232, %v9611
      %9653 = vst.msk [vmem:[#allocation4 + $0x38] sm:$0xff] %vm4232, %v9613
      %9654 = vst.msk [vmem:[#allocation4 + $0x40] sm:$0xff] %vm4232, %v9615
      %9655 = vst.msk [vmem:[#allocation4 + $0x48] sm:$0xff] %vm4232, %v9617
      %9656 = vst.msk [vmem:[#allocation4 + $0x50] sm:$0xff] %vm4232, %v9619
      %9657 = vst.msk [vmem:[#allocation4 + $0x58] sm:$0xff] %vm4232, %v9621
      %9658 = vst.msk [vmem:[#allocation4 + $0x60] sm:$0xff] %vm4232, %v9623
      %9659 = vst.msk [vmem:[#allocation4 + $0x68] sm:$0xff] %vm4232, %v9625
      %9660 = vst.msk [vmem:[#allocation4 + $0x70] sm:$0xff] %vm4232, %v9627
      %9661 = vst.msk [vmem:[#allocation4 + $0x78] sm:$0xff] %vm4232, %v9629
      %v9662 = vld [vmem:[%s7832] sm:$0xe]
      %v9663 = vld [vmem:[%s7832 + $0x4] sm:$0xf]
      %v9664 = vld [vmem:[%s7832 + $0x8] sm:$0x1]
      %v9665 = vld [vmem:[%s7832 + $0xc] sm:$0xe]
      %v9666 = vld [vmem:[%s7832 + $0x10] sm:$0xf]
      %v9667 = vld [vmem:[%s7832 + $0x14] sm:$0x1]
      %v9668 = vld [vmem:[%s7832 + $0x18] sm:$0xe]
      %v9669 = vld [vmem:[%s7832 + $0x1c] sm:$0xf]
      %v9670 = vld [vmem:[%s7832 + $0x20] sm:$0x1]
      %v9671 = vld [vmem:[%s7832 + $0x24] sm:$0xe]
      %v9672 = vld [vmem:[%s7832 + $0x28] sm:$0xf]
      %v9673 = vld [vmem:[%s7832 + $0x2c] sm:$0x1]
      %v9674 = vld [vmem:[%s7832 + $0x30] sm:$0xe]
      %v9675 = vld [vmem:[%s7832 + $0x34] sm:$0xf]
      %v9676 = vld [vmem:[%s7832 + $0x38] sm:$0x1]
      %v9677 = vld [vmem:[%s7832 + $0x3c] sm:$0xe]
      %v9678 = vld [vmem:[%s7832 + $0x40] sm:$0xf]
      %v9679 = vld [vmem:[%s7832 + $0x44] sm:$0x1]
      %v9680 = vld [vmem:[%s7832 + $0x48] sm:$0xe]
      %v9681 = vld [vmem:[%s7832 + $0x4c] sm:$0xf]
      %v9682 = vld [vmem:[%s7832 + $0x50] sm:$0x1]
      %v9683 = vld [vmem:[%s7832 + $0x54] sm:$0xe]
      %v9684 = vld [vmem:[%s7832 + $0x58] sm:$0xf]
      %v9685 = vld [vmem:[%s7832 + $0x5c] sm:$0x1]
      %v9686 = vld [vmem:[%s7832 + $0x60] sm:$0xe]
      %v9687 = vld [vmem:[%s7832 + $0x64] sm:$0xf]
      %v9688 = vld [vmem:[%s7832 + $0x68] sm:$0x1]
      %v9689 = vld [vmem:[%s7832 + $0x6c] sm:$0xe]
      %v9690 = vld [vmem:[%s7832 + $0x70] sm:$0xf]
      %v9691 = vld [vmem:[%s7832 + $0x74] sm:$0x1]
      %v9692 = vld [vmem:[%s7832 + $0x78] sm:$0xe]
      %v9693 = vld [vmem:[%s7832 + $0x7c] sm:$0xf]
      %v9694 = vld [vmem:[%s7832 + $0x80] sm:$0x1]
      %v9695 = vld [vmem:[%s7832 + $0x84] sm:$0xe]
      %v9696 = vld [vmem:[%s7832 + $0x88] sm:$0xf]
      %v9697 = vld [vmem:[%s7832 + $0x8c] sm:$0x1]
      %v9698 = vld [vmem:[%s7832 + $0x90] sm:$0xe]
      %v9699 = vld [vmem:[%s7832 + $0x94] sm:$0xf]
      %v9700 = vld [vmem:[%s7832 + $0x98] sm:$0x1]
      %v9701 = vld [vmem:[%s7832 + $0x9c] sm:$0xe]
      %v9702 = vld [vmem:[%s7832 + $0xa0] sm:$0xf]
      %v9703 = vld [vmem:[%s7832 + $0xa4] sm:$0x1]
      %v9704 = vld [vmem:[%s7832 + $0xa8] sm:$0xe]
      %v9705 = vld [vmem:[%s7832 + $0xac] sm:$0xf]
      %v9706 = vld [vmem:[%s7832 + $0xb0] sm:$0x1]
      %v9707 = vld [vmem:[%s7832 + $0xb4] sm:$0xe]
      %v9708 = vld [vmem:[%s7832 + $0xb8] sm:$0xf]
      %v9709 = vld [vmem:[%s7832 + $0xbc] sm:$0x1]
      %v9758 = vrot.slane %v9662, 5
      %v9759 = vrot.slane %v9758, 4
      %v9760 = vrot.slane %v9663, 5
      %v9761 = vsel %vm4347, %v9759, %v9760
      %v9762 = vrot.slane %v9760, 4
      %v9763 = vrot.slane %v9664, 5
      %v9764 = vsel %vm4347, %v9762, %v9763
      %v9765 = vrot.slane %v9665, 5
      %v9766 = vrot.slane %v9765, 4
      %v9767 = vrot.slane %v9666, 5
      %v9768 = vsel %vm4347, %v9766, %v9767
      %v9769 = vrot.slane %v9767, 4
      %v9770 = vrot.slane %v9667, 5
      %v9771 = vsel %vm4347, %v9769, %v9770
      %v9772 = vrot.slane %v9668, 5
      %v9773 = vrot.slane %v9772, 4
      %v9774 = vrot.slane %v9669, 5
      %v9775 = vsel %vm4347, %v9773, %v9774
      %v9776 = vrot.slane %v9774, 4
      %v9777 = vrot.slane %v9670, 5
      %v9778 = vsel %vm4347, %v9776, %v9777
      %v9779 = vrot.slane %v9671, 5
      %v9780 = vrot.slane %v9779, 4
      %v9781 = vrot.slane %v9672, 5
      %v9782 = vsel %vm4347, %v9780, %v9781
      %v9783 = vrot.slane %v9781, 4
      %v9784 = vrot.slane %v9673, 5
      %v9785 = vsel %vm4347, %v9783, %v9784
      %v9786 = vrot.slane %v9674, 5
      %v9787 = vrot.slane %v9786, 4
      %v9788 = vrot.slane %v9675, 5
      %v9789 = vsel %vm4347, %v9787, %v9788
      %v9790 = vrot.slane %v9788, 4
      %v9791 = vrot.slane %v9676, 5
      %v9792 = vsel %vm4347, %v9790, %v9791
      %v9793 = vrot.slane %v9677, 5
      %v9794 = vrot.slane %v9793, 4
      %v9795 = vrot.slane %v9678, 5
      %v9796 = vsel %vm4347, %v9794, %v9795
      %v9797 = vrot.slane %v9795, 4
      %v9798 = vrot.slane %v9679, 5
      %v9799 = vsel %vm4347, %v9797, %v9798
      %v9800 = vrot.slane %v9680, 5
      %v9801 = vrot.slane %v9800, 4
      %v9802 = vrot.slane %v9681, 5
      %v9803 = vsel %vm4347, %v9801, %v9802
      %v9804 = vrot.slane %v9802, 4
      %v9805 = vrot.slane %v9682, 5
      %v9806 = vsel %vm4347, %v9804, %v9805
      %v9807 = vrot.slane %v9683, 5
      %v9808 = vrot.slane %v9807, 4
      %v9809 = vrot.slane %v9684, 5
      %v9810 = vsel %vm4347, %v9808, %v9809
      %v9811 = vrot.slane %v9809, 4
      %v9812 = vrot.slane %v9685, 5
      %v9813 = vsel %vm4347, %v9811, %v9812
      %v9814 = vrot.slane %v9686, 5
      %v9815 = vrot.slane %v9814, 4
      %v9816 = vrot.slane %v9687, 5
      %v9817 = vsel %vm4347, %v9815, %v9816
      %v9818 = vrot.slane %v9816, 4
      %v9819 = vrot.slane %v9688, 5
      %v9820 = vsel %vm4347, %v9818, %v9819
      %v9821 = vrot.slane %v9689, 5
      %v9822 = vrot.slane %v9821, 4
      %v9823 = vrot.slane %v9690, 5
      %v9824 = vsel %vm4347, %v9822, %v9823
      %v9825 = vrot.slane %v9823, 4
      %v9826 = vrot.slane %v9691, 5
      %v9827 = vsel %vm4347, %v9825, %v9826
      %v9828 = vrot.slane %v9692, 5
      %v9829 = vrot.slane %v9828, 4
      %v9830 = vrot.slane %v9693, 5
      %v9831 = vsel %vm4347, %v9829, %v9830
      %v9832 = vrot.slane %v9830, 4
      %v9833 = vrot.slane %v9694, 5
      %v9834 = vsel %vm4347, %v9832, %v9833
      %v9835 = vrot.slane %v9695, 5
      %v9836 = vrot.slane %v9835, 4
      %v9837 = vrot.slane %v9696, 5
      %v9838 = vsel %vm4347, %v9836, %v9837
      %v9839 = vrot.slane %v9837, 4
      %v9840 = vrot.slane %v9697, 5
      %v9841 = vsel %vm4347, %v9839, %v9840
      %v9842 = vrot.slane %v9698, 5
      %v9843 = vrot.slane %v9842, 4
      %v9844 = vrot.slane %v9699, 5
      %v9845 = vsel %vm4347, %v9843, %v9844
      %v9846 = vrot.slane %v9844, 4
      %v9847 = vrot.slane %v9700, 5
      %v9848 = vsel %vm4347, %v9846, %v9847
      %v9849 = vrot.slane %v9701, 5
      %v9850 = vrot.slane %v9849, 4
      %v9851 = vrot.slane %v9702, 5
      %v9852 = vsel %vm4347, %v9850, %v9851
      %v9853 = vrot.slane %v9851, 4
      %v9854 = vrot.slane %v9703, 5
      %v9855 = vsel %vm4347, %v9853, %v9854
      %v9856 = vrot.slane %v9704, 5
      %v9857 = vrot.slane %v9856, 4
      %v9858 = vrot.slane %v9705, 5
      %v9859 = vsel %vm4347, %v9857, %v9858
      %v9860 = vrot.slane %v9858, 4
      %v9861 = vrot.slane %v9706, 5
      %v9862 = vsel %vm4347, %v9860, %v9861
      %v9863 = vrot.slane %v9707, 5
      %v9864 = vrot.slane %v9863, 4
      %v9865 = vrot.slane %v9708, 5
      %v9866 = vsel %vm4347, %v9864, %v9865
      %v9867 = vrot.slane %v9865, 4
      %v9868 = vrot.slane %v9709, 5
      %v9869 = vsel %vm4347, %v9867, %v9868
      %v9870 = vunpack.c.l.b16 %v9761
      %v9871 = vunpack.c.l.b16 %v9764
      %v9872 = vunpack.c.l.b16 %v9768
      %v9873 = vunpack.c.l.b16 %v9771
      %v9874 = vunpack.c.l.b16 %v9775
      %v9875 = vunpack.c.l.b16 %v9778
      %v9876 = vunpack.c.l.b16 %v9782
      %v9877 = vunpack.c.l.b16 %v9785
      %v9878 = vunpack.c.l.b16 %v9789
      %v9879 = vunpack.c.l.b16 %v9792
      %v9880 = vunpack.c.l.b16 %v9796
      %v9881 = vunpack.c.l.b16 %v9799
      %v9882 = vunpack.c.l.b16 %v9803
      %v9883 = vunpack.c.l.b16 %v9806
      %v9884 = vunpack.c.l.b16 %v9810
      %v9885 = vunpack.c.l.b16 %v9813
      %v9886 = vunpack.c.l.b16 %v9817
      %v9887 = vunpack.c.l.b16 %v9820
      %v9888 = vunpack.c.l.b16 %v9824
      %v9889 = vunpack.c.l.b16 %v9827
      %v9890 = vunpack.c.l.b16 %v9831
      %v9891 = vunpack.c.l.b16 %v9834
      %v9892 = vunpack.c.l.b16 %v9838
      %v9893 = vunpack.c.l.b16 %v9841
      %v9894 = vunpack.c.l.b16 %v9845
      %v9895 = vunpack.c.l.b16 %v9848
      %v9896 = vunpack.c.l.b16 %v9852
      %v9897 = vunpack.c.l.b16 %v9855
      %v9898 = vunpack.c.l.b16 %v9859
      %v9899 = vunpack.c.l.b16 %v9862
      %v9900 = vunpack.c.l.b16 %v9866
      %v9901 = vunpack.c.l.b16 %v9869
      %v9902 = vpack.c.b16 %v9871, %v9870
      %v9903 = vpack.c.b16 %v9873, %v9872
      %v9904 = vpack.c.b16 %v9875, %v9874
      %v9905 = vpack.c.b16 %v9877, %v9876
      %v9906 = vpack.c.b16 %v9879, %v9878
      %v9907 = vpack.c.b16 %v9881, %v9880
      %v9908 = vpack.c.b16 %v9883, %v9882
      %v9909 = vpack.c.b16 %v9885, %v9884
      %v9910 = vpack.c.b16 %v9887, %v9886
      %v9911 = vpack.c.b16 %v9889, %v9888
      %v9912 = vpack.c.b16 %v9891, %v9890
      %v9913 = vpack.c.b16 %v9893, %v9892
      %v9914 = vpack.c.b16 %v9895, %v9894
      %v9915 = vpack.c.b16 %v9897, %v9896
      %v9916 = vpack.c.b16 %v9899, %v9898
      %v9917 = vpack.c.b16 %v9901, %v9900
      %9918 = vrot.lane.b32.xlu0 %v9902, 16
      %v9919 = vpop.permute.xlu0 %9918
      %9920 = vrot.lane.b32.xlu0 %v9903, 16
      %v9921 = vpop.permute.xlu0 %9920
      %9922 = vrot.lane.b32.xlu0 %v9904, 16
      %v9923 = vpop.permute.xlu0 %9922
      %9924 = vrot.lane.b32.xlu0 %v9905, 16
      %v9925 = vpop.permute.xlu0 %9924
      %9926 = vrot.lane.b32.xlu0 %v9906, 16
      %v9927 = vpop.permute.xlu0 %9926
      %9928 = vrot.lane.b32.xlu0 %v9907, 16
      %v9929 = vpop.permute.xlu0 %9928
      %9930 = vrot.lane.b32.xlu0 %v9908, 16
      %v9931 = vpop.permute.xlu0 %9930
      %9932 = vrot.lane.b32.xlu0 %v9909, 16
      %v9933 = vpop.permute.xlu0 %9932
      %9934 = vrot.lane.b32.xlu0 %v9910, 16
      %v9935 = vpop.permute.xlu0 %9934
      %9936 = vrot.lane.b32.xlu0 %v9911, 16
      %v9937 = vpop.permute.xlu0 %9936
      %9938 = vrot.lane.b32.xlu0 %v9912, 16
      %v9939 = vpop.permute.xlu0 %9938
      %9940 = vrot.lane.b32.xlu0 %v9913, 16
      %v9941 = vpop.permute.xlu0 %9940
      %9942 = vrot.lane.b32.xlu0 %v9914, 16
      %v9943 = vpop.permute.xlu0 %9942
      %9944 = vrot.lane.b32.xlu0 %v9915, 16
      %v9945 = vpop.permute.xlu0 %9944
      %9946 = vrot.lane.b32.xlu0 %v9916, 16
      %v9947 = vpop.permute.xlu0 %9946
      %9948 = vrot.lane.b32.xlu0 %v9917, 16
      %v9949 = vpop.permute.xlu0 %9948
      %9966 = vst.msk [vmem:[#allocation4] sm:$0xff] %vm4556, %v9919
      %9967 = vst.msk [vmem:[#allocation4 + $0x8] sm:$0xff] %vm4556, %v9921
      %9968 = vst.msk [vmem:[#allocation4 + $0x10] sm:$0xff] %vm4556, %v9923
      %9969 = vst.msk [vmem:[#allocation4 + $0x18] sm:$0xff] %vm4556, %v9925
      %9970 = vst.msk [vmem:[#allocation4 + $0x20] sm:$0xff] %vm4556, %v9927
      %9971 = vst.msk [vmem:[#allocation4 + $0x28] sm:$0xff] %vm4556, %v9929
      %9972 = vst.msk [vmem:[#allocation4 + $0x30] sm:$0xff] %vm4556, %v9931
      %9973 = vst.msk [vmem:[#allocation4 + $0x38] sm:$0xff] %vm4556, %v9933
      %9974 = vst.msk [vmem:[#allocation4 + $0x40] sm:$0xff] %vm4556, %v9935
      %9975 = vst.msk [vmem:[#allocation4 + $0x48] sm:$0xff] %vm4556, %v9937
      %9976 = vst.msk [vmem:[#allocation4 + $0x50] sm:$0xff] %vm4556, %v9939
      %9977 = vst.msk [vmem:[#allocation4 + $0x58] sm:$0xff] %vm4556, %v9941
      %9978 = vst.msk [vmem:[#allocation4 + $0x60] sm:$0xff] %vm4556, %v9943
      %9979 = vst.msk [vmem:[#allocation4 + $0x68] sm:$0xff] %vm4556, %v9945
      %9980 = vst.msk [vmem:[#allocation4 + $0x70] sm:$0xff] %vm4556, %v9947
      %9981 = vst.msk [vmem:[#allocation4 + $0x78] sm:$0xff] %vm4556, %v9949
      %v9982 = vld [vmem:[#allocation4] sm:$0xff]
      %v9983 = vld [vmem:[#allocation4 + $0x8] sm:$0xff]
      %v9984 = vld [vmem:[#allocation4 + $0x10] sm:$0xff]
      %v9985 = vld [vmem:[#allocation4 + $0x18] sm:$0xff]
      %v9986 = vld [vmem:[#allocation4 + $0x20] sm:$0xff]
      %v9987 = vld [vmem:[#allocation4 + $0x28] sm:$0xff]
      %v9988 = vld [vmem:[#allocation4 + $0x30] sm:$0xff]
      %v9989 = vld [vmem:[#allocation4 + $0x38] sm:$0xff]
      %v9990 = vld [vmem:[#allocation4 + $0x40] sm:$0xff]
      %v9991 = vld [vmem:[#allocation4 + $0x48] sm:$0xff]
      %v9992 = vld [vmem:[#allocation4 + $0x50] sm:$0xff]
      %v9993 = vld [vmem:[#allocation4 + $0x58] sm:$0xff]
      %v9994 = vld [vmem:[#allocation4 + $0x60] sm:$0xff]
      %v9995 = vld [vmem:[#allocation4 + $0x68] sm:$0xff]
      %v9996 = vld [vmem:[#allocation4 + $0x70] sm:$0xff]
      %v9997 = vld [vmem:[#allocation4 + $0x78] sm:$0xff]
      %s9998 = scalar_lea.vmem %s6, 12
      %v9999 = vld [vmem:[%s9998] sm:$0xf]
      %v10000 = vld [vmem:[%s9998 + $0x4] sm:$0xf]
      %v10001 = vld [vmem:[%s9998 + $0x8] sm:$0xf]
      %v10005 = vunpack.c.l.b16 %v9999
      %v10006 = vunpack.c.l.b16 %v10000
      %v10007 = vunpack.c.l.b16 %v10001
      %v10008 = vpack.c.b16 %v10006, %v10005
      %v10009 = vpack.c.b16 %v10007, %v10007
      %v10012 = vsel %vm5629, %v9982, 0
      %v10015 = vsel %vm5629, %v9983, 0
      %v10018 = vsel %vm5629, %v9984, 0
      %v10021 = vsel %vm5629, %v9985, 0
      %v10024 = vsel %vm5629, %v9986, 0
      %v10027 = vsel %vm5629, %v9987, 0
      %v10030 = vsel %vm5629, %v9988, 0
      %v10033 = vsel %vm5629, %v9989, 0
      %v10036 = vsel %vm5629, %v9990, 0
      %v10039 = vsel %vm5629, %v9991, 0
      %v10042 = vsel %vm5629, %v9992, 0
      %v10045 = vsel %vm5629, %v9993, 0
      %v10048 = vsel %vm5629, %v9994, 0
      %v10051 = vsel %vm5629, %v9995, 0
      %v10054 = vsel %vm5629, %v9996, 0
      %v10057 = vsel %vm5629, %v9997, 0
      %v10060 = vsel %vm1181, %v10009, 0
      %10062 = vmatprep.subr.bf16.mxu0 0
      %10063 = vmatpush1.bf16.msra.mxu0 %v10008
      %10064 = vmatprep.subr.bf16.mxu0 0
      %10065 = vmatpush1.bf16.msra.mxu0 %v10060
      %10066 = vmatprep.subr.bf16.mxu0 0
      %10067 = vmatpush1.bf16.msra.mxu0 0
      %10068 = vmatprep.subr.bf16.mxu0 0
      %10069 = vmatpush1.bf16.msra.mxu0 0
      %10070 = vmatprep.subr.bf16.mxu0 0
      %10071 = vmatpush1.bf16.msra.mxu0 0
      %10072 = vmatprep.subr.bf16.mxu0 0
      %10073 = vmatpush1.bf16.msra.mxu0 0
      %10074 = vmatprep.subr.bf16.mxu0 0
      %10075 = vmatpush1.bf16.msra.mxu0 0
      %10076 = vmatprep.subr.bf16.mxu0 0
      %10077 = vmatpush1.bf16.msra.mxu0 0
      %10078 = vmatprep.subr.bf16.mxu0 0
      %10079 = vmatpush1.bf16.msra.mxu0 0
      %10080 = vmatprep.subr.bf16.mxu0 0
      %10081 = vmatpush1.bf16.msra.mxu0 0
      %10082 = vmatprep.subr.bf16.mxu0 0
      %10083 = vmatpush1.bf16.msra.mxu0 0
      %10084 = vmatprep.subr.bf16.mxu0 0
      %10085 = vmatpush1.bf16.msra.mxu0 0
      %10086 = vmatprep.subr.bf16.mxu0 0
      %10087 = vmatpush1.bf16.msra.mxu0 0
      %10088 = vmatprep.subr.bf16.mxu0 0
      %10089 = vmatpush1.bf16.msra.mxu0 0
      %10090 = vmatprep.subr.bf16.mxu0 0
      %10091 = vmatpush1.bf16.msra.mxu0 0
      %10092 = vmatprep.subr.bf16.mxu0 0
      %10093 = vmatpush1.bf16.msra.mxu0 0
      %10094 = vmatprep.mubr.bf16.mxu0 0
      %10095 = vmatmul.mubr.bf16.gmra.mrb[0].mxu0 %v10012
      %v10096 = vpop.f32.mrb[0].mxu0
      %v10097 = vadd.f32 0.0, %v10096
      %v10098 = vpop.f32.mrb[0].mxu0
      %v10099 = vpop.f32.mrb[0].mxu0
      %v10100 = vadd.f32 0.0, %v10099
      %v10101 = vpop.f32.mrb[0].mxu0
      %10102 = vmatprep.mubr.bf16.mxu0 0
      %10103 = vmatmul.mubr.bf16.gmra.mrb[0].mxu0 %v10015
      %v10104 = vpop.f32.mrb[0].mxu0
      %v10105 = vadd.f32 0.0, %v10104
      %v10106 = vpop.f32.mrb[0].mxu0
      %v10107 = vpop.f32.mrb[0].mxu0
      %v10108 = vadd.f32 0.0, %v10107
      %v10109 = vpop.f32.mrb[0].mxu0
      %10110 = vmatprep.mubr.bf16.mxu0 0
      %10111 = vmatmul.mubr.bf16.gmra.mrb[0].mxu0 %v10018
      %v10112 = vpop.f32.mrb[0].mxu0
      %v10113 = vadd.f32 0.0, %v10112
      %v10114 = vpop.f32.mrb[0].mxu0
      %v10115 = vpop.f32.mrb[0].mxu0
      %v10116 = vadd.f32 0.0, %v10115
      %v10117 = vpop.f32.mrb[0].mxu0
      %10118 = vmatprep.mubr.bf16.mxu0 0
      %10119 = vmatmul.mubr.bf16.gmra.mrb[0].mxu0 %v10021
      %v10120 = vpop.f32.mrb[0].mxu0
      %v10121 = vadd.f32 0.0, %v10120
      %v10122 = vpop.f32.mrb[0].mxu0
      %v10123 = vpop.f32.mrb[0].mxu0
      %v10124 = vadd.f32 0.0, %v10123
      %v10125 = vpop.f32.mrb[0].mxu0
      %10126 = vmatprep.mubr.bf16.mxu0 0
      %10127 = vmatmul.mubr.bf16.gmra.mrb[0].mxu0 %v10024
      %v10128 = vpop.f32.mrb[0].mxu0
      %v10129 = vadd.f32 0.0, %v10128
      %v10130 = vpop.f32.mrb[0].mxu0
      %v10131 = vpop.f32.mrb[0].mxu0
      %v10132 = vadd.f32 0.0, %v10131
      %v10133 = vpop.f32.mrb[0].mxu0
      %10134 = vmatprep.mubr.bf16.mxu0 0
      %10135 = vmatmul.mubr.bf16.gmra.mrb[0].mxu0 %v10027
      %v10136 = vpop.f32.mrb[0].mxu0
      %v10137 = vadd.f32 0.0, %v10136
      %v10138 = vpop.f32.mrb[0].mxu0
      %v10139 = vpop.f32.mrb[0].mxu0
      %v10140 = vadd.f32 0.0, %v10139
      %v10141 = vpop.f32.mrb[0].mxu0
      %10142 = vmatprep.mubr.bf16.mxu0 0
      %10143 = vmatmul.mubr.bf16.gmra.mrb[0].mxu0 %v10030
      %v10144 = vpop.f32.mrb[0].mxu0
      %v10145 = vadd.f32 0.0, %v10144
      %v10146 = vpop.f32.mrb[0].mxu0
      %v10147 = vpop.f32.mrb[0].mxu0
      %v10148 = vadd.f32 0.0, %v10147
      %v10149 = vpop.f32.mrb[0].mxu0
      %10150 = vmatprep.mubr.bf16.mxu0 0
      %10151 = vmatmul.mubr.bf16.gmra.mrb[0].mxu0 %v10033
      %v10152 = vpop.f32.mrb[0].mxu0
      %v10153 = vadd.f32 0.0, %v10152
      %v10154 = vpop.f32.mrb[0].mxu0
      %v10155 = vpop.f32.mrb[0].mxu0
      %v10156 = vadd.f32 0.0, %v10155
      %v10157 = vpop.f32.mrb[0].mxu0
      %10158 = vmatprep.mubr.bf16.mxu0 0
      %10159 = vmatmul.mubr.bf16.gmra.mrb[0].mxu0 %v10036
      %v10160 = vpop.f32.mrb[0].mxu0
      %v10161 = vadd.f32 0.0, %v10160
      %v10162 = vpop.f32.mrb[0].mxu0
      %v10163 = vpop.f32.mrb[0].mxu0
      %v10164 = vadd.f32 0.0, %v10163
      %v10165 = vpop.f32.mrb[0].mxu0
      %10166 = vmatprep.mubr.bf16.mxu0 0
      %10167 = vmatmul.mubr.bf16.gmra.mrb[0].mxu0 %v10039
      %v10168 = vpop.f32.mrb[0].mxu0
      %v10169 = vadd.f32 0.0, %v10168
      %v10170 = vpop.f32.mrb[0].mxu0
      %v10171 = vpop.f32.mrb[0].mxu0
      %v10172 = vadd.f32 0.0, %v10171
      %v10173 = vpop.f32.mrb[0].mxu0
      %10174 = vmatprep.mubr.bf16.mxu0 0
      %10175 = vmatmul.mubr.bf16.gmra.mrb[0].mxu0 %v10042
      %v10176 = vpop.f32.mrb[0].mxu0
      %v10177 = vadd.f32 0.0, %v10176
      %v10178 = vpop.f32.mrb[0].mxu0
      %v10179 = vpop.f32.mrb[0].mxu0
      %v10180 = vadd.f32 0.0, %v10179
      %v10181 = vpop.f32.mrb[0].mxu0
      %10182 = vmatprep.mubr.bf16.mxu0 0
      %10183 = vmatmul.mubr.bf16.gmra.mrb[0].mxu0 %v10045
      %v10184 = vpop.f32.mrb[0].mxu0
      %v10185 = vadd.f32 0.0, %v10184
      %v10186 = vpop.f32.mrb[0].mxu0
      %v10187 = vpop.f32.mrb[0].mxu0
      %v10188 = vadd.f32 0.0, %v10187
      %v10189 = vpop.f32.mrb[0].mxu0
      %10190 = vmatprep.mubr.bf16.mxu0 0
      %10191 = vmatmul.mubr.bf16.gmra.mrb[0].mxu0 %v10048
      %v10192 = vpop.f32.mrb[0].mxu0
      %v10193 = vadd.f32 0.0, %v10192
      %v10194 = vpop.f32.mrb[0].mxu0
      %v10195 = vpop.f32.mrb[0].mxu0
      %v10196 = vadd.f32 0.0, %v10195
      %v10197 = vpop.f32.mrb[0].mxu0
      %10198 = vmatprep.mubr.bf16.mxu0 0
      %10199 = vmatmul.mubr.bf16.gmra.mrb[0].mxu0 %v10051
      %v10200 = vpop.f32.mrb[0].mxu0
      %v10201 = vadd.f32 0.0, %v10200
      %v10202 = vpop.f32.mrb[0].mxu0
      %v10203 = vpop.f32.mrb[0].mxu0
      %v10204 = vadd.f32 0.0, %v10203
      %v10205 = vpop.f32.mrb[0].mxu0
      %10206 = vmatprep.mubr.bf16.mxu0 0
      %10207 = vmatmul.mubr.bf16.gmra.mrb[0].mxu0 %v10054
      %v10208 = vpop.f32.mrb[0].mxu0
      %v10209 = vadd.f32 0.0, %v10208
      %v10210 = vpop.f32.mrb[0].mxu0
      %v10211 = vpop.f32.mrb[0].mxu0
      %v10212 = vadd.f32 0.0, %v10211
      %v10213 = vpop.f32.mrb[0].mxu0
      %10214 = vmatprep.mubr.bf16.mxu0 0
      %10215 = vmatmul.mubr.bf16.gmra.mrb[0].mxu0 %v10057
      %v10216 = vpop.f32.mrb[0].mxu0
      %v10217 = vadd.f32 0.0, %v10216
      %v10218 = vpop.f32.mrb[0].mxu0
      %v10219 = vpop.f32.mrb[0].mxu0
      %v10220 = vadd.f32 0.0, %v10219
      %v10221 = vpop.f32.mrb[0].mxu0
      %10222 = vdwg.mxu0
      %v10226 = vunpack.c.l.b16 %v8971
      %v10227 = vunpack.c.l.b16 %v8972
      %v10228 = vunpack.c.l.b16 %v8973
      %v10229 = vpack.c.b16 %v10227, %v10226
      %v10230 = vpack.c.b16 %v10228, %v10228
      %v10233 = vsel %vm5629, %v8955, 0
      %v10236 = vsel %vm5629, %v8956, 0
      %v10239 = vsel %vm5629, %v8957, 0
      %v10242 = vsel %vm5629, %v8958, 0
      %v10245 = vsel %vm5629, %v8959, 0
      %v10248 = vsel %vm5629, %v8960, 0
      %v10251 = vsel %vm5629, %v8961, 0
      %v10254 = vsel %vm5629, %v8962, 0
      %v10257 = vsel %vm5629, %v8963, 0
      %v10260 = vsel %vm5629, %v8964, 0
      %v10263 = vsel %vm5629, %v8965, 0
      %v10266 = vsel %vm5629, %v8966, 0
      %v10269 = vsel %vm5629, %v8967, 0
      %v10272 = vsel %vm5629, %v8968, 0
      %v10275 = vsel %vm5629, %v8969, 0
      %v10278 = vsel %vm5629, %v8970, 0
      %v10281 = vsel %vm1181, %v10230, 0
      %10283 = vmatprep.subr.bf16.mxu0 0
      %10284 = vmatpush1.bf16.msra.mxu0 %v10229
      %10285 = vmatprep.subr.bf16.mxu0 0
      %10286 = vmatpush1.bf16.msra.mxu0 %v10281
      %10287 = vmatprep.subr.bf16.mxu0 0
      %10288 = vmatpush1.bf16.msra.mxu0 0
      %10289 = vmatprep.subr.bf16.mxu0 0
      %10290 = vmatpush1.bf16.msra.mxu0 0
      %10291 = vmatprep.subr.bf16.mxu0 0
      %10292 = vmatpush1.bf16.msra.mxu0 0
      %10293 = vmatprep.subr.bf16.mxu0 0
      %10294 = vmatpush1.bf16.msra.mxu0 0
      %10295 = vmatprep.subr.bf16.mxu0 0
      %10296 = vmatpush1.bf16.msra.mxu0 0
      %10297 = vmatprep.subr.bf16.mxu0 0
      %10298 = vmatpush1.bf16.msra.mxu0 0
      %10299 = vmatprep.subr.bf16.mxu0 0
      %10300 = vmatpush1.bf16.msra.mxu0 0
      %10301 = vmatprep.subr.bf16.mxu0 0
      %10302 = vmatpush1.bf16.msra.mxu0 0
      %10303 = vmatprep.subr.bf16.mxu0 0
      %10304 = vmatpush1.bf16.msra.mxu0 0
      %10305 = vmatprep.subr.bf16.mxu0 0
      %10306 = vmatpush1.bf16.msra.mxu0 0
      %10307 = vmatprep.subr.bf16.mxu0 0
      %10308 = vmatpush1.bf16.msra.mxu0 0
      %10309 = vmatprep.subr.bf16.mxu0 0
      %10310 = vmatpush1.bf16.msra.mxu0 0
      %10311 = vmatprep.subr.bf16.mxu0 0
      %10312 = vmatpush1.bf16.msra.mxu0 0
      %10313 = vmatprep.subr.bf16.mxu0 0
      %10314 = vmatpush1.bf16.msra.mxu0 0
      %10315 = vmatprep.mubr.bf16.mxu0 0
      %10316 = vmatmul.mubr.bf16.gmra.mrb[0].mxu0 %v10233
      %v10317 = vpop.f32.mrb[0].mxu0
      %v10318 = vadd.f32 %v10097, %v10317
      %v10319 = vpop.f32.mrb[0].mxu0
      %v10320 = vpop.f32.mrb[0].mxu0
      %v10321 = vadd.f32 %v10100, %v10320
      %v10322 = vpop.f32.mrb[0].mxu0
      %10323 = vmatprep.mubr.bf16.mxu0 0
      %10324 = vmatmul.mubr.bf16.gmra.mrb[0].mxu0 %v10236
      %v10325 = vpop.f32.mrb[0].mxu0
      %v10326 = vadd.f32 %v10105, %v10325
      %v10327 = vpop.f32.mrb[0].mxu0
      %v10328 = vpop.f32.mrb[0].mxu0
      %v10329 = vadd.f32 %v10108, %v10328
      %v10330 = vpop.f32.mrb[0].mxu0
      %10331 = vmatprep.mubr.bf16.mxu0 0
      %10332 = vmatmul.mubr.bf16.gmra.mrb[0].mxu0 %v10239
      %v10333 = vpop.f32.mrb[0].mxu0
      %v10334 = vadd.f32 %v10113, %v10333
      %v10335 = vpop.f32.mrb[0].mxu0
      %v10336 = vpop.f32.mrb[0].mxu0
      %v10337 = vadd.f32 %v10116, %v10336
      %v10338 = vpop.f32.mrb[0].mxu0
      %10339 = vmatprep.mubr.bf16.mxu0 0
      %10340 = vmatmul.mubr.bf16.gmra.mrb[0].mxu0 %v10242
      %v10341 = vpop.f32.mrb[0].mxu0
      %v10342 = vadd.f32 %v10121, %v10341
      %v10343 = vpop.f32.mrb[0].mxu0
      %v10344 = vpop.f32.mrb[0].mxu0
      %v10345 = vadd.f32 %v10124, %v10344
      %v10346 = vpop.f32.mrb[0].mxu0
      %10347 = vmatprep.mubr.bf16.mxu0 0
      %10348 = vmatmul.mubr.bf16.gmra.mrb[0].mxu0 %v10245
      %v10349 = vpop.f32.mrb[0].mxu0
      %v10350 = vadd.f32 %v10129, %v10349
      %v10351 = vpop.f32.mrb[0].mxu0
      %v10352 = vpop.f32.mrb[0].mxu0
      %v10353 = vadd.f32 %v10132, %v10352
      %v10354 = vpop.f32.mrb[0].mxu0
      %10355 = vmatprep.mubr.bf16.mxu0 0
      %10356 = vmatmul.mubr.bf16.gmra.mrb[0].mxu0 %v10248
      %v10357 = vpop.f32.mrb[0].mxu0
      %v10358 = vadd.f32 %v10137, %v10357
      %v10359 = vpop.f32.mrb[0].mxu0
      %v10360 = vpop.f32.mrb[0].mxu0
      %v10361 = vadd.f32 %v10140, %v10360
      %v10362 = vpop.f32.mrb[0].mxu0
      %10363 = vmatprep.mubr.bf16.mxu0 0
      %10364 = vmatmul.mubr.bf16.gmra.mrb[0].mxu0 %v10251
      %v10365 = vpop.f32.mrb[0].mxu0
      %v10366 = vadd.f32 %v10145, %v10365
      %v10367 = vpop.f32.mrb[0].mxu0
      %v10368 = vpop.f32.mrb[0].mxu0
      %v10369 = vadd.f32 %v10148, %v10368
      %v10370 = vpop.f32.mrb[0].mxu0
      %10371 = vmatprep.mubr.bf16.mxu0 0
      %10372 = vmatmul.mubr.bf16.gmra.mrb[0].mxu0 %v10254
      %v10373 = vpop.f32.mrb[0].mxu0
      %v10374 = vadd.f32 %v10153, %v10373
      %v10375 = vpop.f32.mrb[0].mxu0
      %v10376 = vpop.f32.mrb[0].mxu0
      %v10377 = vadd.f32 %v10156, %v10376
      %v10378 = vpop.f32.mrb[0].mxu0
      %10379 = vmatprep.mubr.bf16.mxu0 0
      %10380 = vmatmul.mubr.bf16.gmra.mrb[0].mxu0 %v10257
      %v10381 = vpop.f32.mrb[0].mxu0
      %v10382 = vadd.f32 %v10161, %v10381
      %v10383 = vpop.f32.mrb[0].mxu0
      %v10384 = vpop.f32.mrb[0].mxu0
      %v10385 = vadd.f32 %v10164, %v10384
      %v10386 = vpop.f32.mrb[0].mxu0
      %10387 = vmatprep.mubr.bf16.mxu0 0
      %10388 = vmatmul.mubr.bf16.gmra.mrb[0].mxu0 %v10260
      %v10389 = vpop.f32.mrb[0].mxu0
      %v10390 = vadd.f32 %v10169, %v10389
      %v10391 = vpop.f32.mrb[0].mxu0
      %v10392 = vpop.f32.mrb[0].mxu0
      %v10393 = vadd.f32 %v10172, %v10392
      %v10394 = vpop.f32.mrb[0].mxu0
      %10395 = vmatprep.mubr.bf16.mxu0 0
      %10396 = vmatmul.mubr.bf16.gmra.mrb[0].mxu0 %v10263
      %v10397 = vpop.f32.mrb[0].mxu0
      %v10398 = vadd.f32 %v10177, %v10397
      %v10399 = vpop.f32.mrb[0].mxu0
      %v10400 = vpop.f32.mrb[0].mxu0
      %v10401 = vadd.f32 %v10180, %v10400
      %v10402 = vpop.f32.mrb[0].mxu0
      %10403 = vmatprep.mubr.bf16.mxu0 0
      %10404 = vmatmul.mubr.bf16.gmra.mrb[0].mxu0 %v10266
      %v10405 = vpop.f32.mrb[0].mxu0
      %v10406 = vadd.f32 %v10185, %v10405
      %v10407 = vpop.f32.mrb[0].mxu0
      %v10408 = vpop.f32.mrb[0].mxu0
      %v10409 = vadd.f32 %v10188, %v10408
      %v10410 = vpop.f32.mrb[0].mxu0
      %10411 = vmatprep.mubr.bf16.mxu0 0
      %10412 = vmatmul.mubr.bf16.gmra.mrb[0].mxu0 %v10269
      %v10413 = vpop.f32.mrb[0].mxu0
      %v10414 = vadd.f32 %v10193, %v10413
      %v10415 = vpop.f32.mrb[0].mxu0
      %v10416 = vpop.f32.mrb[0].mxu0
      %v10417 = vadd.f32 %v10196, %v10416
      %v10418 = vpop.f32.mrb[0].mxu0
      %10419 = vmatprep.mubr.bf16.mxu0 0
      %10420 = vmatmul.mubr.bf16.gmra.mrb[0].mxu0 %v10272
      %v10421 = vpop.f32.mrb[0].mxu0
      %v10422 = vadd.f32 %v10201, %v10421
      %v10423 = vpop.f32.mrb[0].mxu0
      %v10424 = vpop.f32.mrb[0].mxu0
      %v10425 = vadd.f32 %v10204, %v10424
      %v10426 = vpop.f32.mrb[0].mxu0
      %10427 = vmatprep.mubr.bf16.mxu0 0
      %10428 = vmatmul.mubr.bf16.gmra.mrb[0].mxu0 %v10275
      %v10429 = vpop.f32.mrb[0].mxu0
      %v10430 = vadd.f32 %v10209, %v10429
      %v10431 = vpop.f32.mrb[0].mxu0
      %v10432 = vpop.f32.mrb[0].mxu0
      %v10433 = vadd.f32 %v10212, %v10432
      %v10434 = vpop.f32.mrb[0].mxu0
      %10435 = vmatprep.mubr.bf16.mxu0 0
      %10436 = vmatmul.mubr.bf16.gmra.mrb[0].mxu0 %v10278
      %v10437 = vpop.f32.mrb[0].mxu0
      %v10438 = vadd.f32 %v10217, %v10437
      %v10439 = vpop.f32.mrb[0].mxu0
      %v10440 = vpop.f32.mrb[0].mxu0
      %v10441 = vadd.f32 %v10220, %v10440
      %v10442 = vpop.f32.mrb[0].mxu0
      %10443 = vdwg.mxu0
      %s10444 = scalar_lea.vmem [#allocation3], 24
      %v10445 = vld [vmem:[%s10444] sm:$0xf]
      %v10446 = vld [vmem:[%s10444 + $0x4] sm:$0xf]
      %v10447 = vld [vmem:[%s10444 + $0xc] sm:$0xf]
      %v10448 = vld [vmem:[%s10444 + $0x10] sm:$0xf]
      %v10449 = vld [vmem:[%s10444 + $0x18] sm:$0xf]
      %v10450 = vld [vmem:[%s10444 + $0x1c] sm:$0xf]
      %v10451 = vld [vmem:[%s10444 + $0x24] sm:$0xf]
      %v10452 = vld [vmem:[%s10444 + $0x28] sm:$0xf]
      %v10453 = vld [vmem:[%s10444 + $0x30] sm:$0xf]
      %v10454 = vld [vmem:[%s10444 + $0x34] sm:$0xf]
      %v10455 = vld [vmem:[%s10444 + $0x3c] sm:$0xf]
      %v10456 = vld [vmem:[%s10444 + $0x40] sm:$0xf]
      %v10457 = vld [vmem:[%s10444 + $0x48] sm:$0xf]
      %v10458 = vld [vmem:[%s10444 + $0x4c] sm:$0xf]
      %v10459 = vld [vmem:[%s10444 + $0x54] sm:$0xf]
      %v10460 = vld [vmem:[%s10444 + $0x58] sm:$0xf]
      %v10461 = vld [vmem:[%s10444 + $0x60] sm:$0xf]
      %v10462 = vld [vmem:[%s10444 + $0x64] sm:$0xf]
      %v10463 = vld [vmem:[%s10444 + $0x6c] sm:$0xf]
      %v10464 = vld [vmem:[%s10444 + $0x70] sm:$0xf]
      %v10465 = vld [vmem:[%s10444 + $0x78] sm:$0xf]
      %v10466 = vld [vmem:[%s10444 + $0x7c] sm:$0xf]
      %v10467 = vld [vmem:[%s10444 + $0x84] sm:$0xf]
      %v10468 = vld [vmem:[%s10444 + $0x88] sm:$0xf]
      %v10469 = vld [vmem:[%s10444 + $0x90] sm:$0xf]
      %v10470 = vld [vmem:[%s10444 + $0x94] sm:$0xf]
      %v10471 = vld [vmem:[%s10444 + $0x9c] sm:$0xf]
      %v10472 = vld [vmem:[%s10444 + $0xa0] sm:$0xf]
      %v10473 = vld [vmem:[%s10444 + $0xa8] sm:$0xf]
      %v10474 = vld [vmem:[%s10444 + $0xac] sm:$0xf]
      %v10475 = vld [vmem:[%s10444 + $0xb4] sm:$0xf]
      %v10476 = vld [vmem:[%s10444 + $0xb8] sm:$0xf]
      %v10509 = vunpack.c.l.b16 %v10445
      %v10510 = vunpack.c.l.b16 %v10446
      %v10511 = vunpack.c.l.b16 %v10447
      %v10512 = vunpack.c.l.b16 %v10448
      %v10513 = vunpack.c.l.b16 %v10449
      %v10514 = vunpack.c.l.b16 %v10450
      %v10515 = vunpack.c.l.b16 %v10451
      %v10516 = vunpack.c.l.b16 %v10452
      %v10517 = vunpack.c.l.b16 %v10453
      %v10518 = vunpack.c.l.b16 %v10454
      %v10519 = vunpack.c.l.b16 %v10455
      %v10520 = vunpack.c.l.b16 %v10456
      %v10521 = vunpack.c.l.b16 %v10457
      %v10522 = vunpack.c.l.b16 %v10458
      %v10523 = vunpack.c.l.b16 %v10459
      %v10524 = vunpack.c.l.b16 %v10460
      %v10525 = vunpack.c.l.b16 %v10461
      %v10526 = vunpack.c.l.b16 %v10462
      %v10527 = vunpack.c.l.b16 %v10463
      %v10528 = vunpack.c.l.b16 %v10464
      %v10529 = vunpack.c.l.b16 %v10465
      %v10530 = vunpack.c.l.b16 %v10466
      %v10531 = vunpack.c.l.b16 %v10467
      %v10532 = vunpack.c.l.b16 %v10468
      %v10533 = vunpack.c.l.b16 %v10469
      %v10534 = vunpack.c.l.b16 %v10470
      %v10535 = vunpack.c.l.b16 %v10471
      %v10536 = vunpack.c.l.b16 %v10472
      %v10537 = vunpack.c.l.b16 %v10473
      %v10538 = vunpack.c.l.b16 %v10474
      %v10539 = vunpack.c.l.b16 %v10475
      %v10540 = vunpack.c.l.b16 %v10476
      %v10541 = vpack.c.b16 %v10510, %v10509
      %v10542 = vpack.c.b16 %v10512, %v10511
      %v10543 = vpack.c.b16 %v10514, %v10513
      %v10544 = vpack.c.b16 %v10516, %v10515
      %v10545 = vpack.c.b16 %v10518, %v10517
      %v10546 = vpack.c.b16 %v10520, %v10519
      %v10547 = vpack.c.b16 %v10522, %v10521
      %v10548 = vpack.c.b16 %v10524, %v10523
      %v10549 = vpack.c.b16 %v10526, %v10525
      %v10550 = vpack.c.b16 %v10528, %v10527
      %v10551 = vpack.c.b16 %v10530, %v10529
      %v10552 = vpack.c.b16 %v10532, %v10531
      %v10553 = vpack.c.b16 %v10534, %v10533
      %v10554 = vpack.c.b16 %v10536, %v10535
      %v10555 = vpack.c.b16 %v10538, %v10537
      %v10556 = vpack.c.b16 %v10540, %v10539
      %10573 = vst.msk [vmem:[#allocation4] sm:$0xff] %vm1168, %v10541
      %10574 = vst.msk [vmem:[#allocation4 + $0x8] sm:$0xff] %vm1168, %v10542
      %10575 = vst.msk [vmem:[#allocation4 + $0x10] sm:$0xff] %vm1168, %v10543
      %10576 = vst.msk [vmem:[#allocation4 + $0x18] sm:$0xff] %vm1168, %v10544
      %10577 = vst.msk [vmem:[#allocation4 + $0x20] sm:$0xff] %vm1168, %v10545
      %10578 = vst.msk [vmem:[#allocation4 + $0x28] sm:$0xff] %vm1168, %v10546
      %10579 = vst.msk [vmem:[#allocation4 + $0x30] sm:$0xff] %vm1168, %v10547
      %10580 = vst.msk [vmem:[#allocation4 + $0x38] sm:$0xff] %vm1168, %v10548
      %10581 = vst.msk [vmem:[#allocation4 + $0x40] sm:$0xff] %vm1168, %v10549
      %10582 = vst.msk [vmem:[#allocation4 + $0x48] sm:$0xff] %vm1168, %v10550
      %10583 = vst.msk [vmem:[#allocation4 + $0x50] sm:$0xff] %vm1168, %v10551
      %10584 = vst.msk [vmem:[#allocation4 + $0x58] sm:$0xff] %vm1168, %v10552
      %10585 = vst.msk [vmem:[#allocation4 + $0x60] sm:$0xff] %vm1168, %v10553
      %10586 = vst.msk [vmem:[#allocation4 + $0x68] sm:$0xff] %vm1168, %v10554
      %10587 = vst.msk [vmem:[#allocation4 + $0x70] sm:$0xff] %vm1168, %v10555
      %10588 = vst.msk [vmem:[#allocation4 + $0x78] sm:$0xff] %vm1168, %v10556
      %v10589 = vld [vmem:[%s10444] sm:$0xf]
      %v10590 = vld [vmem:[%s10444 + $0x4] sm:$0xf]
      %v10591 = vld [vmem:[%s10444 + $0x8] sm:$0x1]
      %v10592 = vld [vmem:[%s10444 + $0xc] sm:$0xf]
      %v10593 = vld [vmem:[%s10444 + $0x10] sm:$0xf]
      %v10594 = vld [vmem:[%s10444 + $0x14] sm:$0x1]
      %v10595 = vld [vmem:[%s10444 + $0x18] sm:$0xf]
      %v10596 = vld [vmem:[%s10444 + $0x1c] sm:$0xf]
      %v10597 = vld [vmem:[%s10444 + $0x20] sm:$0x1]
      %v10598 = vld [vmem:[%s10444 + $0x24] sm:$0xf]
      %v10599 = vld [vmem:[%s10444 + $0x28] sm:$0xf]
      %v10600 = vld [vmem:[%s10444 + $0x2c] sm:$0x1]
      %v10601 = vld [vmem:[%s10444 + $0x30] sm:$0xf]
      %v10602 = vld [vmem:[%s10444 + $0x34] sm:$0xf]
      %v10603 = vld [vmem:[%s10444 + $0x38] sm:$0x1]
      %v10604 = vld [vmem:[%s10444 + $0x3c] sm:$0xf]
      %v10605 = vld [vmem:[%s10444 + $0x40] sm:$0xf]
      %v10606 = vld [vmem:[%s10444 + $0x44] sm:$0x1]
      %v10607 = vld [vmem:[%s10444 + $0x48] sm:$0xf]
      %v10608 = vld [vmem:[%s10444 + $0x4c] sm:$0xf]
      %v10609 = vld [vmem:[%s10444 + $0x50] sm:$0x1]
      %v10610 = vld [vmem:[%s10444 + $0x54] sm:$0xf]
      %v10611 = vld [vmem:[%s10444 + $0x58] sm:$0xf]
      %v10612 = vld [vmem:[%s10444 + $0x5c] sm:$0x1]
      %v10613 = vld [vmem:[%s10444 + $0x60] sm:$0xf]
      %v10614 = vld [vmem:[%s10444 + $0x64] sm:$0xf]
      %v10615 = vld [vmem:[%s10444 + $0x68] sm:$0x1]
      %v10616 = vld [vmem:[%s10444 + $0x6c] sm:$0xf]
      %v10617 = vld [vmem:[%s10444 + $0x70] sm:$0xf]
      %v10618 = vld [vmem:[%s10444 + $0x74] sm:$0x1]
      %v10619 = vld [vmem:[%s10444 + $0x78] sm:$0xf]
      %v10620 = vld [vmem:[%s10444 + $0x7c] sm:$0xf]
      %v10621 = vld [vmem:[%s10444 + $0x80] sm:$0x1]
      %v10622 = vld [vmem:[%s10444 + $0x84] sm:$0xf]
      %v10623 = vld [vmem:[%s10444 + $0x88] sm:$0xf]
      %v10624 = vld [vmem:[%s10444 + $0x8c] sm:$0x1]
      %v10625 = vld [vmem:[%s10444 + $0x90] sm:$0xf]
      %v10626 = vld [vmem:[%s10444 + $0x94] sm:$0xf]
      %v10627 = vld [vmem:[%s10444 + $0x98] sm:$0x1]
      %v10628 = vld [vmem:[%s10444 + $0x9c] sm:$0xf]
      %v10629 = vld [vmem:[%s10444 + $0xa0] sm:$0xf]
      %v10630 = vld [vmem:[%s10444 + $0xa4] sm:$0x1]
      %v10631 = vld [vmem:[%s10444 + $0xa8] sm:$0xf]
      %v10632 = vld [vmem:[%s10444 + $0xac] sm:$0xf]
      %v10633 = vld [vmem:[%s10444 + $0xb0] sm:$0x1]
      %v10634 = vld [vmem:[%s10444 + $0xb4] sm:$0xf]
      %v10635 = vld [vmem:[%s10444 + $0xb8] sm:$0xf]
      %v10636 = vld [vmem:[%s10444 + $0xbc] sm:$0x1]
      %v10638 = vshrl.u32 %v10589, 16
      %v10640 = vrot.slane %v10638, 4
      %v10641 = vshll.u32 %v10589, 16
      %v10643 = vrot.slane %v10641, 5
      %v10644 = vor.u32 %v10640, %v10643
      %v10645 = vrot.slane %v10644, 4
      %v10647 = vshll.u32 %v10590, 16
      %v10649 = vrot.slane %v10647, 5
      %v10650 = vsel %vm3751, %v10645, %v10649
      %v10651 = vshrl.u32 %v10590, 16
      %v10653 = vrot.slane %v10651, 4
      %v10654 = vor.u32 %v10653, %v10649
      %v10655 = vrot.slane %v10654, 4
      %v10657 = vshll.u32 %v10591, 16
      %v10659 = vrot.slane %v10657, 5
      %v10660 = vsel %vm3751, %v10655, %v10659
      %v10662 = vshrl.u32 %v10592, 16
      %v10664 = vrot.slane %v10662, 4
      %v10665 = vshll.u32 %v10592, 16
      %v10667 = vrot.slane %v10665, 5
      %v10668 = vor.u32 %v10664, %v10667
      %v10669 = vrot.slane %v10668, 4
      %v10671 = vshll.u32 %v10593, 16
      %v10673 = vrot.slane %v10671, 5
      %v10674 = vsel %vm3751, %v10669, %v10673
      %v10675 = vshrl.u32 %v10593, 16
      %v10677 = vrot.slane %v10675, 4
      %v10678 = vor.u32 %v10677, %v10673
      %v10679 = vrot.slane %v10678, 4
      %v10681 = vshll.u32 %v10594, 16
      %v10683 = vrot.slane %v10681, 5
      %v10684 = vsel %vm3751, %v10679, %v10683
      %v10686 = vshrl.u32 %v10595, 16
      %v10688 = vrot.slane %v10686, 4
      %v10689 = vshll.u32 %v10595, 16
      %v10691 = vrot.slane %v10689, 5
      %v10692 = vor.u32 %v10688, %v10691
      %v10693 = vrot.slane %v10692, 4
      %v10695 = vshll.u32 %v10596, 16
      %v10697 = vrot.slane %v10695, 5
      %v10698 = vsel %vm3751, %v10693, %v10697
      %v10699 = vshrl.u32 %v10596, 16
      %v10701 = vrot.slane %v10699, 4
      %v10702 = vor.u32 %v10701, %v10697
      %v10703 = vrot.slane %v10702, 4
      %v10705 = vshll.u32 %v10597, 16
      %v10707 = vrot.slane %v10705, 5
      %v10708 = vsel %vm3751, %v10703, %v10707
      %v10710 = vshrl.u32 %v10598, 16
      %v10712 = vrot.slane %v10710, 4
      %v10713 = vshll.u32 %v10598, 16
      %v10715 = vrot.slane %v10713, 5
      %v10716 = vor.u32 %v10712, %v10715
      %v10717 = vrot.slane %v10716, 4
      %v10719 = vshll.u32 %v10599, 16
      %v10721 = vrot.slane %v10719, 5
      %v10722 = vsel %vm3751, %v10717, %v10721
      %v10723 = vshrl.u32 %v10599, 16
      %v10725 = vrot.slane %v10723, 4
      %v10726 = vor.u32 %v10725, %v10721
      %v10727 = vrot.slane %v10726, 4
      %v10729 = vshll.u32 %v10600, 16
      %v10731 = vrot.slane %v10729, 5
      %v10732 = vsel %vm3751, %v10727, %v10731
      %v10734 = vshrl.u32 %v10601, 16
      %v10736 = vrot.slane %v10734, 4
      %v10737 = vshll.u32 %v10601, 16
      %v10739 = vrot.slane %v10737, 5
      %v10740 = vor.u32 %v10736, %v10739
      %v10741 = vrot.slane %v10740, 4
      %v10743 = vshll.u32 %v10602, 16
      %v10745 = vrot.slane %v10743, 5
      %v10746 = vsel %vm3751, %v10741, %v10745
      %v10747 = vshrl.u32 %v10602, 16
      %v10749 = vrot.slane %v10747, 4
      %v10750 = vor.u32 %v10749, %v10745
      %v10751 = vrot.slane %v10750, 4
      %v10753 = vshll.u32 %v10603, 16
      %v10755 = vrot.slane %v10753, 5
      %v10756 = vsel %vm3751, %v10751, %v10755
      %v10758 = vshrl.u32 %v10604, 16
      %v10760 = vrot.slane %v10758, 4
      %v10761 = vshll.u32 %v10604, 16
      %v10763 = vrot.slane %v10761, 5
      %v10764 = vor.u32 %v10760, %v10763
      %v10765 = vrot.slane %v10764, 4
      %v10767 = vshll.u32 %v10605, 16
      %v10769 = vrot.slane %v10767, 5
      %v10770 = vsel %vm3751, %v10765, %v10769
      %v10771 = vshrl.u32 %v10605, 16
      %v10773 = vrot.slane %v10771, 4
      %v10774 = vor.u32 %v10773, %v10769
      %v10775 = vrot.slane %v10774, 4
      %v10777 = vshll.u32 %v10606, 16
      %v10779 = vrot.slane %v10777, 5
      %v10780 = vsel %vm3751, %v10775, %v10779
      %v10782 = vshrl.u32 %v10607, 16
      %v10784 = vrot.slane %v10782, 4
      %v10785 = vshll.u32 %v10607, 16
      %v10787 = vrot.slane %v10785, 5
      %v10788 = vor.u32 %v10784, %v10787
      %v10789 = vrot.slane %v10788, 4
      %v10791 = vshll.u32 %v10608, 16
      %v10793 = vrot.slane %v10791, 5
      %v10794 = vsel %vm3751, %v10789, %v10793
      %v10795 = vshrl.u32 %v10608, 16
      %v10797 = vrot.slane %v10795, 4
      %v10798 = vor.u32 %v10797, %v10793
      %v10799 = vrot.slane %v10798, 4
      %v10801 = vshll.u32 %v10609, 16
      %v10803 = vrot.slane %v10801, 5
      %v10804 = vsel %vm3751, %v10799, %v10803
      %v10806 = vshrl.u32 %v10610, 16
      %v10808 = vrot.slane %v10806, 4
      %v10809 = vshll.u32 %v10610, 16
      %v10811 = vrot.slane %v10809, 5
      %v10812 = vor.u32 %v10808, %v10811
      %v10813 = vrot.slane %v10812, 4
      %v10815 = vshll.u32 %v10611, 16
      %v10817 = vrot.slane %v10815, 5
      %v10818 = vsel %vm3751, %v10813, %v10817
      %v10819 = vshrl.u32 %v10611, 16
      %v10821 = vrot.slane %v10819, 4
      %v10822 = vor.u32 %v10821, %v10817
      %v10823 = vrot.slane %v10822, 4
      %v10825 = vshll.u32 %v10612, 16
      %v10827 = vrot.slane %v10825, 5
      %v10828 = vsel %vm3751, %v10823, %v10827
      %v10830 = vshrl.u32 %v10613, 16
      %v10832 = vrot.slane %v10830, 4
      %v10833 = vshll.u32 %v10613, 16
      %v10835 = vrot.slane %v10833, 5
      %v10836 = vor.u32 %v10832, %v10835
      %v10837 = vrot.slane %v10836, 4
      %v10839 = vshll.u32 %v10614, 16
      %v10841 = vrot.slane %v10839, 5
      %v10842 = vsel %vm3751, %v10837, %v10841
      %v10843 = vshrl.u32 %v10614, 16
      %v10845 = vrot.slane %v10843, 4
      %v10846 = vor.u32 %v10845, %v10841
      %v10847 = vrot.slane %v10846, 4
      %v10849 = vshll.u32 %v10615, 16
      %v10851 = vrot.slane %v10849, 5
      %v10852 = vsel %vm3751, %v10847, %v10851
      %v10854 = vshrl.u32 %v10616, 16
      %v10856 = vrot.slane %v10854, 4
      %v10857 = vshll.u32 %v10616, 16
      %v10859 = vrot.slane %v10857, 5
      %v10860 = vor.u32 %v10856, %v10859
      %v10861 = vrot.slane %v10860, 4
      %v10863 = vshll.u32 %v10617, 16
      %v10865 = vrot.slane %v10863, 5
      %v10866 = vsel %vm3751, %v10861, %v10865
      %v10867 = vshrl.u32 %v10617, 16
      %v10869 = vrot.slane %v10867, 4
      %v10870 = vor.u32 %v10869, %v10865
      %v10871 = vrot.slane %v10870, 4
      %v10873 = vshll.u32 %v10618, 16
      %v10875 = vrot.slane %v10873, 5
      %v10876 = vsel %vm3751, %v10871, %v10875
      %v10878 = vshrl.u32 %v10619, 16
      %v10880 = vrot.slane %v10878, 4
      %v10881 = vshll.u32 %v10619, 16
      %v10883 = vrot.slane %v10881, 5
      %v10884 = vor.u32 %v10880, %v10883
      %v10885 = vrot.slane %v10884, 4
      %v10887 = vshll.u32 %v10620, 16
      %v10889 = vrot.slane %v10887, 5
      %v10890 = vsel %vm3751, %v10885, %v10889
      %v10891 = vshrl.u32 %v10620, 16
      %v10893 = vrot.slane %v10891, 4
      %v10894 = vor.u32 %v10893, %v10889
      %v10895 = vrot.slane %v10894, 4
      %v10897 = vshll.u32 %v10621, 16
      %v10899 = vrot.slane %v10897, 5
      %v10900 = vsel %vm3751, %v10895, %v10899
      %v10902 = vshrl.u32 %v10622, 16
      %v10904 = vrot.slane %v10902, 4
      %v10905 = vshll.u32 %v10622, 16
      %v10907 = vrot.slane %v10905, 5
      %v10908 = vor.u32 %v10904, %v10907
      %v10909 = vrot.slane %v10908, 4
      %v10911 = vshll.u32 %v10623, 16
      %v10913 = vrot.slane %v10911, 5
      %v10914 = vsel %vm3751, %v10909, %v10913
      %v10915 = vshrl.u32 %v10623, 16
      %v10917 = vrot.slane %v10915, 4
      %v10918 = vor.u32 %v10917, %v10913
      %v10919 = vrot.slane %v10918, 4
      %v10921 = vshll.u32 %v10624, 16
      %v10923 = vrot.slane %v10921, 5
      %v10924 = vsel %vm3751, %v10919, %v10923
      %v10926 = vshrl.u32 %v10625, 16
      %v10928 = vrot.slane %v10926, 4
      %v10929 = vshll.u32 %v10625, 16
      %v10931 = vrot.slane %v10929, 5
      %v10932 = vor.u32 %v10928, %v10931
      %v10933 = vrot.slane %v10932, 4
      %v10935 = vshll.u32 %v10626, 16
      %v10937 = vrot.slane %v10935, 5
      %v10938 = vsel %vm3751, %v10933, %v10937
      %v10939 = vshrl.u32 %v10626, 16
      %v10941 = vrot.slane %v10939, 4
      %v10942 = vor.u32 %v10941, %v10937
      %v10943 = vrot.slane %v10942, 4
      %v10945 = vshll.u32 %v10627, 16
      %v10947 = vrot.slane %v10945, 5
      %v10948 = vsel %vm3751, %v10943, %v10947
      %v10950 = vshrl.u32 %v10628, 16
      %v10952 = vrot.slane %v10950, 4
      %v10953 = vshll.u32 %v10628, 16
      %v10955 = vrot.slane %v10953, 5
      %v10956 = vor.u32 %v10952, %v10955
      %v10957 = vrot.slane %v10956, 4
      %v10959 = vshll.u32 %v10629, 16
      %v10961 = vrot.slane %v10959, 5
      %v10962 = vsel %vm3751, %v10957, %v10961
      %v10963 = vshrl.u32 %v10629, 16
      %v10965 = vrot.slane %v10963, 4
      %v10966 = vor.u32 %v10965, %v10961
      %v10967 = vrot.slane %v10966, 4
      %v10969 = vshll.u32 %v10630, 16
      %v10971 = vrot.slane %v10969, 5
      %v10972 = vsel %vm3751, %v10967, %v10971
      %v10974 = vshrl.u32 %v10631, 16
      %v10976 = vrot.slane %v10974, 4
      %v10977 = vshll.u32 %v10631, 16
      %v10979 = vrot.slane %v10977, 5
      %v10980 = vor.u32 %v10976, %v10979
      %v10981 = vrot.slane %v10980, 4
      %v10983 = vshll.u32 %v10632, 16
      %v10985 = vrot.slane %v10983, 5
      %v10986 = vsel %vm3751, %v10981, %v10985
      %v10987 = vshrl.u32 %v10632, 16
      %v10989 = vrot.slane %v10987, 4
      %v10990 = vor.u32 %v10989, %v10985
      %v10991 = vrot.slane %v10990, 4
      %v10993 = vshll.u32 %v10633, 16
      %v10995 = vrot.slane %v10993, 5
      %v10996 = vsel %vm3751, %v10991, %v10995
      %v10998 = vshrl.u32 %v10634, 16
      %v11000 = vrot.slane %v10998, 4
      %v11001 = vshll.u32 %v10634, 16
      %v11003 = vrot.slane %v11001, 5
      %v11004 = vor.u32 %v11000, %v11003
      %v11005 = vrot.slane %v11004, 4
      %v11007 = vshll.u32 %v10635, 16
      %v11009 = vrot.slane %v11007, 5
      %v11010 = vsel %vm3751, %v11005, %v11009
      %v11011 = vshrl.u32 %v10635, 16
      %v11013 = vrot.slane %v11011, 4
      %v11014 = vor.u32 %v11013, %v11009
      %v11015 = vrot.slane %v11014, 4
      %v11017 = vshll.u32 %v10636, 16
      %v11019 = vrot.slane %v11017, 5
      %v11020 = vsel %vm3751, %v11015, %v11019
      %v11021 = vunpack.c.l.b16 %v10650
      %v11022 = vunpack.c.l.b16 %v10660
      %v11023 = vunpack.c.l.b16 %v10674
      %v11024 = vunpack.c.l.b16 %v10684
      %v11025 = vunpack.c.l.b16 %v10698
      %v11026 = vunpack.c.l.b16 %v10708
      %v11027 = vunpack.c.l.b16 %v10722
      %v11028 = vunpack.c.l.b16 %v10732
      %v11029 = vunpack.c.l.b16 %v10746
      %v11030 = vunpack.c.l.b16 %v10756
      %v11031 = vunpack.c.l.b16 %v10770
      %v11032 = vunpack.c.l.b16 %v10780
      %v11033 = vunpack.c.l.b16 %v10794
      %v11034 = vunpack.c.l.b16 %v10804
      %v11035 = vunpack.c.l.b16 %v10818
      %v11036 = vunpack.c.l.b16 %v10828
      %v11037 = vunpack.c.l.b16 %v10842
      %v11038 = vunpack.c.l.b16 %v10852
      %v11039 = vunpack.c.l.b16 %v10866
      %v11040 = vunpack.c.l.b16 %v10876
      %v11041 = vunpack.c.l.b16 %v10890
      %v11042 = vunpack.c.l.b16 %v10900
      %v11043 = vunpack.c.l.b16 %v10914
      %v11044 = vunpack.c.l.b16 %v10924
      %v11045 = vunpack.c.l.b16 %v10938
      %v11046 = vunpack.c.l.b16 %v10948
      %v11047 = vunpack.c.l.b16 %v10962
      %v11048 = vunpack.c.l.b16 %v10972
      %v11049 = vunpack.c.l.b16 %v10986
      %v11050 = vunpack.c.l.b16 %v10996
      %v11051 = vunpack.c.l.b16 %v11010
      %v11052 = vunpack.c.l.b16 %v11020
      %v11053 = vpack.c.b16 %v11022, %v11021
      %v11054 = vpack.c.b16 %v11024, %v11023
      %v11055 = vpack.c.b16 %v11026, %v11025
      %v11056 = vpack.c.b16 %v11028, %v11027
      %v11057 = vpack.c.b16 %v11030, %v11029
      %v11058 = vpack.c.b16 %v11032, %v11031
      %v11059 = vpack.c.b16 %v11034, %v11033
      %v11060 = vpack.c.b16 %v11036, %v11035
      %v11061 = vpack.c.b16 %v11038, %v11037
      %v11062 = vpack.c.b16 %v11040, %v11039
      %v11063 = vpack.c.b16 %v11042, %v11041
      %v11064 = vpack.c.b16 %v11044, %v11043
      %v11065 = vpack.c.b16 %v11046, %v11045
      %v11066 = vpack.c.b16 %v11048, %v11047
      %v11067 = vpack.c.b16 %v11050, %v11049
      %v11068 = vpack.c.b16 %v11052, %v11051
      %11069 = vrot.lane.b32.xlu0 %v11053, 8
      %v11070 = vpop.permute.xlu0 %11069
      %11071 = vrot.lane.b32.xlu0 %v11054, 8
      %v11072 = vpop.permute.xlu0 %11071
      %11073 = vrot.lane.b32.xlu0 %v11055, 8
      %v11074 = vpop.permute.xlu0 %11073
      %11075 = vrot.lane.b32.xlu0 %v11056, 8
      %v11076 = vpop.permute.xlu0 %11075
      %11077 = vrot.lane.b32.xlu0 %v11057, 8
      %v11078 = vpop.permute.xlu0 %11077
      %11079 = vrot.lane.b32.xlu0 %v11058, 8
      %v11080 = vpop.permute.xlu0 %11079
      %11081 = vrot.lane.b32.xlu0 %v11059, 8
      %v11082 = vpop.permute.xlu0 %11081
      %11083 = vrot.lane.b32.xlu0 %v11060, 8
      %v11084 = vpop.permute.xlu0 %11083
      %11085 = vrot.lane.b32.xlu0 %v11061, 8
      %v11086 = vpop.permute.xlu0 %11085
      %11087 = vrot.lane.b32.xlu0 %v11062, 8
      %v11088 = vpop.permute.xlu0 %11087
      %11089 = vrot.lane.b32.xlu0 %v11063, 8
      %v11090 = vpop.permute.xlu0 %11089
      %11091 = vrot.lane.b32.xlu0 %v11064, 8
      %v11092 = vpop.permute.xlu0 %11091
      %11093 = vrot.lane.b32.xlu0 %v11065, 8
      %v11094 = vpop.permute.xlu0 %11093
      %11095 = vrot.lane.b32.xlu0 %v11066, 8
      %v11096 = vpop.permute.xlu0 %11095
      %11097 = vrot.lane.b32.xlu0 %v11067, 8
      %v11098 = vpop.permute.xlu0 %11097
      %11099 = vrot.lane.b32.xlu0 %v11068, 8
      %v11100 = vpop.permute.xlu0 %11099
      %11117 = vst.msk [vmem:[#allocation4] sm:$0xff] %vm4232, %v11070
      %11118 = vst.msk [vmem:[#allocation4 + $0x8] sm:$0xff] %vm4232, %v11072
      %11119 = vst.msk [vmem:[#allocation4 + $0x10] sm:$0xff] %vm4232, %v11074
      %11120 = vst.msk [vmem:[#allocation4 + $0x18] sm:$0xff] %vm4232, %v11076
      %11121 = vst.msk [vmem:[#allocation4 + $0x20] sm:$0xff] %vm4232, %v11078
      %11122 = vst.msk [vmem:[#allocation4 + $0x28] sm:$0xff] %vm4232, %v11080
      %11123 = vst.msk [vmem:[#allocation4 + $0x30] sm:$0xff] %vm4232, %v11082
      %11124 = vst.msk [vmem:[#allocation4 + $0x38] sm:$0xff] %vm4232, %v11084
      %11125 = vst.msk [vmem:[#allocation4 + $0x40] sm:$0xff] %vm4232, %v11086
      %11126 = vst.msk [vmem:[#allocation4 + $0x48] sm:$0xff] %vm4232, %v11088
      %11127 = vst.msk [vmem:[#allocation4 + $0x50] sm:$0xff] %vm4232, %v11090
      %11128 = vst.msk [vmem:[#allocation4 + $0x58] sm:$0xff] %vm4232, %v11092
      %11129 = vst.msk [vmem:[#allocation4 + $0x60] sm:$0xff] %vm4232, %v11094
      %11130 = vst.msk [vmem:[#allocation4 + $0x68] sm:$0xff] %vm4232, %v11096
      %11131 = vst.msk [vmem:[#allocation4 + $0x70] sm:$0xff] %vm4232, %v11098
      %11132 = vst.msk [vmem:[#allocation4 + $0x78] sm:$0xff] %vm4232, %v11100
      %v11133 = vld [vmem:[%s10444] sm:$0xe]
      %v11134 = vld [vmem:[%s10444 + $0x4] sm:$0xf]
      %v11135 = vld [vmem:[%s10444 + $0x8] sm:$0x1]
      %v11136 = vld [vmem:[%s10444 + $0xc] sm:$0xe]
      %v11137 = vld [vmem:[%s10444 + $0x10] sm:$0xf]
      %v11138 = vld [vmem:[%s10444 + $0x14] sm:$0x1]
      %v11139 = vld [vmem:[%s10444 + $0x18] sm:$0xe]
      %v11140 = vld [vmem:[%s10444 + $0x1c] sm:$0xf]
      %v11141 = vld [vmem:[%s10444 + $0x20] sm:$0x1]
      %v11142 = vld [vmem:[%s10444 + $0x24] sm:$0xe]
      %v11143 = vld [vmem:[%s10444 + $0x28] sm:$0xf]
      %v11144 = vld [vmem:[%s10444 + $0x2c] sm:$0x1]
      %v11145 = vld [vmem:[%s10444 + $0x30] sm:$0xe]
      %v11146 = vld [vmem:[%s10444 + $0x34] sm:$0xf]
      %v11147 = vld [vmem:[%s10444 + $0x38] sm:$0x1]
      %v11148 = vld [vmem:[%s10444 + $0x3c] sm:$0xe]
      %v11149 = vld [vmem:[%s10444 + $0x40] sm:$0xf]
      %v11150 = vld [vmem:[%s10444 + $0x44] sm:$0x1]
      %v11151 = vld [vmem:[%s10444 + $0x48] sm:$0xe]
      %v11152 = vld [vmem:[%s10444 + $0x4c] sm:$0xf]
      %v11153 = vld [vmem:[%s10444 + $0x50] sm:$0x1]
      %v11154 = vld [vmem:[%s10444 + $0x54] sm:$0xe]
      %v11155 = vld [vmem:[%s10444 + $0x58] sm:$0xf]
      %v11156 = vld [vmem:[%s10444 + $0x5c] sm:$0x1]
      %v11157 = vld [vmem:[%s10444 + $0x60] sm:$0xe]
      %v11158 = vld [vmem:[%s10444 + $0x64] sm:$0xf]
      %v11159 = vld [vmem:[%s10444 + $0x68] sm:$0x1]
      %v11160 = vld [vmem:[%s10444 + $0x6c] sm:$0xe]
      %v11161 = vld [vmem:[%s10444 + $0x70] sm:$0xf]
      %v11162 = vld [vmem:[%s10444 + $0x74] sm:$0x1]
      %v11163 = vld [vmem:[%s10444 + $0x78] sm:$0xe]
      %v11164 = vld [vmem:[%s10444 + $0x7c] sm:$0xf]
      %v11165 = vld [vmem:[%s10444 + $0x80] sm:$0x1]
      %v11166 = vld [vmem:[%s10444 + $0x84] sm:$0xe]
      %v11167 = vld [vmem:[%s10444 + $0x88] sm:$0xf]
      %v11168 = vld [vmem:[%s10444 + $0x8c] sm:$0x1]
      %v11169 = vld [vmem:[%s10444 + $0x90] sm:$0xe]
      %v11170 = vld [vmem:[%s10444 + $0x94] sm:$0xf]
      %v11171 = vld [vmem:[%s10444 + $0x98] sm:$0x1]
      %v11172 = vld [vmem:[%s10444 + $0x9c] sm:$0xe]
      %v11173 = vld [vmem:[%s10444 + $0xa0] sm:$0xf]
      %v11174 = vld [vmem:[%s10444 + $0xa4] sm:$0x1]
      %v11175 = vld [vmem:[%s10444 + $0xa8] sm:$0xe]
      %v11176 = vld [vmem:[%s10444 + $0xac] sm:$0xf]
      %v11177 = vld [vmem:[%s10444 + $0xb0] sm:$0x1]
      %v11178 = vld [vmem:[%s10444 + $0xb4] sm:$0xe]
      %v11179 = vld [vmem:[%s10444 + $0xb8] sm:$0xf]
      %v11180 = vld [vmem:[%s10444 + $0xbc] sm:$0x1]
      %v11229 = vrot.slane %v11133, 5
      %v11230 = vrot.slane %v11229, 4
      %v11231 = vrot.slane %v11134, 5
      %v11232 = vsel %vm4347, %v11230, %v11231
      %v11233 = vrot.slane %v11231, 4
      %v11234 = vrot.slane %v11135, 5
      %v11235 = vsel %vm4347, %v11233, %v11234
      %v11236 = vrot.slane %v11136, 5
      %v11237 = vrot.slane %v11236, 4
      %v11238 = vrot.slane %v11137, 5
      %v11239 = vsel %vm4347, %v11237, %v11238
      %v11240 = vrot.slane %v11238, 4
      %v11241 = vrot.slane %v11138, 5
      %v11242 = vsel %vm4347, %v11240, %v11241
      %v11243 = vrot.slane %v11139, 5
      %v11244 = vrot.slane %v11243, 4
      %v11245 = vrot.slane %v11140, 5
      %v11246 = vsel %vm4347, %v11244, %v11245
      %v11247 = vrot.slane %v11245, 4
      %v11248 = vrot.slane %v11141, 5
      %v11249 = vsel %vm4347, %v11247, %v11248
      %v11250 = vrot.slane %v11142, 5
      %v11251 = vrot.slane %v11250, 4
      %v11252 = vrot.slane %v11143, 5
      %v11253 = vsel %vm4347, %v11251, %v11252
      %v11254 = vrot.slane %v11252, 4
      %v11255 = vrot.slane %v11144, 5
      %v11256 = vsel %vm4347, %v11254, %v11255
      %v11257 = vrot.slane %v11145, 5
      %v11258 = vrot.slane %v11257, 4
      %v11259 = vrot.slane %v11146, 5
      %v11260 = vsel %vm4347, %v11258, %v11259
      %v11261 = vrot.slane %v11259, 4
      %v11262 = vrot.slane %v11147, 5
      %v11263 = vsel %vm4347, %v11261, %v11262
      %v11264 = vrot.slane %v11148, 5
      %v11265 = vrot.slane %v11264, 4
      %v11266 = vrot.slane %v11149, 5
      %v11267 = vsel %vm4347, %v11265, %v11266
      %v11268 = vrot.slane %v11266, 4
      %v11269 = vrot.slane %v11150, 5
      %v11270 = vsel %vm4347, %v11268, %v11269
      %v11271 = vrot.slane %v11151, 5
      %v11272 = vrot.slane %v11271, 4
      %v11273 = vrot.slane %v11152, 5
      %v11274 = vsel %vm4347, %v11272, %v11273
      %v11275 = vrot.slane %v11273, 4
      %v11276 = vrot.slane %v11153, 5
      %v11277 = vsel %vm4347, %v11275, %v11276
      %v11278 = vrot.slane %v11154, 5
      %v11279 = vrot.slane %v11278, 4
      %v11280 = vrot.slane %v11155, 5
      %v11281 = vsel %vm4347, %v11279, %v11280
      %v11282 = vrot.slane %v11280, 4
      %v11283 = vrot.slane %v11156, 5
      %v11284 = vsel %vm4347, %v11282, %v11283
      %v11285 = vrot.slane %v11157, 5
      %v11286 = vrot.slane %v11285, 4
      %v11287 = vrot.slane %v11158, 5
      %v11288 = vsel %vm4347, %v11286, %v11287
      %v11289 = vrot.slane %v11287, 4
      %v11290 = vrot.slane %v11159, 5
      %v11291 = vsel %vm4347, %v11289, %v11290
      %v11292 = vrot.slane %v11160, 5
      %v11293 = vrot.slane %v11292, 4
      %v11294 = vrot.slane %v11161, 5
      %v11295 = vsel %vm4347, %v11293, %v11294
      %v11296 = vrot.slane %v11294, 4
      %v11297 = vrot.slane %v11162, 5
      %v11298 = vsel %vm4347, %v11296, %v11297
      %v11299 = vrot.slane %v11163, 5
      %v11300 = vrot.slane %v11299, 4
      %v11301 = vrot.slane %v11164, 5
      %v11302 = vsel %vm4347, %v11300, %v11301
      %v11303 = vrot.slane %v11301, 4
      %v11304 = vrot.slane %v11165, 5
      %v11305 = vsel %vm4347, %v11303, %v11304
      %v11306 = vrot.slane %v11166, 5
      %v11307 = vrot.slane %v11306, 4
      %v11308 = vrot.slane %v11167, 5
      %v11309 = vsel %vm4347, %v11307, %v11308
      %v11310 = vrot.slane %v11308, 4
      %v11311 = vrot.slane %v11168, 5
      %v11312 = vsel %vm4347, %v11310, %v11311
      %v11313 = vrot.slane %v11169, 5
      %v11314 = vrot.slane %v11313, 4
      %v11315 = vrot.slane %v11170, 5
      %v11316 = vsel %vm4347, %v11314, %v11315
      %v11317 = vrot.slane %v11315, 4
      %v11318 = vrot.slane %v11171, 5
      %v11319 = vsel %vm4347, %v11317, %v11318
      %v11320 = vrot.slane %v11172, 5
      %v11321 = vrot.slane %v11320, 4
      %v11322 = vrot.slane %v11173, 5
      %v11323 = vsel %vm4347, %v11321, %v11322
      %v11324 = vrot.slane %v11322, 4
      %v11325 = vrot.slane %v11174, 5
      %v11326 = vsel %vm4347, %v11324, %v11325
      %v11327 = vrot.slane %v11175, 5
      %v11328 = vrot.slane %v11327, 4
      %v11329 = vrot.slane %v11176, 5
      %v11330 = vsel %vm4347, %v11328, %v11329
      %v11331 = vrot.slane %v11329, 4
      %v11332 = vrot.slane %v11177, 5
      %v11333 = vsel %vm4347, %v11331, %v11332
      %v11334 = vrot.slane %v11178, 5
      %v11335 = vrot.slane %v11334, 4
      %v11336 = vrot.slane %v11179, 5
      %v11337 = vsel %vm4347, %v11335, %v11336
      %v11338 = vrot.slane %v11336, 4
      %v11339 = vrot.slane %v11180, 5
      %v11340 = vsel %vm4347, %v11338, %v11339
      %v11341 = vunpack.c.l.b16 %v11232
      %v11342 = vunpack.c.l.b16 %v11235
      %v11343 = vunpack.c.l.b16 %v11239
      %v11344 = vunpack.c.l.b16 %v11242
      %v11345 = vunpack.c.l.b16 %v11246
      %v11346 = vunpack.c.l.b16 %v11249
      %v11347 = vunpack.c.l.b16 %v11253
      %v11348 = vunpack.c.l.b16 %v11256
      %v11349 = vunpack.c.l.b16 %v11260
      %v11350 = vunpack.c.l.b16 %v11263
      %v11351 = vunpack.c.l.b16 %v11267
      %v11352 = vunpack.c.l.b16 %v11270
      %v11353 = vunpack.c.l.b16 %v11274
      %v11354 = vunpack.c.l.b16 %v11277
      %v11355 = vunpack.c.l.b16 %v11281
      %v11356 = vunpack.c.l.b16 %v11284
      %v11357 = vunpack.c.l.b16 %v11288
      %v11358 = vunpack.c.l.b16 %v11291
      %v11359 = vunpack.c.l.b16 %v11295
      %v11360 = vunpack.c.l.b16 %v11298
      %v11361 = vunpack.c.l.b16 %v11302
      %v11362 = vunpack.c.l.b16 %v11305
      %v11363 = vunpack.c.l.b16 %v11309
      %v11364 = vunpack.c.l.b16 %v11312
      %v11365 = vunpack.c.l.b16 %v11316
      %v11366 = vunpack.c.l.b16 %v11319
      %v11367 = vunpack.c.l.b16 %v11323
      %v11368 = vunpack.c.l.b16 %v11326
      %v11369 = vunpack.c.l.b16 %v11330
      %v11370 = vunpack.c.l.b16 %v11333
      %v11371 = vunpack.c.l.b16 %v11337
      %v11372 = vunpack.c.l.b16 %v11340
      %v11373 = vpack.c.b16 %v11342, %v11341
      %v11374 = vpack.c.b16 %v11344, %v11343
      %v11375 = vpack.c.b16 %v11346, %v11345
      %v11376 = vpack.c.b16 %v11348, %v11347
      %v11377 = vpack.c.b16 %v11350, %v11349
      %v11378 = vpack.c.b16 %v11352, %v11351
      %v11379 = vpack.c.b16 %v11354, %v11353
      %v11380 = vpack.c.b16 %v11356, %v11355
      %v11381 = vpack.c.b16 %v11358, %v11357
      %v11382 = vpack.c.b16 %v11360, %v11359
      %v11383 = vpack.c.b16 %v11362, %v11361
      %v11384 = vpack.c.b16 %v11364, %v11363
      %v11385 = vpack.c.b16 %v11366, %v11365
      %v11386 = vpack.c.b16 %v11368, %v11367
      %v11387 = vpack.c.b16 %v11370, %v11369
      %v11388 = vpack.c.b16 %v11372, %v11371
      %11389 = vrot.lane.b32.xlu0 %v11373, 16
      %v11390 = vpop.permute.xlu0 %11389
      %11391 = vrot.lane.b32.xlu0 %v11374, 16
      %v11392 = vpop.permute.xlu0 %11391
      %11393 = vrot.lane.b32.xlu0 %v11375, 16
      %v11394 = vpop.permute.xlu0 %11393
      %11395 = vrot.lane.b32.xlu0 %v11376, 16
      %v11396 = vpop.permute.xlu0 %11395
      %11397 = vrot.lane.b32.xlu0 %v11377, 16
      %v11398 = vpop.permute.xlu0 %11397
      %11399 = vrot.lane.b32.xlu0 %v11378, 16
      %v11400 = vpop.permute.xlu0 %11399
      %11401 = vrot.lane.b32.xlu0 %v11379, 16
      %v11402 = vpop.permute.xlu0 %11401
      %11403 = vrot.lane.b32.xlu0 %v11380, 16
      %v11404 = vpop.permute.xlu0 %11403
      %11405 = vrot.lane.b32.xlu0 %v11381, 16
      %v11406 = vpop.permute.xlu0 %11405
      %11407 = vrot.lane.b32.xlu0 %v11382, 16
      %v11408 = vpop.permute.xlu0 %11407
      %11409 = vrot.lane.b32.xlu0 %v11383, 16
      %v11410 = vpop.permute.xlu0 %11409
      %11411 = vrot.lane.b32.xlu0 %v11384, 16
      %v11412 = vpop.permute.xlu0 %11411
      %11413 = vrot.lane.b32.xlu0 %v11385, 16
      %v11414 = vpop.permute.xlu0 %11413
      %11415 = vrot.lane.b32.xlu0 %v11386, 16
      %v11416 = vpop.permute.xlu0 %11415
      %11417 = vrot.lane.b32.xlu0 %v11387, 16
      %v11418 = vpop.permute.xlu0 %11417
      %11419 = vrot.lane.b32.xlu0 %v11388, 16
      %v11420 = vpop.permute.xlu0 %11419
      %11437 = vst.msk [vmem:[#allocation4] sm:$0xff] %vm4556, %v11390
      %11438 = vst.msk [vmem:[#allocation4 + $0x8] sm:$0xff] %vm4556, %v11392
      %11439 = vst.msk [vmem:[#allocation4 + $0x10] sm:$0xff] %vm4556, %v11394
      %11440 = vst.msk [vmem:[#allocation4 + $0x18] sm:$0xff] %vm4556, %v11396
      %11441 = vst.msk [vmem:[#allocation4 + $0x20] sm:$0xff] %vm4556, %v11398
      %11442 = vst.msk [vmem:[#allocation4 + $0x28] sm:$0xff] %vm4556, %v11400
      %11443 = vst.msk [vmem:[#allocation4 + $0x30] sm:$0xff] %vm4556, %v11402
      %11444 = vst.msk [vmem:[#allocation4 + $0x38] sm:$0xff] %vm4556, %v11404
      %11445 = vst.msk [vmem:[#allocation4 + $0x40] sm:$0xff] %vm4556, %v11406
      %11446 = vst.msk [vmem:[#allocation4 + $0x48] sm:$0xff] %vm4556, %v11408
      %11447 = vst.msk [vmem:[#allocation4 + $0x50] sm:$0xff] %vm4556, %v11410
      %11448 = vst.msk [vmem:[#allocation4 + $0x58] sm:$0xff] %vm4556, %v11412
      %11449 = vst.msk [vmem:[#allocation4 + $0x60] sm:$0xff] %vm4556, %v11414
      %11450 = vst.msk [vmem:[#allocation4 + $0x68] sm:$0xff] %vm4556, %v11416
      %11451 = vst.msk [vmem:[#allocation4 + $0x70] sm:$0xff] %vm4556, %v11418
      %11452 = vst.msk [vmem:[#allocation4 + $0x78] sm:$0xff] %vm4556, %v11420
      %v11453 = vld [vmem:[#allocation4] sm:$0xff]
      %v11454 = vld [vmem:[#allocation4 + $0x8] sm:$0xff]
      %v11455 = vld [vmem:[#allocation4 + $0x10] sm:$0xff]
      %v11456 = vld [vmem:[#allocation4 + $0x18] sm:$0xff]
      %v11457 = vld [vmem:[#allocation4 + $0x20] sm:$0xff]
      %v11458 = vld [vmem:[#allocation4 + $0x28] sm:$0xff]
      %v11459 = vld [vmem:[#allocation4 + $0x30] sm:$0xff]
      %v11460 = vld [vmem:[#allocation4 + $0x38] sm:$0xff]
      %v11461 = vld [vmem:[#allocation4 + $0x40] sm:$0xff]
      %v11462 = vld [vmem:[#allocation4 + $0x48] sm:$0xff]
      %v11463 = vld [vmem:[#allocation4 + $0x50] sm:$0xff]
      %v11464 = vld [vmem:[#allocation4 + $0x58] sm:$0xff]
      %v11465 = vld [vmem:[#allocation4 + $0x60] sm:$0xff]
      %v11466 = vld [vmem:[#allocation4 + $0x68] sm:$0xff]
      %v11467 = vld [vmem:[#allocation4 + $0x70] sm:$0xff]
      %v11468 = vld [vmem:[#allocation4 + $0x78] sm:$0xff]
      %s11469 = scalar_lea.vmem %s6, 24
      %v11470 = vld [vmem:[%s11469] sm:$0xf]
      %v11471 = vld [vmem:[%s11469 + $0x4] sm:$0xf]
      %v11472 = vld [vmem:[%s11469 + $0x8] sm:$0xf]
      %v11476 = vunpack.c.l.b16 %v11470
      %v11477 = vunpack.c.l.b16 %v11471
      %v11478 = vunpack.c.l.b16 %v11472
      %v11479 = vpack.c.b16 %v11477, %v11476
      %v11480 = vpack.c.b16 %v11478, %v11478
      %v11483 = vsel %vm5629, %v11453, 0
      %v11486 = vsel %vm5629, %v11454, 0
      %v11489 = vsel %vm5629, %v11455, 0
      %v11492 = vsel %vm5629, %v11456, 0
      %v11495 = vsel %vm5629, %v11457, 0
      %v11498 = vsel %vm5629, %v11458, 0
      %v11501 = vsel %vm5629, %v11459, 0
      %v11504 = vsel %vm5629, %v11460, 0
      %v11507 = vsel %vm5629, %v11461, 0
      %v11510 = vsel %vm5629, %v11462, 0
      %v11513 = vsel %vm5629, %v11463, 0
      %v11516 = vsel %vm5629, %v11464, 0
      %v11519 = vsel %vm5629, %v11465, 0
      %v11522 = vsel %vm5629, %v11466, 0
      %v11525 = vsel %vm5629, %v11467, 0
      %v11528 = vsel %vm5629, %v11468, 0
      %v11531 = vsel %vm1181, %v11480, 0
      %11533 = vmatprep.subr.bf16.mxu0 0
      %11534 = vmatpush1.bf16.msra.mxu0 %v11479
      %11535 = vmatprep.subr.bf16.mxu0 0
      %11536 = vmatpush1.bf16.msra.mxu0 %v11531
      %11537 = vmatprep.subr.bf16.mxu0 0
      %11538 = vmatpush1.bf16.msra.mxu0 0
      %11539 = vmatprep.subr.bf16.mxu0 0
      %11540 = vmatpush1.bf16.msra.mxu0 0
      %11541 = vmatprep.subr.bf16.mxu0 0
      %11542 = vmatpush1.bf16.msra.mxu0 0
      %11543 = vmatprep.subr.bf16.mxu0 0
      %11544 = vmatpush1.bf16.msra.mxu0 0
      %11545 = vmatprep.subr.bf16.mxu0 0
      %11546 = vmatpush1.bf16.msra.mxu0 0
      %11547 = vmatprep.subr.bf16.mxu0 0
      %11548 = vmatpush1.bf16.msra.mxu0 0
      %11549 = vmatprep.subr.bf16.mxu0 0
      %11550 = vmatpush1.bf16.msra.mxu0 0
      %11551 = vmatprep.subr.bf16.mxu0 0
      %11552 = vmatpush1.bf16.msra.mxu0 0
      %11553 = vmatprep.subr.bf16.mxu0 0
      %11554 = vmatpush1.bf16.msra.mxu0 0
      %11555 = vmatprep.subr.bf16.mxu0 0
      %11556 = vmatpush1.bf16.msra.mxu0 0
      %11557 = vmatprep.subr.bf16.mxu0 0
      %11558 = vmatpush1.bf16.msra.mxu0 0
      %11559 = vmatprep.subr.bf16.mxu0 0
      %11560 = vmatpush1.bf16.msra.mxu0 0
      %11561 = vmatprep.subr.bf16.mxu0 0
      %11562 = vmatpush1.bf16.msra.mxu0 0
      %11563 = vmatprep.subr.bf16.mxu0 0
      %11564 = vmatpush1.bf16.msra.mxu0 0
      %11565 = vmatprep.mubr.bf16.mxu0 0
      %11566 = vmatmul.mubr.bf16.gmra.mrb[0].mxu0 %v11483
      %v11567 = vpop.f32.mrb[0].mxu0
      %v11568 = vadd.f32 0.0, %v11567
      %v11569 = vpop.f32.mrb[0].mxu0
      %v11570 = vpop.f32.mrb[0].mxu0
      %v11571 = vadd.f32 0.0, %v11570
      %v11572 = vpop.f32.mrb[0].mxu0
      %11573 = vmatprep.mubr.bf16.mxu0 0
      %11574 = vmatmul.mubr.bf16.gmra.mrb[0].mxu0 %v11486
      %v11575 = vpop.f32.mrb[0].mxu0
      %v11576 = vadd.f32 0.0, %v11575
      %v11577 = vpop.f32.mrb[0].mxu0
      %v11578 = vpop.f32.mrb[0].mxu0
      %v11579 = vadd.f32 0.0, %v11578
      %v11580 = vpop.f32.mrb[0].mxu0
      %11581 = vmatprep.mubr.bf16.mxu0 0
      %11582 = vmatmul.mubr.bf16.gmra.mrb[0].mxu0 %v11489
      %v11583 = vpop.f32.mrb[0].mxu0
      %v11584 = vadd.f32 0.0, %v11583
      %v11585 = vpop.f32.mrb[0].mxu0
      %v11586 = vpop.f32.mrb[0].mxu0
      %v11587 = vadd.f32 0.0, %v11586
      %v11588 = vpop.f32.mrb[0].mxu0
      %11589 = vmatprep.mubr.bf16.mxu0 0
      %11590 = vmatmul.mubr.bf16.gmra.mrb[0].mxu0 %v11492
      %v11591 = vpop.f32.mrb[0].mxu0
      %v11592 = vadd.f32 0.0, %v11591
      %v11593 = vpop.f32.mrb[0].mxu0
      %v11594 = vpop.f32.mrb[0].mxu0
      %v11595 = vadd.f32 0.0, %v11594
      %v11596 = vpop.f32.mrb[0].mxu0
      %11597 = vmatprep.mubr.bf16.mxu0 0
      %11598 = vmatmul.mubr.bf16.gmra.mrb[0].mxu0 %v11495
      %v11599 = vpop.f32.mrb[0].mxu0
      %v11600 = vadd.f32 0.0, %v11599
      %v11601 = vpop.f32.mrb[0].mxu0
      %v11602 = vpop.f32.mrb[0].mxu0
      %v11603 = vadd.f32 0.0, %v11602
      %v11604 = vpop.f32.mrb[0].mxu0
      %11605 = vmatprep.mubr.bf16.mxu0 0
      %11606 = vmatmul.mubr.bf16.gmra.mrb[0].mxu0 %v11498
      %v11607 = vpop.f32.mrb[0].mxu0
      %v11608 = vadd.f32 0.0, %v11607
      %v11609 = vpop.f32.mrb[0].mxu0
      %v11610 = vpop.f32.mrb[0].mxu0
      %v11611 = vadd.f32 0.0, %v11610
      %v11612 = vpop.f32.mrb[0].mxu0
      %11613 = vmatprep.mubr.bf16.mxu0 0
      %11614 = vmatmul.mubr.bf16.gmra.mrb[0].mxu0 %v11501
      %v11615 = vpop.f32.mrb[0].mxu0
      %v11616 = vadd.f32 0.0, %v11615
      %v11617 = vpop.f32.mrb[0].mxu0
      %v11618 = vpop.f32.mrb[0].mxu0
      %v11619 = vadd.f32 0.0, %v11618
      %v11620 = vpop.f32.mrb[0].mxu0
      %11621 = vmatprep.mubr.bf16.mxu0 0
      %11622 = vmatmul.mubr.bf16.gmra.mrb[0].mxu0 %v11504
      %v11623 = vpop.f32.mrb[0].mxu0
      %v11624 = vadd.f32 0.0, %v11623
      %v11625 = vpop.f32.mrb[0].mxu0
      %v11626 = vpop.f32.mrb[0].mxu0
      %v11627 = vadd.f32 0.0, %v11626
      %v11628 = vpop.f32.mrb[0].mxu0
      %11629 = vmatprep.mubr.bf16.mxu0 0
      %11630 = vmatmul.mubr.bf16.gmra.mrb[0].mxu0 %v11507
      %v11631 = vpop.f32.mrb[0].mxu0
      %v11632 = vadd.f32 0.0, %v11631
      %v11633 = vpop.f32.mrb[0].mxu0
      %v11634 = vpop.f32.mrb[0].mxu0
      %v11635 = vadd.f32 0.0, %v11634
      %v11636 = vpop.f32.mrb[0].mxu0
      %11637 = vmatprep.mubr.bf16.mxu0 0
      %11638 = vmatmul.mubr.bf16.gmra.mrb[0].mxu0 %v11510
      %v11639 = vpop.f32.mrb[0].mxu0
      %v11640 = vadd.f32 0.0, %v11639
      %v11641 = vpop.f32.mrb[0].mxu0
      %v11642 = vpop.f32.mrb[0].mxu0
      %v11643 = vadd.f32 0.0, %v11642
      %v11644 = vpop.f32.mrb[0].mxu0
      %11645 = vmatprep.mubr.bf16.mxu0 0
      %11646 = vmatmul.mubr.bf16.gmra.mrb[0].mxu0 %v11513
      %v11647 = vpop.f32.mrb[0].mxu0
      %v11648 = vadd.f32 0.0, %v11647
      %v11649 = vpop.f32.mrb[0].mxu0
      %v11650 = vpop.f32.mrb[0].mxu0
      %v11651 = vadd.f32 0.0, %v11650
      %v11652 = vpop.f32.mrb[0].mxu0
      %11653 = vmatprep.mubr.bf16.mxu0 0
      %11654 = vmatmul.mubr.bf16.gmra.mrb[0].mxu0 %v11516
      %v11655 = vpop.f32.mrb[0].mxu0
      %v11656 = vadd.f32 0.0, %v11655
      %v11657 = vpop.f32.mrb[0].mxu0
      %v11658 = vpop.f32.mrb[0].mxu0
      %v11659 = vadd.f32 0.0, %v11658
      %v11660 = vpop.f32.mrb[0].mxu0
      %11661 = vmatprep.mubr.bf16.mxu0 0
      %11662 = vmatmul.mubr.bf16.gmra.mrb[0].mxu0 %v11519
      %v11663 = vpop.f32.mrb[0].mxu0
      %v11664 = vadd.f32 0.0, %v11663
      %v11665 = vpop.f32.mrb[0].mxu0
      %v11666 = vpop.f32.mrb[0].mxu0
      %v11667 = vadd.f32 0.0, %v11666
      %v11668 = vpop.f32.mrb[0].mxu0
      %11669 = vmatprep.mubr.bf16.mxu0 0
      %11670 = vmatmul.mubr.bf16.gmra.mrb[0].mxu0 %v11522
      %v11671 = vpop.f32.mrb[0].mxu0
      %v11672 = vadd.f32 0.0, %v11671
      %v11673 = vpop.f32.mrb[0].mxu0
      %v11674 = vpop.f32.mrb[0].mxu0
      %v11675 = vadd.f32 0.0, %v11674
      %v11676 = vpop.f32.mrb[0].mxu0
      %11677 = vmatprep.mubr.bf16.mxu0 0
      %11678 = vmatmul.mubr.bf16.gmra.mrb[0].mxu0 %v11525
      %v11679 = vpop.f32.mrb[0].mxu0
      %v11680 = vadd.f32 0.0, %v11679
      %v11681 = vpop.f32.mrb[0].mxu0
      %v11682 = vpop.f32.mrb[0].mxu0
      %v11683 = vadd.f32 0.0, %v11682
      %v11684 = vpop.f32.mrb[0].mxu0
      %11685 = vmatprep.mubr.bf16.mxu0 0
      %11686 = vmatmul.mubr.bf16.gmra.mrb[0].mxu0 %v11528
      %v11687 = vpop.f32.mrb[0].mxu0
      %v11688 = vadd.f32 0.0, %v11687
      %v11689 = vpop.f32.mrb[0].mxu0
      %v11690 = vpop.f32.mrb[0].mxu0
      %v11691 = vadd.f32 0.0, %v11690
      %v11692 = vpop.f32.mrb[0].mxu0
      %11693 = vdwg.mxu0
      %v11694 = vadd.f32 %v10318, %v11568
      %v11695 = vadd.f32 %v10321, %v11571
      %v11696 = vadd.f32 %v10326, %v11576
      %v11697 = vadd.f32 %v10329, %v11579
      %v11698 = vadd.f32 %v10334, %v11584
      %v11699 = vadd.f32 %v10337, %v11587
      %v11700 = vadd.f32 %v10342, %v11592
      %v11701 = vadd.f32 %v10345, %v11595
      %v11702 = vadd.f32 %v10350, %v11600
      %v11703 = vadd.f32 %v10353, %v11603
      %v11704 = vadd.f32 %v10358, %v11608
      %v11705 = vadd.f32 %v10361, %v11611
      %v11706 = vadd.f32 %v10366, %v11616
      %v11707 = vadd.f32 %v10369, %v11619
      %v11708 = vadd.f32 %v10374, %v11624
      %v11709 = vadd.f32 %v10377, %v11627
      %v11710 = vadd.f32 %v10382, %v11632
      %v11711 = vadd.f32 %v10385, %v11635
      %v11712 = vadd.f32 %v10390, %v11640
      %v11713 = vadd.f32 %v10393, %v11643
      %v11714 = vadd.f32 %v10398, %v11648
      %v11715 = vadd.f32 %v10401, %v11651
      %v11716 = vadd.f32 %v10406, %v11656
      %v11717 = vadd.f32 %v10409, %v11659
      %v11718 = vadd.f32 %v10414, %v11664
      %v11719 = vadd.f32 %v10417, %v11667
      %v11720 = vadd.f32 %v10422, %v11672
      %v11721 = vadd.f32 %v10425, %v11675
      %v11722 = vadd.f32 %v10430, %v11680
      %v11723 = vadd.f32 %v10433, %v11683
      %v11724 = vadd.f32 %v10438, %v11688
      %v11725 = vadd.f32 %v10441, %v11691
      %v11726 = vld [vmem:[%s7] sm:$0x1]
      %v11728 = vlaneseq
      %v11729 = vshrl.u32 %v11728, 7
      %v11730 = vsub.s32 0, %v11729
      %v11731 = vrot.slane %v11726, %v11730
      %v11733 = vadd.f32 %v11694, %v11731
      %v11734 = vadd.f32 %v11695, %v11731
      %v11735 = vadd.f32 %v11696, %v11731
      %v11736 = vadd.f32 %v11697, %v11731
      %v11737 = vadd.f32 %v11698, %v11731
      %v11738 = vadd.f32 %v11699, %v11731
      %v11739 = vadd.f32 %v11700, %v11731
      %v11740 = vadd.f32 %v11701, %v11731
      %v11741 = vadd.f32 %v11702, %v11731
      %v11742 = vadd.f32 %v11703, %v11731
      %v11743 = vadd.f32 %v11704, %v11731
      %v11744 = vadd.f32 %v11705, %v11731
      %v11745 = vadd.f32 %v11706, %v11731
      %v11746 = vadd.f32 %v11707, %v11731
      %v11747 = vadd.f32 %v11708, %v11731
      %v11748 = vadd.f32 %v11709, %v11731
      %v11749 = vadd.f32 %v11710, %v11731
      %v11750 = vadd.f32 %v11711, %v11731
      %v11751 = vadd.f32 %v11712, %v11731
      %v11752 = vadd.f32 %v11713, %v11731
      %v11753 = vadd.f32 %v11714, %v11731
      %v11754 = vadd.f32 %v11715, %v11731
      %v11755 = vadd.f32 %v11716, %v11731
      %v11756 = vadd.f32 %v11717, %v11731
      %v11757 = vadd.f32 %v11718, %v11731
      %v11758 = vadd.f32 %v11719, %v11731
      %v11759 = vadd.f32 %v11720, %v11731
      %v11760 = vadd.f32 %v11721, %v11731
      %v11761 = vadd.f32 %v11722, %v11731
      %v11762 = vadd.f32 %v11723, %v11731
      %v11763 = vadd.f32 %v11724, %v11731
      %v11764 = vadd.f32 %v11725, %v11731
      %v11765 = vmax.f32 %v11733, 0.0
      %v11766 = vmax.f32 %v11734, 0.0
      %v11767 = vmax.f32 %v11735, 0.0
      %v11768 = vmax.f32 %v11736, 0.0
      %v11769 = vmax.f32 %v11737, 0.0
      %v11770 = vmax.f32 %v11738, 0.0
      %v11771 = vmax.f32 %v11739, 0.0
      %v11772 = vmax.f32 %v11740, 0.0
      %v11773 = vmax.f32 %v11741, 0.0
      %v11774 = vmax.f32 %v11742, 0.0
      %v11775 = vmax.f32 %v11743, 0.0
      %v11776 = vmax.f32 %v11744, 0.0
      %v11777 = vmax.f32 %v11745, 0.0
      %v11778 = vmax.f32 %v11746, 0.0
      %v11779 = vmax.f32 %v11747, 0.0
      %v11780 = vmax.f32 %v11748, 0.0
      %v11781 = vmax.f32 %v11749, 0.0
      %v11782 = vmax.f32 %v11750, 0.0
      %v11783 = vmax.f32 %v11751, 0.0
      %v11784 = vmax.f32 %v11752, 0.0
      %v11785 = vmax.f32 %v11753, 0.0
      %v11786 = vmax.f32 %v11754, 0.0
      %v11787 = vmax.f32 %v11755, 0.0
      %v11788 = vmax.f32 %v11756, 0.0
      %v11789 = vmax.f32 %v11757, 0.0
      %v11790 = vmax.f32 %v11758, 0.0
      %v11791 = vmax.f32 %v11759, 0.0
      %v11792 = vmax.f32 %v11760, 0.0
      %v11793 = vmax.f32 %v11761, 0.0
      %v11794 = vmax.f32 %v11762, 0.0
      %v11795 = vmax.f32 %v11763, 0.0
      %v11796 = vmax.f32 %v11764, 0.0
      %11797 = vst.msk [vmem:[%s325] sm:$0xff] %vm1168, %v11765
      %11798 = vst.msk [vmem:[%s325 + $0x8] sm:$0xff] %vm1168, %v11766
      %11799 = vst.msk [vmem:[%s325 + $0x10] sm:$0xff] %vm1168, %v11767
      %11800 = vst.msk [vmem:[%s325 + $0x18] sm:$0xff] %vm1168, %v11768
      %11801 = vst.msk [vmem:[%s325 + $0x20] sm:$0xff] %vm1168, %v11769
      %11802 = vst.msk [vmem:[%s325 + $0x28] sm:$0xff] %vm1168, %v11770
      %11803 = vst.msk [vmem:[%s325 + $0x30] sm:$0xff] %vm1168, %v11771
      %11804 = vst.msk [vmem:[%s325 + $0x38] sm:$0xff] %vm1168, %v11772
      %11805 = vst.msk [vmem:[%s325 + $0x40] sm:$0xff] %vm1168, %v11773
      %11806 = vst.msk [vmem:[%s325 + $0x48] sm:$0xff] %vm1168, %v11774
      %11807 = vst.msk [vmem:[%s325 + $0x50] sm:$0xff] %vm1168, %v11775
      %11808 = vst.msk [vmem:[%s325 + $0x58] sm:$0xff] %vm1168, %v11776
      %11809 = vst.msk [vmem:[%s325 + $0x60] sm:$0xff] %vm1168, %v11777
      %11810 = vst.msk [vmem:[%s325 + $0x68] sm:$0xff] %vm1168, %v11778
      %11811 = vst.msk [vmem:[%s325 + $0x70] sm:$0xff] %vm1168, %v11779
      %11812 = vst.msk [vmem:[%s325 + $0x78] sm:$0xff] %vm1168, %v11780
      %11813 = vst.msk [vmem:[%s325 + $0x80] sm:$0xff] %vm1168, %v11781
      %11814 = vst.msk [vmem:[%s325 + $0x88] sm:$0xff] %vm1168, %v11782
      %11815 = vst.msk [vmem:[%s325 + $0x90] sm:$0xff] %vm1168, %v11783
      %11816 = vst.msk [vmem:[%s325 + $0x98] sm:$0xff] %vm1168, %v11784
      %11817 = vst.msk [vmem:[%s325 + $0xa0] sm:$0xff] %vm1168, %v11785
      %11818 = vst.msk [vmem:[%s325 + $0xa8] sm:$0xff] %vm1168, %v11786
      %11819 = vst.msk [vmem:[%s325 + $0xb0] sm:$0xff] %vm1168, %v11787
      %11820 = vst.msk [vmem:[%s325 + $0xb8] sm:$0xff] %vm1168, %v11788
      %11821 = vst.msk [vmem:[%s325 + $0xc0] sm:$0xff] %vm1168, %v11789
      %11822 = vst.msk [vmem:[%s325 + $0xc8] sm:$0xff] %vm1168, %v11790
      %11823 = vst.msk [vmem:[%s325 + $0xd0] sm:$0xff] %vm1168, %v11791
      %11824 = vst.msk [vmem:[%s325 + $0xd8] sm:$0xff] %vm1168, %v11792
      %11825 = vst.msk [vmem:[%s325 + $0xe0] sm:$0xff] %vm1168, %v11793
      %11826 = vst.msk [vmem:[%s325 + $0xe8] sm:$0xff] %vm1168, %v11794
      %11827 = vst.msk [vmem:[%s325 + $0xf0] sm:$0xff] %vm1168, %v11795
      %11828 = vst.msk [vmem:[%s325 + $0xf8] sm:$0xff] %vm1168, %v11796
      %p11829 = scmp.lt.s32.totalorder %s19, 1
      %s11830 = scalar_select %p11829, %s19, 1
      %s11831 = smul.addr %s11830, 32
      %s11832 = smul.addr %s11831, 8
      %s11833 = scalar_lea.vmem %s8, %s11832
      // Predicated region
      $region53: #{tpu_custom_call.1} parent=51 // pred_check
        %p11834 = pneg %p215
      $region54: #{tpu_custom_call.1} parent=51 // pred_check_branch
        %11836 = sbr.rel (%p11834) target = $region56
      $region55: #{tpu_custom_call.1} parent=51 // pred_region
        _
      $region56: #{tpu_custom_call.1} parent=51 // pred_fallthru
        _
    $region52: #{tpu_custom_call.1} parent=5 // pred_fallthru
      _
    %p11837 = scmp.le.s32.totalorder 2, %s14
    // Predicated region
    $region57: #{tpu_custom_call.1} parent=5 // pred_check
      %p11838 = pneg %p11837
    $region58: #{tpu_custom_call.1} parent=5 // pred_check_branch
      %11840 = sbr.rel (%p11838) target = $region60
    $region59: #{tpu_custom_call.1} parent=5 // pred_region
      %s11841 = ssub.s32 %s14, 2
      // Predicated region
      $region61: #{tpu_custom_call.1} parent=59 // pred_check
        %p11842 = pneg %p221
      $region62: #{tpu_custom_call.1} parent=59 // pred_check_branch
        %11844 = sbr.rel (%p11842) target = $region64
      $region63: #{tpu_custom_call.1} parent=59 // pred_region
        %p11845 = scmp.lt.s32.totalorder %s20, 1
        %s11846 = scalar_select %p11845, %s20, 1
        %s11847 = smul.addr %s11846, 32
        %s11848 = smul.addr %s11847, 8
        %s11849 = scalar_lea.vmem %s8, %s11848
      $region64: #{tpu_custom_call.1} parent=59 // pred_fallthru
        _
    $region60: #{tpu_custom_call.1} parent=5 // pred_fallthru
      _
  $region6: #{tpu_custom_call.1} parent=0 // loop_footer
    %s18 = sadd.s32 1, %s14
  $region7: #{tpu_custom_call.1} parent=0 // loop_footer_branch
    %13 = sbr.rel target = $region3
  $region8: #{tpu_custom_call.1} parent=0 // loop_exit
    _

</llo_original>
